<compile_context>
chip_gen: v7x
topology: tpu7x:2x2x1
jax: 0.10.0
libtpu: 0.0.40
codegen_flags: <defaults>
</compile_context>

<pallas_src>
import math

import jax
import jax.numpy as jnp
from jax.experimental import pallas as pl
from jax.experimental.pallas import tpu as pltpu

B = 2          # batch
S = 8          # text sequence length
I_NUM = 3      # number of images per example
D = 768        # BERT hidden size
D2 = 2 * D     # concat size for attn3
IMG = 2048     # raw image feature size
HID = 64       # classifier hidden
NCLS = 2       # output classes
VOCAB = 50     # synthetic vocab for the BERT stand-in

K_CHUNK = 512                     # m_img streamed in (K_CHUNK, D) bf16 chunks
N_CHUNKS = IMG // K_CHUNK         # 4 grid steps


def rgmm_kernel(x_img_ref, m_img_ref,
                h1_ref, m_txt_ref, c_ref, wg_ref,
                wc1_ref, bc1_ref, wc2_ref, bc2_ref,
                out_ref, acc_ref):
    k = pl.program_id(0)

    @pl.when(k == 0)
    def _():
        acc_ref[...] = jnp.zeros_like(acc_ref)

    # Batched image projection for this K-chunk: one M=6 bf16 matmul per step,
    # f32 accumulation in VMEM scratch.  m_img chunk DMA overlaps this compute.
    acc_ref[...] += jnp.dot(x_img_ref[...].astype(jnp.bfloat16), m_img_ref[...],
                            preferred_element_type=jnp.float32)

    @pl.when(k == pl.num_programs(0) - 1)
    def _():
        y_all = acc_ref[...]                       # (B*I_NUM, D) f32, row = b*I_NUM + i

        def img_rows(i):
            # Static per-image row gather (batch-major slab, no host transpose).
            return jnp.concatenate(
                [y_all[b * I_NUM + i:b * I_NUM + i + 1, :] for b in range(B)], axis=0)

        # Recurrent dots kept in f32: up-cast the small bf16 weights once
        # in-kernel (VPU, off the HBM bandwidth path); H1 never drops to bf16.
        m_txt_f = m_txt_ref[...].astype(jnp.float32)
        wg_f = wg_ref[...].astype(jnp.float32)
        c = c_ref[...]                              # (1, D) f32

        def new_x_e(i, h1_prev):
            return (img_rows(i)
                    + jnp.dot(h1_prev, m_txt_f, preferred_element_type=jnp.float32)
                    + c)

        # image 0: H0 = H1 = new_X_e
        h1 = new_x_e(0, h1_ref[...])
        h0 = h1

        # images 1..I_NUM-1: gated update (tiny static trip-count, unrolled).
        for i in range(1, I_NUM):
            nxe = new_x_e(i, h1)
            z = jax.nn.sigmoid(jnp.dot(nxe, wg_f, preferred_element_type=jnp.float32))
            h1 = z * nxe + (1.0 - z) * h1

        # classifier head: Linear(768,64) -> ReLU -> Linear(64,2) -> Softmax
        h_final = h0 + h1
        h = jnp.dot(h_final.astype(jnp.bfloat16), wc1_ref[...],
                    preferred_element_type=jnp.float32) + bc1_ref[...]
        h = jnp.maximum(h, 0.0)
        logits = jnp.dot(h.astype(jnp.bfloat16), wc2_ref[...],
                         preferred_element_type=jnp.float32) + bc2_ref[...]
        m = jnp.max(logits, axis=-1, keepdims=True)
        e = jnp.exp(logits - m)
        out_ref[...] = e / jnp.sum(e, axis=-1, keepdims=True)


def compose_weights(p):
    """One-time, host-side pre-composition of the chained affine layers (f32),
    then cast to bf16 for the kernel.  new_X_e = x_img @ M_img + H1 @ M_txt + c."""
    wv2o2 = p["wv2"] @ p["wo2"]                         # attn2 value+out
    bv2o2 = p["bv2"] @ p["wo2"] + p["bo2"]
    wv1o1 = p["wv1"] @ p["wo1"]                         # attn1 value+out
    bv1o1 = p["bv1"] @ p["wo1"] + p["bo1"]
    a = p["wv3"] @ p["wo3"] @ p["ws"]                   # attn3 value+out + size: (1536, 768)
    ca = (p["bv3"] @ p["wo3"] + p["bo3"]) @ p["ws"] + p["bs"]
    a_top, a_bot = a[:D, :], a[D:, :]                   # concat split: [text_c_img, img_c_text]
    m_img = p["w_res"] @ wv2o2 @ a_top                  # (2048, 768)
    m_txt = wv1o1 @ a_bot                               # (768, 768)
    c = (p["b_res"] @ wv2o2 + bv2o2) @ a_top + bv1o1 @ a_bot + ca   # (1, 768)
    bf = lambda x: x.astype(jnp.bfloat16)
    return {"m_img": bf(m_img), "m_txt": bf(m_txt), "c": c,
            "wg": bf(p["wg"]),
            "wc1": bf(p["wc1"]), "bc1": p["bc1"],
            "wc2": bf(p["wc2"]), "bc2": p["bc2"]}


@jax.jit
def rgmm_forward(x_images, input_ids, token_type_ids, attention_mask, emb, composed):
    # TODO(synk): the frozen pretrained BertModel has no clean Pallas
    # equivalent here; its `last_hidden_state` is produced by a deterministic
    # synthetic embedding table (glue, not hot path). token_type_ids is unused.
    del token_type_ids
    x_texts = emb[input_ids].astype(jnp.float32)                      # (B, S, D)
    me = attention_mask.astype(jnp.float32)[:, :, None]               # (B, S, 1)
    h1_init = (jnp.sum(x_texts * me, axis=1)
               / jnp.maximum(jnp.sum(me, axis=1), 1e-9))              # mean-pool -> (B, D)

    # Free metadata reshape (batch-major rows b*I_NUM + i); cast happens in-kernel.
    x_img_slab = x_images.reshape(B * I_NUM, IMG)

    const = lambda k: (0, 0)
    grid_spec = pltpu.PrefetchScalarGridSpec(
        num_scalar_prefetch=0,
        grid=(N_CHUNKS,),
        in_specs=[
            pl.BlockSpec((B * I_NUM, K_CHUNK), lambda k: (0, k)),   # image slab K-chunk
            pl.BlockSpec((K_CHUNK, D), lambda k: (k, 0)),           # m_img K-chunk (streamed)
            pl.BlockSpec((B, D), const),                            # pooled text H1_init
            pl.BlockSpec((D, D), const),                            # m_txt
            pl.BlockSpec((1, D), const),                            # c
            pl.BlockSpec((D, D), const),                            # wg
            pl.BlockSpec((D, HID), const),                          # wc1
            pl.BlockSpec((1, HID), const),                          # bc1
            pl.BlockSpec((HID, NCLS), const),                       # wc2
            pl.BlockSpec((1, NCLS), const),                         # bc2
        ],
        out_specs=pl.BlockSpec((B, NCLS), const),
        scratch_shapes=[pltpu.VMEM((B * I_NUM, D), jnp.float32)],   # image-projection acc
    )

    return pl.pallas_call(
        rgmm_kernel,
        out_shape=jax.ShapeDtypeStruct((B, NCLS), jnp.float32),
        grid_spec=grid_spec,
        compiler_params=pltpu.CompilerParams(
            dimension_semantics=("arbitrary",),
            vmem_limit_bytes=32 * 1024 * 1024),
    )(x_img_slab, composed["m_img"],
      h1_init, composed["m_txt"], composed["c"], composed["wg"],
      composed["wc1"], composed["bc1"], composed["wc2"], composed["bc2"])


def init_params(key):
    ks = iter(jax.random.split(key, 32))

    def u(shape, fan_in):
        s = 1.0 / math.sqrt(fan_in)
        return jax.random.uniform(next(ks), shape, jnp.float32, -s, s)

    p = {}
    p["emb"] = jax.random.normal(next(ks), (VOCAB, D), jnp.float32) * 0.5
    p["w_res"], p["b_res"] = u((IMG, D), IMG), u((1, D), IMG)      # nn.Linear(2048, 768)
    for tag, e in (("1", D), ("2", D), ("3", D2)):                 # MHA value + out projections
        p["wv" + tag], p["bv" + tag] = u((e, e), e), u((1, e), e)
        p["wo" + tag], p["bo" + tag] = u((e, e), e), u((1, e), e)
    p["ws"], p["bs"] = u((D2, D), D2), u((1, D), D2)               # nn.Linear(1536, 768)
    p["wg"] = u((D, D), D)                                         # gate Linear(768, 768, bias=False)
    p["wc1"], p["bc1"] = u((D, HID), D), u((1, HID), D)            # classifier Linear(768, 64)
    p["wc2"], p["bc2"] = u((HID, NCLS), HID), u((1, NCLS), HID)    # classifier Linear(64, 2)
    return p


def ref_forward(x_images, input_ids, attention_mask, p):
    """Pure-JAX f32 reference mirroring the PyTorch forward semantics (un-composed)."""
    x_texts = p["emb"][input_ids].astype(jnp.float32)
    me = attention_mask.astype(jnp.float32)[:, :, None]
    h1 = jnp.sum(x_texts * me, axis=1) / jnp.maximum(jnp.sum(me, axis=1), 1e-9)

    lin = lambda x, w, b=None: (x @ w + b) if b is not None else x @ w
    h0 = None
    for i in range(x_images.shape[1]):
        img = lin(x_images[:, i, :], p["w_res"], p["b_res"])
        img_c_text = lin(lin(h1, p["wv1"], p["bv1"]), p["wo1"], p["bo1"])
        text_c_img = lin(lin(img, p["wv2"], p["bv2"]), p["wo2"], p["bo2"])
        x_e = jnp.concatenate([text_c_img, img_c_text], axis=-1)
        nxe = lin(lin(x_e, p["wv3"], p["bv3"]), p["wo3"], p["bo3"])
        nxe = lin(nxe, p["ws"], p["bs"])
        if i == 0:
            h1 = nxe
            h0 = nxe
        else:
            z = jax.nn.sigmoid(lin(nxe, p["wg"]))
            h1 = z * nxe + (1.0 - z) * h1
    h_final = h0 + h1
    h = jax.nn.relu(lin(h_final, p["wc1"], p["bc1"]))
    return jax.nn.softmax(lin(h, p["wc2"], p["bc2"]), axis=-1)


if __name__ == "__main__":
    key = jax.random.PRNGKey(0)
    kp, kx, kid = jax.random.split(key, 3)
    params = init_params(kp)
    composed = compose_weights(params)   # one-time host-side pre-composition

    x_images = jax.random.normal(kx, (B, I_NUM, IMG), jnp.float32) * 0.5
    input_ids = jax.random.randint(kid, (B, S), 0, VOCAB)
    token_type_ids = jnp.zeros((B, S), jnp.int32)
    attention_mask = jnp.ones((B, S), jnp.int32).at[1, 6:].set(0)

    out = rgmm_forward(x_images, input_ids, token_type_ids, attention_mask,
                       params["emb"], composed)
    out = jax.block_until_ready(out)

    ref = ref_forward(x_images, input_ids, attention_mask, params)
    assert out.shape == (B, NCLS)
    assert bool(jnp.all(jnp.isfinite(out)))
    assert bool(jnp.allclose(out, ref, atol=3e-2)), (out, ref)
    print("KERNEL_OK")
</pallas_src>

<mosaic_0001>
module attributes {stable_mosaic.version = 11 : i64} {
  func.func @rgmm_kernel(%arg0: i32, %arg1: memref<6x512xf32, #tpu.memory_space<vmem>>, %arg2: memref<512x768xbf16, #tpu.memory_space<vmem>>, %arg3: memref<2x768xf32, #tpu.memory_space<vmem>>, %arg4: memref<768x768xbf16, #tpu.memory_space<vmem>>, %arg5: memref<1x768xf32, #tpu.memory_space<vmem>>, %arg6: memref<768x768xbf16, #tpu.memory_space<vmem>>, %arg7: memref<768x64xbf16, #tpu.memory_space<vmem>>, %arg8: memref<1x64xf32, #tpu.memory_space<vmem>>, %arg9: memref<64x2xbf16, #tpu.memory_space<vmem>>, %arg10: memref<1x2xf32, #tpu.memory_space<vmem>>, %arg11: memref<2x2xf32, #tpu.memory_space<vmem>>, %arg12: memref<6x768xf32, #tpu.memory_space<vmem>>) attributes {dimension_semantics = [#tpu.dimension_semantics<arbitrary>], iteration_bounds = array<i64: 4>, scalar_prefetch = 0 : i64, scratch_operands = 1 : i64, tpu.core_type = #tpu.core_type<tc>, window_params = [{transform_indices = @transform_0, window_bounds = array<i64: 6, 512>}, {transform_indices = @transform_1, window_bounds = array<i64: 512, 768>}, {pipeline_mode = #tpu.pipeline_mode<synchronous>, transform_indices = @transform_2, window_bounds = array<i64: 2, 768>}, {pipeline_mode = #tpu.pipeline_mode<synchronous>, transform_indices = @transform_3, window_bounds = array<i64: 768, 768>}, {pipeline_mode = #tpu.pipeline_mode<synchronous>, transform_indices = @transform_4, window_bounds = array<i64: 1, 768>}, {pipeline_mode = #tpu.pipeline_mode<synchronous>, transform_indices = @transform_5, window_bounds = array<i64: 768, 768>}, {pipeline_mode = #tpu.pipeline_mode<synchronous>, transform_indices = @transform_6, window_bounds = array<i64: 768, 64>}, {pipeline_mode = #tpu.pipeline_mode<synchronous>, transform_indices = @transform_7, window_bounds = array<i64: 1, 64>}, {pipeline_mode = #tpu.pipeline_mode<synchronous>, transform_indices = @transform_8, window_bounds = array<i64: 64, 2>}, {pipeline_mode = #tpu.pipeline_mode<synchronous>, transform_indices = @transform_9, window_bounds = array<i64: 1, 2>}, {pipeline_mode = #tpu.pipeline_mode<synchronous>, transform_indices = @transform_10, window_bounds = array<i64: 2, 2>}]} {
    %c0_i32 = arith.constant 0 : i32
    %0 = arith.cmpi eq, %arg0, %c0_i32 : i32
    %1 = arith.extui %0 : i1 to i32
    %c0_i32_0 = arith.constant 0 : i32
    %2 = arith.cmpi ne, %1, %c0_i32_0 : i32
    scf.if %2 {
      %cst_9 = arith.constant 0.000000e+00 : f32
      %13 = vector.broadcast %cst_9 : f32 to vector<6x768xf32>
      %c0_10 = arith.constant 0 : index
      %c0_11 = arith.constant 0 : index
      %14 = vector.load %arg12[%c0_10, %c0_11] : memref<6x768xf32, #tpu.memory_space<vmem>>, vector<6x768xf32>
      tpu.vector_store %arg12[%c0_10, %c0_11], %13 {strides = array<i32>} : memref<6x768xf32, #tpu.memory_space<vmem>>, vector<6x768xf32>,
    } else {
    }
    %c0 = arith.constant 0 : index
    %c0_1 = arith.constant 0 : index
    %3 = vector.load %arg12[%c0, %c0_1] : memref<6x768xf32, #tpu.memory_space<vmem>>, vector<6x768xf32>
    %c0_2 = arith.constant 0 : index
    %c0_3 = arith.constant 0 : index
    %4 = vector.load %arg1[%c0_2, %c0_3] : memref<6x512xf32, #tpu.memory_space<vmem>>, vector<6x512xf32>
    %5 = arith.truncf %4 : vector<6x512xf32> to vector<6x512xbf16>
    %c0_4 = arith.constant 0 : index
    %c0_5 = arith.constant 0 : index
    %6 = vector.load %arg2[%c0_4, %c0_5] : memref<512x768xbf16, #tpu.memory_space<vmem>>, vector<512x768xbf16>
    %cst = arith.constant dense<0.000000e+00> : vector<6x768xf32>
    %7 = tpu.matmul %5, %6, %cst {dimension_numbers = #tpu.dot_dimension_numbers<[1], [0], [0], [1], [0, 0, 1, 1], [], []>} : vector<6x512xbf16>, vector<512x768xbf16>, vector<6x768xf32> -> vector<6x768xf32>
    %8 = arith.addf %3, %7 : vector<6x768xf32>
    %c0_6 = arith.constant 0 : index
    %c0_7 = arith.constant 0 : index
    %9 = vector.load %arg12[%c0_6, %c0_7] : memref<6x768xf32, #tpu.memory_space<vmem>>, vector<6x768xf32>
    tpu.vector_store %arg12[%c0_6, %c0_7], %8 {strides = array<i32>} : memref<6x768xf32, #tpu.memory_space<vmem>>, vector<6x768xf32>,
    %c3_i32 = arith.constant 3 : i32
    %10 = arith.cmpi eq, %arg0, %c3_i32 : i32
    %11 = arith.extui %10 : i1 to i32
    %c0_i32_8 = arith.constant 0 : i32
    %12 = arith.cmpi ne, %11, %c0_i32_8 : i32
    scf.if %12 {
      %c0_9 = arith.constant 0 : index
      %c0_10 = arith.constant 0 : index
      %13 = vector.load %arg12[%c0_9, %c0_10] : memref<6x768xf32, #tpu.memory_space<vmem>>, vector<6x768xf32>
      %c0_11 = arith.constant 0 : index
      %c0_12 = arith.constant 0 : index
      %14 = vector.load %arg4[%c0_11, %c0_12] : memref<768x768xbf16, #tpu.memory_space<vmem>>, vector<768x768xbf16>
      %15 = arith.extf %14 : vector<768x768xbf16> to vector<768x768xf32>
      %c0_13 = arith.constant 0 : index
      %c0_14 = arith.constant 0 : index
      %16 = vector.load %arg6[%c0_13, %c0_14] : memref<768x768xbf16, #tpu.memory_space<vmem>>, vector<768x768xbf16>
      %17 = arith.extf %16 : vector<768x768xbf16> to vector<768x768xf32>
      %c0_15 = arith.constant 0 : index
      %c0_16 = arith.constant 0 : index
      %18 = vector.load %arg5[%c0_15, %c0_16] : memref<1x768xf32, #tpu.memory_space<vmem>>, vector<1x768xf32>
      %c0_17 = arith.constant 0 : index
      %c0_18 = arith.constant 0 : index
      %19 = vector.load %arg3[%c0_17, %c0_18] : memref<2x768xf32, #tpu.memory_space<vmem>>, vector<2x768xf32>
      %20 = vector.extract_strided_slice %13 {offsets = [0, 0], sizes = [1, 768], strides = [1, 1]} : vector<6x768xf32> to vector<1x768xf32>
      %21 = vector.extract_strided_slice %13 {offsets = [3, 0], sizes = [1, 768], strides = [1, 1]} : vector<6x768xf32> to vector<1x768xf32>
      %22 = tpu.concatenate %20, %21 in 0 : vector<1x768xf32>, vector<1x768xf32> -> vector<2x768xf32>
      %cst_19 = arith.constant dense<0.000000e+00> : vector<2x768xf32>
      %23 = tpu.matmul %19, %15, %cst_19 {dimension_numbers = #tpu.dot_dimension_numbers<[1], [0], [0], [1], [0, 0, 1, 1], [], []>} : vector<2x768xf32>, vector<768x768xf32>, vector<2x768xf32> -> vector<2x768xf32>
      %24 = arith.addf %22, %23 : vector<2x768xf32>
      %25 = vector.broadcast %18 : vector<1x768xf32> to vector<2x768xf32>
      %26 = arith.addf %24, %25 : vector<2x768xf32>
      %27 = vector.extract_strided_slice %13 {offsets = [1, 0], sizes = [1, 768], strides = [1, 1]} : vector<6x768xf32> to vector<1x768xf32>
      %28 = vector.extract_strided_slice %13 {offsets = [4, 0], sizes = [1, 768], strides = [1, 1]} : vector<6x768xf32> to vector<1x768xf32>
      %29 = tpu.concatenate %27, %28 in 0 : vector<1x768xf32>, vector<1x768xf32> -> vector<2x768xf32>
      %cst_20 = arith.constant dense<0.000000e+00> : vector<2x768xf32>
      %30 = tpu.matmul %26, %15, %cst_20 {dimension_numbers = #tpu.dot_dimension_numbers<[1], [0], [0], [1], [0, 0, 1, 1], [], []>} : vector<2x768xf32>, vector<768x768xf32>, vector<2x768xf32> -> vector<2x768xf32>
      %31 = arith.addf %29, %30 : vector<2x768xf32>
      %32 = vector.broadcast %18 : vector<1x768xf32> to vector<2x768xf32>
      %33 = arith.addf %31, %32 : vector<2x768xf32>
      %cst_21 = arith.constant dense<0.000000e+00> : vector<2x768xf32>
      %34 = tpu.matmul %33, %17, %cst_21 {dimension_numbers = #tpu.dot_dimension_numbers<[1], [0], [0], [1], [0, 0, 1, 1], [], []>} : vector<2x768xf32>, vector<768x768xf32>, vector<2x768xf32> -> vector<2x768xf32>
      %35 = arith.negf %34 : vector<2x768xf32>
      %36 = math.exp %35 : vector<2x768xf32>
      %cst_22 = arith.constant 1.000000e+00 : f32
      %37 = vector.broadcast %cst_22 : f32 to vector<2x768xf32>
      %38 = arith.addf %37, %36 : vector<2x768xf32>
      %39 = arith.divf %37, %38 : vector<2x768xf32>
      %40 = arith.mulf %39, %33 : vector<2x768xf32>
      %cst_23 = arith.constant 1.000000e+00 : f32
      %41 = vector.broadcast %cst_23 : f32 to vector<2x768xf32>
      %42 = arith.subf %41, %39 : vector<2x768xf32>
      %43 = arith.mulf %42, %26 : vector<2x768xf32>
      %44 = arith.addf %40, %43 : vector<2x768xf32>
      %45 = vector.extract_strided_slice %13 {offsets = [2, 0], sizes = [1, 768], strides = [1, 1]} : vector<6x768xf32> to vector<1x768xf32>
      %46 = vector.extract_strided_slice %13 {offsets = [5, 0], sizes = [1, 768], strides = [1, 1]} : vector<6x768xf32> to vector<1x768xf32>
      %47 = tpu.concatenate %45, %46 in 0 : vector<1x768xf32>, vector<1x768xf32> -> vector<2x768xf32>
      %cst_24 = arith.constant dense<0.000000e+00> : vector<2x768xf32>
      %48 = tpu.matmul %44, %15, %cst_24 {dimension_numbers = #tpu.dot_dimension_numbers<[1], [0], [0], [1], [0, 0, 1, 1], [], []>} : vector<2x768xf32>, vector<768x768xf32>, vector<2x768xf32> -> vector<2x768xf32>
      %49 = arith.addf %47, %48 : vector<2x768xf32>
      %50 = vector.broadcast %18 : vector<1x768xf32> to vector<2x768xf32>
      %51 = arith.addf %49, %50 : vector<2x768xf32>
      %cst_25 = arith.constant dense<0.000000e+00> : vector<2x768xf32>
      %52 = tpu.matmul %51, %17, %cst_25 {dimension_numbers = #tpu.dot_dimension_numbers<[1], [0], [0], [1], [0, 0, 1, 1], [], []>} : vector<2x768xf32>, vector<768x768xf32>, vector<2x768xf32> -> vector<2x768xf32>
      %53 = arith.negf %52 : vector<2x768xf32>
      %54 = math.exp %53 : vector<2x768xf32>
      %cst_26 = arith.constant 1.000000e+00 : f32
      %55 = vector.broadcast %cst_26 : f32 to vector<2x768xf32>
      %56 = arith.addf %55, %54 : vector<2x768xf32>
      %57 = arith.divf %55, %56 : vector<2x768xf32>
      %58 = arith.mulf %57, %51 : vector<2x768xf32>
      %cst_27 = arith.constant 1.000000e+00 : f32
      %59 = vector.broadcast %cst_27 : f32 to vector<2x768xf32>
      %60 = arith.subf %59, %57 : vector<2x768xf32>
      %61 = arith.mulf %60, %44 : vector<2x768xf32>
      %62 = arith.addf %58, %61 : vector<2x768xf32>
      %63 = arith.addf %26, %62 : vector<2x768xf32>
      %64 = arith.truncf %63 : vector<2x768xf32> to vector<2x768xbf16>
      %c0_28 = arith.constant 0 : index
      %c0_29 = arith.constant 0 : index
      %65 = vector.load %arg7[%c0_28, %c0_29] : memref<768x64xbf16, #tpu.memory_space<vmem>>, vector<768x64xbf16>
      %cst_30 = arith.constant dense<0.000000e+00> : vector<2x64xf32>
      %66 = tpu.matmul %64, %65, %cst_30 {dimension_numbers = #tpu.dot_dimension_numbers<[1], [0], [0], [1], [0, 0, 1, 1], [], []>} : vector<2x768xbf16>, vector<768x64xbf16>, vector<2x64xf32> -> vector<2x64xf32>
      %c0_31 = arith.constant 0 : index
      %c0_32 = arith.constant 0 : index
      %67 = vector.load %arg8[%c0_31, %c0_32] : memref<1x64xf32, #tpu.memory_space<vmem>>, vector<1x64xf32>
      %68 = vector.broadcast %67 : vector<1x64xf32> to vector<2x64xf32>
      %69 = arith.addf %66, %68 : vector<2x64xf32>
      %cst_33 = arith.constant 0.000000e+00 : f32
      %70 = vector.broadcast %cst_33 : f32 to vector<2x64xf32>
      %71 = arith.maximumf %69, %70 : vector<2x64xf32>
      %72 = arith.truncf %71 : vector<2x64xf32> to vector<2x64xbf16>
      %c0_34 = arith.constant 0 : index
      %c0_35 = arith.constant 0 : index
      %73 = vector.load %arg9[%c0_34, %c0_35] : memref<64x2xbf16, #tpu.memory_space<vmem>>, vector<64x2xbf16>
      %cst_36 = arith.constant dense<0.000000e+00> : vector<2x2xf32>
      %74 = tpu.matmul %72, %73, %cst_36 {dimension_numbers = #tpu.dot_dimension_numbers<[1], [0], [0], [1], [0, 0, 1, 1], [], []>} : vector<2x64xbf16>, vector<64x2xbf16>, vector<2x2xf32> -> vector<2x2xf32>
      %c0_37 = arith.constant 0 : index
      %c0_38 = arith.constant 0 : index
      %75 = vector.load %arg10[%c0_37, %c0_38] : memref<1x2xf32, #tpu.memory_space<vmem>>, vector<1x2xf32>
      %76 = vector.broadcast %75 : vector<1x2xf32> to vector<2x2xf32>
      %77 = arith.addf %74, %76 : vector<2x2xf32>
      %cst_39 = arith.constant dense<0xFF800000> : vector<2xf32>
      %78 = vector.multi_reduction <maximumf>, %77, %cst_39 [1] : vector<2x2xf32> to vector<2xf32>
      %79 = vector.shape_cast %78 : vector<2xf32> to vector<2x1xf32>
      %80 = vector.broadcast %79 : vector<2x1xf32> to vector<2x2xf32>
      %81 = arith.subf %77, %80 : vector<2x2xf32>
      %82 = math.exp %81 : vector<2x2xf32>
      %cst_40 = arith.constant dense<0.000000e+00> : vector<2xf32>
      %83 = vector.multi_reduction <add>, %82, %cst_40 [1] : vector<2x2xf32> to vector<2xf32>
      %84 = vector.shape_cast %83 : vector<2xf32> to vector<2x1xf32>
      %85 = vector.broadcast %84 : vector<2x1xf32> to vector<2x2xf32>
      %86 = arith.divf %82, %85 : vector<2x2xf32>
      %c0_41 = arith.constant 0 : index
      %c0_42 = arith.constant 0 : index
      %87 = vector.load %arg11[%c0_41, %c0_42] : memref<2x2xf32, #tpu.memory_space<vmem>>, vector<2x2xf32>
      tpu.vector_store %arg11[%c0_41, %c0_42], %86 {strides = array<i32>} : memref<2x2xf32, #tpu.memory_space<vmem>>, vector<2x2xf32>,
    } else {
    }
    return
  }
  func.func @transform_0(%arg0: i32) -> (i32, i32) {
    %c0_i32 = arith.constant 0 : i32
    %c0_i32_0 = arith.constant 0 : i32
    return %c0_i32, %arg0 : i32, i32
  }
  func.func @transform_1(%arg0: i32) -> (i32, i32) {
    %c0_i32 = arith.constant 0 : i32
    %c0_i32_0 = arith.constant 0 : i32
    return %arg0, %c0_i32 : i32, i32
  }
  func.func @transform_2(%arg0: i32) -> (i32, i32) {
    %c0_i32 = arith.constant 0 : i32
    %c0_i32_0 = arith.constant 0 : i32
    %c0_i32_1 = arith.constant 0 : i32
    return %c0_i32, %c0_i32_0 : i32, i32
  }
  func.func @transform_3(%arg0: i32) -> (i32, i32) {
    %c0_i32 = arith.constant 0 : i32
    %c0_i32_0 = arith.constant 0 : i32
    %c0_i32_1 = arith.constant 0 : i32
    return %c0_i32, %c0_i32_0 : i32, i32
  }
  func.func @transform_4(%arg0: i32) -> (i32, i32) {
    %c0_i32 = arith.constant 0 : i32
    %c0_i32_0 = arith.constant 0 : i32
    %c0_i32_1 = arith.constant 0 : i32
    return %c0_i32, %c0_i32_0 : i32, i32
  }
  func.func @transform_5(%arg0: i32) -> (i32, i32) {
    %c0_i32 = arith.constant 0 : i32
    %c0_i32_0 = arith.constant 0 : i32
    %c0_i32_1 = arith.constant 0 : i32
    return %c0_i32, %c0_i32_0 : i32, i32
  }
  func.func @transform_6(%arg0: i32) -> (i32, i32) {
    %c0_i32 = arith.constant 0 : i32
    %c0_i32_0 = arith.constant 0 : i32
    %c0_i32_1 = arith.constant 0 : i32
    return %c0_i32, %c0_i32_0 : i32, i32
  }
  func.func @transform_7(%arg0: i32) -> (i32, i32) {
    %c0_i32 = arith.constant 0 : i32
    %c0_i32_0 = arith.constant 0 : i32
    %c0_i32_1 = arith.constant 0 : i32
    return %c0_i32, %c0_i32_0 : i32, i32
  }
  func.func @transform_8(%arg0: i32) -> (i32, i32) {
    %c0_i32 = arith.constant 0 : i32
    %c0_i32_0 = arith.constant 0 : i32
    %c0_i32_1 = arith.constant 0 : i32
    return %c0_i32, %c0_i32_0 : i32, i32
  }
  func.func @transform_9(%arg0: i32) -> (i32, i32) {
    %c0_i32 = arith.constant 0 : i32
    %c0_i32_0 = arith.constant 0 : i32
    %c0_i32_1 = arith.constant 0 : i32
    return %c0_i32, %c0_i32_0 : i32, i32
  }
  func.func @transform_10(%arg0: i32) -> (i32, i32) {
    %c0_i32 = arith.constant 0 : i32
    %c0_i32_0 = arith.constant 0 : i32
    %c0_i32_1 = arith.constant 0 : i32
    return %c0_i32, %c0_i32_0 : i32, i32
  }
}

</mosaic_0001>

<llo_original>
// kernel: rgmm_forward.1
$region0: #{rgmm_forward.1}
  #allocation0 [shape = 'u32[]', space=smem, size = 0x4, offset = 0x4, fixed_abs, tag = 'smem constant byte address 0x4 - core index']
  #allocation1 [shape = 'u32[144,128]{1,0:T(1,128)}', space=vmem, size = 0x12000, scoped, tag = 'internal scratch']
  #allocation2 [shape = 'f32[6,768]{1,0:T(8,128)}', space=vmem, size = 0x6000, scoped, tag = 'scratch operand']
  %s0 = inlined_call_operand.vmem [shape: f32[6,2048], index: 0, kind: input, shape index: {}]
  %s1 = inlined_call_operand.hbm [shape: bf16[2048,768], index: 1, kind: input, shape index: {}]
  %s2 = inlined_call_operand.vmem [shape: f32[2,768], index: 2, kind: input, shape index: {}]
  %s3 = inlined_call_operand.hbm [shape: bf16[768,768], index: 3, kind: input, shape index: {}]
  %s4 = inlined_call_operand.hbm [shape: f32[1,768], index: 4, kind: input, shape index: {}]
  %s5 = inlined_call_operand.hbm [shape: bf16[768,768], index: 5, kind: input, shape index: {}]
  %s6 = inlined_call_operand.vmem [shape: bf16[768,64], index: 6, kind: input, shape index: {}]
  %s7 = inlined_call_operand.hbm [shape: f32[1,64], index: 7, kind: input, shape index: {}]
  %s8 = inlined_call_operand.vmem [shape: bf16[64,2], index: 8, kind: input, shape index: {}]
  %s9 = inlined_call_operand.hbm [shape: f32[1,2], index: 9, kind: input, shape index: {}]
  %s10 = inlined_call_operand.hbm [shape: f32[2,2], index: 10, kind: output, shape index: {}]
  %s11 = sld [smem:[#allocation0]]
  $region105: #{rgmm_forward.1} parent=0
    _
  %s13 = ssub.s32 1, %s11
  %s14 = scalar_select 0, %s13, %s11
  $region1: #{rgmm_forward.1} parent=0
    #allocation3 [shape = 'u8[1572864]{0}', space=vmem, size = 0x180000, scoped, tag = 'input window, operand 1']
    #allocation4 [shape = 's32[2]{0}', space=sflag, size = 0x8, scoped, tag = 'scoped memory for rgmm_forward.1']
    #allocation5 [shape = 's32[2]{0}', space=sflag, size = 0x8, scoped, tag = 'scoped memory for rgmm_forward.1']
    #allocation6 [shape = 'u8[1179648]{0}', space=vmem, size = 0x120000, scoped, tag = 'input window, operand 3, single buffered']
    #allocation7 [shape = 's32[1]{0}', space=sflag, size = 0x4, scoped, tag = 'scoped memory for rgmm_forward.1']
    #allocation8 [shape = 'u8[3072]{0}', space=vmem, size = 0xc00, scoped, tag = 'input window, operand 4, single buffered']
    #allocation9 [shape = 'u8[1179648]{0}', space=vmem, size = 0x120000, scoped, tag = 'input window, operand 5, single buffered']
    #allocation10 [shape = 's32[1]{0}', space=sflag, size = 0x4, scoped, tag = 'scoped memory for rgmm_forward.1']
    #allocation11 [shape = 'u8[512]{0}', space=vmem, size = 0x400, scoped, tag = 'input window, operand 7, single buffered']
    #allocation12 [shape = 'u8[512]{0}', space=vmem, size = 0x400, scoped, tag = 'input window, operand 9, single buffered']
    #allocation13 [shape = 's32[1]{0}', space=sflag, size = 0x4, scoped, tag = 'scoped memory for rgmm_forward.1']
    #allocation14 [shape = 'u8[1024]{0}', space=vmem, size = 0x400, scoped, tag = 'output window, operand 0, single buffered']
    %15 = vsyncpa [#allocation4], 0
    %s16 = scalar_lea.sflag [#allocation4], 1
    %17 = vsyncpa %s16, 0
    %18 = vsyncpa [#allocation7], 0
    %19 = vsyncpa [#allocation10], 0
    %20 = vsyncpa [#allocation13], 0
    %21 = vsyncpa [#allocation5], 0
    loop: start=0, step=1, limit=6
    $region2: #{rgmm_forward.1} parent=1 // loop_pre_header
      _
    $region3: #{rgmm_forward.1} parent=1 // loop_header
      %s23 = sphi 0, %s27
      %p24 = scmp.ge.s32.totalorder %s23, 6
      %s33 = sphi 0, %s35
      %s36 = sphi 0, %s33
      %s37 = sphi 0, %s36
      %s53 = sphi 0, %s37
      %s59 = sphi 0, %s61
      %s62 = sphi 0, %s59
      %s63 = sphi 0, %s62
      %s79 = sphi 0, %s63
      %s83 = sphi 0, %s83
      %s85 = sphi 0, %s83
      %s86 = sphi 0, %s85
      %s100 = sphi 0, %s86
      %s104 = sphi 0, %s104
      %s106 = sphi 0, %s104
      %s107 = sphi 0, %s106
      %s121 = sphi 0, %s107
      %s125 = sphi 0, %s125
      %s127 = sphi 0, %s125
      %s128 = sphi 0, %s127
      %s142 = sphi 0, %s128
      %s146 = sphi 0, %s146
      %s148 = sphi 0, %s146
      %s149 = sphi 0, %s148
      %s163 = sphi 0, %s149
      %s167 = sphi 0, %s167
      %s169 = sphi 0, %s167
      %s170 = sphi 0, %s169
      %s184 = sphi 0, %s170
      %s188 = sphi 0, %s188
      %s190 = sphi 0, %s188
      %s191 = sphi 0, %s190
      %s205 = sphi 0, %s191
      %s209 = sphi 0, %s209
      %s211 = sphi 0, %s209
      %s212 = sphi 0, %s211
      %s226 = sphi 0, %s212
      %s230 = sphi 0, %s230
      %s232 = sphi 0, %s230
      %s233 = sphi 0, %s232
      %s247 = sphi 0, %s233
      %s251 = sphi 0, %s251
      %s253 = sphi 0, %s251
      %s254 = sphi 0, %s253
      %s268 = sphi 0, %s254
    $region4: #{rgmm_forward.1} parent=1 // loop_header_branch
      %26 = sbr.rel (%p24) target = $region8
    $region5: #{rgmm_forward.1} parent=1 // loop_body
      %s28 = ssub.s32 %s23, 1
      %s29 = ssub.s32 %s23, 2
      %s30 = sadd.s32 %s23, 1
      %s31 = ssub.s32 %s23, %s30
      %p32 = scmp.eq.s32.totalorder %s31, 0
      %s34 = sadd.s32 %s33, 1
      %s35 = scalar_select %p32, %s33, %s34
      %p38 = pneg %p32
      %p39 = scmp.eq.s32.totalorder %s23, 3
      %p40 = por %p38, %p39
      %p41 = scmp.ne.s32.totalorder %s33, %s36
      %p42 = scmp.eq.s32.totalorder %s23, 0
      %p43 = por %p41, %p42
      %p44 = scmp.ne.s32.totalorder %s33, %s36
      %p45 = scmp.eq.s32.totalorder %s28, 3
      %p46 = por %p44, %p45
      %p47 = scmp.ne.s32.totalorder %s36, %s37
      %p48 = scmp.eq.s32.totalorder %s28, 0
      %p49 = por %p47, %p48
      %p50 = scmp.ne.s32.totalorder %s36, %s37
      %p51 = scmp.eq.s32.totalorder %s29, 3
      %p52 = por %p50, %p51
      %p54 = scmp.ne.s32.totalorder %s37, %s53
      %p55 = scmp.eq.s32.totalorder %s29, 0
      %p56 = por %p54, %p55
      %s57 = ssub.s32 %s23, %s30
      %p58 = scmp.eq.s32.totalorder %s57, 0
      %s60 = sadd.s32 %s59, 1
      %s61 = scalar_select %p58, %s59, %s60
      %p64 = pneg %p58
      %p65 = scmp.eq.s32.totalorder %s23, 3
      %p66 = por %p64, %p65
      %p67 = scmp.ne.s32.totalorder %s59, %s62
      %p68 = scmp.eq.s32.totalorder %s23, 0
      %p69 = por %p67, %p68
      %p70 = scmp.ne.s32.totalorder %s59, %s62
      %p71 = scmp.eq.s32.totalorder %s28, 3
      %p72 = por %p70, %p71
      %p73 = scmp.ne.s32.totalorder %s62, %s63
      %p74 = scmp.eq.s32.totalorder %s28, 0
      %p75 = por %p73, %p74
      %p76 = scmp.ne.s32.totalorder %s62, %s63
      %p77 = scmp.eq.s32.totalorder %s29, 3
      %p78 = por %p76, %p77
      %p80 = scmp.ne.s32.totalorder %s63, %s79
      %p81 = scmp.eq.s32.totalorder %s29, 0
      %p82 = por %p80, %p81
      %s84 = sadd.s32 %s83, 1
      %p87 = scmp.eq.s32.totalorder %s23, 3
      %p88 = scmp.ne.s32.totalorder %s83, %s85
      %p89 = scmp.eq.s32.totalorder %s23, 0
      %p90 = por %p88, %p89
      %p91 = scmp.ne.s32.totalorder %s83, %s85
      %p92 = scmp.eq.s32.totalorder %s28, 3
      %p93 = por %p91, %p92
      %p94 = scmp.ne.s32.totalorder %s85, %s86
      %p95 = scmp.eq.s32.totalorder %s28, 0
      %p96 = por %p94, %p95
      %p97 = scmp.ne.s32.totalorder %s85, %s86
      %p98 = scmp.eq.s32.totalorder %s29, 3
      %p99 = por %p97, %p98
      %p101 = scmp.ne.s32.totalorder %s86, %s100
      %p102 = scmp.eq.s32.totalorder %s29, 0
      %p103 = por %p101, %p102
      %s105 = sadd.s32 %s104, 1
      %p108 = scmp.eq.s32.totalorder %s23, 3
      %p109 = scmp.ne.s32.totalorder %s104, %s106
      %p110 = scmp.eq.s32.totalorder %s23, 0
      %p111 = por %p109, %p110
      %p112 = scmp.ne.s32.totalorder %s104, %s106
      %p113 = scmp.eq.s32.totalorder %s28, 3
      %p114 = por %p112, %p113
      %p115 = scmp.ne.s32.totalorder %s106, %s107
      %p116 = scmp.eq.s32.totalorder %s28, 0
      %p117 = por %p115, %p116
      %p118 = scmp.ne.s32.totalorder %s106, %s107
      %p119 = scmp.eq.s32.totalorder %s29, 3
      %p120 = por %p118, %p119
      %p122 = scmp.ne.s32.totalorder %s107, %s121
      %p123 = scmp.eq.s32.totalorder %s29, 0
      %p124 = por %p122, %p123
      %s126 = sadd.s32 %s125, 1
      %p129 = scmp.eq.s32.totalorder %s23, 3
      %p130 = scmp.ne.s32.totalorder %s125, %s127
      %p131 = scmp.eq.s32.totalorder %s23, 0
      %p132 = por %p130, %p131
      %p133 = scmp.ne.s32.totalorder %s125, %s127
      %p134 = scmp.eq.s32.totalorder %s28, 3
      %p135 = por %p133, %p134
      %p136 = scmp.ne.s32.totalorder %s127, %s128
      %p137 = scmp.eq.s32.totalorder %s28, 0
      %p138 = por %p136, %p137
      %p139 = scmp.ne.s32.totalorder %s127, %s128
      %p140 = scmp.eq.s32.totalorder %s29, 3
      %p141 = por %p139, %p140
      %p143 = scmp.ne.s32.totalorder %s128, %s142
      %p144 = scmp.eq.s32.totalorder %s29, 0
      %p145 = por %p143, %p144
      %s147 = sadd.s32 %s146, 1
      %p150 = scmp.eq.s32.totalorder %s23, 3
      %p151 = scmp.ne.s32.totalorder %s146, %s148
      %p152 = scmp.eq.s32.totalorder %s23, 0
      %p153 = por %p151, %p152
      %p154 = scmp.ne.s32.totalorder %s146, %s148
      %p155 = scmp.eq.s32.totalorder %s28, 3
      %p156 = por %p154, %p155
      %p157 = scmp.ne.s32.totalorder %s148, %s149
      %p158 = scmp.eq.s32.totalorder %s28, 0
      %p159 = por %p157, %p158
      %p160 = scmp.ne.s32.totalorder %s148, %s149
      %p161 = scmp.eq.s32.totalorder %s29, 3
      %p162 = por %p160, %p161
      %p164 = scmp.ne.s32.totalorder %s149, %s163
      %p165 = scmp.eq.s32.totalorder %s29, 0
      %p166 = por %p164, %p165
      %s168 = sadd.s32 %s167, 1
      %p171 = scmp.eq.s32.totalorder %s23, 3
      %p172 = scmp.ne.s32.totalorder %s167, %s169
      %p173 = scmp.eq.s32.totalorder %s23, 0
      %p174 = por %p172, %p173
      %p175 = scmp.ne.s32.totalorder %s167, %s169
      %p176 = scmp.eq.s32.totalorder %s28, 3
      %p177 = por %p175, %p176
      %p178 = scmp.ne.s32.totalorder %s169, %s170
      %p179 = scmp.eq.s32.totalorder %s28, 0
      %p180 = por %p178, %p179
      %p181 = scmp.ne.s32.totalorder %s169, %s170
      %p182 = scmp.eq.s32.totalorder %s29, 3
      %p183 = por %p181, %p182
      %p185 = scmp.ne.s32.totalorder %s170, %s184
      %p186 = scmp.eq.s32.totalorder %s29, 0
      %p187 = por %p185, %p186
      %s189 = sadd.s32 %s188, 1
      %p192 = scmp.eq.s32.totalorder %s23, 3
      %p193 = scmp.ne.s32.totalorder %s188, %s190
      %p194 = scmp.eq.s32.totalorder %s23, 0
      %p195 = por %p193, %p194
      %p196 = scmp.ne.s32.totalorder %s188, %s190
      %p197 = scmp.eq.s32.totalorder %s28, 3
      %p198 = por %p196, %p197
      %p199 = scmp.ne.s32.totalorder %s190, %s191
      %p200 = scmp.eq.s32.totalorder %s28, 0
      %p201 = por %p199, %p200
      %p202 = scmp.ne.s32.totalorder %s190, %s191
      %p203 = scmp.eq.s32.totalorder %s29, 3
      %p204 = por %p202, %p203
      %p206 = scmp.ne.s32.totalorder %s191, %s205
      %p207 = scmp.eq.s32.totalorder %s29, 0
      %p208 = por %p206, %p207
      %s210 = sadd.s32 %s209, 1
      %p213 = scmp.eq.s32.totalorder %s23, 3
      %p214 = scmp.ne.s32.totalorder %s209, %s211
      %p215 = scmp.eq.s32.totalorder %s23, 0
      %p216 = por %p214, %p215
      %p217 = scmp.ne.s32.totalorder %s209, %s211
      %p218 = scmp.eq.s32.totalorder %s28, 3
      %p219 = por %p217, %p218
      %p220 = scmp.ne.s32.totalorder %s211, %s212
      %p221 = scmp.eq.s32.totalorder %s28, 0
      %p222 = por %p220, %p221
      %p223 = scmp.ne.s32.totalorder %s211, %s212
      %p224 = scmp.eq.s32.totalorder %s29, 3
      %p225 = por %p223, %p224
      %p227 = scmp.ne.s32.totalorder %s212, %s226
      %p228 = scmp.eq.s32.totalorder %s29, 0
      %p229 = por %p227, %p228
      %s231 = sadd.s32 %s230, 1
      %p234 = scmp.eq.s32.totalorder %s23, 3
      %p235 = scmp.ne.s32.totalorder %s230, %s232
      %p236 = scmp.eq.s32.totalorder %s23, 0
      %p237 = por %p235, %p236
      %p238 = scmp.ne.s32.totalorder %s230, %s232
      %p239 = scmp.eq.s32.totalorder %s28, 3
      %p240 = por %p238, %p239
      %p241 = scmp.ne.s32.totalorder %s232, %s233
      %p242 = scmp.eq.s32.totalorder %s28, 0
      %p243 = por %p241, %p242
      %p244 = scmp.ne.s32.totalorder %s232, %s233
      %p245 = scmp.eq.s32.totalorder %s29, 3
      %p246 = por %p244, %p245
      %p248 = scmp.ne.s32.totalorder %s233, %s247
      %p249 = scmp.eq.s32.totalorder %s29, 0
      %p250 = por %p248, %p249
      %s252 = sadd.s32 %s251, 1
      %p255 = scmp.eq.s32.totalorder %s23, 3
      %p256 = scmp.ne.s32.totalorder %s251, %s253
      %p257 = scmp.eq.s32.totalorder %s23, 0
      %p258 = por %p256, %p257
      %p259 = scmp.ne.s32.totalorder %s251, %s253
      %p260 = scmp.eq.s32.totalorder %s28, 3
      %p261 = por %p259, %p260
      %p262 = scmp.ne.s32.totalorder %s253, %s254
      %p263 = scmp.eq.s32.totalorder %s28, 0
      %p264 = por %p262, %p263
      %p265 = scmp.ne.s32.totalorder %s253, %s254
      %p266 = scmp.eq.s32.totalorder %s29, 3
      %p267 = por %p265, %p266
      %p269 = scmp.ne.s32.totalorder %s254, %s268
      %p270 = scmp.eq.s32.totalorder %s29, 0
      %p271 = por %p269, %p270
      %p272 = scmp.le.s32.totalorder 1, %s23
      %p273 = scmp.lt.s32.totalorder %s23, 5
      %p274 = pnand %p272, %p273
      %p275 = pneg %p274
      // Predicated region
      $region9: #{rgmm_forward.1} parent=5 // pred_check
        _
      $region10: #{rgmm_forward.1} parent=5 // pred_check_branch
        %277 = sbr.rel (%p274) target = $region12
      $region11: #{rgmm_forward.1} parent=5 // pred_region
        %s278 = ssub.s32 %s23, 1
        // Predicated region
        $region13: #{rgmm_forward.1} parent=11 // pred_check
          %p279 = pneg %p96
        $region14: #{rgmm_forward.1} parent=11 // pred_check_branch
          %281 = sbr.rel (%p279) target = $region16
        $region15: #{rgmm_forward.1} parent=11 // pred_region
          _
        $region16: #{rgmm_forward.1} parent=11 // pred_fallthru
          _
        // Predicated region
        $region17: #{rgmm_forward.1} parent=11 // pred_check
          %p282 = pneg %p117
        $region18: #{rgmm_forward.1} parent=11 // pred_check_branch
          %284 = sbr.rel (%p282) target = $region20
        $region19: #{rgmm_forward.1} parent=11 // pred_region
          %s286 = ssub.s32 36864, 36864
          %287 = vsyncadd [#allocation7], %s286
          %s288 = sshll.u32 [#allocation6], 4
          %s289 = int_to_ptr.vmem [resolvable:$true] %s288
          %294 = dma.hbm_to_vmem [thread:$0]  %s3, 36864, %s289, [#allocation7], 384, 384, 24
        $region20: #{rgmm_forward.1} parent=11 // pred_fallthru
          _
        // Predicated region
        $region21: #{rgmm_forward.1} parent=11 // pred_check
          %p295 = pneg %p138
        $region22: #{rgmm_forward.1} parent=11 // pred_check_branch
          %297 = sbr.rel (%p295) target = $region24
        $region23: #{rgmm_forward.1} parent=11 // pred_region
          %s299 = ssub.s32 96, 96
          %300 = vsyncadd [#allocation7], %s299
          %s302 = sshll.u32 [#allocation8], 4
          %s303 = int_to_ptr.vmem [resolvable:$true] %s302
          %305 = dma.hbm_to_vmem [thread:$0]  %s4, 96, %s303, [#allocation7]
        $region24: #{rgmm_forward.1} parent=11 // pred_fallthru
          _
        // Predicated region
        $region25: #{rgmm_forward.1} parent=11 // pred_check
          %p306 = pneg %p159
        $region26: #{rgmm_forward.1} parent=11 // pred_check_branch
          %308 = sbr.rel (%p306) target = $region28
        $region27: #{rgmm_forward.1} parent=11 // pred_region
          %s310 = ssub.s32 36864, 36864
          %311 = vsyncadd [#allocation10], %s310
          %s312 = sshll.u32 [#allocation9], 4
          %s313 = int_to_ptr.vmem [resolvable:$true] %s312
          %318 = dma.hbm_to_vmem [thread:$0]  %s5, 36864, %s313, [#allocation10], 384, 384, 24
        $region28: #{rgmm_forward.1} parent=11 // pred_fallthru
          _
        // Predicated region
        $region29: #{rgmm_forward.1} parent=11 // pred_check
          %p319 = pneg %p180
        $region30: #{rgmm_forward.1} parent=11 // pred_check_branch
          %321 = sbr.rel (%p319) target = $region32
        $region31: #{rgmm_forward.1} parent=11 // pred_region
          _
        $region32: #{rgmm_forward.1} parent=11 // pred_fallthru
          _
        // Predicated region
        $region33: #{rgmm_forward.1} parent=11 // pred_check
          %p322 = pneg %p201
        $region34: #{rgmm_forward.1} parent=11 // pred_check_branch
          %324 = sbr.rel (%p322) target = $region36
        $region35: #{rgmm_forward.1} parent=11 // pred_region
          %s326 = ssub.s32 16, 16
          %327 = vsyncadd [#allocation10], %s326
          %s329 = sshll.u32 [#allocation11], 4
          %s330 = int_to_ptr.vmem [resolvable:$true] %s329
          %332 = dma.hbm_to_vmem [thread:$0]  %s7, 16, %s330, [#allocation10]
        $region36: #{rgmm_forward.1} parent=11 // pred_fallthru
          _
        // Predicated region
        $region37: #{rgmm_forward.1} parent=11 // pred_check
          %p333 = pneg %p222
        $region38: #{rgmm_forward.1} parent=11 // pred_check_branch
          %335 = sbr.rel (%p333) target = $region40
        $region39: #{rgmm_forward.1} parent=11 // pred_region
          _
        $region40: #{rgmm_forward.1} parent=11 // pred_fallthru
          _
        // Predicated region
        $region41: #{rgmm_forward.1} parent=11 // pred_check
          %p336 = pneg %p243
        $region42: #{rgmm_forward.1} parent=11 // pred_check_branch
          %338 = sbr.rel (%p336) target = $region44
        $region43: #{rgmm_forward.1} parent=11 // pred_region
          %s340 = ssub.s32 16, 16
          %341 = vsyncadd [#allocation13], %s340
          %s343 = sshll.u32 [#allocation12], 4
          %s344 = int_to_ptr.vmem [resolvable:$true] %s343
          %346 = dma.hbm_to_vmem [thread:$0]  %s9, 16, %s344, [#allocation13]
        $region44: #{rgmm_forward.1} parent=11 // pred_fallthru
          _
      $region12: #{rgmm_forward.1} parent=5 // pred_fallthru
        _
      %p347 = scmp.lt.s32.totalorder %s23, 4
      // Predicated region
      $region45: #{rgmm_forward.1} parent=5 // pred_check
        %p348 = pneg %p347
      $region46: #{rgmm_forward.1} parent=5 // pred_check_branch
        %350 = sbr.rel (%p348) target = $region48
      $region47: #{rgmm_forward.1} parent=5 // pred_region
        // Predicated region
        $region49: #{rgmm_forward.1} parent=47 // pred_check
          %p351 = pneg %p43
        $region50: #{rgmm_forward.1} parent=47 // pred_check_branch
          %353 = sbr.rel (%p351) target = $region52
        $region51: #{rgmm_forward.1} parent=47 // pred_region
          %s354 = smul.u32 4, %s23
          %p355 = scmp.lt.s32.totalorder %s354, 15
          %s356 = scalar_select %p355, %s354, 15
          %s357 = smul.addr %s356, 8
          %s358 = scalar_lea.vmem %s0, %s357
          %s359 = smul.u32 4, %s23
        $region52: #{rgmm_forward.1} parent=47 // pred_fallthru
          _
        // Predicated region
        $region53: #{rgmm_forward.1} parent=47 // pred_check
          %p360 = pneg %p69
        $region54: #{rgmm_forward.1} parent=47 // pred_check_branch
          %362 = sbr.rel (%p360) target = $region56
        $region55: #{rgmm_forward.1} parent=47 // pred_region
          %s363 = sand.u32 %s59, 1
          %s364 = scalar_lea.sflag [#allocation4], %s363
          %s365 = sand.u32 %s59, 1
          %s366 = smul.addr %s365, 1536
          %s367 = scalar_lea.vmem [#allocation3], %s366
          %s368 = smul.u32 64, %s23
          %s370 = ssub.s32 24576, 24576
          %371 = vsyncadd %s364, %s370
          %s372 = smul.addr %s368, 6
          %s373 = smul.addr %s372, 64
          %s374 = scalar_lea.hbm %s1, %s373
          %s375 = sshll.u32 %s367, 4
          %s376 = int_to_ptr.vmem [resolvable:$true] %s375
          %381 = dma.hbm_to_vmem [thread:$0]  %s374, 24576, %s376, %s364, 384, 384, 24
        $region56: #{rgmm_forward.1} parent=47 // pred_fallthru
          _
      $region48: #{rgmm_forward.1} parent=5 // pred_fallthru
        _
      %p382 = scmp.le.s32.totalorder 1, %s23
      %p383 = scmp.lt.s32.totalorder %s23, 5
      %p384 = pnand %p382, %p383
      %p385 = pneg %p384
      // Predicated region
      $region57: #{rgmm_forward.1} parent=5 // pred_check
        _
      $region58: #{rgmm_forward.1} parent=5 // pred_check_branch
        %387 = sbr.rel (%p384) target = $region60
      $region59: #{rgmm_forward.1} parent=5 // pred_region
        %s388 = ssub.s32 %s23, 1
        %s389 = sand.u32 %s62, 1
        %s390 = scalar_lea.sflag [#allocation4], %s389
        %s391 = sand.u32 %s62, 1
        %s392 = smul.addr %s391, 1536
        %s393 = scalar_lea.vmem [#allocation3], %s392
        // Predicated region
        $region61: #{rgmm_forward.1} parent=59 // pred_check
          %p394 = pneg %p75
        $region62: #{rgmm_forward.1} parent=59 // pred_check_branch
          %396 = sbr.rel (%p394) target = $region64
        $region63: #{rgmm_forward.1} parent=59 // pred_region
          %397 = dma.done %s390, 24576
        $region64: #{rgmm_forward.1} parent=59 // pred_fallthru
          _
        // Predicated region
        $region65: #{rgmm_forward.1} parent=59 // pred_check
          %p398 = pneg %p117
        $region66: #{rgmm_forward.1} parent=59 // pred_check_branch
          %400 = sbr.rel (%p398) target = $region68
        $region67: #{rgmm_forward.1} parent=59 // pred_region
          %401 = dma.done [#allocation7], 36864
        $region68: #{rgmm_forward.1} parent=59 // pred_fallthru
          _
        // Predicated region
        $region69: #{rgmm_forward.1} parent=59 // pred_check
          %p402 = pneg %p138
        $region70: #{rgmm_forward.1} parent=59 // pred_check_branch
          %404 = sbr.rel (%p402) target = $region72
        $region71: #{rgmm_forward.1} parent=59 // pred_region
          %405 = dma.done [#allocation7], 96
        $region72: #{rgmm_forward.1} parent=59 // pred_fallthru
          _
        // Predicated region
        $region73: #{rgmm_forward.1} parent=59 // pred_check
          %p406 = pneg %p159
        $region74: #{rgmm_forward.1} parent=59 // pred_check_branch
          %408 = sbr.rel (%p406) target = $region76
        $region75: #{rgmm_forward.1} parent=59 // pred_region
          %409 = dma.done [#allocation10], 36864
        $region76: #{rgmm_forward.1} parent=59 // pred_fallthru
          _
        // Predicated region
        $region77: #{rgmm_forward.1} parent=59 // pred_check
          %p410 = pneg %p201
        $region78: #{rgmm_forward.1} parent=59 // pred_check_branch
          %412 = sbr.rel (%p410) target = $region80
        $region79: #{rgmm_forward.1} parent=59 // pred_region
          %413 = dma.done [#allocation10], 16
        $region80: #{rgmm_forward.1} parent=59 // pred_fallthru
          _
        // Predicated region
        $region81: #{rgmm_forward.1} parent=59 // pred_check
          %p414 = pneg %p243
        $region82: #{rgmm_forward.1} parent=59 // pred_check_branch
          %416 = sbr.rel (%p414) target = $region84
        $region83: #{rgmm_forward.1} parent=59 // pred_region
          %417 = dma.done [#allocation13], 16
        $region84: #{rgmm_forward.1} parent=59 // pred_fallthru
          _
        %s418 = smul.u32 4, %s28
        %p419 = scmp.lt.s32.totalorder %s418, 15
        %s420 = scalar_select %p419, %s418, 15
        %s421 = smul.addr %s420, 8
        %s422 = scalar_lea.vmem %s0, %s421
        %p423 = pneg %p49
        %p424 = pneg %p46
        %s425 = sand.u32 %s62, 1
        %s426 = scalar_lea.sflag [#allocation4], %s425
        %s427 = sand.u32 %s62, 1
        %s428 = smul.addr %s427, 1536
        %s429 = scalar_lea.vmem [#allocation3], %s428
        %p430 = pneg %p75
        %p431 = pneg %p72
        %p432 = pneg %p96
        %p433 = pneg %p93
        %p434 = pneg %p117
        %p435 = pneg %p114
        %p436 = pneg %p138
        %p437 = pneg %p135
        %p438 = pneg %p159
        %p439 = pneg %p156
        %p440 = pneg %p180
        %p441 = pneg %p177
        %p442 = pneg %p201
        %p443 = pneg %p198
        %p444 = pneg %p222
        %p445 = pneg %p219
        %p446 = pneg %p243
        %p447 = pneg %p240
        %p448 = pneg %p264
        %p449 = pneg %p261
        %s450 = smul.u32 4, %s28
        %p451 = scmp.lt.s32.totalorder %s450, 15
        %s452 = scalar_select %p451, %s450, 15
        %s453 = smul.addr %s452, 8
        %s454 = scalar_lea.vmem %s0, %s453
        %s455 = smul.u32 4, %s28
        %s456 = smul.u32 64, %s28
        %p458 = scmp.eq.s32.totalorder %s28, 0
        // Predicated region
        $region85: #{rgmm_forward.1} parent=59 // pred_check
          %p459 = pneg %p458
        $region86: #{rgmm_forward.1} parent=59 // pred_check_branch
          %461 = sbr.rel (%p459) target = $region88
        $region87: #{rgmm_forward.1} parent=59 // pred_region
          %462 = vst [vmem:[#allocation2] sm:$0x3f] 0.0
          %463 = vst [vmem:[#allocation2 + $0x8] sm:$0x3f] 0.0
          %464 = vst [vmem:[#allocation2 + $0x10] sm:$0x3f] 0.0
          %465 = vst [vmem:[#allocation2 + $0x18] sm:$0x3f] 0.0
          %466 = vst [vmem:[#allocation2 + $0x20] sm:$0x3f] 0.0
          %467 = vst [vmem:[#allocation2 + $0x28] sm:$0x3f] 0.0
        $region88: #{rgmm_forward.1} parent=59 // pred_fallthru
          _
        %v468 = vld [vmem:[#allocation2] sm:$0x3f]
        %v469 = vld [vmem:[#allocation2 + $0x8] sm:$0x3f]
        %v470 = vld [vmem:[#allocation2 + $0x10] sm:$0x3f]
        %v471 = vld [vmem:[#allocation2 + $0x18] sm:$0x3f]
        %v472 = vld [vmem:[#allocation2 + $0x20] sm:$0x3f]
        %v473 = vld [vmem:[#allocation2 + $0x28] sm:$0x3f]
        %v474 = vld [vmem:[%s454] sm:$0x3f]
        %v475 = vld [vmem:[%s454 + $0x8] sm:$0x3f]
        %v476 = vld [vmem:[%s454 + $0x10] sm:$0x3f]
        %v477 = vld [vmem:[%s454 + $0x18] sm:$0x3f]
        %v478 = vpack.c.bf16 %v474, %v474
        %v479 = vpack.c.bf16 %v475, %v475
        %v480 = vpack.c.bf16 %v476, %v476
        %v481 = vpack.c.bf16 %v477, %v477
        %v482 = vld [vmem:[%s393] sm:$0xff]
        %v483 = vld [vmem:[%s393 + $0x8] sm:$0xff]
        %v484 = vld [vmem:[%s393 + $0x10] sm:$0xff]
        %v485 = vld [vmem:[%s393 + $0x18] sm:$0xff]
        %v486 = vld [vmem:[%s393 + $0x20] sm:$0xff]
        %v487 = vld [vmem:[%s393 + $0x28] sm:$0xff]
        %v488 = vld [vmem:[%s393 + $0x30] sm:$0xff]
        %v489 = vld [vmem:[%s393 + $0x38] sm:$0xff]
        %v490 = vld [vmem:[%s393 + $0x40] sm:$0xff]
        %v491 = vld [vmem:[%s393 + $0x48] sm:$0xff]
        %v492 = vld [vmem:[%s393 + $0x50] sm:$0xff]
        %v493 = vld [vmem:[%s393 + $0x58] sm:$0xff]
        %v494 = vld [vmem:[%s393 + $0x60] sm:$0xff]
        %v495 = vld [vmem:[%s393 + $0x68] sm:$0xff]
        %v496 = vld [vmem:[%s393 + $0x70] sm:$0xff]
        %v497 = vld [vmem:[%s393 + $0x78] sm:$0xff]
        %v498 = vld [vmem:[%s393 + $0x80] sm:$0xff]
        %v499 = vld [vmem:[%s393 + $0x88] sm:$0xff]
        %v500 = vld [vmem:[%s393 + $0x90] sm:$0xff]
        %v501 = vld [vmem:[%s393 + $0x98] sm:$0xff]
        %v502 = vld [vmem:[%s393 + $0xa0] sm:$0xff]
        %v503 = vld [vmem:[%s393 + $0xa8] sm:$0xff]
        %v504 = vld [vmem:[%s393 + $0xb0] sm:$0xff]
        %v505 = vld [vmem:[%s393 + $0xb8] sm:$0xff]
        %v506 = vld [vmem:[%s393 + $0xc0] sm:$0xff]
        %v507 = vld [vmem:[%s393 + $0xc8] sm:$0xff]
        %v508 = vld [vmem:[%s393 + $0xd0] sm:$0xff]
        %v509 = vld [vmem:[%s393 + $0xd8] sm:$0xff]
        %v510 = vld [vmem:[%s393 + $0xe0] sm:$0xff]
        %v511 = vld [vmem:[%s393 + $0xe8] sm:$0xff]
        %v512 = vld [vmem:[%s393 + $0xf0] sm:$0xff]
        %v513 = vld [vmem:[%s393 + $0xf8] sm:$0xff]
        %v514 = vld [vmem:[%s393 + $0x100] sm:$0xff]
        %v515 = vld [vmem:[%s393 + $0x108] sm:$0xff]
        %v516 = vld [vmem:[%s393 + $0x110] sm:$0xff]
        %v517 = vld [vmem:[%s393 + $0x118] sm:$0xff]
        %v518 = vld [vmem:[%s393 + $0x120] sm:$0xff]
        %v519 = vld [vmem:[%s393 + $0x128] sm:$0xff]
        %v520 = vld [vmem:[%s393 + $0x130] sm:$0xff]
        %v521 = vld [vmem:[%s393 + $0x138] sm:$0xff]
        %v522 = vld [vmem:[%s393 + $0x140] sm:$0xff]
        %v523 = vld [vmem:[%s393 + $0x148] sm:$0xff]
        %v524 = vld [vmem:[%s393 + $0x150] sm:$0xff]
        %v525 = vld [vmem:[%s393 + $0x158] sm:$0xff]
        %v526 = vld [vmem:[%s393 + $0x160] sm:$0xff]
        %v527 = vld [vmem:[%s393 + $0x168] sm:$0xff]
        %v528 = vld [vmem:[%s393 + $0x170] sm:$0xff]
        %v529 = vld [vmem:[%s393 + $0x178] sm:$0xff]
        %v530 = vld [vmem:[%s393 + $0x180] sm:$0xff]
        %v531 = vld [vmem:[%s393 + $0x188] sm:$0xff]
        %v532 = vld [vmem:[%s393 + $0x190] sm:$0xff]
        %v533 = vld [vmem:[%s393 + $0x198] sm:$0xff]
        %v534 = vld [vmem:[%s393 + $0x1a0] sm:$0xff]
        %v535 = vld [vmem:[%s393 + $0x1a8] sm:$0xff]
        %v536 = vld [vmem:[%s393 + $0x1b0] sm:$0xff]
        %v537 = vld [vmem:[%s393 + $0x1b8] sm:$0xff]
        %v538 = vld [vmem:[%s393 + $0x1c0] sm:$0xff]
        %v539 = vld [vmem:[%s393 + $0x1c8] sm:$0xff]
        %v540 = vld [vmem:[%s393 + $0x1d0] sm:$0xff]
        %v541 = vld [vmem:[%s393 + $0x1d8] sm:$0xff]
        %v542 = vld [vmem:[%s393 + $0x1e0] sm:$0xff]
        %v543 = vld [vmem:[%s393 + $0x1e8] sm:$0xff]
        %v544 = vld [vmem:[%s393 + $0x1f0] sm:$0xff]
        %v545 = vld [vmem:[%s393 + $0x1f8] sm:$0xff]
        %v546 = vld [vmem:[%s393 + $0x200] sm:$0xff]
        %v547 = vld [vmem:[%s393 + $0x208] sm:$0xff]
        %v548 = vld [vmem:[%s393 + $0x210] sm:$0xff]
        %v549 = vld [vmem:[%s393 + $0x218] sm:$0xff]
        %v550 = vld [vmem:[%s393 + $0x220] sm:$0xff]
        %v551 = vld [vmem:[%s393 + $0x228] sm:$0xff]
        %v552 = vld [vmem:[%s393 + $0x230] sm:$0xff]
        %v553 = vld [vmem:[%s393 + $0x238] sm:$0xff]
        %v554 = vld [vmem:[%s393 + $0x240] sm:$0xff]
        %v555 = vld [vmem:[%s393 + $0x248] sm:$0xff]
        %v556 = vld [vmem:[%s393 + $0x250] sm:$0xff]
        %v557 = vld [vmem:[%s393 + $0x258] sm:$0xff]
        %v558 = vld [vmem:[%s393 + $0x260] sm:$0xff]
        %v559 = vld [vmem:[%s393 + $0x268] sm:$0xff]
        %v560 = vld [vmem:[%s393 + $0x270] sm:$0xff]
        %v561 = vld [vmem:[%s393 + $0x278] sm:$0xff]
        %v562 = vld [vmem:[%s393 + $0x280] sm:$0xff]
        %v563 = vld [vmem:[%s393 + $0x288] sm:$0xff]
        %v564 = vld [vmem:[%s393 + $0x290] sm:$0xff]
        %v565 = vld [vmem:[%s393 + $0x298] sm:$0xff]
        %v566 = vld [vmem:[%s393 + $0x2a0] sm:$0xff]
        %v567 = vld [vmem:[%s393 + $0x2a8] sm:$0xff]
        %v568 = vld [vmem:[%s393 + $0x2b0] sm:$0xff]
        %v569 = vld [vmem:[%s393 + $0x2b8] sm:$0xff]
        %v570 = vld [vmem:[%s393 + $0x2c0] sm:$0xff]
        %v571 = vld [vmem:[%s393 + $0x2c8] sm:$0xff]
        %v572 = vld [vmem:[%s393 + $0x2d0] sm:$0xff]
        %v573 = vld [vmem:[%s393 + $0x2d8] sm:$0xff]
        %v574 = vld [vmem:[%s393 + $0x2e0] sm:$0xff]
        %v575 = vld [vmem:[%s393 + $0x2e8] sm:$0xff]
        %v576 = vld [vmem:[%s393 + $0x2f0] sm:$0xff]
        %v577 = vld [vmem:[%s393 + $0x2f8] sm:$0xff]
        %v578 = vld [vmem:[%s393 + $0x300] sm:$0xff]
        %v579 = vld [vmem:[%s393 + $0x308] sm:$0xff]
        %v580 = vld [vmem:[%s393 + $0x310] sm:$0xff]
        %v581 = vld [vmem:[%s393 + $0x318] sm:$0xff]
        %v582 = vld [vmem:[%s393 + $0x320] sm:$0xff]
        %v583 = vld [vmem:[%s393 + $0x328] sm:$0xff]
        %v584 = vld [vmem:[%s393 + $0x330] sm:$0xff]
        %v585 = vld [vmem:[%s393 + $0x338] sm:$0xff]
        %v586 = vld [vmem:[%s393 + $0x340] sm:$0xff]
        %v587 = vld [vmem:[%s393 + $0x348] sm:$0xff]
        %v588 = vld [vmem:[%s393 + $0x350] sm:$0xff]
        %v589 = vld [vmem:[%s393 + $0x358] sm:$0xff]
        %v590 = vld [vmem:[%s393 + $0x360] sm:$0xff]
        %v591 = vld [vmem:[%s393 + $0x368] sm:$0xff]
        %v592 = vld [vmem:[%s393 + $0x370] sm:$0xff]
        %v593 = vld [vmem:[%s393 + $0x378] sm:$0xff]
        %v594 = vld [vmem:[%s393 + $0x380] sm:$0xff]
        %v595 = vld [vmem:[%s393 + $0x388] sm:$0xff]
        %v596 = vld [vmem:[%s393 + $0x390] sm:$0xff]
        %v597 = vld [vmem:[%s393 + $0x398] sm:$0xff]
        %v598 = vld [vmem:[%s393 + $0x3a0] sm:$0xff]
        %v599 = vld [vmem:[%s393 + $0x3a8] sm:$0xff]
        %v600 = vld [vmem:[%s393 + $0x3b0] sm:$0xff]
        %v601 = vld [vmem:[%s393 + $0x3b8] sm:$0xff]
        %v602 = vld [vmem:[%s393 + $0x3c0] sm:$0xff]
        %v603 = vld [vmem:[%s393 + $0x3c8] sm:$0xff]
        %v604 = vld [vmem:[%s393 + $0x3d0] sm:$0xff]
        %v605 = vld [vmem:[%s393 + $0x3d8] sm:$0xff]
        %v606 = vld [vmem:[%s393 + $0x3e0] sm:$0xff]
        %v607 = vld [vmem:[%s393 + $0x3e8] sm:$0xff]
        %v608 = vld [vmem:[%s393 + $0x3f0] sm:$0xff]
        %v609 = vld [vmem:[%s393 + $0x3f8] sm:$0xff]
        %v610 = vld [vmem:[%s393 + $0x400] sm:$0xff]
        %v611 = vld [vmem:[%s393 + $0x408] sm:$0xff]
        %v612 = vld [vmem:[%s393 + $0x410] sm:$0xff]
        %v613 = vld [vmem:[%s393 + $0x418] sm:$0xff]
        %v614 = vld [vmem:[%s393 + $0x420] sm:$0xff]
        %v615 = vld [vmem:[%s393 + $0x428] sm:$0xff]
        %v616 = vld [vmem:[%s393 + $0x430] sm:$0xff]
        %v617 = vld [vmem:[%s393 + $0x438] sm:$0xff]
        %v618 = vld [vmem:[%s393 + $0x440] sm:$0xff]
        %v619 = vld [vmem:[%s393 + $0x448] sm:$0xff]
        %v620 = vld [vmem:[%s393 + $0x450] sm:$0xff]
        %v621 = vld [vmem:[%s393 + $0x458] sm:$0xff]
        %v622 = vld [vmem:[%s393 + $0x460] sm:$0xff]
        %v623 = vld [vmem:[%s393 + $0x468] sm:$0xff]
        %v624 = vld [vmem:[%s393 + $0x470] sm:$0xff]
        %v625 = vld [vmem:[%s393 + $0x478] sm:$0xff]
        %v626 = vld [vmem:[%s393 + $0x480] sm:$0xff]
        %v627 = vld [vmem:[%s393 + $0x488] sm:$0xff]
        %v628 = vld [vmem:[%s393 + $0x490] sm:$0xff]
        %v629 = vld [vmem:[%s393 + $0x498] sm:$0xff]
        %v630 = vld [vmem:[%s393 + $0x4a0] sm:$0xff]
        %v631 = vld [vmem:[%s393 + $0x4a8] sm:$0xff]
        %v632 = vld [vmem:[%s393 + $0x4b0] sm:$0xff]
        %v633 = vld [vmem:[%s393 + $0x4b8] sm:$0xff]
        %v634 = vld [vmem:[%s393 + $0x4c0] sm:$0xff]
        %v635 = vld [vmem:[%s393 + $0x4c8] sm:$0xff]
        %v636 = vld [vmem:[%s393 + $0x4d0] sm:$0xff]
        %v637 = vld [vmem:[%s393 + $0x4d8] sm:$0xff]
        %v638 = vld [vmem:[%s393 + $0x4e0] sm:$0xff]
        %v639 = vld [vmem:[%s393 + $0x4e8] sm:$0xff]
        %v640 = vld [vmem:[%s393 + $0x4f0] sm:$0xff]
        %v641 = vld [vmem:[%s393 + $0x4f8] sm:$0xff]
        %v642 = vld [vmem:[%s393 + $0x500] sm:$0xff]
        %v643 = vld [vmem:[%s393 + $0x508] sm:$0xff]
        %v644 = vld [vmem:[%s393 + $0x510] sm:$0xff]
        %v645 = vld [vmem:[%s393 + $0x518] sm:$0xff]
        %v646 = vld [vmem:[%s393 + $0x520] sm:$0xff]
        %v647 = vld [vmem:[%s393 + $0x528] sm:$0xff]
        %v648 = vld [vmem:[%s393 + $0x530] sm:$0xff]
        %v649 = vld [vmem:[%s393 + $0x538] sm:$0xff]
        %v650 = vld [vmem:[%s393 + $0x540] sm:$0xff]
        %v651 = vld [vmem:[%s393 + $0x548] sm:$0xff]
        %v652 = vld [vmem:[%s393 + $0x550] sm:$0xff]
        %v653 = vld [vmem:[%s393 + $0x558] sm:$0xff]
        %v654 = vld [vmem:[%s393 + $0x560] sm:$0xff]
        %v655 = vld [vmem:[%s393 + $0x568] sm:$0xff]
        %v656 = vld [vmem:[%s393 + $0x570] sm:$0xff]
        %v657 = vld [vmem:[%s393 + $0x578] sm:$0xff]
        %v658 = vld [vmem:[%s393 + $0x580] sm:$0xff]
        %v659 = vld [vmem:[%s393 + $0x588] sm:$0xff]
        %v660 = vld [vmem:[%s393 + $0x590] sm:$0xff]
        %v661 = vld [vmem:[%s393 + $0x598] sm:$0xff]
        %v662 = vld [vmem:[%s393 + $0x5a0] sm:$0xff]
        %v663 = vld [vmem:[%s393 + $0x5a8] sm:$0xff]
        %v664 = vld [vmem:[%s393 + $0x5b0] sm:$0xff]
        %v665 = vld [vmem:[%s393 + $0x5b8] sm:$0xff]
        %v666 = vld [vmem:[%s393 + $0x5c0] sm:$0xff]
        %v667 = vld [vmem:[%s393 + $0x5c8] sm:$0xff]
        %v668 = vld [vmem:[%s393 + $0x5d0] sm:$0xff]
        %v669 = vld [vmem:[%s393 + $0x5d8] sm:$0xff]
        %v670 = vld [vmem:[%s393 + $0x5e0] sm:$0xff]
        %v671 = vld [vmem:[%s393 + $0x5e8] sm:$0xff]
        %v672 = vld [vmem:[%s393 + $0x5f0] sm:$0xff]
        %v673 = vld [vmem:[%s393 + $0x5f8] sm:$0xff]
        %v866 = vunpack.c.l.b16 %v482
        %v867 = vunpack.c.h.b16 %v482
        %v868 = vunpack.c.l.b16 %v483
        %v869 = vunpack.c.h.b16 %v483
        %v870 = vunpack.c.l.b16 %v484
        %v871 = vunpack.c.h.b16 %v484
        %v872 = vunpack.c.l.b16 %v485
        %v873 = vunpack.c.h.b16 %v485
        %v874 = vunpack.c.l.b16 %v486
        %v875 = vunpack.c.h.b16 %v486
        %v876 = vunpack.c.l.b16 %v487
        %v877 = vunpack.c.h.b16 %v487
        %v878 = vunpack.c.l.b16 %v488
        %v879 = vunpack.c.h.b16 %v488
        %v880 = vunpack.c.l.b16 %v489
        %v881 = vunpack.c.h.b16 %v489
        %v882 = vunpack.c.l.b16 %v490
        %v883 = vunpack.c.h.b16 %v490
        %v884 = vunpack.c.l.b16 %v491
        %v885 = vunpack.c.h.b16 %v491
        %v886 = vunpack.c.l.b16 %v492
        %v887 = vunpack.c.h.b16 %v492
        %v888 = vunpack.c.l.b16 %v493
        %v889 = vunpack.c.h.b16 %v493
        %v890 = vunpack.c.l.b16 %v494
        %v891 = vunpack.c.h.b16 %v494
        %v892 = vunpack.c.l.b16 %v495
        %v893 = vunpack.c.h.b16 %v495
        %v894 = vunpack.c.l.b16 %v496
        %v895 = vunpack.c.h.b16 %v496
        %v896 = vunpack.c.l.b16 %v497
        %v897 = vunpack.c.h.b16 %v497
        %v898 = vunpack.c.l.b16 %v498
        %v899 = vunpack.c.h.b16 %v498
        %v900 = vunpack.c.l.b16 %v499
        %v901 = vunpack.c.h.b16 %v499
        %v902 = vunpack.c.l.b16 %v500
        %v903 = vunpack.c.h.b16 %v500
        %v904 = vunpack.c.l.b16 %v501
        %v905 = vunpack.c.h.b16 %v501
        %v906 = vunpack.c.l.b16 %v502
        %v907 = vunpack.c.h.b16 %v502
        %v908 = vunpack.c.l.b16 %v503
        %v909 = vunpack.c.h.b16 %v503
        %v910 = vunpack.c.l.b16 %v504
        %v911 = vunpack.c.h.b16 %v504
        %v912 = vunpack.c.l.b16 %v505
        %v913 = vunpack.c.h.b16 %v505
        %v914 = vunpack.c.l.b16 %v506
        %v915 = vunpack.c.h.b16 %v506
        %v916 = vunpack.c.l.b16 %v507
        %v917 = vunpack.c.h.b16 %v507
        %v918 = vunpack.c.l.b16 %v508
        %v919 = vunpack.c.h.b16 %v508
        %v920 = vunpack.c.l.b16 %v509
        %v921 = vunpack.c.h.b16 %v509
        %v922 = vunpack.c.l.b16 %v510
        %v923 = vunpack.c.h.b16 %v510
        %v924 = vunpack.c.l.b16 %v511
        %v925 = vunpack.c.h.b16 %v511
        %v926 = vunpack.c.l.b16 %v512
        %v927 = vunpack.c.h.b16 %v512
        %v928 = vunpack.c.l.b16 %v513
        %v929 = vunpack.c.h.b16 %v513
        %v930 = vunpack.c.l.b16 %v514
        %v931 = vunpack.c.h.b16 %v514
        %v932 = vunpack.c.l.b16 %v515
        %v933 = vunpack.c.h.b16 %v515
        %v934 = vunpack.c.l.b16 %v516
        %v935 = vunpack.c.h.b16 %v516
        %v936 = vunpack.c.l.b16 %v517
        %v937 = vunpack.c.h.b16 %v517
        %v938 = vunpack.c.l.b16 %v518
        %v939 = vunpack.c.h.b16 %v518
        %v940 = vunpack.c.l.b16 %v519
        %v941 = vunpack.c.h.b16 %v519
        %v942 = vunpack.c.l.b16 %v520
        %v943 = vunpack.c.h.b16 %v520
        %v944 = vunpack.c.l.b16 %v521
        %v945 = vunpack.c.h.b16 %v521
        %v946 = vunpack.c.l.b16 %v522
        %v947 = vunpack.c.h.b16 %v522
        %v948 = vunpack.c.l.b16 %v523
        %v949 = vunpack.c.h.b16 %v523
        %v950 = vunpack.c.l.b16 %v524
        %v951 = vunpack.c.h.b16 %v524
        %v952 = vunpack.c.l.b16 %v525
        %v953 = vunpack.c.h.b16 %v525
        %v954 = vunpack.c.l.b16 %v526
        %v955 = vunpack.c.h.b16 %v526
        %v956 = vunpack.c.l.b16 %v527
        %v957 = vunpack.c.h.b16 %v527
        %v958 = vunpack.c.l.b16 %v528
        %v959 = vunpack.c.h.b16 %v528
        %v960 = vunpack.c.l.b16 %v529
        %v961 = vunpack.c.h.b16 %v529
        %v962 = vunpack.c.l.b16 %v530
        %v963 = vunpack.c.h.b16 %v530
        %v964 = vunpack.c.l.b16 %v531
        %v965 = vunpack.c.h.b16 %v531
        %v966 = vunpack.c.l.b16 %v532
        %v967 = vunpack.c.h.b16 %v532
        %v968 = vunpack.c.l.b16 %v533
        %v969 = vunpack.c.h.b16 %v533
        %v970 = vunpack.c.l.b16 %v534
        %v971 = vunpack.c.h.b16 %v534
        %v972 = vunpack.c.l.b16 %v535
        %v973 = vunpack.c.h.b16 %v535
        %v974 = vunpack.c.l.b16 %v536
        %v975 = vunpack.c.h.b16 %v536
        %v976 = vunpack.c.l.b16 %v537
        %v977 = vunpack.c.h.b16 %v537
        %v978 = vunpack.c.l.b16 %v538
        %v979 = vunpack.c.h.b16 %v538
        %v980 = vunpack.c.l.b16 %v539
        %v981 = vunpack.c.h.b16 %v539
        %v982 = vunpack.c.l.b16 %v540
        %v983 = vunpack.c.h.b16 %v540
        %v984 = vunpack.c.l.b16 %v541
        %v985 = vunpack.c.h.b16 %v541
        %v986 = vunpack.c.l.b16 %v542
        %v987 = vunpack.c.h.b16 %v542
        %v988 = vunpack.c.l.b16 %v543
        %v989 = vunpack.c.h.b16 %v543
        %v990 = vunpack.c.l.b16 %v544
        %v991 = vunpack.c.h.b16 %v544
        %v992 = vunpack.c.l.b16 %v545
        %v993 = vunpack.c.h.b16 %v545
        %v994 = vunpack.c.l.b16 %v546
        %v995 = vunpack.c.h.b16 %v546
        %v996 = vunpack.c.l.b16 %v547
        %v997 = vunpack.c.h.b16 %v547
        %v998 = vunpack.c.l.b16 %v548
        %v999 = vunpack.c.h.b16 %v548
        %v1000 = vunpack.c.l.b16 %v549
        %v1001 = vunpack.c.h.b16 %v549
        %v1002 = vunpack.c.l.b16 %v550
        %v1003 = vunpack.c.h.b16 %v550
        %v1004 = vunpack.c.l.b16 %v551
        %v1005 = vunpack.c.h.b16 %v551
        %v1006 = vunpack.c.l.b16 %v552
        %v1007 = vunpack.c.h.b16 %v552
        %v1008 = vunpack.c.l.b16 %v553
        %v1009 = vunpack.c.h.b16 %v553
        %v1010 = vunpack.c.l.b16 %v554
        %v1011 = vunpack.c.h.b16 %v554
        %v1012 = vunpack.c.l.b16 %v555
        %v1013 = vunpack.c.h.b16 %v555
        %v1014 = vunpack.c.l.b16 %v556
        %v1015 = vunpack.c.h.b16 %v556
        %v1016 = vunpack.c.l.b16 %v557
        %v1017 = vunpack.c.h.b16 %v557
        %v1018 = vunpack.c.l.b16 %v558
        %v1019 = vunpack.c.h.b16 %v558
        %v1020 = vunpack.c.l.b16 %v559
        %v1021 = vunpack.c.h.b16 %v559
        %v1022 = vunpack.c.l.b16 %v560
        %v1023 = vunpack.c.h.b16 %v560
        %v1024 = vunpack.c.l.b16 %v561
        %v1025 = vunpack.c.h.b16 %v561
        %v1026 = vunpack.c.l.b16 %v562
        %v1027 = vunpack.c.h.b16 %v562
        %v1028 = vunpack.c.l.b16 %v563
        %v1029 = vunpack.c.h.b16 %v563
        %v1030 = vunpack.c.l.b16 %v564
        %v1031 = vunpack.c.h.b16 %v564
        %v1032 = vunpack.c.l.b16 %v565
        %v1033 = vunpack.c.h.b16 %v565
        %v1034 = vunpack.c.l.b16 %v566
        %v1035 = vunpack.c.h.b16 %v566
        %v1036 = vunpack.c.l.b16 %v567
        %v1037 = vunpack.c.h.b16 %v567
        %v1038 = vunpack.c.l.b16 %v568
        %v1039 = vunpack.c.h.b16 %v568
        %v1040 = vunpack.c.l.b16 %v569
        %v1041 = vunpack.c.h.b16 %v569
        %v1042 = vunpack.c.l.b16 %v570
        %v1043 = vunpack.c.h.b16 %v570
        %v1044 = vunpack.c.l.b16 %v571
        %v1045 = vunpack.c.h.b16 %v571
        %v1046 = vunpack.c.l.b16 %v572
        %v1047 = vunpack.c.h.b16 %v572
        %v1048 = vunpack.c.l.b16 %v573
        %v1049 = vunpack.c.h.b16 %v573
        %v1050 = vunpack.c.l.b16 %v574
        %v1051 = vunpack.c.h.b16 %v574
        %v1052 = vunpack.c.l.b16 %v575
        %v1053 = vunpack.c.h.b16 %v575
        %v1054 = vunpack.c.l.b16 %v576
        %v1055 = vunpack.c.h.b16 %v576
        %v1056 = vunpack.c.l.b16 %v577
        %v1057 = vunpack.c.h.b16 %v577
        %v1058 = vunpack.c.l.b16 %v578
        %v1059 = vunpack.c.h.b16 %v578
        %v1060 = vunpack.c.l.b16 %v579
        %v1061 = vunpack.c.h.b16 %v579
        %v1062 = vunpack.c.l.b16 %v580
        %v1063 = vunpack.c.h.b16 %v580
        %v1064 = vunpack.c.l.b16 %v581
        %v1065 = vunpack.c.h.b16 %v581
        %v1066 = vunpack.c.l.b16 %v582
        %v1067 = vunpack.c.h.b16 %v582
        %v1068 = vunpack.c.l.b16 %v583
        %v1069 = vunpack.c.h.b16 %v583
        %v1070 = vunpack.c.l.b16 %v584
        %v1071 = vunpack.c.h.b16 %v584
        %v1072 = vunpack.c.l.b16 %v585
        %v1073 = vunpack.c.h.b16 %v585
        %v1074 = vunpack.c.l.b16 %v586
        %v1075 = vunpack.c.h.b16 %v586
        %v1076 = vunpack.c.l.b16 %v587
        %v1077 = vunpack.c.h.b16 %v587
        %v1078 = vunpack.c.l.b16 %v588
        %v1079 = vunpack.c.h.b16 %v588
        %v1080 = vunpack.c.l.b16 %v589
        %v1081 = vunpack.c.h.b16 %v589
        %v1082 = vunpack.c.l.b16 %v590
        %v1083 = vunpack.c.h.b16 %v590
        %v1084 = vunpack.c.l.b16 %v591
        %v1085 = vunpack.c.h.b16 %v591
        %v1086 = vunpack.c.l.b16 %v592
        %v1087 = vunpack.c.h.b16 %v592
        %v1088 = vunpack.c.l.b16 %v593
        %v1089 = vunpack.c.h.b16 %v593
        %v1090 = vunpack.c.l.b16 %v594
        %v1091 = vunpack.c.h.b16 %v594
        %v1092 = vunpack.c.l.b16 %v595
        %v1093 = vunpack.c.h.b16 %v595
        %v1094 = vunpack.c.l.b16 %v596
        %v1095 = vunpack.c.h.b16 %v596
        %v1096 = vunpack.c.l.b16 %v597
        %v1097 = vunpack.c.h.b16 %v597
        %v1098 = vunpack.c.l.b16 %v598
        %v1099 = vunpack.c.h.b16 %v598
        %v1100 = vunpack.c.l.b16 %v599
        %v1101 = vunpack.c.h.b16 %v599
        %v1102 = vunpack.c.l.b16 %v600
        %v1103 = vunpack.c.h.b16 %v600
        %v1104 = vunpack.c.l.b16 %v601
        %v1105 = vunpack.c.h.b16 %v601
        %v1106 = vunpack.c.l.b16 %v602
        %v1107 = vunpack.c.h.b16 %v602
        %v1108 = vunpack.c.l.b16 %v603
        %v1109 = vunpack.c.h.b16 %v603
        %v1110 = vunpack.c.l.b16 %v604
        %v1111 = vunpack.c.h.b16 %v604
        %v1112 = vunpack.c.l.b16 %v605
        %v1113 = vunpack.c.h.b16 %v605
        %v1114 = vunpack.c.l.b16 %v606
        %v1115 = vunpack.c.h.b16 %v606
        %v1116 = vunpack.c.l.b16 %v607
        %v1117 = vunpack.c.h.b16 %v607
        %v1118 = vunpack.c.l.b16 %v608
        %v1119 = vunpack.c.h.b16 %v608
        %v1120 = vunpack.c.l.b16 %v609
        %v1121 = vunpack.c.h.b16 %v609
        %v1122 = vunpack.c.l.b16 %v610
        %v1123 = vunpack.c.h.b16 %v610
        %v1124 = vunpack.c.l.b16 %v611
        %v1125 = vunpack.c.h.b16 %v611
        %v1126 = vunpack.c.l.b16 %v612
        %v1127 = vunpack.c.h.b16 %v612
        %v1128 = vunpack.c.l.b16 %v613
        %v1129 = vunpack.c.h.b16 %v613
        %v1130 = vunpack.c.l.b16 %v614
        %v1131 = vunpack.c.h.b16 %v614
        %v1132 = vunpack.c.l.b16 %v615
        %v1133 = vunpack.c.h.b16 %v615
        %v1134 = vunpack.c.l.b16 %v616
        %v1135 = vunpack.c.h.b16 %v616
        %v1136 = vunpack.c.l.b16 %v617
        %v1137 = vunpack.c.h.b16 %v617
        %v1138 = vunpack.c.l.b16 %v618
        %v1139 = vunpack.c.h.b16 %v618
        %v1140 = vunpack.c.l.b16 %v619
        %v1141 = vunpack.c.h.b16 %v619
        %v1142 = vunpack.c.l.b16 %v620
        %v1143 = vunpack.c.h.b16 %v620
        %v1144 = vunpack.c.l.b16 %v621
        %v1145 = vunpack.c.h.b16 %v621
        %v1146 = vunpack.c.l.b16 %v622
        %v1147 = vunpack.c.h.b16 %v622
        %v1148 = vunpack.c.l.b16 %v623
        %v1149 = vunpack.c.h.b16 %v623
        %v1150 = vunpack.c.l.b16 %v624
        %v1151 = vunpack.c.h.b16 %v624
        %v1152 = vunpack.c.l.b16 %v625
        %v1153 = vunpack.c.h.b16 %v625
        %v1154 = vunpack.c.l.b16 %v626
        %v1155 = vunpack.c.h.b16 %v626
        %v1156 = vunpack.c.l.b16 %v627
        %v1157 = vunpack.c.h.b16 %v627
        %v1158 = vunpack.c.l.b16 %v628
        %v1159 = vunpack.c.h.b16 %v628
        %v1160 = vunpack.c.l.b16 %v629
        %v1161 = vunpack.c.h.b16 %v629
        %v1162 = vunpack.c.l.b16 %v630
        %v1163 = vunpack.c.h.b16 %v630
        %v1164 = vunpack.c.l.b16 %v631
        %v1165 = vunpack.c.h.b16 %v631
        %v1166 = vunpack.c.l.b16 %v632
        %v1167 = vunpack.c.h.b16 %v632
        %v1168 = vunpack.c.l.b16 %v633
        %v1169 = vunpack.c.h.b16 %v633
        %v1170 = vunpack.c.l.b16 %v634
        %v1171 = vunpack.c.h.b16 %v634
        %v1172 = vunpack.c.l.b16 %v635
        %v1173 = vunpack.c.h.b16 %v635
        %v1174 = vunpack.c.l.b16 %v636
        %v1175 = vunpack.c.h.b16 %v636
        %v1176 = vunpack.c.l.b16 %v637
        %v1177 = vunpack.c.h.b16 %v637
        %v1178 = vunpack.c.l.b16 %v638
        %v1179 = vunpack.c.h.b16 %v638
        %v1180 = vunpack.c.l.b16 %v639
        %v1181 = vunpack.c.h.b16 %v639
        %v1182 = vunpack.c.l.b16 %v640
        %v1183 = vunpack.c.h.b16 %v640
        %v1184 = vunpack.c.l.b16 %v641
        %v1185 = vunpack.c.h.b16 %v641
        %v1186 = vunpack.c.l.b16 %v642
        %v1187 = vunpack.c.h.b16 %v642
        %v1188 = vunpack.c.l.b16 %v643
        %v1189 = vunpack.c.h.b16 %v643
        %v1190 = vunpack.c.l.b16 %v644
        %v1191 = vunpack.c.h.b16 %v644
        %v1192 = vunpack.c.l.b16 %v645
        %v1193 = vunpack.c.h.b16 %v645
        %v1194 = vunpack.c.l.b16 %v646
        %v1195 = vunpack.c.h.b16 %v646
        %v1196 = vunpack.c.l.b16 %v647
        %v1197 = vunpack.c.h.b16 %v647
        %v1198 = vunpack.c.l.b16 %v648
        %v1199 = vunpack.c.h.b16 %v648
        %v1200 = vunpack.c.l.b16 %v649
        %v1201 = vunpack.c.h.b16 %v649
        %v1202 = vunpack.c.l.b16 %v650
        %v1203 = vunpack.c.h.b16 %v650
        %v1204 = vunpack.c.l.b16 %v651
        %v1205 = vunpack.c.h.b16 %v651
        %v1206 = vunpack.c.l.b16 %v652
        %v1207 = vunpack.c.h.b16 %v652
        %v1208 = vunpack.c.l.b16 %v653
        %v1209 = vunpack.c.h.b16 %v653
        %v1210 = vunpack.c.l.b16 %v654
        %v1211 = vunpack.c.h.b16 %v654
        %v1212 = vunpack.c.l.b16 %v655
        %v1213 = vunpack.c.h.b16 %v655
        %v1214 = vunpack.c.l.b16 %v656
        %v1215 = vunpack.c.h.b16 %v656
        %v1216 = vunpack.c.l.b16 %v657
        %v1217 = vunpack.c.h.b16 %v657
        %v1218 = vunpack.c.l.b16 %v658
        %v1219 = vunpack.c.h.b16 %v658
        %v1220 = vunpack.c.l.b16 %v659
        %v1221 = vunpack.c.h.b16 %v659
        %v1222 = vunpack.c.l.b16 %v660
        %v1223 = vunpack.c.h.b16 %v660
        %v1224 = vunpack.c.l.b16 %v661
        %v1225 = vunpack.c.h.b16 %v661
        %v1226 = vunpack.c.l.b16 %v662
        %v1227 = vunpack.c.h.b16 %v662
        %v1228 = vunpack.c.l.b16 %v663
        %v1229 = vunpack.c.h.b16 %v663
        %v1230 = vunpack.c.l.b16 %v664
        %v1231 = vunpack.c.h.b16 %v664
        %v1232 = vunpack.c.l.b16 %v665
        %v1233 = vunpack.c.h.b16 %v665
        %v1234 = vunpack.c.l.b16 %v666
        %v1235 = vunpack.c.h.b16 %v666
        %v1236 = vunpack.c.l.b16 %v667
        %v1237 = vunpack.c.h.b16 %v667
        %v1238 = vunpack.c.l.b16 %v668
        %v1239 = vunpack.c.h.b16 %v668
        %v1240 = vunpack.c.l.b16 %v669
        %v1241 = vunpack.c.h.b16 %v669
        %v1242 = vunpack.c.l.b16 %v670
        %v1243 = vunpack.c.h.b16 %v670
        %v1244 = vunpack.c.l.b16 %v671
        %v1245 = vunpack.c.h.b16 %v671
        %v1246 = vunpack.c.l.b16 %v672
        %v1247 = vunpack.c.h.b16 %v672
        %v1248 = vunpack.c.l.b16 %v673
        %v1249 = vunpack.c.h.b16 %v673
        %v1250 = vpack.c.b16 %v872, %v866
        %v1251 = vpack.c.b16 %v873, %v867
        %v1252 = vpack.c.b16 %v874, %v868
        %v1253 = vpack.c.b16 %v875, %v869
        %v1254 = vpack.c.b16 %v876, %v870
        %v1255 = vpack.c.b16 %v877, %v871
        %v1256 = vpack.c.b16 %v884, %v878
        %v1257 = vpack.c.b16 %v885, %v879
        %v1258 = vpack.c.b16 %v886, %v880
        %v1259 = vpack.c.b16 %v887, %v881
        %v1260 = vpack.c.b16 %v888, %v882
        %v1261 = vpack.c.b16 %v889, %v883
        %v1262 = vpack.c.b16 %v896, %v890
        %v1263 = vpack.c.b16 %v897, %v891
        %v1264 = vpack.c.b16 %v898, %v892
        %v1265 = vpack.c.b16 %v899, %v893
        %v1266 = vpack.c.b16 %v900, %v894
        %v1267 = vpack.c.b16 %v901, %v895
        %v1268 = vpack.c.b16 %v908, %v902
        %v1269 = vpack.c.b16 %v909, %v903
        %v1270 = vpack.c.b16 %v910, %v904
        %v1271 = vpack.c.b16 %v911, %v905
        %v1272 = vpack.c.b16 %v912, %v906
        %v1273 = vpack.c.b16 %v913, %v907
        %v1274 = vpack.c.b16 %v920, %v914
        %v1275 = vpack.c.b16 %v921, %v915
        %v1276 = vpack.c.b16 %v922, %v916
        %v1277 = vpack.c.b16 %v923, %v917
        %v1278 = vpack.c.b16 %v924, %v918
        %v1279 = vpack.c.b16 %v925, %v919
        %v1280 = vpack.c.b16 %v932, %v926
        %v1281 = vpack.c.b16 %v933, %v927
        %v1282 = vpack.c.b16 %v934, %v928
        %v1283 = vpack.c.b16 %v935, %v929
        %v1284 = vpack.c.b16 %v936, %v930
        %v1285 = vpack.c.b16 %v937, %v931
        %v1286 = vpack.c.b16 %v944, %v938
        %v1287 = vpack.c.b16 %v945, %v939
        %v1288 = vpack.c.b16 %v946, %v940
        %v1289 = vpack.c.b16 %v947, %v941
        %v1290 = vpack.c.b16 %v948, %v942
        %v1291 = vpack.c.b16 %v949, %v943
        %v1292 = vpack.c.b16 %v956, %v950
        %v1293 = vpack.c.b16 %v957, %v951
        %v1294 = vpack.c.b16 %v958, %v952
        %v1295 = vpack.c.b16 %v959, %v953
        %v1296 = vpack.c.b16 %v960, %v954
        %v1297 = vpack.c.b16 %v961, %v955
        %v1298 = vpack.c.b16 %v968, %v962
        %v1299 = vpack.c.b16 %v969, %v963
        %v1300 = vpack.c.b16 %v970, %v964
        %v1301 = vpack.c.b16 %v971, %v965
        %v1302 = vpack.c.b16 %v972, %v966
        %v1303 = vpack.c.b16 %v973, %v967
        %v1304 = vpack.c.b16 %v980, %v974
        %v1305 = vpack.c.b16 %v981, %v975
        %v1306 = vpack.c.b16 %v982, %v976
        %v1307 = vpack.c.b16 %v983, %v977
        %v1308 = vpack.c.b16 %v984, %v978
        %v1309 = vpack.c.b16 %v985, %v979
        %v1310 = vpack.c.b16 %v992, %v986
        %v1311 = vpack.c.b16 %v993, %v987
        %v1312 = vpack.c.b16 %v994, %v988
        %v1313 = vpack.c.b16 %v995, %v989
        %v1314 = vpack.c.b16 %v996, %v990
        %v1315 = vpack.c.b16 %v997, %v991
        %v1316 = vpack.c.b16 %v1004, %v998
        %v1317 = vpack.c.b16 %v1005, %v999
        %v1318 = vpack.c.b16 %v1006, %v1000
        %v1319 = vpack.c.b16 %v1007, %v1001
        %v1320 = vpack.c.b16 %v1008, %v1002
        %v1321 = vpack.c.b16 %v1009, %v1003
        %v1322 = vpack.c.b16 %v1016, %v1010
        %v1323 = vpack.c.b16 %v1017, %v1011
        %v1324 = vpack.c.b16 %v1018, %v1012
        %v1325 = vpack.c.b16 %v1019, %v1013
        %v1326 = vpack.c.b16 %v1020, %v1014
        %v1327 = vpack.c.b16 %v1021, %v1015
        %v1328 = vpack.c.b16 %v1028, %v1022
        %v1329 = vpack.c.b16 %v1029, %v1023
        %v1330 = vpack.c.b16 %v1030, %v1024
        %v1331 = vpack.c.b16 %v1031, %v1025
        %v1332 = vpack.c.b16 %v1032, %v1026
        %v1333 = vpack.c.b16 %v1033, %v1027
        %v1334 = vpack.c.b16 %v1040, %v1034
        %v1335 = vpack.c.b16 %v1041, %v1035
        %v1336 = vpack.c.b16 %v1042, %v1036
        %v1337 = vpack.c.b16 %v1043, %v1037
        %v1338 = vpack.c.b16 %v1044, %v1038
        %v1339 = vpack.c.b16 %v1045, %v1039
        %v1340 = vpack.c.b16 %v1052, %v1046
        %v1341 = vpack.c.b16 %v1053, %v1047
        %v1342 = vpack.c.b16 %v1054, %v1048
        %v1343 = vpack.c.b16 %v1055, %v1049
        %v1344 = vpack.c.b16 %v1056, %v1050
        %v1345 = vpack.c.b16 %v1057, %v1051
        %v1346 = vpack.c.b16 %v1064, %v1058
        %v1347 = vpack.c.b16 %v1065, %v1059
        %v1348 = vpack.c.b16 %v1066, %v1060
        %v1349 = vpack.c.b16 %v1067, %v1061
        %v1350 = vpack.c.b16 %v1068, %v1062
        %v1351 = vpack.c.b16 %v1069, %v1063
        %v1352 = vpack.c.b16 %v1076, %v1070
        %v1353 = vpack.c.b16 %v1077, %v1071
        %v1354 = vpack.c.b16 %v1078, %v1072
        %v1355 = vpack.c.b16 %v1079, %v1073
        %v1356 = vpack.c.b16 %v1080, %v1074
        %v1357 = vpack.c.b16 %v1081, %v1075
        %v1358 = vpack.c.b16 %v1088, %v1082
        %v1359 = vpack.c.b16 %v1089, %v1083
        %v1360 = vpack.c.b16 %v1090, %v1084
        %v1361 = vpack.c.b16 %v1091, %v1085
        %v1362 = vpack.c.b16 %v1092, %v1086
        %v1363 = vpack.c.b16 %v1093, %v1087
        %v1364 = vpack.c.b16 %v1100, %v1094
        %v1365 = vpack.c.b16 %v1101, %v1095
        %v1366 = vpack.c.b16 %v1102, %v1096
        %v1367 = vpack.c.b16 %v1103, %v1097
        %v1368 = vpack.c.b16 %v1104, %v1098
        %v1369 = vpack.c.b16 %v1105, %v1099
        %v1370 = vpack.c.b16 %v1112, %v1106
        %v1371 = vpack.c.b16 %v1113, %v1107
        %v1372 = vpack.c.b16 %v1114, %v1108
        %v1373 = vpack.c.b16 %v1115, %v1109
        %v1374 = vpack.c.b16 %v1116, %v1110
        %v1375 = vpack.c.b16 %v1117, %v1111
        %v1376 = vpack.c.b16 %v1124, %v1118
        %v1377 = vpack.c.b16 %v1125, %v1119
        %v1378 = vpack.c.b16 %v1126, %v1120
        %v1379 = vpack.c.b16 %v1127, %v1121
        %v1380 = vpack.c.b16 %v1128, %v1122
        %v1381 = vpack.c.b16 %v1129, %v1123
        %v1382 = vpack.c.b16 %v1136, %v1130
        %v1383 = vpack.c.b16 %v1137, %v1131
        %v1384 = vpack.c.b16 %v1138, %v1132
        %v1385 = vpack.c.b16 %v1139, %v1133
        %v1386 = vpack.c.b16 %v1140, %v1134
        %v1387 = vpack.c.b16 %v1141, %v1135
        %v1388 = vpack.c.b16 %v1148, %v1142
        %v1389 = vpack.c.b16 %v1149, %v1143
        %v1390 = vpack.c.b16 %v1150, %v1144
        %v1391 = vpack.c.b16 %v1151, %v1145
        %v1392 = vpack.c.b16 %v1152, %v1146
        %v1393 = vpack.c.b16 %v1153, %v1147
        %v1394 = vpack.c.b16 %v1160, %v1154
        %v1395 = vpack.c.b16 %v1161, %v1155
        %v1396 = vpack.c.b16 %v1162, %v1156
        %v1397 = vpack.c.b16 %v1163, %v1157
        %v1398 = vpack.c.b16 %v1164, %v1158
        %v1399 = vpack.c.b16 %v1165, %v1159
        %v1400 = vpack.c.b16 %v1172, %v1166
        %v1401 = vpack.c.b16 %v1173, %v1167
        %v1402 = vpack.c.b16 %v1174, %v1168
        %v1403 = vpack.c.b16 %v1175, %v1169
        %v1404 = vpack.c.b16 %v1176, %v1170
        %v1405 = vpack.c.b16 %v1177, %v1171
        %v1406 = vpack.c.b16 %v1184, %v1178
        %v1407 = vpack.c.b16 %v1185, %v1179
        %v1408 = vpack.c.b16 %v1186, %v1180
        %v1409 = vpack.c.b16 %v1187, %v1181
        %v1410 = vpack.c.b16 %v1188, %v1182
        %v1411 = vpack.c.b16 %v1189, %v1183
        %v1412 = vpack.c.b16 %v1196, %v1190
        %v1413 = vpack.c.b16 %v1197, %v1191
        %v1414 = vpack.c.b16 %v1198, %v1192
        %v1415 = vpack.c.b16 %v1199, %v1193
        %v1416 = vpack.c.b16 %v1200, %v1194
        %v1417 = vpack.c.b16 %v1201, %v1195
        %v1418 = vpack.c.b16 %v1208, %v1202
        %v1419 = vpack.c.b16 %v1209, %v1203
        %v1420 = vpack.c.b16 %v1210, %v1204
        %v1421 = vpack.c.b16 %v1211, %v1205
        %v1422 = vpack.c.b16 %v1212, %v1206
        %v1423 = vpack.c.b16 %v1213, %v1207
        %v1424 = vpack.c.b16 %v1220, %v1214
        %v1425 = vpack.c.b16 %v1221, %v1215
        %v1426 = vpack.c.b16 %v1222, %v1216
        %v1427 = vpack.c.b16 %v1223, %v1217
        %v1428 = vpack.c.b16 %v1224, %v1218
        %v1429 = vpack.c.b16 %v1225, %v1219
        %v1430 = vpack.c.b16 %v1232, %v1226
        %v1431 = vpack.c.b16 %v1233, %v1227
        %v1432 = vpack.c.b16 %v1234, %v1228
        %v1433 = vpack.c.b16 %v1235, %v1229
        %v1434 = vpack.c.b16 %v1236, %v1230
        %v1435 = vpack.c.b16 %v1237, %v1231
        %v1436 = vpack.c.b16 %v1244, %v1238
        %v1437 = vpack.c.b16 %v1245, %v1239
        %v1438 = vpack.c.b16 %v1246, %v1240
        %v1439 = vpack.c.b16 %v1247, %v1241
        %v1440 = vpack.c.b16 %v1248, %v1242
        %v1441 = vpack.c.b16 %v1249, %v1243
        %1634 = vmatprep.subr.bf16.mxu0 %v1251
        %1635 = vmatpush1.bf16.msra.mxu0 %v1250
        %1636 = vmatprep.subr.bf16.mxu0 %v1257
        %1637 = vmatpush1.bf16.msra.mxu0 %v1256
        %1638 = vmatprep.subr.bf16.mxu0 %v1263
        %1639 = vmatpush1.bf16.msra.mxu0 %v1262
        %1640 = vmatprep.subr.bf16.mxu0 %v1269
        %1641 = vmatpush1.bf16.msra.mxu0 %v1268
        %1642 = vmatprep.subr.bf16.mxu0 %v1275
        %1643 = vmatpush1.bf16.msra.mxu0 %v1274
        %1644 = vmatprep.subr.bf16.mxu0 %v1281
        %1645 = vmatpush1.bf16.msra.mxu0 %v1280
        %1646 = vmatprep.subr.bf16.mxu0 %v1287
        %1647 = vmatpush1.bf16.msra.mxu0 %v1286
        %1648 = vmatprep.subr.bf16.mxu0 %v1293
        %1649 = vmatpush1.bf16.msra.mxu0 %v1292
        %1650 = vmatprep.subr.bf16.mxu0 %v1299
        %1651 = vmatpush1.bf16.msra.mxu0 %v1298
        %1652 = vmatprep.subr.bf16.mxu0 %v1305
        %1653 = vmatpush1.bf16.msra.mxu0 %v1304
        %1654 = vmatprep.subr.bf16.mxu0 %v1311
        %1655 = vmatpush1.bf16.msra.mxu0 %v1310
        %1656 = vmatprep.subr.bf16.mxu0 %v1317
        %1657 = vmatpush1.bf16.msra.mxu0 %v1316
        %1658 = vmatprep.subr.bf16.mxu0 %v1323
        %1659 = vmatpush1.bf16.msra.mxu0 %v1322
        %1660 = vmatprep.subr.bf16.mxu0 %v1329
        %1661 = vmatpush1.bf16.msra.mxu0 %v1328
        %1662 = vmatprep.subr.bf16.mxu0 %v1335
        %1663 = vmatpush1.bf16.msra.mxu0 %v1334
        %1664 = vmatprep.subr.bf16.mxu0 %v1341
        %1665 = vmatpush1.bf16.msra.mxu0 %v1340
        %1666 = vmatprep.mubr.bf16.mxu0 %v479
        %1667 = vmatmul.mubr.bf16.gmra.mrb[0].mxu0 %v478
        %v1668 = vpop.f32.mrb[0].mxu0
        %v1669 = vadd.f32 0.0, %v1668
        %v1670 = vpop.f32.mrb[0].mxu0
        %v1671 = vadd.f32 0.0, %v1670
        %v1672 = vpop.f32.mrb[0].mxu0
        %v1673 = vpop.f32.mrb[0].mxu0
        %1674 = vdwg.mxu0
        %1675 = vmatprep.subr.bf16.mxu0 %v1347
        %1676 = vmatpush1.bf16.msra.mxu0 %v1346
        %1677 = vmatprep.subr.bf16.mxu0 %v1353
        %1678 = vmatpush1.bf16.msra.mxu0 %v1352
        %1679 = vmatprep.subr.bf16.mxu0 %v1359
        %1680 = vmatpush1.bf16.msra.mxu0 %v1358
        %1681 = vmatprep.subr.bf16.mxu0 %v1365
        %1682 = vmatpush1.bf16.msra.mxu0 %v1364
        %1683 = vmatprep.subr.bf16.mxu0 %v1371
        %1684 = vmatpush1.bf16.msra.mxu0 %v1370
        %1685 = vmatprep.subr.bf16.mxu0 %v1377
        %1686 = vmatpush1.bf16.msra.mxu0 %v1376
        %1687 = vmatprep.subr.bf16.mxu0 %v1383
        %1688 = vmatpush1.bf16.msra.mxu0 %v1382
        %1689 = vmatprep.subr.bf16.mxu0 %v1389
        %1690 = vmatpush1.bf16.msra.mxu0 %v1388
        %1691 = vmatprep.subr.bf16.mxu0 %v1395
        %1692 = vmatpush1.bf16.msra.mxu0 %v1394
        %1693 = vmatprep.subr.bf16.mxu0 %v1401
        %1694 = vmatpush1.bf16.msra.mxu0 %v1400
        %1695 = vmatprep.subr.bf16.mxu0 %v1407
        %1696 = vmatpush1.bf16.msra.mxu0 %v1406
        %1697 = vmatprep.subr.bf16.mxu0 %v1413
        %1698 = vmatpush1.bf16.msra.mxu0 %v1412
        %1699 = vmatprep.subr.bf16.mxu0 %v1419
        %1700 = vmatpush1.bf16.msra.mxu0 %v1418
        %1701 = vmatprep.subr.bf16.mxu0 %v1425
        %1702 = vmatpush1.bf16.msra.mxu0 %v1424
        %1703 = vmatprep.subr.bf16.mxu0 %v1431
        %1704 = vmatpush1.bf16.msra.mxu0 %v1430
        %1705 = vmatprep.subr.bf16.mxu0 %v1437
        %1706 = vmatpush1.bf16.msra.mxu0 %v1436
        %1707 = vmatprep.mubr.bf16.mxu0 %v481
        %1708 = vmatmul.mubr.bf16.gmra.mrb[0].mxu0 %v480
        %v1709 = vpop.f32.mrb[0].mxu0
        %v1710 = vadd.f32 %v1669, %v1709
        %v1711 = vpop.f32.mrb[0].mxu0
        %v1712 = vadd.f32 %v1671, %v1711
        %v1713 = vpop.f32.mrb[0].mxu0
        %v1714 = vpop.f32.mrb[0].mxu0
        %1715 = vdwg.mxu0
        %1716 = vmatprep.subr.bf16.mxu0 %v1253
        %1717 = vmatpush1.bf16.msra.mxu0 %v1252
        %1718 = vmatprep.subr.bf16.mxu0 %v1259
        %1719 = vmatpush1.bf16.msra.mxu0 %v1258
        %1720 = vmatprep.subr.bf16.mxu0 %v1265
        %1721 = vmatpush1.bf16.msra.mxu0 %v1264
        %1722 = vmatprep.subr.bf16.mxu0 %v1271
        %1723 = vmatpush1.bf16.msra.mxu0 %v1270
        %1724 = vmatprep.subr.bf16.mxu0 %v1277
        %1725 = vmatpush1.bf16.msra.mxu0 %v1276
        %1726 = vmatprep.subr.bf16.mxu0 %v1283
        %1727 = vmatpush1.bf16.msra.mxu0 %v1282
        %1728 = vmatprep.subr.bf16.mxu0 %v1289
        %1729 = vmatpush1.bf16.msra.mxu0 %v1288
        %1730 = vmatprep.subr.bf16.mxu0 %v1295
        %1731 = vmatpush1.bf16.msra.mxu0 %v1294
        %1732 = vmatprep.subr.bf16.mxu0 %v1301
        %1733 = vmatpush1.bf16.msra.mxu0 %v1300
        %1734 = vmatprep.subr.bf16.mxu0 %v1307
        %1735 = vmatpush1.bf16.msra.mxu0 %v1306
        %1736 = vmatprep.subr.bf16.mxu0 %v1313
        %1737 = vmatpush1.bf16.msra.mxu0 %v1312
        %1738 = vmatprep.subr.bf16.mxu0 %v1319
        %1739 = vmatpush1.bf16.msra.mxu0 %v1318
        %1740 = vmatprep.subr.bf16.mxu0 %v1325
        %1741 = vmatpush1.bf16.msra.mxu0 %v1324
        %1742 = vmatprep.subr.bf16.mxu0 %v1331
        %1743 = vmatpush1.bf16.msra.mxu0 %v1330
        %1744 = vmatprep.subr.bf16.mxu0 %v1337
        %1745 = vmatpush1.bf16.msra.mxu0 %v1336
        %1746 = vmatprep.subr.bf16.mxu0 %v1343
        %1747 = vmatpush1.bf16.msra.mxu0 %v1342
        %1748 = vmatprep.mubr.bf16.mxu0 %v479
        %1749 = vmatmul.mubr.bf16.gmra.mrb[0].mxu0 %v478
        %v1750 = vpop.f32.mrb[0].mxu0
        %v1751 = vadd.f32 0.0, %v1750
        %v1752 = vpop.f32.mrb[0].mxu0
        %v1753 = vadd.f32 0.0, %v1752
        %v1754 = vpop.f32.mrb[0].mxu0
        %v1755 = vpop.f32.mrb[0].mxu0
        %1756 = vdwg.mxu0
        %1757 = vmatprep.subr.bf16.mxu0 %v1349
        %1758 = vmatpush1.bf16.msra.mxu0 %v1348
        %1759 = vmatprep.subr.bf16.mxu0 %v1355
        %1760 = vmatpush1.bf16.msra.mxu0 %v1354
        %1761 = vmatprep.subr.bf16.mxu0 %v1361
        %1762 = vmatpush1.bf16.msra.mxu0 %v1360
        %1763 = vmatprep.subr.bf16.mxu0 %v1367
        %1764 = vmatpush1.bf16.msra.mxu0 %v1366
        %1765 = vmatprep.subr.bf16.mxu0 %v1373
        %1766 = vmatpush1.bf16.msra.mxu0 %v1372
        %1767 = vmatprep.subr.bf16.mxu0 %v1379
        %1768 = vmatpush1.bf16.msra.mxu0 %v1378
        %1769 = vmatprep.subr.bf16.mxu0 %v1385
        %1770 = vmatpush1.bf16.msra.mxu0 %v1384
        %1771 = vmatprep.subr.bf16.mxu0 %v1391
        %1772 = vmatpush1.bf16.msra.mxu0 %v1390
        %1773 = vmatprep.subr.bf16.mxu0 %v1397
        %1774 = vmatpush1.bf16.msra.mxu0 %v1396
        %1775 = vmatprep.subr.bf16.mxu0 %v1403
        %1776 = vmatpush1.bf16.msra.mxu0 %v1402
        %1777 = vmatprep.subr.bf16.mxu0 %v1409
        %1778 = vmatpush1.bf16.msra.mxu0 %v1408
        %1779 = vmatprep.subr.bf16.mxu0 %v1415
        %1780 = vmatpush1.bf16.msra.mxu0 %v1414
        %1781 = vmatprep.subr.bf16.mxu0 %v1421
        %1782 = vmatpush1.bf16.msra.mxu0 %v1420
        %1783 = vmatprep.subr.bf16.mxu0 %v1427
        %1784 = vmatpush1.bf16.msra.mxu0 %v1426
        %1785 = vmatprep.subr.bf16.mxu0 %v1433
        %1786 = vmatpush1.bf16.msra.mxu0 %v1432
        %1787 = vmatprep.subr.bf16.mxu0 %v1439
        %1788 = vmatpush1.bf16.msra.mxu0 %v1438
        %1789 = vmatprep.mubr.bf16.mxu0 %v481
        %1790 = vmatmul.mubr.bf16.gmra.mrb[0].mxu0 %v480
        %v1791 = vpop.f32.mrb[0].mxu0
        %v1792 = vadd.f32 %v1751, %v1791
        %v1793 = vpop.f32.mrb[0].mxu0
        %v1794 = vadd.f32 %v1753, %v1793
        %v1795 = vpop.f32.mrb[0].mxu0
        %v1796 = vpop.f32.mrb[0].mxu0
        %1797 = vdwg.mxu0
        %1798 = vmatprep.subr.bf16.mxu0 %v1255
        %1799 = vmatpush1.bf16.msra.mxu0 %v1254
        %1800 = vmatprep.subr.bf16.mxu0 %v1261
        %1801 = vmatpush1.bf16.msra.mxu0 %v1260
        %1802 = vmatprep.subr.bf16.mxu0 %v1267
        %1803 = vmatpush1.bf16.msra.mxu0 %v1266
        %1804 = vmatprep.subr.bf16.mxu0 %v1273
        %1805 = vmatpush1.bf16.msra.mxu0 %v1272
        %1806 = vmatprep.subr.bf16.mxu0 %v1279
        %1807 = vmatpush1.bf16.msra.mxu0 %v1278
        %1808 = vmatprep.subr.bf16.mxu0 %v1285
        %1809 = vmatpush1.bf16.msra.mxu0 %v1284
        %1810 = vmatprep.subr.bf16.mxu0 %v1291
        %1811 = vmatpush1.bf16.msra.mxu0 %v1290
        %1812 = vmatprep.subr.bf16.mxu0 %v1297
        %1813 = vmatpush1.bf16.msra.mxu0 %v1296
        %1814 = vmatprep.subr.bf16.mxu0 %v1303
        %1815 = vmatpush1.bf16.msra.mxu0 %v1302
        %1816 = vmatprep.subr.bf16.mxu0 %v1309
        %1817 = vmatpush1.bf16.msra.mxu0 %v1308
        %1818 = vmatprep.subr.bf16.mxu0 %v1315
        %1819 = vmatpush1.bf16.msra.mxu0 %v1314
        %1820 = vmatprep.subr.bf16.mxu0 %v1321
        %1821 = vmatpush1.bf16.msra.mxu0 %v1320
        %1822 = vmatprep.subr.bf16.mxu0 %v1327
        %1823 = vmatpush1.bf16.msra.mxu0 %v1326
        %1824 = vmatprep.subr.bf16.mxu0 %v1333
        %1825 = vmatpush1.bf16.msra.mxu0 %v1332
        %1826 = vmatprep.subr.bf16.mxu0 %v1339
        %1827 = vmatpush1.bf16.msra.mxu0 %v1338
        %1828 = vmatprep.subr.bf16.mxu0 %v1345
        %1829 = vmatpush1.bf16.msra.mxu0 %v1344
        %1830 = vmatprep.mubr.bf16.mxu0 %v479
        %1831 = vmatmul.mubr.bf16.gmra.mrb[0].mxu0 %v478
        %v1832 = vpop.f32.mrb[0].mxu0
        %v1833 = vadd.f32 0.0, %v1832
        %v1834 = vpop.f32.mrb[0].mxu0
        %v1835 = vadd.f32 0.0, %v1834
        %v1836 = vpop.f32.mrb[0].mxu0
        %v1837 = vpop.f32.mrb[0].mxu0
        %1838 = vdwg.mxu0
        %1839 = vmatprep.subr.bf16.mxu0 %v1351
        %1840 = vmatpush1.bf16.msra.mxu0 %v1350
        %1841 = vmatprep.subr.bf16.mxu0 %v1357
        %1842 = vmatpush1.bf16.msra.mxu0 %v1356
        %1843 = vmatprep.subr.bf16.mxu0 %v1363
        %1844 = vmatpush1.bf16.msra.mxu0 %v1362
        %1845 = vmatprep.subr.bf16.mxu0 %v1369
        %1846 = vmatpush1.bf16.msra.mxu0 %v1368
        %1847 = vmatprep.subr.bf16.mxu0 %v1375
        %1848 = vmatpush1.bf16.msra.mxu0 %v1374
        %1849 = vmatprep.subr.bf16.mxu0 %v1381
        %1850 = vmatpush1.bf16.msra.mxu0 %v1380
        %1851 = vmatprep.subr.bf16.mxu0 %v1387
        %1852 = vmatpush1.bf16.msra.mxu0 %v1386
        %1853 = vmatprep.subr.bf16.mxu0 %v1393
        %1854 = vmatpush1.bf16.msra.mxu0 %v1392
        %1855 = vmatprep.subr.bf16.mxu0 %v1399
        %1856 = vmatpush1.bf16.msra.mxu0 %v1398
        %1857 = vmatprep.subr.bf16.mxu0 %v1405
        %1858 = vmatpush1.bf16.msra.mxu0 %v1404
        %1859 = vmatprep.subr.bf16.mxu0 %v1411
        %1860 = vmatpush1.bf16.msra.mxu0 %v1410
        %1861 = vmatprep.subr.bf16.mxu0 %v1417
        %1862 = vmatpush1.bf16.msra.mxu0 %v1416
        %1863 = vmatprep.subr.bf16.mxu0 %v1423
        %1864 = vmatpush1.bf16.msra.mxu0 %v1422
        %1865 = vmatprep.subr.bf16.mxu0 %v1429
        %1866 = vmatpush1.bf16.msra.mxu0 %v1428
        %1867 = vmatprep.subr.bf16.mxu0 %v1435
        %1868 = vmatpush1.bf16.msra.mxu0 %v1434
        %1869 = vmatprep.subr.bf16.mxu0 %v1441
        %1870 = vmatpush1.bf16.msra.mxu0 %v1440
        %1871 = vmatprep.mubr.bf16.mxu0 %v481
        %1872 = vmatmul.mubr.bf16.gmra.mrb[0].mxu0 %v480
        %v1873 = vpop.f32.mrb[0].mxu0
        %v1874 = vadd.f32 %v1833, %v1873
        %v1875 = vpop.f32.mrb[0].mxu0
        %v1876 = vadd.f32 %v1835, %v1875
        %v1877 = vpop.f32.mrb[0].mxu0
        %v1878 = vpop.f32.mrb[0].mxu0
        %1879 = vdwg.mxu0
        %v1880 = vadd.f32 %v468, %v1710
        %v1881 = vadd.f32 %v469, %v1712
        %v1882 = vadd.f32 %v470, %v1792
        %v1883 = vadd.f32 %v471, %v1794
        %v1884 = vadd.f32 %v472, %v1874
        %v1885 = vadd.f32 %v473, %v1876
        %1886 = vst [vmem:[#allocation2] sm:$0x3f] %v1880
        %1887 = vst [vmem:[#allocation2 + $0x8] sm:$0x3f] %v1881
        %1888 = vst [vmem:[#allocation2 + $0x10] sm:$0x3f] %v1882
        %1889 = vst [vmem:[#allocation2 + $0x18] sm:$0x3f] %v1883
        %1890 = vst [vmem:[#allocation2 + $0x20] sm:$0x3f] %v1884
        %1891 = vst [vmem:[#allocation2 + $0x28] sm:$0x3f] %v1885
        %p1892 = scmp.eq.s32.totalorder %s28, 3
        // Predicated region
        $region89: #{rgmm_forward.1} parent=59 // pred_check
          %p1893 = pneg %p1892
        $region90: #{rgmm_forward.1} parent=59 // pred_check_branch
          %1895 = sbr.rel (%p1893) target = $region92
        $region91: #{rgmm_forward.1} parent=59 // pred_region
          %v1896 = vld [vmem:[#allocation2] sm:$0x3f]
          %v1897 = vld [vmem:[#allocation2 + $0x8] sm:$0x3f]
          %v1898 = vld [vmem:[#allocation2 + $0x10] sm:$0x3f]
          %v1899 = vld [vmem:[#allocation2 + $0x18] sm:$0x3f]
          %v1900 = vld [vmem:[#allocation2 + $0x20] sm:$0x3f]
          %v1901 = vld [vmem:[#allocation2 + $0x28] sm:$0x3f]
          %v1902 = vld [vmem:[#allocation6] sm:$0xff]
          %v1903 = vld [vmem:[#allocation6 + $0x8] sm:$0xff]
          %v1904 = vld [vmem:[#allocation6 + $0x10] sm:$0xff]
          %v1905 = vld [vmem:[#allocation6 + $0x18] sm:$0xff]
          %v1906 = vld [vmem:[#allocation6 + $0x20] sm:$0xff]
          %v1907 = vld [vmem:[#allocation6 + $0x28] sm:$0xff]
          %v1908 = vld [vmem:[#allocation6 + $0x30] sm:$0xff]
          %v1909 = vld [vmem:[#allocation6 + $0x38] sm:$0xff]
          %v1910 = vld [vmem:[#allocation6 + $0x40] sm:$0xff]
          %v1911 = vld [vmem:[#allocation6 + $0x48] sm:$0xff]
          %v1912 = vld [vmem:[#allocation6 + $0x50] sm:$0xff]
          %v1913 = vld [vmem:[#allocation6 + $0x58] sm:$0xff]
          %v1914 = vld [vmem:[#allocation6 + $0x60] sm:$0xff]
          %v1915 = vld [vmem:[#allocation6 + $0x68] sm:$0xff]
          %v1916 = vld [vmem:[#allocation6 + $0x70] sm:$0xff]
          %v1917 = vld [vmem:[#allocation6 + $0x78] sm:$0xff]
          %v1918 = vld [vmem:[#allocation6 + $0x80] sm:$0xff]
          %v1919 = vld [vmem:[#allocation6 + $0x88] sm:$0xff]
          %v1920 = vld [vmem:[#allocation6 + $0x90] sm:$0xff]
          %v1921 = vld [vmem:[#allocation6 + $0x98] sm:$0xff]
          %v1922 = vld [vmem:[#allocation6 + $0xa0] sm:$0xff]
          %v1923 = vld [vmem:[#allocation6 + $0xa8] sm:$0xff]
          %v1924 = vld [vmem:[#allocation6 + $0xb0] sm:$0xff]
          %v1925 = vld [vmem:[#allocation6 + $0xb8] sm:$0xff]
          %v1926 = vld [vmem:[#allocation6 + $0xc0] sm:$0xff]
          %v1927 = vld [vmem:[#allocation6 + $0xc8] sm:$0xff]
          %v1928 = vld [vmem:[#allocation6 + $0xd0] sm:$0xff]
          %v1929 = vld [vmem:[#allocation6 + $0xd8] sm:$0xff]
          %v1930 = vld [vmem:[#allocation6 + $0xe0] sm:$0xff]
          %v1931 = vld [vmem:[#allocation6 + $0xe8] sm:$0xff]
          %v1932 = vld [vmem:[#allocation6 + $0xf0] sm:$0xff]
          %v1933 = vld [vmem:[#allocation6 + $0xf8] sm:$0xff]
          %v1934 = vld [vmem:[#allocation6 + $0x100] sm:$0xff]
          %v1935 = vld [vmem:[#allocation6 + $0x108] sm:$0xff]
          %v1936 = vld [vmem:[#allocation6 + $0x110] sm:$0xff]
          %v1937 = vld [vmem:[#allocation6 + $0x118] sm:$0xff]
          %v1938 = vld [vmem:[#allocation6 + $0x120] sm:$0xff]
          %v1939 = vld [vmem:[#allocation6 + $0x128] sm:$0xff]
          %v1940 = vld [vmem:[#allocation6 + $0x130] sm:$0xff]
          %v1941 = vld [vmem:[#allocation6 + $0x138] sm:$0xff]
          %v1942 = vld [vmem:[#allocation6 + $0x140] sm:$0xff]
          %v1943 = vld [vmem:[#allocation6 + $0x148] sm:$0xff]
          %v1944 = vld [vmem:[#allocation6 + $0x150] sm:$0xff]
          %v1945 = vld [vmem:[#allocation6 + $0x158] sm:$0xff]
          %v1946 = vld [vmem:[#allocation6 + $0x160] sm:$0xff]
          %v1947 = vld [vmem:[#allocation6 + $0x168] sm:$0xff]
          %v1948 = vld [vmem:[#allocation6 + $0x170] sm:$0xff]
          %v1949 = vld [vmem:[#allocation6 + $0x178] sm:$0xff]
          %v1950 = vld [vmem:[#allocation6 + $0x180] sm:$0xff]
          %v1951 = vld [vmem:[#allocation6 + $0x188] sm:$0xff]
          %v1952 = vld [vmem:[#allocation6 + $0x190] sm:$0xff]
          %v1953 = vld [vmem:[#allocation6 + $0x198] sm:$0xff]
          %v1954 = vld [vmem:[#allocation6 + $0x1a0] sm:$0xff]
          %v1955 = vld [vmem:[#allocation6 + $0x1a8] sm:$0xff]
          %v1956 = vld [vmem:[#allocation6 + $0x1b0] sm:$0xff]
          %v1957 = vld [vmem:[#allocation6 + $0x1b8] sm:$0xff]
          %v1958 = vld [vmem:[#allocation6 + $0x1c0] sm:$0xff]
          %v1959 = vld [vmem:[#allocation6 + $0x1c8] sm:$0xff]
          %v1960 = vld [vmem:[#allocation6 + $0x1d0] sm:$0xff]
          %v1961 = vld [vmem:[#allocation6 + $0x1d8] sm:$0xff]
          %v1962 = vld [vmem:[#allocation6 + $0x1e0] sm:$0xff]
          %v1963 = vld [vmem:[#allocation6 + $0x1e8] sm:$0xff]
          %v1964 = vld [vmem:[#allocation6 + $0x1f0] sm:$0xff]
          %v1965 = vld [vmem:[#allocation6 + $0x1f8] sm:$0xff]
          %v1966 = vld [vmem:[#allocation6 + $0x200] sm:$0xff]
          %v1967 = vld [vmem:[#allocation6 + $0x208] sm:$0xff]
          %v1968 = vld [vmem:[#allocation6 + $0x210] sm:$0xff]
          %v1969 = vld [vmem:[#allocation6 + $0x218] sm:$0xff]
          %v1970 = vld [vmem:[#allocation6 + $0x220] sm:$0xff]
          %v1971 = vld [vmem:[#allocation6 + $0x228] sm:$0xff]
          %v1972 = vld [vmem:[#allocation6 + $0x230] sm:$0xff]
          %v1973 = vld [vmem:[#allocation6 + $0x238] sm:$0xff]
          %v1974 = vld [vmem:[#allocation6 + $0x240] sm:$0xff]
          %v1975 = vld [vmem:[#allocation6 + $0x248] sm:$0xff]
          %v1976 = vld [vmem:[#allocation6 + $0x250] sm:$0xff]
          %v1977 = vld [vmem:[#allocation6 + $0x258] sm:$0xff]
          %v1978 = vld [vmem:[#allocation6 + $0x260] sm:$0xff]
          %v1979 = vld [vmem:[#allocation6 + $0x268] sm:$0xff]
          %v1980 = vld [vmem:[#allocation6 + $0x270] sm:$0xff]
          %v1981 = vld [vmem:[#allocation6 + $0x278] sm:$0xff]
          %v1982 = vld [vmem:[#allocation6 + $0x280] sm:$0xff]
          %v1983 = vld [vmem:[#allocation6 + $0x288] sm:$0xff]
          %v1984 = vld [vmem:[#allocation6 + $0x290] sm:$0xff]
          %v1985 = vld [vmem:[#allocation6 + $0x298] sm:$0xff]
          %v1986 = vld [vmem:[#allocation6 + $0x2a0] sm:$0xff]
          %v1987 = vld [vmem:[#allocation6 + $0x2a8] sm:$0xff]
          %v1988 = vld [vmem:[#allocation6 + $0x2b0] sm:$0xff]
          %v1989 = vld [vmem:[#allocation6 + $0x2b8] sm:$0xff]
          %v1990 = vld [vmem:[#allocation6 + $0x2c0] sm:$0xff]
          %v1991 = vld [vmem:[#allocation6 + $0x2c8] sm:$0xff]
          %v1992 = vld [vmem:[#allocation6 + $0x2d0] sm:$0xff]
          %v1993 = vld [vmem:[#allocation6 + $0x2d8] sm:$0xff]
          %v1994 = vld [vmem:[#allocation6 + $0x2e0] sm:$0xff]
          %v1995 = vld [vmem:[#allocation6 + $0x2e8] sm:$0xff]
          %v1996 = vld [vmem:[#allocation6 + $0x2f0] sm:$0xff]
          %v1997 = vld [vmem:[#allocation6 + $0x2f8] sm:$0xff]
          %v1998 = vld [vmem:[#allocation6 + $0x300] sm:$0xff]
          %v1999 = vld [vmem:[#allocation6 + $0x308] sm:$0xff]
          %v2000 = vld [vmem:[#allocation6 + $0x310] sm:$0xff]
          %v2001 = vld [vmem:[#allocation6 + $0x318] sm:$0xff]
          %v2002 = vld [vmem:[#allocation6 + $0x320] sm:$0xff]
          %v2003 = vld [vmem:[#allocation6 + $0x328] sm:$0xff]
          %v2004 = vld [vmem:[#allocation6 + $0x330] sm:$0xff]
          %v2005 = vld [vmem:[#allocation6 + $0x338] sm:$0xff]
          %v2006 = vld [vmem:[#allocation6 + $0x340] sm:$0xff]
          %v2007 = vld [vmem:[#allocation6 + $0x348] sm:$0xff]
          %v2008 = vld [vmem:[#allocation6 + $0x350] sm:$0xff]
          %v2009 = vld [vmem:[#allocation6 + $0x358] sm:$0xff]
          %v2010 = vld [vmem:[#allocation6 + $0x360] sm:$0xff]
          %v2011 = vld [vmem:[#allocation6 + $0x368] sm:$0xff]
          %v2012 = vld [vmem:[#allocation6 + $0x370] sm:$0xff]
          %v2013 = vld [vmem:[#allocation6 + $0x378] sm:$0xff]
          %v2014 = vld [vmem:[#allocation6 + $0x380] sm:$0xff]
          %v2015 = vld [vmem:[#allocation6 + $0x388] sm:$0xff]
          %v2016 = vld [vmem:[#allocation6 + $0x390] sm:$0xff]
          %v2017 = vld [vmem:[#allocation6 + $0x398] sm:$0xff]
          %v2018 = vld [vmem:[#allocation6 + $0x3a0] sm:$0xff]
          %v2019 = vld [vmem:[#allocation6 + $0x3a8] sm:$0xff]
          %v2020 = vld [vmem:[#allocation6 + $0x3b0] sm:$0xff]
          %v2021 = vld [vmem:[#allocation6 + $0x3b8] sm:$0xff]
          %v2022 = vld [vmem:[#allocation6 + $0x3c0] sm:$0xff]
          %v2023 = vld [vmem:[#allocation6 + $0x3c8] sm:$0xff]
          %v2024 = vld [vmem:[#allocation6 + $0x3d0] sm:$0xff]
          %v2025 = vld [vmem:[#allocation6 + $0x3d8] sm:$0xff]
          %v2026 = vld [vmem:[#allocation6 + $0x3e0] sm:$0xff]
          %v2027 = vld [vmem:[#allocation6 + $0x3e8] sm:$0xff]
          %v2028 = vld [vmem:[#allocation6 + $0x3f0] sm:$0xff]
          %v2029 = vld [vmem:[#allocation6 + $0x3f8] sm:$0xff]
          %v2030 = vld [vmem:[#allocation6 + $0x400] sm:$0xff]
          %v2031 = vld [vmem:[#allocation6 + $0x408] sm:$0xff]
          %v2032 = vld [vmem:[#allocation6 + $0x410] sm:$0xff]
          %v2033 = vld [vmem:[#allocation6 + $0x418] sm:$0xff]
          %v2034 = vld [vmem:[#allocation6 + $0x420] sm:$0xff]
          %v2035 = vld [vmem:[#allocation6 + $0x428] sm:$0xff]
          %v2036 = vld [vmem:[#allocation6 + $0x430] sm:$0xff]
          %v2037 = vld [vmem:[#allocation6 + $0x438] sm:$0xff]
          %v2038 = vld [vmem:[#allocation6 + $0x440] sm:$0xff]
          %v2039 = vld [vmem:[#allocation6 + $0x448] sm:$0xff]
          %v2040 = vld [vmem:[#allocation6 + $0x450] sm:$0xff]
          %v2041 = vld [vmem:[#allocation6 + $0x458] sm:$0xff]
          %v2042 = vld [vmem:[#allocation6 + $0x460] sm:$0xff]
          %v2043 = vld [vmem:[#allocation6 + $0x468] sm:$0xff]
          %v2044 = vld [vmem:[#allocation6 + $0x470] sm:$0xff]
          %v2045 = vld [vmem:[#allocation6 + $0x478] sm:$0xff]
          %v2046 = vld [vmem:[#allocation6 + $0x480] sm:$0xff]
          %v2047 = vld [vmem:[#allocation6 + $0x488] sm:$0xff]
          %v2048 = vld [vmem:[#allocation6 + $0x490] sm:$0xff]
          %v2049 = vld [vmem:[#allocation6 + $0x498] sm:$0xff]
          %v2050 = vld [vmem:[#allocation6 + $0x4a0] sm:$0xff]
          %v2051 = vld [vmem:[#allocation6 + $0x4a8] sm:$0xff]
          %v2052 = vld [vmem:[#allocation6 + $0x4b0] sm:$0xff]
          %v2053 = vld [vmem:[#allocation6 + $0x4b8] sm:$0xff]
          %v2054 = vld [vmem:[#allocation6 + $0x4c0] sm:$0xff]
          %v2055 = vld [vmem:[#allocation6 + $0x4c8] sm:$0xff]
          %v2056 = vld [vmem:[#allocation6 + $0x4d0] sm:$0xff]
          %v2057 = vld [vmem:[#allocation6 + $0x4d8] sm:$0xff]
          %v2058 = vld [vmem:[#allocation6 + $0x4e0] sm:$0xff]
          %v2059 = vld [vmem:[#allocation6 + $0x4e8] sm:$0xff]
          %v2060 = vld [vmem:[#allocation6 + $0x4f0] sm:$0xff]
          %v2061 = vld [vmem:[#allocation6 + $0x4f8] sm:$0xff]
          %v2062 = vld [vmem:[#allocation6 + $0x500] sm:$0xff]
          %v2063 = vld [vmem:[#allocation6 + $0x508] sm:$0xff]
          %v2064 = vld [vmem:[#allocation6 + $0x510] sm:$0xff]
          %v2065 = vld [vmem:[#allocation6 + $0x518] sm:$0xff]
          %v2066 = vld [vmem:[#allocation6 + $0x520] sm:$0xff]
          %v2067 = vld [vmem:[#allocation6 + $0x528] sm:$0xff]
          %v2068 = vld [vmem:[#allocation6 + $0x530] sm:$0xff]
          %v2069 = vld [vmem:[#allocation6 + $0x538] sm:$0xff]
          %v2070 = vld [vmem:[#allocation6 + $0x540] sm:$0xff]
          %v2071 = vld [vmem:[#allocation6 + $0x548] sm:$0xff]
          %v2072 = vld [vmem:[#allocation6 + $0x550] sm:$0xff]
          %v2073 = vld [vmem:[#allocation6 + $0x558] sm:$0xff]
          %v2074 = vld [vmem:[#allocation6 + $0x560] sm:$0xff]
          %v2075 = vld [vmem:[#allocation6 + $0x568] sm:$0xff]
          %v2076 = vld [vmem:[#allocation6 + $0x570] sm:$0xff]
          %v2077 = vld [vmem:[#allocation6 + $0x578] sm:$0xff]
          %v2078 = vld [vmem:[#allocation6 + $0x580] sm:$0xff]
          %v2079 = vld [vmem:[#allocation6 + $0x588] sm:$0xff]
          %v2080 = vld [vmem:[#allocation6 + $0x590] sm:$0xff]
          %v2081 = vld [vmem:[#allocation6 + $0x598] sm:$0xff]
          %v2082 = vld [vmem:[#allocation6 + $0x5a0] sm:$0xff]
          %v2083 = vld [vmem:[#allocation6 + $0x5a8] sm:$0xff]
          %v2084 = vld [vmem:[#allocation6 + $0x5b0] sm:$0xff]
          %v2085 = vld [vmem:[#allocation6 + $0x5b8] sm:$0xff]
          %v2086 = vld [vmem:[#allocation6 + $0x5c0] sm:$0xff]
          %v2087 = vld [vmem:[#allocation6 + $0x5c8] sm:$0xff]
          %v2088 = vld [vmem:[#allocation6 + $0x5d0] sm:$0xff]
          %v2089 = vld [vmem:[#allocation6 + $0x5d8] sm:$0xff]
          %v2090 = vld [vmem:[#allocation6 + $0x5e0] sm:$0xff]
          %v2091 = vld [vmem:[#allocation6 + $0x5e8] sm:$0xff]
          %v2092 = vld [vmem:[#allocation6 + $0x5f0] sm:$0xff]
          %v2093 = vld [vmem:[#allocation6 + $0x5f8] sm:$0xff]
          %v2094 = vld [vmem:[#allocation6 + $0x600] sm:$0xff]
          %v2095 = vld [vmem:[#allocation6 + $0x608] sm:$0xff]
          %v2096 = vld [vmem:[#allocation6 + $0x610] sm:$0xff]
          %v2097 = vld [vmem:[#allocation6 + $0x618] sm:$0xff]
          %v2098 = vld [vmem:[#allocation6 + $0x620] sm:$0xff]
          %v2099 = vld [vmem:[#allocation6 + $0x628] sm:$0xff]
          %v2100 = vld [vmem:[#allocation6 + $0x630] sm:$0xff]
          %v2101 = vld [vmem:[#allocation6 + $0x638] sm:$0xff]
          %v2102 = vld [vmem:[#allocation6 + $0x640] sm:$0xff]
          %v2103 = vld [vmem:[#allocation6 + $0x648] sm:$0xff]
          %v2104 = vld [vmem:[#allocation6 + $0x650] sm:$0xff]
          %v2105 = vld [vmem:[#allocation6 + $0x658] sm:$0xff]
          %v2106 = vld [vmem:[#allocation6 + $0x660] sm:$0xff]
          %v2107 = vld [vmem:[#allocation6 + $0x668] sm:$0xff]
          %v2108 = vld [vmem:[#allocation6 + $0x670] sm:$0xff]
          %v2109 = vld [vmem:[#allocation6 + $0x678] sm:$0xff]
          %v2110 = vld [vmem:[#allocation6 + $0x680] sm:$0xff]
          %v2111 = vld [vmem:[#allocation6 + $0x688] sm:$0xff]
          %v2112 = vld [vmem:[#allocation6 + $0x690] sm:$0xff]
          %v2113 = vld [vmem:[#allocation6 + $0x698] sm:$0xff]
          %v2114 = vld [vmem:[#allocation6 + $0x6a0] sm:$0xff]
          %v2115 = vld [vmem:[#allocation6 + $0x6a8] sm:$0xff]
          %v2116 = vld [vmem:[#allocation6 + $0x6b0] sm:$0xff]
          %v2117 = vld [vmem:[#allocation6 + $0x6b8] sm:$0xff]
          %v2118 = vld [vmem:[#allocation6 + $0x6c0] sm:$0xff]
          %v2119 = vld [vmem:[#allocation6 + $0x6c8] sm:$0xff]
          %v2120 = vld [vmem:[#allocation6 + $0x6d0] sm:$0xff]
          %v2121 = vld [vmem:[#allocation6 + $0x6d8] sm:$0xff]
          %v2122 = vld [vmem:[#allocation6 + $0x6e0] sm:$0xff]
          %v2123 = vld [vmem:[#allocation6 + $0x6e8] sm:$0xff]
          %v2124 = vld [vmem:[#allocation6 + $0x6f0] sm:$0xff]
          %v2125 = vld [vmem:[#allocation6 + $0x6f8] sm:$0xff]
          %v2126 = vld [vmem:[#allocation6 + $0x700] sm:$0xff]
          %v2127 = vld [vmem:[#allocation6 + $0x708] sm:$0xff]
          %v2128 = vld [vmem:[#allocation6 + $0x710] sm:$0xff]
          %v2129 = vld [vmem:[#allocation6 + $0x718] sm:$0xff]
          %v2130 = vld [vmem:[#allocation6 + $0x720] sm:$0xff]
          %v2131 = vld [vmem:[#allocation6 + $0x728] sm:$0xff]
          %v2132 = vld [vmem:[#allocation6 + $0x730] sm:$0xff]
          %v2133 = vld [vmem:[#allocation6 + $0x738] sm:$0xff]
          %v2134 = vld [vmem:[#allocation6 + $0x740] sm:$0xff]
          %v2135 = vld [vmem:[#allocation6 + $0x748] sm:$0xff]
          %v2136 = vld [vmem:[#allocation6 + $0x750] sm:$0xff]
          %v2137 = vld [vmem:[#allocation6 + $0x758] sm:$0xff]
          %v2138 = vld [vmem:[#allocation6 + $0x760] sm:$0xff]
          %v2139 = vld [vmem:[#allocation6 + $0x768] sm:$0xff]
          %v2140 = vld [vmem:[#allocation6 + $0x770] sm:$0xff]
          %v2141 = vld [vmem:[#allocation6 + $0x778] sm:$0xff]
          %v2142 = vld [vmem:[#allocation6 + $0x780] sm:$0xff]
          %v2143 = vld [vmem:[#allocation6 + $0x788] sm:$0xff]
          %v2144 = vld [vmem:[#allocation6 + $0x790] sm:$0xff]
          %v2145 = vld [vmem:[#allocation6 + $0x798] sm:$0xff]
          %v2146 = vld [vmem:[#allocation6 + $0x7a0] sm:$0xff]
          %v2147 = vld [vmem:[#allocation6 + $0x7a8] sm:$0xff]
          %v2148 = vld [vmem:[#allocation6 + $0x7b0] sm:$0xff]
          %v2149 = vld [vmem:[#allocation6 + $0x7b8] sm:$0xff]
          %v2150 = vld [vmem:[#allocation6 + $0x7c0] sm:$0xff]
          %v2151 = vld [vmem:[#allocation6 + $0x7c8] sm:$0xff]
          %v2152 = vld [vmem:[#allocation6 + $0x7d0] sm:$0xff]
          %v2153 = vld [vmem:[#allocation6 + $0x7d8] sm:$0xff]
          %v2154 = vld [vmem:[#allocation6 + $0x7e0] sm:$0xff]
          %v2155 = vld [vmem:[#allocation6 + $0x7e8] sm:$0xff]
          %v2156 = vld [vmem:[#allocation6 + $0x7f0] sm:$0xff]
          %v2157 = vld [vmem:[#allocation6 + $0x7f8] sm:$0xff]
          %v2158 = vld [vmem:[#allocation6 + $0x800] sm:$0xff]
          %v2159 = vld [vmem:[#allocation6 + $0x808] sm:$0xff]
          %v2160 = vld [vmem:[#allocation6 + $0x810] sm:$0xff]
          %v2161 = vld [vmem:[#allocation6 + $0x818] sm:$0xff]
          %v2162 = vld [vmem:[#allocation6 + $0x820] sm:$0xff]
          %v2163 = vld [vmem:[#allocation6 + $0x828] sm:$0xff]
          %v2164 = vld [vmem:[#allocation6 + $0x830] sm:$0xff]
          %v2165 = vld [vmem:[#allocation6 + $0x838] sm:$0xff]
          %v2166 = vld [vmem:[#allocation6 + $0x840] sm:$0xff]
          %v2167 = vld [vmem:[#allocation6 + $0x848] sm:$0xff]
          %v2168 = vld [vmem:[#allocation6 + $0x850] sm:$0xff]
          %v2169 = vld [vmem:[#allocation6 + $0x858] sm:$0xff]
          %v2170 = vld [vmem:[#allocation6 + $0x860] sm:$0xff]
          %v2171 = vld [vmem:[#allocation6 + $0x868] sm:$0xff]
          %v2172 = vld [vmem:[#allocation6 + $0x870] sm:$0xff]
          %v2173 = vld [vmem:[#allocation6 + $0x878] sm:$0xff]
          %v2174 = vld [vmem:[#allocation6 + $0x880] sm:$0xff]
          %v2175 = vld [vmem:[#allocation6 + $0x888] sm:$0xff]
          %v2176 = vld [vmem:[#allocation6 + $0x890] sm:$0xff]
          %v2177 = vld [vmem:[#allocation6 + $0x898] sm:$0xff]
          %v2178 = vld [vmem:[#allocation6 + $0x8a0] sm:$0xff]
          %v2179 = vld [vmem:[#allocation6 + $0x8a8] sm:$0xff]
          %v2180 = vld [vmem:[#allocation6 + $0x8b0] sm:$0xff]
          %v2181 = vld [vmem:[#allocation6 + $0x8b8] sm:$0xff]
          %v2182 = vld [vmem:[#allocation6 + $0x8c0] sm:$0xff]
          %v2183 = vld [vmem:[#allocation6 + $0x8c8] sm:$0xff]
          %v2184 = vld [vmem:[#allocation6 + $0x8d0] sm:$0xff]
          %v2185 = vld [vmem:[#allocation6 + $0x8d8] sm:$0xff]
          %v2186 = vld [vmem:[#allocation6 + $0x8e0] sm:$0xff]
          %v2187 = vld [vmem:[#allocation6 + $0x8e8] sm:$0xff]
          %v2188 = vld [vmem:[#allocation6 + $0x8f0] sm:$0xff]
          %v2189 = vld [vmem:[#allocation6 + $0x8f8] sm:$0xff]
          %v2190 = vunpack.c.l.bf16 %v1902
          %v2191 = vunpack.c.h.bf16 %v1902
          %v2192 = vunpack.c.l.bf16 %v1903
          %v2193 = vunpack.c.h.bf16 %v1903
          %v2194 = vunpack.c.l.bf16 %v1904
          %v2195 = vunpack.c.h.bf16 %v1904
          %v2196 = vunpack.c.l.bf16 %v1905
          %v2197 = vunpack.c.h.bf16 %v1905
          %v2198 = vunpack.c.l.bf16 %v1906
          %v2199 = vunpack.c.h.bf16 %v1906
          %v2200 = vunpack.c.l.bf16 %v1907
          %v2201 = vunpack.c.h.bf16 %v1907
          %v2202 = vunpack.c.l.bf16 %v1908
          %v2203 = vunpack.c.h.bf16 %v1908
          %v2204 = vunpack.c.l.bf16 %v1909
          %v2205 = vunpack.c.h.bf16 %v1909
          %v2206 = vunpack.c.l.bf16 %v1910
          %v2207 = vunpack.c.h.bf16 %v1910
          %v2208 = vunpack.c.l.bf16 %v1911
          %v2209 = vunpack.c.h.bf16 %v1911
          %v2210 = vunpack.c.l.bf16 %v1912
          %v2211 = vunpack.c.h.bf16 %v1912
          %v2212 = vunpack.c.l.bf16 %v1913
          %v2213 = vunpack.c.h.bf16 %v1913
          %v2214 = vunpack.c.l.bf16 %v1914
          %v2215 = vunpack.c.h.bf16 %v1914
          %v2216 = vunpack.c.l.bf16 %v1915
          %v2217 = vunpack.c.h.bf16 %v1915
          %v2218 = vunpack.c.l.bf16 %v1916
          %v2219 = vunpack.c.h.bf16 %v1916
          %v2220 = vunpack.c.l.bf16 %v1917
          %v2221 = vunpack.c.h.bf16 %v1917
          %v2222 = vunpack.c.l.bf16 %v1918
          %v2223 = vunpack.c.h.bf16 %v1918
          %v2224 = vunpack.c.l.bf16 %v1919
          %v2225 = vunpack.c.h.bf16 %v1919
          %v2226 = vunpack.c.l.bf16 %v1920
          %v2227 = vunpack.c.h.bf16 %v1920
          %v2228 = vunpack.c.l.bf16 %v1921
          %v2229 = vunpack.c.h.bf16 %v1921
          %v2230 = vunpack.c.l.bf16 %v1922
          %v2231 = vunpack.c.h.bf16 %v1922
          %v2232 = vunpack.c.l.bf16 %v1923
          %v2233 = vunpack.c.h.bf16 %v1923
          %v2234 = vunpack.c.l.bf16 %v1924
          %v2235 = vunpack.c.h.bf16 %v1924
          %v2236 = vunpack.c.l.bf16 %v1925
          %v2237 = vunpack.c.h.bf16 %v1925
          %v2238 = vunpack.c.l.bf16 %v1926
          %v2239 = vunpack.c.h.bf16 %v1926
          %v2240 = vunpack.c.l.bf16 %v1927
          %v2241 = vunpack.c.h.bf16 %v1927
          %v2242 = vunpack.c.l.bf16 %v1928
          %v2243 = vunpack.c.h.bf16 %v1928
          %v2244 = vunpack.c.l.bf16 %v1929
          %v2245 = vunpack.c.h.bf16 %v1929
          %v2246 = vunpack.c.l.bf16 %v1930
          %v2247 = vunpack.c.h.bf16 %v1930
          %v2248 = vunpack.c.l.bf16 %v1931
          %v2249 = vunpack.c.h.bf16 %v1931
          %v2250 = vunpack.c.l.bf16 %v1932
          %v2251 = vunpack.c.h.bf16 %v1932
          %v2252 = vunpack.c.l.bf16 %v1933
          %v2253 = vunpack.c.h.bf16 %v1933
          %v2254 = vunpack.c.l.bf16 %v1934
          %v2255 = vunpack.c.h.bf16 %v1934
          %v2256 = vunpack.c.l.bf16 %v1935
          %v2257 = vunpack.c.h.bf16 %v1935
          %v2258 = vunpack.c.l.bf16 %v1936
          %v2259 = vunpack.c.h.bf16 %v1936
          %v2260 = vunpack.c.l.bf16 %v1937
          %v2261 = vunpack.c.h.bf16 %v1937
          %v2262 = vunpack.c.l.bf16 %v1938
          %v2263 = vunpack.c.h.bf16 %v1938
          %v2264 = vunpack.c.l.bf16 %v1939
          %v2265 = vunpack.c.h.bf16 %v1939
          %v2266 = vunpack.c.l.bf16 %v1940
          %v2267 = vunpack.c.h.bf16 %v1940
          %v2268 = vunpack.c.l.bf16 %v1941
          %v2269 = vunpack.c.h.bf16 %v1941
          %v2270 = vunpack.c.l.bf16 %v1942
          %v2271 = vunpack.c.h.bf16 %v1942
          %v2272 = vunpack.c.l.bf16 %v1943
          %v2273 = vunpack.c.h.bf16 %v1943
          %v2274 = vunpack.c.l.bf16 %v1944
          %v2275 = vunpack.c.h.bf16 %v1944
          %v2276 = vunpack.c.l.bf16 %v1945
          %v2277 = vunpack.c.h.bf16 %v1945
          %v2278 = vunpack.c.l.bf16 %v1946
          %v2279 = vunpack.c.h.bf16 %v1946
          %v2280 = vunpack.c.l.bf16 %v1947
          %v2281 = vunpack.c.h.bf16 %v1947
          %v2282 = vunpack.c.l.bf16 %v1948
          %v2283 = vunpack.c.h.bf16 %v1948
          %v2284 = vunpack.c.l.bf16 %v1949
          %v2285 = vunpack.c.h.bf16 %v1949
          %v2286 = vunpack.c.l.bf16 %v1950
          %v2287 = vunpack.c.h.bf16 %v1950
          %v2288 = vunpack.c.l.bf16 %v1951
          %v2289 = vunpack.c.h.bf16 %v1951
          %v2290 = vunpack.c.l.bf16 %v1952
          %v2291 = vunpack.c.h.bf16 %v1952
          %v2292 = vunpack.c.l.bf16 %v1953
          %v2293 = vunpack.c.h.bf16 %v1953
          %v2294 = vunpack.c.l.bf16 %v1954
          %v2295 = vunpack.c.h.bf16 %v1954
          %v2296 = vunpack.c.l.bf16 %v1955
          %v2297 = vunpack.c.h.bf16 %v1955
          %v2298 = vunpack.c.l.bf16 %v1956
          %v2299 = vunpack.c.h.bf16 %v1956
          %v2300 = vunpack.c.l.bf16 %v1957
          %v2301 = vunpack.c.h.bf16 %v1957
          %v2302 = vunpack.c.l.bf16 %v1958
          %v2303 = vunpack.c.h.bf16 %v1958
          %v2304 = vunpack.c.l.bf16 %v1959
          %v2305 = vunpack.c.h.bf16 %v1959
          %v2306 = vunpack.c.l.bf16 %v1960
          %v2307 = vunpack.c.h.bf16 %v1960
          %v2308 = vunpack.c.l.bf16 %v1961
          %v2309 = vunpack.c.h.bf16 %v1961
          %v2310 = vunpack.c.l.bf16 %v1962
          %v2311 = vunpack.c.h.bf16 %v1962
          %v2312 = vunpack.c.l.bf16 %v1963
          %v2313 = vunpack.c.h.bf16 %v1963
          %v2314 = vunpack.c.l.bf16 %v1964
          %v2315 = vunpack.c.h.bf16 %v1964
          %v2316 = vunpack.c.l.bf16 %v1965
          %v2317 = vunpack.c.h.bf16 %v1965
          %v2318 = vunpack.c.l.bf16 %v1966
          %v2319 = vunpack.c.h.bf16 %v1966
          %v2320 = vunpack.c.l.bf16 %v1967
          %v2321 = vunpack.c.h.bf16 %v1967
          %v2322 = vunpack.c.l.bf16 %v1968
          %v2323 = vunpack.c.h.bf16 %v1968
          %v2324 = vunpack.c.l.bf16 %v1969
          %v2325 = vunpack.c.h.bf16 %v1969
          %v2326 = vunpack.c.l.bf16 %v1970
          %v2327 = vunpack.c.h.bf16 %v1970
          %v2328 = vunpack.c.l.bf16 %v1971
          %v2329 = vunpack.c.h.bf16 %v1971
          %v2330 = vunpack.c.l.bf16 %v1972
          %v2331 = vunpack.c.h.bf16 %v1972
          %v2332 = vunpack.c.l.bf16 %v1973
          %v2333 = vunpack.c.h.bf16 %v1973
          %v2334 = vunpack.c.l.bf16 %v1974
          %v2335 = vunpack.c.h.bf16 %v1974
          %v2336 = vunpack.c.l.bf16 %v1975
          %v2337 = vunpack.c.h.bf16 %v1975
          %v2338 = vunpack.c.l.bf16 %v1976
          %v2339 = vunpack.c.h.bf16 %v1976
          %v2340 = vunpack.c.l.bf16 %v1977
          %v2341 = vunpack.c.h.bf16 %v1977
          %v2342 = vunpack.c.l.bf16 %v1978
          %v2343 = vunpack.c.h.bf16 %v1978
          %v2344 = vunpack.c.l.bf16 %v1979
          %v2345 = vunpack.c.h.bf16 %v1979
          %v2346 = vunpack.c.l.bf16 %v1980
          %v2347 = vunpack.c.h.bf16 %v1980
          %v2348 = vunpack.c.l.bf16 %v1981
          %v2349 = vunpack.c.h.bf16 %v1981
          %v2350 = vunpack.c.l.bf16 %v1982
          %v2351 = vunpack.c.h.bf16 %v1982
          %v2352 = vunpack.c.l.bf16 %v1983
          %v2353 = vunpack.c.h.bf16 %v1983
          %v2354 = vunpack.c.l.bf16 %v1984
          %v2355 = vunpack.c.h.bf16 %v1984
          %v2356 = vunpack.c.l.bf16 %v1985
          %v2357 = vunpack.c.h.bf16 %v1985
          %v2358 = vunpack.c.l.bf16 %v1986
          %v2359 = vunpack.c.h.bf16 %v1986
          %v2360 = vunpack.c.l.bf16 %v1987
          %v2361 = vunpack.c.h.bf16 %v1987
          %v2362 = vunpack.c.l.bf16 %v1988
          %v2363 = vunpack.c.h.bf16 %v1988
          %v2364 = vunpack.c.l.bf16 %v1989
          %v2365 = vunpack.c.h.bf16 %v1989
          %v2366 = vunpack.c.l.bf16 %v1990
          %v2367 = vunpack.c.h.bf16 %v1990
          %v2368 = vunpack.c.l.bf16 %v1991
          %v2369 = vunpack.c.h.bf16 %v1991
          %v2370 = vunpack.c.l.bf16 %v1992
          %v2371 = vunpack.c.h.bf16 %v1992
          %v2372 = vunpack.c.l.bf16 %v1993
          %v2373 = vunpack.c.h.bf16 %v1993
          %v2374 = vunpack.c.l.bf16 %v1994
          %v2375 = vunpack.c.h.bf16 %v1994
          %v2376 = vunpack.c.l.bf16 %v1995
          %v2377 = vunpack.c.h.bf16 %v1995
          %v2378 = vunpack.c.l.bf16 %v1996
          %v2379 = vunpack.c.h.bf16 %v1996
          %v2380 = vunpack.c.l.bf16 %v1997
          %v2381 = vunpack.c.h.bf16 %v1997
          %v2382 = vunpack.c.l.bf16 %v1998
          %v2383 = vunpack.c.h.bf16 %v1998
          %v2384 = vunpack.c.l.bf16 %v1999
          %v2385 = vunpack.c.h.bf16 %v1999
          %v2386 = vunpack.c.l.bf16 %v2000
          %v2387 = vunpack.c.h.bf16 %v2000
          %v2388 = vunpack.c.l.bf16 %v2001
          %v2389 = vunpack.c.h.bf16 %v2001
          %v2390 = vunpack.c.l.bf16 %v2002
          %v2391 = vunpack.c.h.bf16 %v2002
          %v2392 = vunpack.c.l.bf16 %v2003
          %v2393 = vunpack.c.h.bf16 %v2003
          %v2394 = vunpack.c.l.bf16 %v2004
          %v2395 = vunpack.c.h.bf16 %v2004
          %v2396 = vunpack.c.l.bf16 %v2005
          %v2397 = vunpack.c.h.bf16 %v2005
          %v2398 = vunpack.c.l.bf16 %v2006
          %v2399 = vunpack.c.h.bf16 %v2006
          %v2400 = vunpack.c.l.bf16 %v2007
          %v2401 = vunpack.c.h.bf16 %v2007
          %v2402 = vunpack.c.l.bf16 %v2008
          %v2403 = vunpack.c.h.bf16 %v2008
          %v2404 = vunpack.c.l.bf16 %v2009
          %v2405 = vunpack.c.h.bf16 %v2009
          %v2406 = vunpack.c.l.bf16 %v2010
          %v2407 = vunpack.c.h.bf16 %v2010
          %v2408 = vunpack.c.l.bf16 %v2011
          %v2409 = vunpack.c.h.bf16 %v2011
          %v2410 = vunpack.c.l.bf16 %v2012
          %v2411 = vunpack.c.h.bf16 %v2012
          %v2412 = vunpack.c.l.bf16 %v2013
          %v2413 = vunpack.c.h.bf16 %v2013
          %v2414 = vunpack.c.l.bf16 %v2014
          %v2415 = vunpack.c.h.bf16 %v2014
          %v2416 = vunpack.c.l.bf16 %v2015
          %v2417 = vunpack.c.h.bf16 %v2015
          %v2418 = vunpack.c.l.bf16 %v2016
          %v2419 = vunpack.c.h.bf16 %v2016
          %v2420 = vunpack.c.l.bf16 %v2017
          %v2421 = vunpack.c.h.bf16 %v2017
          %v2422 = vunpack.c.l.bf16 %v2018
          %v2423 = vunpack.c.h.bf16 %v2018
          %v2424 = vunpack.c.l.bf16 %v2019
          %v2425 = vunpack.c.h.bf16 %v2019
          %v2426 = vunpack.c.l.bf16 %v2020
          %v2427 = vunpack.c.h.bf16 %v2020
          %v2428 = vunpack.c.l.bf16 %v2021
          %v2429 = vunpack.c.h.bf16 %v2021
          %v2430 = vunpack.c.l.bf16 %v2022
          %v2431 = vunpack.c.h.bf16 %v2022
          %v2432 = vunpack.c.l.bf16 %v2023
          %v2433 = vunpack.c.h.bf16 %v2023
          %v2434 = vunpack.c.l.bf16 %v2024
          %v2435 = vunpack.c.h.bf16 %v2024
          %v2436 = vunpack.c.l.bf16 %v2025
          %v2437 = vunpack.c.h.bf16 %v2025
          %v2438 = vunpack.c.l.bf16 %v2026
          %v2439 = vunpack.c.h.bf16 %v2026
          %v2440 = vunpack.c.l.bf16 %v2027
          %v2441 = vunpack.c.h.bf16 %v2027
          %v2442 = vunpack.c.l.bf16 %v2028
          %v2443 = vunpack.c.h.bf16 %v2028
          %v2444 = vunpack.c.l.bf16 %v2029
          %v2445 = vunpack.c.h.bf16 %v2029
          %v2446 = vunpack.c.l.bf16 %v2030
          %v2447 = vunpack.c.h.bf16 %v2030
          %v2448 = vunpack.c.l.bf16 %v2031
          %v2449 = vunpack.c.h.bf16 %v2031
          %v2450 = vunpack.c.l.bf16 %v2032
          %v2451 = vunpack.c.h.bf16 %v2032
          %v2452 = vunpack.c.l.bf16 %v2033
          %v2453 = vunpack.c.h.bf16 %v2033
          %v2454 = vunpack.c.l.bf16 %v2034
          %v2455 = vunpack.c.h.bf16 %v2034
          %v2456 = vunpack.c.l.bf16 %v2035
          %v2457 = vunpack.c.h.bf16 %v2035
          %v2458 = vunpack.c.l.bf16 %v2036
          %v2459 = vunpack.c.h.bf16 %v2036
          %v2460 = vunpack.c.l.bf16 %v2037
          %v2461 = vunpack.c.h.bf16 %v2037
          %v2462 = vunpack.c.l.bf16 %v2038
          %v2463 = vunpack.c.h.bf16 %v2038
          %v2464 = vunpack.c.l.bf16 %v2039
          %v2465 = vunpack.c.h.bf16 %v2039
          %v2466 = vunpack.c.l.bf16 %v2040
          %v2467 = vunpack.c.h.bf16 %v2040
          %v2468 = vunpack.c.l.bf16 %v2041
          %v2469 = vunpack.c.h.bf16 %v2041
          %v2470 = vunpack.c.l.bf16 %v2042
          %v2471 = vunpack.c.h.bf16 %v2042
          %v2472 = vunpack.c.l.bf16 %v2043
          %v2473 = vunpack.c.h.bf16 %v2043
          %v2474 = vunpack.c.l.bf16 %v2044
          %v2475 = vunpack.c.h.bf16 %v2044
          %v2476 = vunpack.c.l.bf16 %v2045
          %v2477 = vunpack.c.h.bf16 %v2045
          %v2478 = vunpack.c.l.bf16 %v2046
          %v2479 = vunpack.c.h.bf16 %v2046
          %v2480 = vunpack.c.l.bf16 %v2047
          %v2481 = vunpack.c.h.bf16 %v2047
          %v2482 = vunpack.c.l.bf16 %v2048
          %v2483 = vunpack.c.h.bf16 %v2048
          %v2484 = vunpack.c.l.bf16 %v2049
          %v2485 = vunpack.c.h.bf16 %v2049
          %v2486 = vunpack.c.l.bf16 %v2050
          %v2487 = vunpack.c.h.bf16 %v2050
          %v2488 = vunpack.c.l.bf16 %v2051
          %v2489 = vunpack.c.h.bf16 %v2051
          %v2490 = vunpack.c.l.bf16 %v2052
          %v2491 = vunpack.c.h.bf16 %v2052
          %v2492 = vunpack.c.l.bf16 %v2053
          %v2493 = vunpack.c.h.bf16 %v2053
          %v2494 = vunpack.c.l.bf16 %v2054
          %v2495 = vunpack.c.h.bf16 %v2054
          %v2496 = vunpack.c.l.bf16 %v2055
          %v2497 = vunpack.c.h.bf16 %v2055
          %v2498 = vunpack.c.l.bf16 %v2056
          %v2499 = vunpack.c.h.bf16 %v2056
          %v2500 = vunpack.c.l.bf16 %v2057
          %v2501 = vunpack.c.h.bf16 %v2057
          %v2502 = vunpack.c.l.bf16 %v2058
          %v2503 = vunpack.c.h.bf16 %v2058
          %v2504 = vunpack.c.l.bf16 %v2059
          %v2505 = vunpack.c.h.bf16 %v2059
          %v2506 = vunpack.c.l.bf16 %v2060
          %v2507 = vunpack.c.h.bf16 %v2060
          %v2508 = vunpack.c.l.bf16 %v2061
          %v2509 = vunpack.c.h.bf16 %v2061
          %v2510 = vunpack.c.l.bf16 %v2062
          %v2511 = vunpack.c.h.bf16 %v2062
          %v2512 = vunpack.c.l.bf16 %v2063
          %v2513 = vunpack.c.h.bf16 %v2063
          %v2514 = vunpack.c.l.bf16 %v2064
          %v2515 = vunpack.c.h.bf16 %v2064
          %v2516 = vunpack.c.l.bf16 %v2065
          %v2517 = vunpack.c.h.bf16 %v2065
          %v2518 = vunpack.c.l.bf16 %v2066
          %v2519 = vunpack.c.h.bf16 %v2066
          %v2520 = vunpack.c.l.bf16 %v2067
          %v2521 = vunpack.c.h.bf16 %v2067
          %v2522 = vunpack.c.l.bf16 %v2068
          %v2523 = vunpack.c.h.bf16 %v2068
          %v2524 = vunpack.c.l.bf16 %v2069
          %v2525 = vunpack.c.h.bf16 %v2069
          %v2526 = vunpack.c.l.bf16 %v2070
          %v2527 = vunpack.c.h.bf16 %v2070
          %v2528 = vunpack.c.l.bf16 %v2071
          %v2529 = vunpack.c.h.bf16 %v2071
          %v2530 = vunpack.c.l.bf16 %v2072
          %v2531 = vunpack.c.h.bf16 %v2072
          %v2532 = vunpack.c.l.bf16 %v2073
          %v2533 = vunpack.c.h.bf16 %v2073
          %v2534 = vunpack.c.l.bf16 %v2074
          %v2535 = vunpack.c.h.bf16 %v2074
          %v2536 = vunpack.c.l.bf16 %v2075
          %v2537 = vunpack.c.h.bf16 %v2075
          %v2538 = vunpack.c.l.bf16 %v2076
          %v2539 = vunpack.c.h.bf16 %v2076
          %v2540 = vunpack.c.l.bf16 %v2077
          %v2541 = vunpack.c.h.bf16 %v2077
          %v2542 = vunpack.c.l.bf16 %v2078
          %v2543 = vunpack.c.h.bf16 %v2078
          %v2544 = vunpack.c.l.bf16 %v2079
          %v2545 = vunpack.c.h.bf16 %v2079
          %v2546 = vunpack.c.l.bf16 %v2080
          %v2547 = vunpack.c.h.bf16 %v2080
          %v2548 = vunpack.c.l.bf16 %v2081
          %v2549 = vunpack.c.h.bf16 %v2081
          %v2550 = vunpack.c.l.bf16 %v2082
          %v2551 = vunpack.c.h.bf16 %v2082
          %v2552 = vunpack.c.l.bf16 %v2083
          %v2553 = vunpack.c.h.bf16 %v2083
          %v2554 = vunpack.c.l.bf16 %v2084
          %v2555 = vunpack.c.h.bf16 %v2084
          %v2556 = vunpack.c.l.bf16 %v2085
          %v2557 = vunpack.c.h.bf16 %v2085
          %v2558 = vunpack.c.l.bf16 %v2086
          %v2559 = vunpack.c.h.bf16 %v2086
          %v2560 = vunpack.c.l.bf16 %v2087
          %v2561 = vunpack.c.h.bf16 %v2087
          %v2562 = vunpack.c.l.bf16 %v2088
          %v2563 = vunpack.c.h.bf16 %v2088
          %v2564 = vunpack.c.l.bf16 %v2089
          %v2565 = vunpack.c.h.bf16 %v2089
          %v2566 = vunpack.c.l.bf16 %v2090
          %v2567 = vunpack.c.h.bf16 %v2090
          %v2568 = vunpack.c.l.bf16 %v2091
          %v2569 = vunpack.c.h.bf16 %v2091
          %v2570 = vunpack.c.l.bf16 %v2092
          %v2571 = vunpack.c.h.bf16 %v2092
          %v2572 = vunpack.c.l.bf16 %v2093
          %v2573 = vunpack.c.h.bf16 %v2093
          %v2574 = vunpack.c.l.bf16 %v2094
          %v2575 = vunpack.c.h.bf16 %v2094
          %v2576 = vunpack.c.l.bf16 %v2095
          %v2577 = vunpack.c.h.bf16 %v2095
          %v2578 = vunpack.c.l.bf16 %v2096
          %v2579 = vunpack.c.h.bf16 %v2096
          %v2580 = vunpack.c.l.bf16 %v2097
          %v2581 = vunpack.c.h.bf16 %v2097
          %v2582 = vunpack.c.l.bf16 %v2098
          %v2583 = vunpack.c.h.bf16 %v2098
          %v2584 = vunpack.c.l.bf16 %v2099
          %v2585 = vunpack.c.h.bf16 %v2099
          %v2586 = vunpack.c.l.bf16 %v2100
          %v2587 = vunpack.c.h.bf16 %v2100
          %v2588 = vunpack.c.l.bf16 %v2101
          %v2589 = vunpack.c.h.bf16 %v2101
          %v2590 = vunpack.c.l.bf16 %v2102
          %v2591 = vunpack.c.h.bf16 %v2102
          %v2592 = vunpack.c.l.bf16 %v2103
          %v2593 = vunpack.c.h.bf16 %v2103
          %v2594 = vunpack.c.l.bf16 %v2104
          %v2595 = vunpack.c.h.bf16 %v2104
          %v2596 = vunpack.c.l.bf16 %v2105
          %v2597 = vunpack.c.h.bf16 %v2105
          %v2598 = vunpack.c.l.bf16 %v2106
          %v2599 = vunpack.c.h.bf16 %v2106
          %v2600 = vunpack.c.l.bf16 %v2107
          %v2601 = vunpack.c.h.bf16 %v2107
          %v2602 = vunpack.c.l.bf16 %v2108
          %v2603 = vunpack.c.h.bf16 %v2108
          %v2604 = vunpack.c.l.bf16 %v2109
          %v2605 = vunpack.c.h.bf16 %v2109
          %v2606 = vunpack.c.l.bf16 %v2110
          %v2607 = vunpack.c.h.bf16 %v2110
          %v2608 = vunpack.c.l.bf16 %v2111
          %v2609 = vunpack.c.h.bf16 %v2111
          %v2610 = vunpack.c.l.bf16 %v2112
          %v2611 = vunpack.c.h.bf16 %v2112
          %v2612 = vunpack.c.l.bf16 %v2113
          %v2613 = vunpack.c.h.bf16 %v2113
          %v2614 = vunpack.c.l.bf16 %v2114
          %v2615 = vunpack.c.h.bf16 %v2114
          %v2616 = vunpack.c.l.bf16 %v2115
          %v2617 = vunpack.c.h.bf16 %v2115
          %v2618 = vunpack.c.l.bf16 %v2116
          %v2619 = vunpack.c.h.bf16 %v2116
          %v2620 = vunpack.c.l.bf16 %v2117
          %v2621 = vunpack.c.h.bf16 %v2117
          %v2622 = vunpack.c.l.bf16 %v2118
          %v2623 = vunpack.c.h.bf16 %v2118
          %v2624 = vunpack.c.l.bf16 %v2119
          %v2625 = vunpack.c.h.bf16 %v2119
          %v2626 = vunpack.c.l.bf16 %v2120
          %v2627 = vunpack.c.h.bf16 %v2120
          %v2628 = vunpack.c.l.bf16 %v2121
          %v2629 = vunpack.c.h.bf16 %v2121
          %v2630 = vunpack.c.l.bf16 %v2122
          %v2631 = vunpack.c.h.bf16 %v2122
          %v2632 = vunpack.c.l.bf16 %v2123
          %v2633 = vunpack.c.h.bf16 %v2123
          %v2634 = vunpack.c.l.bf16 %v2124
          %v2635 = vunpack.c.h.bf16 %v2124
          %v2636 = vunpack.c.l.bf16 %v2125
          %v2637 = vunpack.c.h.bf16 %v2125
          %v2638 = vunpack.c.l.bf16 %v2126
          %v2639 = vunpack.c.h.bf16 %v2126
          %v2640 = vunpack.c.l.bf16 %v2127
          %v2641 = vunpack.c.h.bf16 %v2127
          %v2642 = vunpack.c.l.bf16 %v2128
          %v2643 = vunpack.c.h.bf16 %v2128
          %v2644 = vunpack.c.l.bf16 %v2129
          %v2645 = vunpack.c.h.bf16 %v2129
          %v2646 = vunpack.c.l.bf16 %v2130
          %v2647 = vunpack.c.h.bf16 %v2130
          %v2648 = vunpack.c.l.bf16 %v2131
          %v2649 = vunpack.c.h.bf16 %v2131
          %v2650 = vunpack.c.l.bf16 %v2132
          %v2651 = vunpack.c.h.bf16 %v2132
          %v2652 = vunpack.c.l.bf16 %v2133
          %v2653 = vunpack.c.h.bf16 %v2133
          %v2654 = vunpack.c.l.bf16 %v2134
          %v2655 = vunpack.c.h.bf16 %v2134
          %v2656 = vunpack.c.l.bf16 %v2135
          %v2657 = vunpack.c.h.bf16 %v2135
          %v2658 = vunpack.c.l.bf16 %v2136
          %v2659 = vunpack.c.h.bf16 %v2136
          %v2660 = vunpack.c.l.bf16 %v2137
          %v2661 = vunpack.c.h.bf16 %v2137
          %v2662 = vunpack.c.l.bf16 %v2138
          %v2663 = vunpack.c.h.bf16 %v2138
          %v2664 = vunpack.c.l.bf16 %v2139
          %v2665 = vunpack.c.h.bf16 %v2139
          %v2666 = vunpack.c.l.bf16 %v2140
          %v2667 = vunpack.c.h.bf16 %v2140
          %v2668 = vunpack.c.l.bf16 %v2141
          %v2669 = vunpack.c.h.bf16 %v2141
          %v2670 = vunpack.c.l.bf16 %v2142
          %v2671 = vunpack.c.h.bf16 %v2142
          %v2672 = vunpack.c.l.bf16 %v2143
          %v2673 = vunpack.c.h.bf16 %v2143
          %v2674 = vunpack.c.l.bf16 %v2144
          %v2675 = vunpack.c.h.bf16 %v2144
          %v2676 = vunpack.c.l.bf16 %v2145
          %v2677 = vunpack.c.h.bf16 %v2145
          %v2678 = vunpack.c.l.bf16 %v2146
          %v2679 = vunpack.c.h.bf16 %v2146
          %v2680 = vunpack.c.l.bf16 %v2147
          %v2681 = vunpack.c.h.bf16 %v2147
          %v2682 = vunpack.c.l.bf16 %v2148
          %v2683 = vunpack.c.h.bf16 %v2148
          %v2684 = vunpack.c.l.bf16 %v2149
          %v2685 = vunpack.c.h.bf16 %v2149
          %v2686 = vunpack.c.l.bf16 %v2150
          %v2687 = vunpack.c.h.bf16 %v2150
          %v2688 = vunpack.c.l.bf16 %v2151
          %v2689 = vunpack.c.h.bf16 %v2151
          %v2690 = vunpack.c.l.bf16 %v2152
          %v2691 = vunpack.c.h.bf16 %v2152
          %v2692 = vunpack.c.l.bf16 %v2153
          %v2693 = vunpack.c.h.bf16 %v2153
          %v2694 = vunpack.c.l.bf16 %v2154
          %v2695 = vunpack.c.h.bf16 %v2154
          %v2696 = vunpack.c.l.bf16 %v2155
          %v2697 = vunpack.c.h.bf16 %v2155
          %v2698 = vunpack.c.l.bf16 %v2156
          %v2699 = vunpack.c.h.bf16 %v2156
          %v2700 = vunpack.c.l.bf16 %v2157
          %v2701 = vunpack.c.h.bf16 %v2157
          %v2702 = vunpack.c.l.bf16 %v2158
          %v2703 = vunpack.c.h.bf16 %v2158
          %v2704 = vunpack.c.l.bf16 %v2159
          %v2705 = vunpack.c.h.bf16 %v2159
          %v2706 = vunpack.c.l.bf16 %v2160
          %v2707 = vunpack.c.h.bf16 %v2160
          %v2708 = vunpack.c.l.bf16 %v2161
          %v2709 = vunpack.c.h.bf16 %v2161
          %v2710 = vunpack.c.l.bf16 %v2162
          %v2711 = vunpack.c.h.bf16 %v2162
          %v2712 = vunpack.c.l.bf16 %v2163
          %v2713 = vunpack.c.h.bf16 %v2163
          %v2714 = vunpack.c.l.bf16 %v2164
          %v2715 = vunpack.c.h.bf16 %v2164
          %v2716 = vunpack.c.l.bf16 %v2165
          %v2717 = vunpack.c.h.bf16 %v2165
          %v2718 = vunpack.c.l.bf16 %v2166
          %v2719 = vunpack.c.h.bf16 %v2166
          %v2720 = vunpack.c.l.bf16 %v2167
          %v2721 = vunpack.c.h.bf16 %v2167
          %v2722 = vunpack.c.l.bf16 %v2168
          %v2723 = vunpack.c.h.bf16 %v2168
          %v2724 = vunpack.c.l.bf16 %v2169
          %v2725 = vunpack.c.h.bf16 %v2169
          %v2726 = vunpack.c.l.bf16 %v2170
          %v2727 = vunpack.c.h.bf16 %v2170
          %v2728 = vunpack.c.l.bf16 %v2171
          %v2729 = vunpack.c.h.bf16 %v2171
          %v2730 = vunpack.c.l.bf16 %v2172
          %v2731 = vunpack.c.h.bf16 %v2172
          %v2732 = vunpack.c.l.bf16 %v2173
          %v2733 = vunpack.c.h.bf16 %v2173
          %v2734 = vunpack.c.l.bf16 %v2174
          %v2735 = vunpack.c.h.bf16 %v2174
          %v2736 = vunpack.c.l.bf16 %v2175
          %v2737 = vunpack.c.h.bf16 %v2175
          %v2738 = vunpack.c.l.bf16 %v2176
          %v2739 = vunpack.c.h.bf16 %v2176
          %v2740 = vunpack.c.l.bf16 %v2177
          %v2741 = vunpack.c.h.bf16 %v2177
          %v2742 = vunpack.c.l.bf16 %v2178
          %v2743 = vunpack.c.h.bf16 %v2178
          %v2744 = vunpack.c.l.bf16 %v2179
          %v2745 = vunpack.c.h.bf16 %v2179
          %v2746 = vunpack.c.l.bf16 %v2180
          %v2747 = vunpack.c.h.bf16 %v2180
          %v2748 = vunpack.c.l.bf16 %v2181
          %v2749 = vunpack.c.h.bf16 %v2181
          %v2750 = vunpack.c.l.bf16 %v2182
          %v2751 = vunpack.c.h.bf16 %v2182
          %v2752 = vunpack.c.l.bf16 %v2183
          %v2753 = vunpack.c.h.bf16 %v2183
          %v2754 = vunpack.c.l.bf16 %v2184
          %v2755 = vunpack.c.h.bf16 %v2184
          %v2756 = vunpack.c.l.bf16 %v2185
          %v2757 = vunpack.c.h.bf16 %v2185
          %v2758 = vunpack.c.l.bf16 %v2186
          %v2759 = vunpack.c.h.bf16 %v2186
          %v2760 = vunpack.c.l.bf16 %v2187
          %v2761 = vunpack.c.h.bf16 %v2187
          %v2762 = vunpack.c.l.bf16 %v2188
          %v2763 = vunpack.c.h.bf16 %v2188
          %v2764 = vunpack.c.l.bf16 %v2189
          %v2765 = vunpack.c.h.bf16 %v2189
          %v2766 = vld [vmem:[#allocation9] sm:$0xff]
          %v2767 = vld [vmem:[#allocation9 + $0x8] sm:$0xff]
          %v2768 = vld [vmem:[#allocation9 + $0x10] sm:$0xff]
          %v2769 = vld [vmem:[#allocation9 + $0x18] sm:$0xff]
          %v2770 = vld [vmem:[#allocation9 + $0x20] sm:$0xff]
          %v2771 = vld [vmem:[#allocation9 + $0x28] sm:$0xff]
          %v2772 = vld [vmem:[#allocation9 + $0x30] sm:$0xff]
          %v2773 = vld [vmem:[#allocation9 + $0x38] sm:$0xff]
          %v2774 = vld [vmem:[#allocation9 + $0x40] sm:$0xff]
          %v2775 = vld [vmem:[#allocation9 + $0x48] sm:$0xff]
          %v2776 = vld [vmem:[#allocation9 + $0x50] sm:$0xff]
          %v2777 = vld [vmem:[#allocation9 + $0x58] sm:$0xff]
          %v2778 = vld [vmem:[#allocation9 + $0x60] sm:$0xff]
          %v2779 = vld [vmem:[#allocation9 + $0x68] sm:$0xff]
          %v2780 = vld [vmem:[#allocation9 + $0x70] sm:$0xff]
          %v2781 = vld [vmem:[#allocation9 + $0x78] sm:$0xff]
          %v2782 = vld [vmem:[#allocation9 + $0x80] sm:$0xff]
          %v2783 = vld [vmem:[#allocation9 + $0x88] sm:$0xff]
          %v2784 = vld [vmem:[#allocation9 + $0x90] sm:$0xff]
          %v2785 = vld [vmem:[#allocation9 + $0x98] sm:$0xff]
          %v2786 = vld [vmem:[#allocation9 + $0xa0] sm:$0xff]
          %v2787 = vld [vmem:[#allocation9 + $0xa8] sm:$0xff]
          %v2788 = vld [vmem:[#allocation9 + $0xb0] sm:$0xff]
          %v2789 = vld [vmem:[#allocation9 + $0xb8] sm:$0xff]
          %v2790 = vld [vmem:[#allocation9 + $0xc0] sm:$0xff]
          %v2791 = vld [vmem:[#allocation9 + $0xc8] sm:$0xff]
          %v2792 = vld [vmem:[#allocation9 + $0xd0] sm:$0xff]
          %v2793 = vld [vmem:[#allocation9 + $0xd8] sm:$0xff]
          %v2794 = vld [vmem:[#allocation9 + $0xe0] sm:$0xff]
          %v2795 = vld [vmem:[#allocation9 + $0xe8] sm:$0xff]
          %v2796 = vld [vmem:[#allocation9 + $0xf0] sm:$0xff]
          %v2797 = vld [vmem:[#allocation9 + $0xf8] sm:$0xff]
          %v2798 = vld [vmem:[#allocation9 + $0x100] sm:$0xff]
          %v2799 = vld [vmem:[#allocation9 + $0x108] sm:$0xff]
          %v2800 = vld [vmem:[#allocation9 + $0x110] sm:$0xff]
          %v2801 = vld [vmem:[#allocation9 + $0x118] sm:$0xff]
          %v2802 = vld [vmem:[#allocation9 + $0x120] sm:$0xff]
          %v2803 = vld [vmem:[#allocation9 + $0x128] sm:$0xff]
          %v2804 = vld [vmem:[#allocation9 + $0x130] sm:$0xff]
          %v2805 = vld [vmem:[#allocation9 + $0x138] sm:$0xff]
          %v2806 = vld [vmem:[#allocation9 + $0x140] sm:$0xff]
          %v2807 = vld [vmem:[#allocation9 + $0x148] sm:$0xff]
          %v2808 = vld [vmem:[#allocation9 + $0x150] sm:$0xff]
          %v2809 = vld [vmem:[#allocation9 + $0x158] sm:$0xff]
          %v2810 = vld [vmem:[#allocation9 + $0x160] sm:$0xff]
          %v2811 = vld [vmem:[#allocation9 + $0x168] sm:$0xff]
          %v2812 = vld [vmem:[#allocation9 + $0x170] sm:$0xff]
          %v2813 = vld [vmem:[#allocation9 + $0x178] sm:$0xff]
          %v2814 = vld [vmem:[#allocation9 + $0x180] sm:$0xff]
          %v2815 = vld [vmem:[#allocation9 + $0x188] sm:$0xff]
          %v2816 = vld [vmem:[#allocation9 + $0x190] sm:$0xff]
          %v2817 = vld [vmem:[#allocation9 + $0x198] sm:$0xff]
          %v2818 = vld [vmem:[#allocation9 + $0x1a0] sm:$0xff]
          %v2819 = vld [vmem:[#allocation9 + $0x1a8] sm:$0xff]
          %v2820 = vld [vmem:[#allocation9 + $0x1b0] sm:$0xff]
          %v2821 = vld [vmem:[#allocation9 + $0x1b8] sm:$0xff]
          %v2822 = vld [vmem:[#allocation9 + $0x1c0] sm:$0xff]
          %v2823 = vld [vmem:[#allocation9 + $0x1c8] sm:$0xff]
          %v2824 = vld [vmem:[#allocation9 + $0x1d0] sm:$0xff]
          %v2825 = vld [vmem:[#allocation9 + $0x1d8] sm:$0xff]
          %v2826 = vld [vmem:[#allocation9 + $0x1e0] sm:$0xff]
          %v2827 = vld [vmem:[#allocation9 + $0x1e8] sm:$0xff]
          %v2828 = vld [vmem:[#allocation9 + $0x1f0] sm:$0xff]
          %v2829 = vld [vmem:[#allocation9 + $0x1f8] sm:$0xff]
          %v2830 = vld [vmem:[#allocation9 + $0x200] sm:$0xff]
          %v2831 = vld [vmem:[#allocation9 + $0x208] sm:$0xff]
          %v2832 = vld [vmem:[#allocation9 + $0x210] sm:$0xff]
          %v2833 = vld [vmem:[#allocation9 + $0x218] sm:$0xff]
          %v2834 = vld [vmem:[#allocation9 + $0x220] sm:$0xff]
          %v2835 = vld [vmem:[#allocation9 + $0x228] sm:$0xff]
          %v2836 = vld [vmem:[#allocation9 + $0x230] sm:$0xff]
          %v2837 = vld [vmem:[#allocation9 + $0x238] sm:$0xff]
          %v2838 = vld [vmem:[#allocation9 + $0x240] sm:$0xff]
          %v2839 = vld [vmem:[#allocation9 + $0x248] sm:$0xff]
          %v2840 = vld [vmem:[#allocation9 + $0x250] sm:$0xff]
          %v2841 = vld [vmem:[#allocation9 + $0x258] sm:$0xff]
          %v2842 = vld [vmem:[#allocation9 + $0x260] sm:$0xff]
          %v2843 = vld [vmem:[#allocation9 + $0x268] sm:$0xff]
          %v2844 = vld [vmem:[#allocation9 + $0x270] sm:$0xff]
          %v2845 = vld [vmem:[#allocation9 + $0x278] sm:$0xff]
          %v2846 = vld [vmem:[#allocation9 + $0x280] sm:$0xff]
          %v2847 = vld [vmem:[#allocation9 + $0x288] sm:$0xff]
          %v2848 = vld [vmem:[#allocation9 + $0x290] sm:$0xff]
          %v2849 = vld [vmem:[#allocation9 + $0x298] sm:$0xff]
          %v2850 = vld [vmem:[#allocation9 + $0x2a0] sm:$0xff]
          %v2851 = vld [vmem:[#allocation9 + $0x2a8] sm:$0xff]
          %v2852 = vld [vmem:[#allocation9 + $0x2b0] sm:$0xff]
          %v2853 = vld [vmem:[#allocation9 + $0x2b8] sm:$0xff]
          %v2854 = vld [vmem:[#allocation9 + $0x2c0] sm:$0xff]
          %v2855 = vld [vmem:[#allocation9 + $0x2c8] sm:$0xff]
          %v2856 = vld [vmem:[#allocation9 + $0x2d0] sm:$0xff]
          %v2857 = vld [vmem:[#allocation9 + $0x2d8] sm:$0xff]
          %v2858 = vld [vmem:[#allocation9 + $0x2e0] sm:$0xff]
          %v2859 = vld [vmem:[#allocation9 + $0x2e8] sm:$0xff]
          %v2860 = vld [vmem:[#allocation9 + $0x2f0] sm:$0xff]
          %v2861 = vld [vmem:[#allocation9 + $0x2f8] sm:$0xff]
          %v2862 = vld [vmem:[#allocation9 + $0x300] sm:$0xff]
          %v2863 = vld [vmem:[#allocation9 + $0x308] sm:$0xff]
          %v2864 = vld [vmem:[#allocation9 + $0x310] sm:$0xff]
          %v2865 = vld [vmem:[#allocation9 + $0x318] sm:$0xff]
          %v2866 = vld [vmem:[#allocation9 + $0x320] sm:$0xff]
          %v2867 = vld [vmem:[#allocation9 + $0x328] sm:$0xff]
          %v2868 = vld [vmem:[#allocation9 + $0x330] sm:$0xff]
          %v2869 = vld [vmem:[#allocation9 + $0x338] sm:$0xff]
          %v2870 = vld [vmem:[#allocation9 + $0x340] sm:$0xff]
          %v2871 = vld [vmem:[#allocation9 + $0x348] sm:$0xff]
          %v2872 = vld [vmem:[#allocation9 + $0x350] sm:$0xff]
          %v2873 = vld [vmem:[#allocation9 + $0x358] sm:$0xff]
          %v2874 = vld [vmem:[#allocation9 + $0x360] sm:$0xff]
          %v2875 = vld [vmem:[#allocation9 + $0x368] sm:$0xff]
          %v2876 = vld [vmem:[#allocation9 + $0x370] sm:$0xff]
          %v2877 = vld [vmem:[#allocation9 + $0x378] sm:$0xff]
          %v2878 = vld [vmem:[#allocation9 + $0x380] sm:$0xff]
          %v2879 = vld [vmem:[#allocation9 + $0x388] sm:$0xff]
          %v2880 = vld [vmem:[#allocation9 + $0x390] sm:$0xff]
          %v2881 = vld [vmem:[#allocation9 + $0x398] sm:$0xff]
          %v2882 = vld [vmem:[#allocation9 + $0x3a0] sm:$0xff]
          %v2883 = vld [vmem:[#allocation9 + $0x3a8] sm:$0xff]
          %v2884 = vld [vmem:[#allocation9 + $0x3b0] sm:$0xff]
          %v2885 = vld [vmem:[#allocation9 + $0x3b8] sm:$0xff]
          %v2886 = vld [vmem:[#allocation9 + $0x3c0] sm:$0xff]
          %v2887 = vld [vmem:[#allocation9 + $0x3c8] sm:$0xff]
          %v2888 = vld [vmem:[#allocation9 + $0x3d0] sm:$0xff]
          %v2889 = vld [vmem:[#allocation9 + $0x3d8] sm:$0xff]
          %v2890 = vld [vmem:[#allocation9 + $0x3e0] sm:$0xff]
          %v2891 = vld [vmem:[#allocation9 + $0x3e8] sm:$0xff]
          %v2892 = vld [vmem:[#allocation9 + $0x3f0] sm:$0xff]
          %v2893 = vld [vmem:[#allocation9 + $0x3f8] sm:$0xff]
          %v2894 = vld [vmem:[#allocation9 + $0x400] sm:$0xff]
          %v2895 = vld [vmem:[#allocation9 + $0x408] sm:$0xff]
          %v2896 = vld [vmem:[#allocation9 + $0x410] sm:$0xff]
          %v2897 = vld [vmem:[#allocation9 + $0x418] sm:$0xff]
          %v2898 = vld [vmem:[#allocation9 + $0x420] sm:$0xff]
          %v2899 = vld [vmem:[#allocation9 + $0x428] sm:$0xff]
          %v2900 = vld [vmem:[#allocation9 + $0x430] sm:$0xff]
          %v2901 = vld [vmem:[#allocation9 + $0x438] sm:$0xff]
          %v2902 = vld [vmem:[#allocation9 + $0x440] sm:$0xff]
          %v2903 = vld [vmem:[#allocation9 + $0x448] sm:$0xff]
          %v2904 = vld [vmem:[#allocation9 + $0x450] sm:$0xff]
          %v2905 = vld [vmem:[#allocation9 + $0x458] sm:$0xff]
          %v2906 = vld [vmem:[#allocation9 + $0x460] sm:$0xff]
          %v2907 = vld [vmem:[#allocation9 + $0x468] sm:$0xff]
          %v2908 = vld [vmem:[#allocation9 + $0x470] sm:$0xff]
          %v2909 = vld [vmem:[#allocation9 + $0x478] sm:$0xff]
          %v2910 = vld [vmem:[#allocation9 + $0x480] sm:$0xff]
          %v2911 = vld [vmem:[#allocation9 + $0x488] sm:$0xff]
          %v2912 = vld [vmem:[#allocation9 + $0x490] sm:$0xff]
          %v2913 = vld [vmem:[#allocation9 + $0x498] sm:$0xff]
          %v2914 = vld [vmem:[#allocation9 + $0x4a0] sm:$0xff]
          %v2915 = vld [vmem:[#allocation9 + $0x4a8] sm:$0xff]
          %v2916 = vld [vmem:[#allocation9 + $0x4b0] sm:$0xff]
          %v2917 = vld [vmem:[#allocation9 + $0x4b8] sm:$0xff]
          %v2918 = vld [vmem:[#allocation9 + $0x4c0] sm:$0xff]
          %v2919 = vld [vmem:[#allocation9 + $0x4c8] sm:$0xff]
          %v2920 = vld [vmem:[#allocation9 + $0x4d0] sm:$0xff]
          %v2921 = vld [vmem:[#allocation9 + $0x4d8] sm:$0xff]
          %v2922 = vld [vmem:[#allocation9 + $0x4e0] sm:$0xff]
          %v2923 = vld [vmem:[#allocation9 + $0x4e8] sm:$0xff]
          %v2924 = vld [vmem:[#allocation9 + $0x4f0] sm:$0xff]
          %v2925 = vld [vmem:[#allocation9 + $0x4f8] sm:$0xff]
          %v2926 = vld [vmem:[#allocation9 + $0x500] sm:$0xff]
          %v2927 = vld [vmem:[#allocation9 + $0x508] sm:$0xff]
          %v2928 = vld [vmem:[#allocation9 + $0x510] sm:$0xff]
          %v2929 = vld [vmem:[#allocation9 + $0x518] sm:$0xff]
          %v2930 = vld [vmem:[#allocation9 + $0x520] sm:$0xff]
          %v2931 = vld [vmem:[#allocation9 + $0x528] sm:$0xff]
          %v2932 = vld [vmem:[#allocation9 + $0x530] sm:$0xff]
          %v2933 = vld [vmem:[#allocation9 + $0x538] sm:$0xff]
          %v2934 = vld [vmem:[#allocation9 + $0x540] sm:$0xff]
          %v2935 = vld [vmem:[#allocation9 + $0x548] sm:$0xff]
          %v2936 = vld [vmem:[#allocation9 + $0x550] sm:$0xff]
          %v2937 = vld [vmem:[#allocation9 + $0x558] sm:$0xff]
          %v2938 = vld [vmem:[#allocation9 + $0x560] sm:$0xff]
          %v2939 = vld [vmem:[#allocation9 + $0x568] sm:$0xff]
          %v2940 = vld [vmem:[#allocation9 + $0x570] sm:$0xff]
          %v2941 = vld [vmem:[#allocation9 + $0x578] sm:$0xff]
          %v2942 = vld [vmem:[#allocation9 + $0x580] sm:$0xff]
          %v2943 = vld [vmem:[#allocation9 + $0x588] sm:$0xff]
          %v2944 = vld [vmem:[#allocation9 + $0x590] sm:$0xff]
          %v2945 = vld [vmem:[#allocation9 + $0x598] sm:$0xff]
          %v2946 = vld [vmem:[#allocation9 + $0x5a0] sm:$0xff]
          %v2947 = vld [vmem:[#allocation9 + $0x5a8] sm:$0xff]
          %v2948 = vld [vmem:[#allocation9 + $0x5b0] sm:$0xff]
          %v2949 = vld [vmem:[#allocation9 + $0x5b8] sm:$0xff]
          %v2950 = vld [vmem:[#allocation9 + $0x5c0] sm:$0xff]
          %v2951 = vld [vmem:[#allocation9 + $0x5c8] sm:$0xff]
          %v2952 = vld [vmem:[#allocation9 + $0x5d0] sm:$0xff]
          %v2953 = vld [vmem:[#allocation9 + $0x5d8] sm:$0xff]
          %v2954 = vld [vmem:[#allocation9 + $0x5e0] sm:$0xff]
          %v2955 = vld [vmem:[#allocation9 + $0x5e8] sm:$0xff]
          %v2956 = vld [vmem:[#allocation9 + $0x5f0] sm:$0xff]
          %v2957 = vld [vmem:[#allocation9 + $0x5f8] sm:$0xff]
          %v2958 = vld [vmem:[#allocation9 + $0x600] sm:$0xff]
          %v2959 = vld [vmem:[#allocation9 + $0x608] sm:$0xff]
          %v2960 = vld [vmem:[#allocation9 + $0x610] sm:$0xff]
          %v2961 = vld [vmem:[#allocation9 + $0x618] sm:$0xff]
          %v2962 = vld [vmem:[#allocation9 + $0x620] sm:$0xff]
          %v2963 = vld [vmem:[#allocation9 + $0x628] sm:$0xff]
          %v2964 = vld [vmem:[#allocation9 + $0x630] sm:$0xff]
          %v2965 = vld [vmem:[#allocation9 + $0x638] sm:$0xff]
          %v2966 = vld [vmem:[#allocation9 + $0x640] sm:$0xff]
          %v2967 = vld [vmem:[#allocation9 + $0x648] sm:$0xff]
          %v2968 = vld [vmem:[#allocation9 + $0x650] sm:$0xff]
          %v2969 = vld [vmem:[#allocation9 + $0x658] sm:$0xff]
          %v2970 = vld [vmem:[#allocation9 + $0x660] sm:$0xff]
          %v2971 = vld [vmem:[#allocation9 + $0x668] sm:$0xff]
          %v2972 = vld [vmem:[#allocation9 + $0x670] sm:$0xff]
          %v2973 = vld [vmem:[#allocation9 + $0x678] sm:$0xff]
          %v2974 = vld [vmem:[#allocation9 + $0x680] sm:$0xff]
          %v2975 = vld [vmem:[#allocation9 + $0x688] sm:$0xff]
          %v2976 = vld [vmem:[#allocation9 + $0x690] sm:$0xff]
          %v2977 = vld [vmem:[#allocation9 + $0x698] sm:$0xff]
          %v2978 = vld [vmem:[#allocation9 + $0x6a0] sm:$0xff]
          %v2979 = vld [vmem:[#allocation9 + $0x6a8] sm:$0xff]
          %v2980 = vld [vmem:[#allocation9 + $0x6b0] sm:$0xff]
          %v2981 = vld [vmem:[#allocation9 + $0x6b8] sm:$0xff]
          %v2982 = vld [vmem:[#allocation9 + $0x6c0] sm:$0xff]
          %v2983 = vld [vmem:[#allocation9 + $0x6c8] sm:$0xff]
          %v2984 = vld [vmem:[#allocation9 + $0x6d0] sm:$0xff]
          %v2985 = vld [vmem:[#allocation9 + $0x6d8] sm:$0xff]
          %v2986 = vld [vmem:[#allocation9 + $0x6e0] sm:$0xff]
          %v2987 = vld [vmem:[#allocation9 + $0x6e8] sm:$0xff]
          %v2988 = vld [vmem:[#allocation9 + $0x6f0] sm:$0xff]
          %v2989 = vld [vmem:[#allocation9 + $0x6f8] sm:$0xff]
          %v2990 = vld [vmem:[#allocation9 + $0x700] sm:$0xff]
          %v2991 = vld [vmem:[#allocation9 + $0x708] sm:$0xff]
          %v2992 = vld [vmem:[#allocation9 + $0x710] sm:$0xff]
          %v2993 = vld [vmem:[#allocation9 + $0x718] sm:$0xff]
          %v2994 = vld [vmem:[#allocation9 + $0x720] sm:$0xff]
          %v2995 = vld [vmem:[#allocation9 + $0x728] sm:$0xff]
          %v2996 = vld [vmem:[#allocation9 + $0x730] sm:$0xff]
          %v2997 = vld [vmem:[#allocation9 + $0x738] sm:$0xff]
          %v2998 = vld [vmem:[#allocation9 + $0x740] sm:$0xff]
          %v2999 = vld [vmem:[#allocation9 + $0x748] sm:$0xff]
          %v3000 = vld [vmem:[#allocation9 + $0x750] sm:$0xff]
          %v3001 = vld [vmem:[#allocation9 + $0x758] sm:$0xff]
          %v3002 = vld [vmem:[#allocation9 + $0x760] sm:$0xff]
          %v3003 = vld [vmem:[#allocation9 + $0x768] sm:$0xff]
          %v3004 = vld [vmem:[#allocation9 + $0x770] sm:$0xff]
          %v3005 = vld [vmem:[#allocation9 + $0x778] sm:$0xff]
          %v3006 = vld [vmem:[#allocation9 + $0x780] sm:$0xff]
          %v3007 = vld [vmem:[#allocation9 + $0x788] sm:$0xff]
          %v3008 = vld [vmem:[#allocation9 + $0x790] sm:$0xff]
          %v3009 = vld [vmem:[#allocation9 + $0x798] sm:$0xff]
          %v3010 = vld [vmem:[#allocation9 + $0x7a0] sm:$0xff]
          %v3011 = vld [vmem:[#allocation9 + $0x7a8] sm:$0xff]
          %v3012 = vld [vmem:[#allocation9 + $0x7b0] sm:$0xff]
          %v3013 = vld [vmem:[#allocation9 + $0x7b8] sm:$0xff]
          %v3014 = vld [vmem:[#allocation9 + $0x7c0] sm:$0xff]
          %v3015 = vld [vmem:[#allocation9 + $0x7c8] sm:$0xff]
          %v3016 = vld [vmem:[#allocation9 + $0x7d0] sm:$0xff]
          %v3017 = vld [vmem:[#allocation9 + $0x7d8] sm:$0xff]
          %v3018 = vld [vmem:[#allocation9 + $0x7e0] sm:$0xff]
          %v3019 = vld [vmem:[#allocation9 + $0x7e8] sm:$0xff]
          %v3020 = vld [vmem:[#allocation9 + $0x7f0] sm:$0xff]
          %v3021 = vld [vmem:[#allocation9 + $0x7f8] sm:$0xff]
          %v3022 = vld [vmem:[#allocation9 + $0x800] sm:$0xff]
          %v3023 = vld [vmem:[#allocation9 + $0x808] sm:$0xff]
          %v3024 = vld [vmem:[#allocation9 + $0x810] sm:$0xff]
          %v3025 = vld [vmem:[#allocation9 + $0x818] sm:$0xff]
          %v3026 = vld [vmem:[#allocation9 + $0x820] sm:$0xff]
          %v3027 = vld [vmem:[#allocation9 + $0x828] sm:$0xff]
          %v3028 = vld [vmem:[#allocation9 + $0x830] sm:$0xff]
          %v3029 = vld [vmem:[#allocation9 + $0x838] sm:$0xff]
          %v3030 = vld [vmem:[#allocation9 + $0x840] sm:$0xff]
          %v3031 = vld [vmem:[#allocation9 + $0x848] sm:$0xff]
          %v3032 = vld [vmem:[#allocation9 + $0x850] sm:$0xff]
          %v3033 = vld [vmem:[#allocation9 + $0x858] sm:$0xff]
          %v3034 = vld [vmem:[#allocation9 + $0x860] sm:$0xff]
          %v3035 = vld [vmem:[#allocation9 + $0x868] sm:$0xff]
          %v3036 = vld [vmem:[#allocation9 + $0x870] sm:$0xff]
          %v3037 = vld [vmem:[#allocation9 + $0x878] sm:$0xff]
          %v3038 = vld [vmem:[#allocation9 + $0x880] sm:$0xff]
          %v3039 = vld [vmem:[#allocation9 + $0x888] sm:$0xff]
          %v3040 = vld [vmem:[#allocation9 + $0x890] sm:$0xff]
          %v3041 = vld [vmem:[#allocation9 + $0x898] sm:$0xff]
          %v3042 = vld [vmem:[#allocation9 + $0x8a0] sm:$0xff]
          %v3043 = vld [vmem:[#allocation9 + $0x8a8] sm:$0xff]
          %v3044 = vld [vmem:[#allocation9 + $0x8b0] sm:$0xff]
          %v3045 = vld [vmem:[#allocation9 + $0x8b8] sm:$0xff]
          %v3046 = vld [vmem:[#allocation9 + $0x8c0] sm:$0xff]
          %v3047 = vld [vmem:[#allocation9 + $0x8c8] sm:$0xff]
          %v3048 = vld [vmem:[#allocation9 + $0x8d0] sm:$0xff]
          %v3049 = vld [vmem:[#allocation9 + $0x8d8] sm:$0xff]
          %v3050 = vld [vmem:[#allocation9 + $0x8e0] sm:$0xff]
          %v3051 = vld [vmem:[#allocation9 + $0x8e8] sm:$0xff]
          %v3052 = vld [vmem:[#allocation9 + $0x8f0] sm:$0xff]
          %v3053 = vld [vmem:[#allocation9 + $0x8f8] sm:$0xff]
          %v3054 = vunpack.c.l.bf16 %v2766
          %v3055 = vunpack.c.h.bf16 %v2766
          %v3056 = vunpack.c.l.bf16 %v2767
          %v3057 = vunpack.c.h.bf16 %v2767
          %v3058 = vunpack.c.l.bf16 %v2768
          %v3059 = vunpack.c.h.bf16 %v2768
          %v3060 = vunpack.c.l.bf16 %v2769
          %v3061 = vunpack.c.h.bf16 %v2769
          %v3062 = vunpack.c.l.bf16 %v2770
          %v3063 = vunpack.c.h.bf16 %v2770
          %v3064 = vunpack.c.l.bf16 %v2771
          %v3065 = vunpack.c.h.bf16 %v2771
          %v3066 = vunpack.c.l.bf16 %v2772
          %v3067 = vunpack.c.h.bf16 %v2772
          %v3068 = vunpack.c.l.bf16 %v2773
          %v3069 = vunpack.c.h.bf16 %v2773
          %v3070 = vunpack.c.l.bf16 %v2774
          %v3071 = vunpack.c.h.bf16 %v2774
          %v3072 = vunpack.c.l.bf16 %v2775
          %v3073 = vunpack.c.h.bf16 %v2775
          %v3074 = vunpack.c.l.bf16 %v2776
          %v3075 = vunpack.c.h.bf16 %v2776
          %v3076 = vunpack.c.l.bf16 %v2777
          %v3077 = vunpack.c.h.bf16 %v2777
          %v3078 = vunpack.c.l.bf16 %v2778
          %v3079 = vunpack.c.h.bf16 %v2778
          %v3080 = vunpack.c.l.bf16 %v2779
          %v3081 = vunpack.c.h.bf16 %v2779
          %v3082 = vunpack.c.l.bf16 %v2780
          %v3083 = vunpack.c.h.bf16 %v2780
          %v3084 = vunpack.c.l.bf16 %v2781
          %v3085 = vunpack.c.h.bf16 %v2781
          %v3086 = vunpack.c.l.bf16 %v2782
          %v3087 = vunpack.c.h.bf16 %v2782
          %v3088 = vunpack.c.l.bf16 %v2783
          %v3089 = vunpack.c.h.bf16 %v2783
          %v3090 = vunpack.c.l.bf16 %v2784
          %v3091 = vunpack.c.h.bf16 %v2784
          %v3092 = vunpack.c.l.bf16 %v2785
          %v3093 = vunpack.c.h.bf16 %v2785
          %v3094 = vunpack.c.l.bf16 %v2786
          %v3095 = vunpack.c.h.bf16 %v2786
          %v3096 = vunpack.c.l.bf16 %v2787
          %v3097 = vunpack.c.h.bf16 %v2787
          %v3098 = vunpack.c.l.bf16 %v2788
          %v3099 = vunpack.c.h.bf16 %v2788
          %v3100 = vunpack.c.l.bf16 %v2789
          %v3101 = vunpack.c.h.bf16 %v2789
          %v3102 = vunpack.c.l.bf16 %v2790
          %v3103 = vunpack.c.h.bf16 %v2790
          %v3104 = vunpack.c.l.bf16 %v2791
          %v3105 = vunpack.c.h.bf16 %v2791
          %v3106 = vunpack.c.l.bf16 %v2792
          %v3107 = vunpack.c.h.bf16 %v2792
          %v3108 = vunpack.c.l.bf16 %v2793
          %v3109 = vunpack.c.h.bf16 %v2793
          %v3110 = vunpack.c.l.bf16 %v2794
          %v3111 = vunpack.c.h.bf16 %v2794
          %v3112 = vunpack.c.l.bf16 %v2795
          %v3113 = vunpack.c.h.bf16 %v2795
          %v3114 = vunpack.c.l.bf16 %v2796
          %v3115 = vunpack.c.h.bf16 %v2796
          %v3116 = vunpack.c.l.bf16 %v2797
          %v3117 = vunpack.c.h.bf16 %v2797
          %v3118 = vunpack.c.l.bf16 %v2798
          %v3119 = vunpack.c.h.bf16 %v2798
          %v3120 = vunpack.c.l.bf16 %v2799
          %v3121 = vunpack.c.h.bf16 %v2799
          %v3122 = vunpack.c.l.bf16 %v2800
          %v3123 = vunpack.c.h.bf16 %v2800
          %v3124 = vunpack.c.l.bf16 %v2801
          %v3125 = vunpack.c.h.bf16 %v2801
          %v3126 = vunpack.c.l.bf16 %v2802
          %v3127 = vunpack.c.h.bf16 %v2802
          %v3128 = vunpack.c.l.bf16 %v2803
          %v3129 = vunpack.c.h.bf16 %v2803
          %v3130 = vunpack.c.l.bf16 %v2804
          %v3131 = vunpack.c.h.bf16 %v2804
          %v3132 = vunpack.c.l.bf16 %v2805
          %v3133 = vunpack.c.h.bf16 %v2805
          %v3134 = vunpack.c.l.bf16 %v2806
          %v3135 = vunpack.c.h.bf16 %v2806
          %v3136 = vunpack.c.l.bf16 %v2807
          %v3137 = vunpack.c.h.bf16 %v2807
          %v3138 = vunpack.c.l.bf16 %v2808
          %v3139 = vunpack.c.h.bf16 %v2808
          %v3140 = vunpack.c.l.bf16 %v2809
          %v3141 = vunpack.c.h.bf16 %v2809
          %v3142 = vunpack.c.l.bf16 %v2810
          %v3143 = vunpack.c.h.bf16 %v2810
          %v3144 = vunpack.c.l.bf16 %v2811
          %v3145 = vunpack.c.h.bf16 %v2811
          %v3146 = vunpack.c.l.bf16 %v2812
          %v3147 = vunpack.c.h.bf16 %v2812
          %v3148 = vunpack.c.l.bf16 %v2813
          %v3149 = vunpack.c.h.bf16 %v2813
          %v3150 = vunpack.c.l.bf16 %v2814
          %v3151 = vunpack.c.h.bf16 %v2814
          %v3152 = vunpack.c.l.bf16 %v2815
          %v3153 = vunpack.c.h.bf16 %v2815
          %v3154 = vunpack.c.l.bf16 %v2816
          %v3155 = vunpack.c.h.bf16 %v2816
          %v3156 = vunpack.c.l.bf16 %v2817
          %v3157 = vunpack.c.h.bf16 %v2817
          %v3158 = vunpack.c.l.bf16 %v2818
          %v3159 = vunpack.c.h.bf16 %v2818
          %v3160 = vunpack.c.l.bf16 %v2819
          %v3161 = vunpack.c.h.bf16 %v2819
          %v3162 = vunpack.c.l.bf16 %v2820
          %v3163 = vunpack.c.h.bf16 %v2820
          %v3164 = vunpack.c.l.bf16 %v2821
          %v3165 = vunpack.c.h.bf16 %v2821
          %v3166 = vunpack.c.l.bf16 %v2822
          %v3167 = vunpack.c.h.bf16 %v2822
          %v3168 = vunpack.c.l.bf16 %v2823
          %v3169 = vunpack.c.h.bf16 %v2823
          %v3170 = vunpack.c.l.bf16 %v2824
          %v3171 = vunpack.c.h.bf16 %v2824
          %v3172 = vunpack.c.l.bf16 %v2825
          %v3173 = vunpack.c.h.bf16 %v2825
          %v3174 = vunpack.c.l.bf16 %v2826
          %v3175 = vunpack.c.h.bf16 %v2826
          %v3176 = vunpack.c.l.bf16 %v2827
          %v3177 = vunpack.c.h.bf16 %v2827
          %v3178 = vunpack.c.l.bf16 %v2828
          %v3179 = vunpack.c.h.bf16 %v2828
          %v3180 = vunpack.c.l.bf16 %v2829
          %v3181 = vunpack.c.h.bf16 %v2829
          %v3182 = vunpack.c.l.bf16 %v2830
          %v3183 = vunpack.c.h.bf16 %v2830
          %v3184 = vunpack.c.l.bf16 %v2831
          %v3185 = vunpack.c.h.bf16 %v2831
          %v3186 = vunpack.c.l.bf16 %v2832
          %v3187 = vunpack.c.h.bf16 %v2832
          %v3188 = vunpack.c.l.bf16 %v2833
          %v3189 = vunpack.c.h.bf16 %v2833
          %v3190 = vunpack.c.l.bf16 %v2834
          %v3191 = vunpack.c.h.bf16 %v2834
          %v3192 = vunpack.c.l.bf16 %v2835
          %v3193 = vunpack.c.h.bf16 %v2835
          %v3194 = vunpack.c.l.bf16 %v2836
          %v3195 = vunpack.c.h.bf16 %v2836
          %v3196 = vunpack.c.l.bf16 %v2837
          %v3197 = vunpack.c.h.bf16 %v2837
          %v3198 = vunpack.c.l.bf16 %v2838
          %v3199 = vunpack.c.h.bf16 %v2838
          %v3200 = vunpack.c.l.bf16 %v2839
          %v3201 = vunpack.c.h.bf16 %v2839
          %v3202 = vunpack.c.l.bf16 %v2840
          %v3203 = vunpack.c.h.bf16 %v2840
          %v3204 = vunpack.c.l.bf16 %v2841
          %v3205 = vunpack.c.h.bf16 %v2841
          %v3206 = vunpack.c.l.bf16 %v2842
          %v3207 = vunpack.c.h.bf16 %v2842
          %v3208 = vunpack.c.l.bf16 %v2843
          %v3209 = vunpack.c.h.bf16 %v2843
          %v3210 = vunpack.c.l.bf16 %v2844
          %v3211 = vunpack.c.h.bf16 %v2844
          %v3212 = vunpack.c.l.bf16 %v2845
          %v3213 = vunpack.c.h.bf16 %v2845
          %v3214 = vunpack.c.l.bf16 %v2846
          %v3215 = vunpack.c.h.bf16 %v2846
          %v3216 = vunpack.c.l.bf16 %v2847
          %v3217 = vunpack.c.h.bf16 %v2847
          %v3218 = vunpack.c.l.bf16 %v2848
          %v3219 = vunpack.c.h.bf16 %v2848
          %v3220 = vunpack.c.l.bf16 %v2849
          %v3221 = vunpack.c.h.bf16 %v2849
          %v3222 = vunpack.c.l.bf16 %v2850
          %v3223 = vunpack.c.h.bf16 %v2850
          %v3224 = vunpack.c.l.bf16 %v2851
          %v3225 = vunpack.c.h.bf16 %v2851
          %v3226 = vunpack.c.l.bf16 %v2852
          %v3227 = vunpack.c.h.bf16 %v2852
          %v3228 = vunpack.c.l.bf16 %v2853
          %v3229 = vunpack.c.h.bf16 %v2853
          %v3230 = vunpack.c.l.bf16 %v2854
          %v3231 = vunpack.c.h.bf16 %v2854
          %v3232 = vunpack.c.l.bf16 %v2855
          %v3233 = vunpack.c.h.bf16 %v2855
          %v3234 = vunpack.c.l.bf16 %v2856
          %v3235 = vunpack.c.h.bf16 %v2856
          %v3236 = vunpack.c.l.bf16 %v2857
          %v3237 = vunpack.c.h.bf16 %v2857
          %v3238 = vunpack.c.l.bf16 %v2858
          %v3239 = vunpack.c.h.bf16 %v2858
          %v3240 = vunpack.c.l.bf16 %v2859
          %v3241 = vunpack.c.h.bf16 %v2859
          %v3242 = vunpack.c.l.bf16 %v2860
          %v3243 = vunpack.c.h.bf16 %v2860
          %v3244 = vunpack.c.l.bf16 %v2861
          %v3245 = vunpack.c.h.bf16 %v2861
          %v3246 = vunpack.c.l.bf16 %v2862
          %v3247 = vunpack.c.h.bf16 %v2862
          %v3248 = vunpack.c.l.bf16 %v2863
          %v3249 = vunpack.c.h.bf16 %v2863
          %v3250 = vunpack.c.l.bf16 %v2864
          %v3251 = vunpack.c.h.bf16 %v2864
          %v3252 = vunpack.c.l.bf16 %v2865
          %v3253 = vunpack.c.h.bf16 %v2865
          %v3254 = vunpack.c.l.bf16 %v2866
          %v3255 = vunpack.c.h.bf16 %v2866
          %v3256 = vunpack.c.l.bf16 %v2867
          %v3257 = vunpack.c.h.bf16 %v2867
          %v3258 = vunpack.c.l.bf16 %v2868
          %v3259 = vunpack.c.h.bf16 %v2868
          %v3260 = vunpack.c.l.bf16 %v2869
          %v3261 = vunpack.c.h.bf16 %v2869
          %v3262 = vunpack.c.l.bf16 %v2870
          %v3263 = vunpack.c.h.bf16 %v2870
          %v3264 = vunpack.c.l.bf16 %v2871
          %v3265 = vunpack.c.h.bf16 %v2871
          %v3266 = vunpack.c.l.bf16 %v2872
          %v3267 = vunpack.c.h.bf16 %v2872
          %v3268 = vunpack.c.l.bf16 %v2873
          %v3269 = vunpack.c.h.bf16 %v2873
          %v3270 = vunpack.c.l.bf16 %v2874
          %v3271 = vunpack.c.h.bf16 %v2874
          %v3272 = vunpack.c.l.bf16 %v2875
          %v3273 = vunpack.c.h.bf16 %v2875
          %v3274 = vunpack.c.l.bf16 %v2876
          %v3275 = vunpack.c.h.bf16 %v2876
          %v3276 = vunpack.c.l.bf16 %v2877
          %v3277 = vunpack.c.h.bf16 %v2877
          %v3278 = vunpack.c.l.bf16 %v2878
          %v3279 = vunpack.c.h.bf16 %v2878
          %v3280 = vunpack.c.l.bf16 %v2879
          %v3281 = vunpack.c.h.bf16 %v2879
          %v3282 = vunpack.c.l.bf16 %v2880
          %v3283 = vunpack.c.h.bf16 %v2880
          %v3284 = vunpack.c.l.bf16 %v2881
          %v3285 = vunpack.c.h.bf16 %v2881
          %v3286 = vunpack.c.l.bf16 %v2882
          %v3287 = vunpack.c.h.bf16 %v2882
          %v3288 = vunpack.c.l.bf16 %v2883
          %v3289 = vunpack.c.h.bf16 %v2883
          %v3290 = vunpack.c.l.bf16 %v2884
          %v3291 = vunpack.c.h.bf16 %v2884
          %v3292 = vunpack.c.l.bf16 %v2885
          %v3293 = vunpack.c.h.bf16 %v2885
          %v3294 = vunpack.c.l.bf16 %v2886
          %v3295 = vunpack.c.h.bf16 %v2886
          %v3296 = vunpack.c.l.bf16 %v2887
          %v3297 = vunpack.c.h.bf16 %v2887
          %v3298 = vunpack.c.l.bf16 %v2888
          %v3299 = vunpack.c.h.bf16 %v2888
          %v3300 = vunpack.c.l.bf16 %v2889
          %v3301 = vunpack.c.h.bf16 %v2889
          %v3302 = vunpack.c.l.bf16 %v2890
          %v3303 = vunpack.c.h.bf16 %v2890
          %v3304 = vunpack.c.l.bf16 %v2891
          %v3305 = vunpack.c.h.bf16 %v2891
          %v3306 = vunpack.c.l.bf16 %v2892
          %v3307 = vunpack.c.h.bf16 %v2892
          %v3308 = vunpack.c.l.bf16 %v2893
          %v3309 = vunpack.c.h.bf16 %v2893
          %v3310 = vunpack.c.l.bf16 %v2894
          %v3311 = vunpack.c.h.bf16 %v2894
          %v3312 = vunpack.c.l.bf16 %v2895
          %v3313 = vunpack.c.h.bf16 %v2895
          %v3314 = vunpack.c.l.bf16 %v2896
          %v3315 = vunpack.c.h.bf16 %v2896
          %v3316 = vunpack.c.l.bf16 %v2897
          %v3317 = vunpack.c.h.bf16 %v2897
          %v3318 = vunpack.c.l.bf16 %v2898
          %v3319 = vunpack.c.h.bf16 %v2898
          %v3320 = vunpack.c.l.bf16 %v2899
          %v3321 = vunpack.c.h.bf16 %v2899
          %v3322 = vunpack.c.l.bf16 %v2900
          %v3323 = vunpack.c.h.bf16 %v2900
          %v3324 = vunpack.c.l.bf16 %v2901
          %v3325 = vunpack.c.h.bf16 %v2901
          %v3326 = vunpack.c.l.bf16 %v2902
          %v3327 = vunpack.c.h.bf16 %v2902
          %v3328 = vunpack.c.l.bf16 %v2903
          %v3329 = vunpack.c.h.bf16 %v2903
          %v3330 = vunpack.c.l.bf16 %v2904
          %v3331 = vunpack.c.h.bf16 %v2904
          %v3332 = vunpack.c.l.bf16 %v2905
          %v3333 = vunpack.c.h.bf16 %v2905
          %v3334 = vunpack.c.l.bf16 %v2906
          %v3335 = vunpack.c.h.bf16 %v2906
          %v3336 = vunpack.c.l.bf16 %v2907
          %v3337 = vunpack.c.h.bf16 %v2907
          %v3338 = vunpack.c.l.bf16 %v2908
          %v3339 = vunpack.c.h.bf16 %v2908
          %v3340 = vunpack.c.l.bf16 %v2909
          %v3341 = vunpack.c.h.bf16 %v2909
          %v3342 = vunpack.c.l.bf16 %v2910
          %v3343 = vunpack.c.h.bf16 %v2910
          %v3344 = vunpack.c.l.bf16 %v2911
          %v3345 = vunpack.c.h.bf16 %v2911
          %v3346 = vunpack.c.l.bf16 %v2912
          %v3347 = vunpack.c.h.bf16 %v2912
          %v3348 = vunpack.c.l.bf16 %v2913
          %v3349 = vunpack.c.h.bf16 %v2913
          %v3350 = vunpack.c.l.bf16 %v2914
          %v3351 = vunpack.c.h.bf16 %v2914
          %v3352 = vunpack.c.l.bf16 %v2915
          %v3353 = vunpack.c.h.bf16 %v2915
          %v3354 = vunpack.c.l.bf16 %v2916
          %v3355 = vunpack.c.h.bf16 %v2916
          %v3356 = vunpack.c.l.bf16 %v2917
          %v3357 = vunpack.c.h.bf16 %v2917
          %v3358 = vunpack.c.l.bf16 %v2918
          %v3359 = vunpack.c.h.bf16 %v2918
          %v3360 = vunpack.c.l.bf16 %v2919
          %v3361 = vunpack.c.h.bf16 %v2919
          %v3362 = vunpack.c.l.bf16 %v2920
          %v3363 = vunpack.c.h.bf16 %v2920
          %v3364 = vunpack.c.l.bf16 %v2921
          %v3365 = vunpack.c.h.bf16 %v2921
          %v3366 = vunpack.c.l.bf16 %v2922
          %v3367 = vunpack.c.h.bf16 %v2922
          %v3368 = vunpack.c.l.bf16 %v2923
          %v3369 = vunpack.c.h.bf16 %v2923
          %v3370 = vunpack.c.l.bf16 %v2924
          %v3371 = vunpack.c.h.bf16 %v2924
          %v3372 = vunpack.c.l.bf16 %v2925
          %v3373 = vunpack.c.h.bf16 %v2925
          %v3374 = vunpack.c.l.bf16 %v2926
          %v3375 = vunpack.c.h.bf16 %v2926
          %v3376 = vunpack.c.l.bf16 %v2927
          %v3377 = vunpack.c.h.bf16 %v2927
          %v3378 = vunpack.c.l.bf16 %v2928
          %v3379 = vunpack.c.h.bf16 %v2928
          %v3380 = vunpack.c.l.bf16 %v2929
          %v3381 = vunpack.c.h.bf16 %v2929
          %v3382 = vunpack.c.l.bf16 %v2930
          %v3383 = vunpack.c.h.bf16 %v2930
          %v3384 = vunpack.c.l.bf16 %v2931
          %v3385 = vunpack.c.h.bf16 %v2931
          %v3386 = vunpack.c.l.bf16 %v2932
          %v3387 = vunpack.c.h.bf16 %v2932
          %v3388 = vunpack.c.l.bf16 %v2933
          %v3389 = vunpack.c.h.bf16 %v2933
          %v3390 = vunpack.c.l.bf16 %v2934
          %v3391 = vunpack.c.h.bf16 %v2934
          %v3392 = vunpack.c.l.bf16 %v2935
          %v3393 = vunpack.c.h.bf16 %v2935
          %v3394 = vunpack.c.l.bf16 %v2936
          %v3395 = vunpack.c.h.bf16 %v2936
          %v3396 = vunpack.c.l.bf16 %v2937
          %v3397 = vunpack.c.h.bf16 %v2937
          %v3398 = vunpack.c.l.bf16 %v2938
          %v3399 = vunpack.c.h.bf16 %v2938
          %v3400 = vunpack.c.l.bf16 %v2939
          %v3401 = vunpack.c.h.bf16 %v2939
          %v3402 = vunpack.c.l.bf16 %v2940
          %v3403 = vunpack.c.h.bf16 %v2940
          %v3404 = vunpack.c.l.bf16 %v2941
          %v3405 = vunpack.c.h.bf16 %v2941
          %v3406 = vunpack.c.l.bf16 %v2942
          %v3407 = vunpack.c.h.bf16 %v2942
          %v3408 = vunpack.c.l.bf16 %v2943
          %v3409 = vunpack.c.h.bf16 %v2943
          %v3410 = vunpack.c.l.bf16 %v2944
          %v3411 = vunpack.c.h.bf16 %v2944
          %v3412 = vunpack.c.l.bf16 %v2945
          %v3413 = vunpack.c.h.bf16 %v2945
          %v3414 = vunpack.c.l.bf16 %v2946
          %v3415 = vunpack.c.h.bf16 %v2946
          %v3416 = vunpack.c.l.bf16 %v2947
          %v3417 = vunpack.c.h.bf16 %v2947
          %v3418 = vunpack.c.l.bf16 %v2948
          %v3419 = vunpack.c.h.bf16 %v2948
          %v3420 = vunpack.c.l.bf16 %v2949
          %v3421 = vunpack.c.h.bf16 %v2949
          %v3422 = vunpack.c.l.bf16 %v2950
          %v3423 = vunpack.c.h.bf16 %v2950
          %v3424 = vunpack.c.l.bf16 %v2951
          %v3425 = vunpack.c.h.bf16 %v2951
          %v3426 = vunpack.c.l.bf16 %v2952
          %v3427 = vunpack.c.h.bf16 %v2952
          %v3428 = vunpack.c.l.bf16 %v2953
          %v3429 = vunpack.c.h.bf16 %v2953
          %v3430 = vunpack.c.l.bf16 %v2954
          %v3431 = vunpack.c.h.bf16 %v2954
          %v3432 = vunpack.c.l.bf16 %v2955
          %v3433 = vunpack.c.h.bf16 %v2955
          %v3434 = vunpack.c.l.bf16 %v2956
          %v3435 = vunpack.c.h.bf16 %v2956
          %v3436 = vunpack.c.l.bf16 %v2957
          %v3437 = vunpack.c.h.bf16 %v2957
          %v3438 = vunpack.c.l.bf16 %v2958
          %v3439 = vunpack.c.h.bf16 %v2958
          %v3440 = vunpack.c.l.bf16 %v2959
          %v3441 = vunpack.c.h.bf16 %v2959
          %v3442 = vunpack.c.l.bf16 %v2960
          %v3443 = vunpack.c.h.bf16 %v2960
          %v3444 = vunpack.c.l.bf16 %v2961
          %v3445 = vunpack.c.h.bf16 %v2961
          %v3446 = vunpack.c.l.bf16 %v2962
          %v3447 = vunpack.c.h.bf16 %v2962
          %v3448 = vunpack.c.l.bf16 %v2963
          %v3449 = vunpack.c.h.bf16 %v2963
          %v3450 = vunpack.c.l.bf16 %v2964
          %v3451 = vunpack.c.h.bf16 %v2964
          %v3452 = vunpack.c.l.bf16 %v2965
          %v3453 = vunpack.c.h.bf16 %v2965
          %v3454 = vunpack.c.l.bf16 %v2966
          %v3455 = vunpack.c.h.bf16 %v2966
          %v3456 = vunpack.c.l.bf16 %v2967
          %v3457 = vunpack.c.h.bf16 %v2967
          %v3458 = vunpack.c.l.bf16 %v2968
          %v3459 = vunpack.c.h.bf16 %v2968
          %v3460 = vunpack.c.l.bf16 %v2969
          %v3461 = vunpack.c.h.bf16 %v2969
          %v3462 = vunpack.c.l.bf16 %v2970
          %v3463 = vunpack.c.h.bf16 %v2970
          %v3464 = vunpack.c.l.bf16 %v2971
          %v3465 = vunpack.c.h.bf16 %v2971
          %v3466 = vunpack.c.l.bf16 %v2972
          %v3467 = vunpack.c.h.bf16 %v2972
          %v3468 = vunpack.c.l.bf16 %v2973
          %v3469 = vunpack.c.h.bf16 %v2973
          %v3470 = vunpack.c.l.bf16 %v2974
          %v3471 = vunpack.c.h.bf16 %v2974
          %v3472 = vunpack.c.l.bf16 %v2975
          %v3473 = vunpack.c.h.bf16 %v2975
          %v3474 = vunpack.c.l.bf16 %v2976
          %v3475 = vunpack.c.h.bf16 %v2976
          %v3476 = vunpack.c.l.bf16 %v2977
          %v3477 = vunpack.c.h.bf16 %v2977
          %v3478 = vunpack.c.l.bf16 %v2978
          %v3479 = vunpack.c.h.bf16 %v2978
          %v3480 = vunpack.c.l.bf16 %v2979
          %v3481 = vunpack.c.h.bf16 %v2979
          %v3482 = vunpack.c.l.bf16 %v2980
          %v3483 = vunpack.c.h.bf16 %v2980
          %v3484 = vunpack.c.l.bf16 %v2981
          %v3485 = vunpack.c.h.bf16 %v2981
          %v3486 = vunpack.c.l.bf16 %v2982
          %v3487 = vunpack.c.h.bf16 %v2982
          %v3488 = vunpack.c.l.bf16 %v2983
          %v3489 = vunpack.c.h.bf16 %v2983
          %v3490 = vunpack.c.l.bf16 %v2984
          %v3491 = vunpack.c.h.bf16 %v2984
          %v3492 = vunpack.c.l.bf16 %v2985
          %v3493 = vunpack.c.h.bf16 %v2985
          %v3494 = vunpack.c.l.bf16 %v2986
          %v3495 = vunpack.c.h.bf16 %v2986
          %v3496 = vunpack.c.l.bf16 %v2987
          %v3497 = vunpack.c.h.bf16 %v2987
          %v3498 = vunpack.c.l.bf16 %v2988
          %v3499 = vunpack.c.h.bf16 %v2988
          %v3500 = vunpack.c.l.bf16 %v2989
          %v3501 = vunpack.c.h.bf16 %v2989
          %v3502 = vunpack.c.l.bf16 %v2990
          %v3503 = vunpack.c.h.bf16 %v2990
          %v3504 = vunpack.c.l.bf16 %v2991
          %v3505 = vunpack.c.h.bf16 %v2991
          %v3506 = vunpack.c.l.bf16 %v2992
          %v3507 = vunpack.c.h.bf16 %v2992
          %v3508 = vunpack.c.l.bf16 %v2993
          %v3509 = vunpack.c.h.bf16 %v2993
          %v3510 = vunpack.c.l.bf16 %v2994
          %v3511 = vunpack.c.h.bf16 %v2994
          %v3512 = vunpack.c.l.bf16 %v2995
          %v3513 = vunpack.c.h.bf16 %v2995
          %v3514 = vunpack.c.l.bf16 %v2996
          %v3515 = vunpack.c.h.bf16 %v2996
          %v3516 = vunpack.c.l.bf16 %v2997
          %v3517 = vunpack.c.h.bf16 %v2997
          %v3518 = vunpack.c.l.bf16 %v2998
          %v3519 = vunpack.c.h.bf16 %v2998
          %v3520 = vunpack.c.l.bf16 %v2999
          %v3521 = vunpack.c.h.bf16 %v2999
          %v3522 = vunpack.c.l.bf16 %v3000
          %v3523 = vunpack.c.h.bf16 %v3000
          %v3524 = vunpack.c.l.bf16 %v3001
          %v3525 = vunpack.c.h.bf16 %v3001
          %v3526 = vunpack.c.l.bf16 %v3002
          %v3527 = vunpack.c.h.bf16 %v3002
          %v3528 = vunpack.c.l.bf16 %v3003
          %v3529 = vunpack.c.h.bf16 %v3003
          %v3530 = vunpack.c.l.bf16 %v3004
          %v3531 = vunpack.c.h.bf16 %v3004
          %v3532 = vunpack.c.l.bf16 %v3005
          %v3533 = vunpack.c.h.bf16 %v3005
          %v3534 = vunpack.c.l.bf16 %v3006
          %v3535 = vunpack.c.h.bf16 %v3006
          %v3536 = vunpack.c.l.bf16 %v3007
          %v3537 = vunpack.c.h.bf16 %v3007
          %v3538 = vunpack.c.l.bf16 %v3008
          %v3539 = vunpack.c.h.bf16 %v3008
          %v3540 = vunpack.c.l.bf16 %v3009
          %v3541 = vunpack.c.h.bf16 %v3009
          %v3542 = vunpack.c.l.bf16 %v3010
          %v3543 = vunpack.c.h.bf16 %v3010
          %v3544 = vunpack.c.l.bf16 %v3011
          %v3545 = vunpack.c.h.bf16 %v3011
          %v3546 = vunpack.c.l.bf16 %v3012
          %v3547 = vunpack.c.h.bf16 %v3012
          %v3548 = vunpack.c.l.bf16 %v3013
          %v3549 = vunpack.c.h.bf16 %v3013
          %v3550 = vunpack.c.l.bf16 %v3014
          %v3551 = vunpack.c.h.bf16 %v3014
          %v3552 = vunpack.c.l.bf16 %v3015
          %v3553 = vunpack.c.h.bf16 %v3015
          %v3554 = vunpack.c.l.bf16 %v3016
          %v3555 = vunpack.c.h.bf16 %v3016
          %v3556 = vunpack.c.l.bf16 %v3017
          %v3557 = vunpack.c.h.bf16 %v3017
          %v3558 = vunpack.c.l.bf16 %v3018
          %v3559 = vunpack.c.h.bf16 %v3018
          %v3560 = vunpack.c.l.bf16 %v3019
          %v3561 = vunpack.c.h.bf16 %v3019
          %v3562 = vunpack.c.l.bf16 %v3020
          %v3563 = vunpack.c.h.bf16 %v3020
          %v3564 = vunpack.c.l.bf16 %v3021
          %v3565 = vunpack.c.h.bf16 %v3021
          %v3566 = vunpack.c.l.bf16 %v3022
          %v3567 = vunpack.c.h.bf16 %v3022
          %v3568 = vunpack.c.l.bf16 %v3023
          %v3569 = vunpack.c.h.bf16 %v3023
          %v3570 = vunpack.c.l.bf16 %v3024
          %v3571 = vunpack.c.h.bf16 %v3024
          %v3572 = vunpack.c.l.bf16 %v3025
          %v3573 = vunpack.c.h.bf16 %v3025
          %v3574 = vunpack.c.l.bf16 %v3026
          %v3575 = vunpack.c.h.bf16 %v3026
          %v3576 = vunpack.c.l.bf16 %v3027
          %v3577 = vunpack.c.h.bf16 %v3027
          %v3578 = vunpack.c.l.bf16 %v3028
          %v3579 = vunpack.c.h.bf16 %v3028
          %v3580 = vunpack.c.l.bf16 %v3029
          %v3581 = vunpack.c.h.bf16 %v3029
          %v3582 = vunpack.c.l.bf16 %v3030
          %v3583 = vunpack.c.h.bf16 %v3030
          %v3584 = vunpack.c.l.bf16 %v3031
          %v3585 = vunpack.c.h.bf16 %v3031
          %v3586 = vunpack.c.l.bf16 %v3032
          %v3587 = vunpack.c.h.bf16 %v3032
          %v3588 = vunpack.c.l.bf16 %v3033
          %v3589 = vunpack.c.h.bf16 %v3033
          %v3590 = vunpack.c.l.bf16 %v3034
          %v3591 = vunpack.c.h.bf16 %v3034
          %v3592 = vunpack.c.l.bf16 %v3035
          %v3593 = vunpack.c.h.bf16 %v3035
          %v3594 = vunpack.c.l.bf16 %v3036
          %v3595 = vunpack.c.h.bf16 %v3036
          %v3596 = vunpack.c.l.bf16 %v3037
          %v3597 = vunpack.c.h.bf16 %v3037
          %v3598 = vunpack.c.l.bf16 %v3038
          %v3599 = vunpack.c.h.bf16 %v3038
          %v3600 = vunpack.c.l.bf16 %v3039
          %v3601 = vunpack.c.h.bf16 %v3039
          %v3602 = vunpack.c.l.bf16 %v3040
          %v3603 = vunpack.c.h.bf16 %v3040
          %v3604 = vunpack.c.l.bf16 %v3041
          %v3605 = vunpack.c.h.bf16 %v3041
          %v3606 = vunpack.c.l.bf16 %v3042
          %v3607 = vunpack.c.h.bf16 %v3042
          %v3608 = vunpack.c.l.bf16 %v3043
          %v3609 = vunpack.c.h.bf16 %v3043
          %v3610 = vunpack.c.l.bf16 %v3044
          %v3611 = vunpack.c.h.bf16 %v3044
          %v3612 = vunpack.c.l.bf16 %v3045
          %v3613 = vunpack.c.h.bf16 %v3045
          %v3614 = vunpack.c.l.bf16 %v3046
          %v3615 = vunpack.c.h.bf16 %v3046
          %v3616 = vunpack.c.l.bf16 %v3047
          %v3617 = vunpack.c.h.bf16 %v3047
          %v3618 = vunpack.c.l.bf16 %v3048
          %v3619 = vunpack.c.h.bf16 %v3048
          %v3620 = vunpack.c.l.bf16 %v3049
          %v3621 = vunpack.c.h.bf16 %v3049
          %v3622 = vunpack.c.l.bf16 %v3050
          %v3623 = vunpack.c.h.bf16 %v3050
          %v3624 = vunpack.c.l.bf16 %v3051
          %v3625 = vunpack.c.h.bf16 %v3051
          %v3626 = vunpack.c.l.bf16 %v3052
          %v3627 = vunpack.c.h.bf16 %v3052
          %v3628 = vunpack.c.l.bf16 %v3053
          %v3629 = vunpack.c.h.bf16 %v3053
          %v3630 = vld [vmem:[#allocation8] sm:$0x3f]
          %v3631 = vld [vmem:[%s2] sm:$0xff]
          %v3632 = vld [vmem:[%s2 + $0x8] sm:$0xf]
          %v3639 = vrot.slane %v1896, 2
          %v3640 = vrot.slane %v1897, 2
          %v3641 = vrot.slane %v1898, 2
          %v3642 = vrot.slane %v1899, 2
          %v3643 = vrot.slane %v1900, 2
          %v3644 = vrot.slane %v1901, 2
          %vm3651 = vcmask 1040384
          %v3652 = vsel %vm3651, %v1896, %v3639
          %v3653 = vsel %vm3651, %v1897, %v3640
          %v3654 = vsel %vm3651, %v1898, %v3641
          %v3655 = vsel %vm3651, %v1899, %v3642
          %v3656 = vsel %vm3651, %v1900, %v3643
          %v3657 = vsel %vm3651, %v1901, %v3644
          %v3660 = vcombine.high %v3631, %v3631
          %v3662 = vunpack.c.l.s4 1983009808
          %v3663 = vunpack.c.0.s8 %v3662
          %v3664 = vlaneseq
          %v3665 = vshrl.u32 %v3664, 7
          %v3666 = vsub.s32 %v3663, %v3665
          %v3667 = vrot.slane %v3631, %v3666
          %v3669 = vunpack.c.l.s4 1983009808
          %v3670 = vunpack.c.0.s8 %v3669
          %v3671 = vlaneseq
          %v3672 = vshrl.u32 %v3671, 7
          %v3673 = vsub.s32 %v3670, %v3672
          %v3674 = vrot.slane %v3660, %v3673
          %v3675 = vcombine.high %v3667, %v3667
          %v3676 = vcombine.high %v3674, %v3674
          %v3678 = vunpack.c.l.s4 1983009808
          %v3679 = vunpack.c.0.s8 %v3678
          %v3680 = vlaneseq
          %v3681 = vshrl.u32 %v3680, 7
          %v3682 = vsub.s32 %v3679, %v3681
          %v3683 = vrot.slane %v3632, %v3682
          %v3684 = vcombine.high %v3683, %v3683
          %3691 = vmatprep.subr.mxu0 %v2191
          %3692 = vmatpush1.msra.mxu0 %v2190
          %3693 = vmatprep.subr.mxu0 %v2197
          %3694 = vmatpush1.msra.mxu0 %v2196
          %3695 = vmatprep.subr.mxu0 %v2203
          %3696 = vmatpush1.msra.mxu0 %v2202
          %3697 = vmatprep.subr.mxu0 %v2209
          %3698 = vmatpush1.msra.mxu0 %v2208
          %3699 = vmatprep.subr.mxu0 %v2215
          %3700 = vmatpush1.msra.mxu0 %v2214
          %3701 = vmatprep.subr.mxu0 %v2221
          %3702 = vmatpush1.msra.mxu0 %v2220
          %3703 = vmatprep.subr.mxu0 %v2227
          %3704 = vmatpush1.msra.mxu0 %v2226
          %3705 = vmatprep.subr.mxu0 %v2233
          %3706 = vmatpush1.msra.mxu0 %v2232
          %3707 = vmatprep.subr.mxu0 %v2239
          %3708 = vmatpush1.msra.mxu0 %v2238
          %3709 = vmatprep.subr.mxu0 %v2245
          %3710 = vmatpush1.msra.mxu0 %v2244
          %3711 = vmatprep.subr.mxu0 %v2251
          %3712 = vmatpush1.msra.mxu0 %v2250
          %3713 = vmatprep.subr.mxu0 %v2257
          %3714 = vmatpush1.msra.mxu0 %v2256
          %3715 = vmatprep.subr.mxu0 %v2263
          %3716 = vmatpush1.msra.mxu0 %v2262
          %3717 = vmatprep.subr.mxu0 %v2269
          %3718 = vmatpush1.msra.mxu0 %v2268
          %3719 = vmatprep.subr.mxu0 %v2275
          %3720 = vmatpush1.msra.mxu0 %v2274
          %3721 = vmatprep.subr.mxu0 %v2281
          %3722 = vmatpush1.msra.mxu0 %v2280
          %3723 = vmatprep.subr.mxu0 %v2287
          %3724 = vmatpush1.msra.mxu0 %v2286
          %3725 = vmatprep.subr.mxu0 %v2293
          %3726 = vmatpush1.msra.mxu0 %v2292
          %3727 = vmatprep.subr.mxu0 %v2299
          %3728 = vmatpush1.msra.mxu0 %v2298
          %3729 = vmatprep.subr.mxu0 %v2305
          %3730 = vmatpush1.msra.mxu0 %v2304
          %3731 = vmatprep.subr.mxu0 %v2311
          %3732 = vmatpush1.msra.mxu0 %v2310
          %3733 = vmatprep.subr.mxu0 %v2317
          %3734 = vmatpush1.msra.mxu0 %v2316
          %3735 = vmatprep.subr.mxu0 %v2323
          %3736 = vmatpush1.msra.mxu0 %v2322
          %3737 = vmatprep.subr.mxu0 %v2329
          %3738 = vmatpush1.msra.mxu0 %v2328
          %3739 = vmatprep.subr.mxu0 %v2335
          %3740 = vmatpush1.msra.mxu0 %v2334
          %3741 = vmatprep.subr.mxu0 %v2341
          %3742 = vmatpush1.msra.mxu0 %v2340
          %3743 = vmatprep.subr.mxu0 %v2347
          %3744 = vmatpush1.msra.mxu0 %v2346
          %3745 = vmatprep.subr.mxu0 %v2353
          %3746 = vmatpush1.msra.mxu0 %v2352
          %3747 = vmatprep.subr.mxu0 %v2359
          %3748 = vmatpush1.msra.mxu0 %v2358
          %3749 = vmatprep.subr.mxu0 %v2365
          %3750 = vmatpush1.msra.mxu0 %v2364
          %3751 = vmatprep.subr.mxu0 %v2371
          %3752 = vmatpush1.msra.mxu0 %v2370
          %3753 = vmatprep.subr.mxu0 %v2377
          %3754 = vmatpush1.msra.mxu0 %v2376
          %3755 = vmatprep.mubr.f32.mxu0 %v3675
          %3756 = vmatmul.mubr.f32.gmra.mrb[0].mxu0 %v3667
          %v3757 = vpop.f32.mrb[0].mxu0
          %v3758 = vadd.f32 0.0, %v3757
          %v3759 = vpop.f32.mrb[0].mxu0
          %v3760 = vadd.f32 0.0, %v3759
          %3761 = vdwg.mxu0
          %3762 = vmatprep.subr.mxu0 %v2383
          %3763 = vmatpush1.msra.mxu0 %v2382
          %3764 = vmatprep.subr.mxu0 %v2389
          %3765 = vmatpush1.msra.mxu0 %v2388
          %3766 = vmatprep.subr.mxu0 %v2395
          %3767 = vmatpush1.msra.mxu0 %v2394
          %3768 = vmatprep.subr.mxu0 %v2401
          %3769 = vmatpush1.msra.mxu0 %v2400
          %3770 = vmatprep.subr.mxu0 %v2407
          %3771 = vmatpush1.msra.mxu0 %v2406
          %3772 = vmatprep.subr.mxu0 %v2413
          %3773 = vmatpush1.msra.mxu0 %v2412
          %3774 = vmatprep.subr.mxu0 %v2419
          %3775 = vmatpush1.msra.mxu0 %v2418
          %3776 = vmatprep.subr.mxu0 %v2425
          %3777 = vmatpush1.msra.mxu0 %v2424
          %3778 = vmatprep.subr.mxu0 %v2431
          %3779 = vmatpush1.msra.mxu0 %v2430
          %3780 = vmatprep.subr.mxu0 %v2437
          %3781 = vmatpush1.msra.mxu0 %v2436
          %3782 = vmatprep.subr.mxu0 %v2443
          %3783 = vmatpush1.msra.mxu0 %v2442
          %3784 = vmatprep.subr.mxu0 %v2449
          %3785 = vmatpush1.msra.mxu0 %v2448
          %3786 = vmatprep.subr.mxu0 %v2455
          %3787 = vmatpush1.msra.mxu0 %v2454
          %3788 = vmatprep.subr.mxu0 %v2461
          %3789 = vmatpush1.msra.mxu0 %v2460
          %3790 = vmatprep.subr.mxu0 %v2467
          %3791 = vmatpush1.msra.mxu0 %v2466
          %3792 = vmatprep.subr.mxu0 %v2473
          %3793 = vmatpush1.msra.mxu0 %v2472
          %3794 = vmatprep.subr.mxu0 %v2479
          %3795 = vmatpush1.msra.mxu0 %v2478
          %3796 = vmatprep.subr.mxu0 %v2485
          %3797 = vmatpush1.msra.mxu0 %v2484
          %3798 = vmatprep.subr.mxu0 %v2491
          %3799 = vmatpush1.msra.mxu0 %v2490
          %3800 = vmatprep.subr.mxu0 %v2497
          %3801 = vmatpush1.msra.mxu0 %v2496
          %3802 = vmatprep.subr.mxu0 %v2503
          %3803 = vmatpush1.msra.mxu0 %v2502
          %3804 = vmatprep.subr.mxu0 %v2509
          %3805 = vmatpush1.msra.mxu0 %v2508
          %3806 = vmatprep.subr.mxu0 %v2515
          %3807 = vmatpush1.msra.mxu0 %v2514
          %3808 = vmatprep.subr.mxu0 %v2521
          %3809 = vmatpush1.msra.mxu0 %v2520
          %3810 = vmatprep.subr.mxu0 %v2527
          %3811 = vmatpush1.msra.mxu0 %v2526
          %3812 = vmatprep.subr.mxu0 %v2533
          %3813 = vmatpush1.msra.mxu0 %v2532
          %3814 = vmatprep.subr.mxu0 %v2539
          %3815 = vmatpush1.msra.mxu0 %v2538
          %3816 = vmatprep.subr.mxu0 %v2545
          %3817 = vmatpush1.msra.mxu0 %v2544
          %3818 = vmatprep.subr.mxu0 %v2551
          %3819 = vmatpush1.msra.mxu0 %v2550
          %3820 = vmatprep.subr.mxu0 %v2557
          %3821 = vmatpush1.msra.mxu0 %v2556
          %3822 = vmatprep.subr.mxu0 %v2563
          %3823 = vmatpush1.msra.mxu0 %v2562
          %3824 = vmatprep.subr.mxu0 %v2569
          %3825 = vmatpush1.msra.mxu0 %v2568
          %3826 = vmatprep.mubr.f32.mxu0 %v3676
          %3827 = vmatmul.mubr.f32.gmra.mrb[0].mxu0 %v3674
          %v3828 = vpop.f32.mrb[0].mxu0
          %v3829 = vadd.f32 %v3758, %v3828
          %v3830 = vpop.f32.mrb[0].mxu0
          %v3831 = vadd.f32 %v3760, %v3830
          %3832 = vdwg.mxu0
          %3833 = vmatprep.subr.mxu0 %v2575
          %3834 = vmatpush1.msra.mxu0 %v2574
          %3835 = vmatprep.subr.mxu0 %v2581
          %3836 = vmatpush1.msra.mxu0 %v2580
          %3837 = vmatprep.subr.mxu0 %v2587
          %3838 = vmatpush1.msra.mxu0 %v2586
          %3839 = vmatprep.subr.mxu0 %v2593
          %3840 = vmatpush1.msra.mxu0 %v2592
          %3841 = vmatprep.subr.mxu0 %v2599
          %3842 = vmatpush1.msra.mxu0 %v2598
          %3843 = vmatprep.subr.mxu0 %v2605
          %3844 = vmatpush1.msra.mxu0 %v2604
          %3845 = vmatprep.subr.mxu0 %v2611
          %3846 = vmatpush1.msra.mxu0 %v2610
          %3847 = vmatprep.subr.mxu0 %v2617
          %3848 = vmatpush1.msra.mxu0 %v2616
          %3849 = vmatprep.subr.mxu0 %v2623
          %3850 = vmatpush1.msra.mxu0 %v2622
          %3851 = vmatprep.subr.mxu0 %v2629
          %3852 = vmatpush1.msra.mxu0 %v2628
          %3853 = vmatprep.subr.mxu0 %v2635
          %3854 = vmatpush1.msra.mxu0 %v2634
          %3855 = vmatprep.subr.mxu0 %v2641
          %3856 = vmatpush1.msra.mxu0 %v2640
          %3857 = vmatprep.subr.mxu0 %v2647
          %3858 = vmatpush1.msra.mxu0 %v2646
          %3859 = vmatprep.subr.mxu0 %v2653
          %3860 = vmatpush1.msra.mxu0 %v2652
          %3861 = vmatprep.subr.mxu0 %v2659
          %3862 = vmatpush1.msra.mxu0 %v2658
          %3863 = vmatprep.subr.mxu0 %v2665
          %3864 = vmatpush1.msra.mxu0 %v2664
          %3865 = vmatprep.subr.mxu0 %v2671
          %3866 = vmatpush1.msra.mxu0 %v2670
          %3867 = vmatprep.subr.mxu0 %v2677
          %3868 = vmatpush1.msra.mxu0 %v2676
          %3869 = vmatprep.subr.mxu0 %v2683
          %3870 = vmatpush1.msra.mxu0 %v2682
          %3871 = vmatprep.subr.mxu0 %v2689
          %3872 = vmatpush1.msra.mxu0 %v2688
          %3873 = vmatprep.subr.mxu0 %v2695
          %3874 = vmatpush1.msra.mxu0 %v2694
          %3875 = vmatprep.subr.mxu0 %v2701
          %3876 = vmatpush1.msra.mxu0 %v2700
          %3877 = vmatprep.subr.mxu0 %v2707
          %3878 = vmatpush1.msra.mxu0 %v2706
          %3879 = vmatprep.subr.mxu0 %v2713
          %3880 = vmatpush1.msra.mxu0 %v2712
          %3881 = vmatprep.subr.mxu0 %v2719
          %3882 = vmatpush1.msra.mxu0 %v2718
          %3883 = vmatprep.subr.mxu0 %v2725
          %3884 = vmatpush1.msra.mxu0 %v2724
          %3885 = vmatprep.subr.mxu0 %v2731
          %3886 = vmatpush1.msra.mxu0 %v2730
          %3887 = vmatprep.subr.mxu0 %v2737
          %3888 = vmatpush1.msra.mxu0 %v2736
          %3889 = vmatprep.subr.mxu0 %v2743
          %3890 = vmatpush1.msra.mxu0 %v2742
          %3891 = vmatprep.subr.mxu0 %v2749
          %3892 = vmatpush1.msra.mxu0 %v2748
          %3893 = vmatprep.subr.mxu0 %v2755
          %3894 = vmatpush1.msra.mxu0 %v2754
          %3895 = vmatprep.subr.mxu0 %v2761
          %3896 = vmatpush1.msra.mxu0 %v2760
          %3897 = vmatprep.mubr.f32.mxu0 %v3684
          %3898 = vmatmul.mubr.f32.gmra.mrb[0].mxu0 %v3683
          %v3899 = vpop.f32.mrb[0].mxu0
          %v3900 = vadd.f32 %v3829, %v3899
          %v3901 = vpop.f32.mrb[0].mxu0
          %v3902 = vadd.f32 %v3831, %v3901
          %3903 = vdwg.mxu0
          %3904 = vmatprep.subr.mxu0 %v2193
          %3905 = vmatpush1.msra.mxu0 %v2192
          %3906 = vmatprep.subr.mxu0 %v2199
          %3907 = vmatpush1.msra.mxu0 %v2198
          %3908 = vmatprep.subr.mxu0 %v2205
          %3909 = vmatpush1.msra.mxu0 %v2204
          %3910 = vmatprep.subr.mxu0 %v2211
          %3911 = vmatpush1.msra.mxu0 %v2210
          %3912 = vmatprep.subr.mxu0 %v2217
          %3913 = vmatpush1.msra.mxu0 %v2216
          %3914 = vmatprep.subr.mxu0 %v2223
          %3915 = vmatpush1.msra.mxu0 %v2222
          %3916 = vmatprep.subr.mxu0 %v2229
          %3917 = vmatpush1.msra.mxu0 %v2228
          %3918 = vmatprep.subr.mxu0 %v2235
          %3919 = vmatpush1.msra.mxu0 %v2234
          %3920 = vmatprep.subr.mxu0 %v2241
          %3921 = vmatpush1.msra.mxu0 %v2240
          %3922 = vmatprep.subr.mxu0 %v2247
          %3923 = vmatpush1.msra.mxu0 %v2246
          %3924 = vmatprep.subr.mxu0 %v2253
          %3925 = vmatpush1.msra.mxu0 %v2252
          %3926 = vmatprep.subr.mxu0 %v2259
          %3927 = vmatpush1.msra.mxu0 %v2258
          %3928 = vmatprep.subr.mxu0 %v2265
          %3929 = vmatpush1.msra.mxu0 %v2264
          %3930 = vmatprep.subr.mxu0 %v2271
          %3931 = vmatpush1.msra.mxu0 %v2270
          %3932 = vmatprep.subr.mxu0 %v2277
          %3933 = vmatpush1.msra.mxu0 %v2276
          %3934 = vmatprep.subr.mxu0 %v2283
          %3935 = vmatpush1.msra.mxu0 %v2282
          %3936 = vmatprep.subr.mxu0 %v2289
          %3937 = vmatpush1.msra.mxu0 %v2288
          %3938 = vmatprep.subr.mxu0 %v2295
          %3939 = vmatpush1.msra.mxu0 %v2294
          %3940 = vmatprep.subr.mxu0 %v2301
          %3941 = vmatpush1.msra.mxu0 %v2300
          %3942 = vmatprep.subr.mxu0 %v2307
          %3943 = vmatpush1.msra.mxu0 %v2306
          %3944 = vmatprep.subr.mxu0 %v2313
          %3945 = vmatpush1.msra.mxu0 %v2312
          %3946 = vmatprep.subr.mxu0 %v2319
          %3947 = vmatpush1.msra.mxu0 %v2318
          %3948 = vmatprep.subr.mxu0 %v2325
          %3949 = vmatpush1.msra.mxu0 %v2324
          %3950 = vmatprep.subr.mxu0 %v2331
          %3951 = vmatpush1.msra.mxu0 %v2330
          %3952 = vmatprep.subr.mxu0 %v2337
          %3953 = vmatpush1.msra.mxu0 %v2336
          %3954 = vmatprep.subr.mxu0 %v2343
          %3955 = vmatpush1.msra.mxu0 %v2342
          %3956 = vmatprep.subr.mxu0 %v2349
          %3957 = vmatpush1.msra.mxu0 %v2348
          %3958 = vmatprep.subr.mxu0 %v2355
          %3959 = vmatpush1.msra.mxu0 %v2354
          %3960 = vmatprep.subr.mxu0 %v2361
          %3961 = vmatpush1.msra.mxu0 %v2360
          %3962 = vmatprep.subr.mxu0 %v2367
          %3963 = vmatpush1.msra.mxu0 %v2366
          %3964 = vmatprep.subr.mxu0 %v2373
          %3965 = vmatpush1.msra.mxu0 %v2372
          %3966 = vmatprep.subr.mxu0 %v2379
          %3967 = vmatpush1.msra.mxu0 %v2378
          %3968 = vmatprep.mubr.f32.mxu0 %v3675
          %3969 = vmatmul.mubr.f32.gmra.mrb[0].mxu0 %v3667
          %v3970 = vpop.f32.mrb[0].mxu0
          %v3971 = vadd.f32 0.0, %v3970
          %v3972 = vpop.f32.mrb[0].mxu0
          %v3973 = vadd.f32 0.0, %v3972
          %3974 = vdwg.mxu0
          %3975 = vmatprep.subr.mxu0 %v2385
          %3976 = vmatpush1.msra.mxu0 %v2384
          %3977 = vmatprep.subr.mxu0 %v2391
          %3978 = vmatpush1.msra.mxu0 %v2390
          %3979 = vmatprep.subr.mxu0 %v2397
          %3980 = vmatpush1.msra.mxu0 %v2396
          %3981 = vmatprep.subr.mxu0 %v2403
          %3982 = vmatpush1.msra.mxu0 %v2402
          %3983 = vmatprep.subr.mxu0 %v2409
          %3984 = vmatpush1.msra.mxu0 %v2408
          %3985 = vmatprep.subr.mxu0 %v2415
          %3986 = vmatpush1.msra.mxu0 %v2414
          %3987 = vmatprep.subr.mxu0 %v2421
          %3988 = vmatpush1.msra.mxu0 %v2420
          %3989 = vmatprep.subr.mxu0 %v2427
          %3990 = vmatpush1.msra.mxu0 %v2426
          %3991 = vmatprep.subr.mxu0 %v2433
          %3992 = vmatpush1.msra.mxu0 %v2432
          %3993 = vmatprep.subr.mxu0 %v2439
          %3994 = vmatpush1.msra.mxu0 %v2438
          %3995 = vmatprep.subr.mxu0 %v2445
          %3996 = vmatpush1.msra.mxu0 %v2444
          %3997 = vmatprep.subr.mxu0 %v2451
          %3998 = vmatpush1.msra.mxu0 %v2450
          %3999 = vmatprep.subr.mxu0 %v2457
          %4000 = vmatpush1.msra.mxu0 %v2456
          %4001 = vmatprep.subr.mxu0 %v2463
          %4002 = vmatpush1.msra.mxu0 %v2462
          %4003 = vmatprep.subr.mxu0 %v2469
          %4004 = vmatpush1.msra.mxu0 %v2468
          %4005 = vmatprep.subr.mxu0 %v2475
          %4006 = vmatpush1.msra.mxu0 %v2474
          %4007 = vmatprep.subr.mxu0 %v2481
          %4008 = vmatpush1.msra.mxu0 %v2480
          %4009 = vmatprep.subr.mxu0 %v2487
          %4010 = vmatpush1.msra.mxu0 %v2486
          %4011 = vmatprep.subr.mxu0 %v2493
          %4012 = vmatpush1.msra.mxu0 %v2492
          %4013 = vmatprep.subr.mxu0 %v2499
          %4014 = vmatpush1.msra.mxu0 %v2498
          %4015 = vmatprep.subr.mxu0 %v2505
          %4016 = vmatpush1.msra.mxu0 %v2504
          %4017 = vmatprep.subr.mxu0 %v2511
          %4018 = vmatpush1.msra.mxu0 %v2510
          %4019 = vmatprep.subr.mxu0 %v2517
          %4020 = vmatpush1.msra.mxu0 %v2516
          %4021 = vmatprep.subr.mxu0 %v2523
          %4022 = vmatpush1.msra.mxu0 %v2522
          %4023 = vmatprep.subr.mxu0 %v2529
          %4024 = vmatpush1.msra.mxu0 %v2528
          %4025 = vmatprep.subr.mxu0 %v2535
          %4026 = vmatpush1.msra.mxu0 %v2534
          %4027 = vmatprep.subr.mxu0 %v2541
          %4028 = vmatpush1.msra.mxu0 %v2540
          %4029 = vmatprep.subr.mxu0 %v2547
          %4030 = vmatpush1.msra.mxu0 %v2546
          %4031 = vmatprep.subr.mxu0 %v2553
          %4032 = vmatpush1.msra.mxu0 %v2552
          %4033 = vmatprep.subr.mxu0 %v2559
          %4034 = vmatpush1.msra.mxu0 %v2558
          %4035 = vmatprep.subr.mxu0 %v2565
          %4036 = vmatpush1.msra.mxu0 %v2564
          %4037 = vmatprep.subr.mxu0 %v2571
          %4038 = vmatpush1.msra.mxu0 %v2570
          %4039 = vmatprep.mubr.f32.mxu0 %v3676
          %4040 = vmatmul.mubr.f32.gmra.mrb[0].mxu0 %v3674
          %v4041 = vpop.f32.mrb[0].mxu0
          %v4042 = vadd.f32 %v3971, %v4041
          %v4043 = vpop.f32.mrb[0].mxu0
          %v4044 = vadd.f32 %v3973, %v4043
          %4045 = vdwg.mxu0
          %4046 = vmatprep.subr.mxu0 %v2577
          %4047 = vmatpush1.msra.mxu0 %v2576
          %4048 = vmatprep.subr.mxu0 %v2583
          %4049 = vmatpush1.msra.mxu0 %v2582
          %4050 = vmatprep.subr.mxu0 %v2589
          %4051 = vmatpush1.msra.mxu0 %v2588
          %4052 = vmatprep.subr.mxu0 %v2595
          %4053 = vmatpush1.msra.mxu0 %v2594
          %4054 = vmatprep.subr.mxu0 %v2601
          %4055 = vmatpush1.msra.mxu0 %v2600
          %4056 = vmatprep.subr.mxu0 %v2607
          %4057 = vmatpush1.msra.mxu0 %v2606
          %4058 = vmatprep.subr.mxu0 %v2613
          %4059 = vmatpush1.msra.mxu0 %v2612
          %4060 = vmatprep.subr.mxu0 %v2619
          %4061 = vmatpush1.msra.mxu0 %v2618
          %4062 = vmatprep.subr.mxu0 %v2625
          %4063 = vmatpush1.msra.mxu0 %v2624
          %4064 = vmatprep.subr.mxu0 %v2631
          %4065 = vmatpush1.msra.mxu0 %v2630
          %4066 = vmatprep.subr.mxu0 %v2637
          %4067 = vmatpush1.msra.mxu0 %v2636
          %4068 = vmatprep.subr.mxu0 %v2643
          %4069 = vmatpush1.msra.mxu0 %v2642
          %4070 = vmatprep.subr.mxu0 %v2649
          %4071 = vmatpush1.msra.mxu0 %v2648
          %4072 = vmatprep.subr.mxu0 %v2655
          %4073 = vmatpush1.msra.mxu0 %v2654
          %4074 = vmatprep.subr.mxu0 %v2661
          %4075 = vmatpush1.msra.mxu0 %v2660
          %4076 = vmatprep.subr.mxu0 %v2667
          %4077 = vmatpush1.msra.mxu0 %v2666
          %4078 = vmatprep.subr.mxu0 %v2673
          %4079 = vmatpush1.msra.mxu0 %v2672
          %4080 = vmatprep.subr.mxu0 %v2679
          %4081 = vmatpush1.msra.mxu0 %v2678
          %4082 = vmatprep.subr.mxu0 %v2685
          %4083 = vmatpush1.msra.mxu0 %v2684
          %4084 = vmatprep.subr.mxu0 %v2691
          %4085 = vmatpush1.msra.mxu0 %v2690
          %4086 = vmatprep.subr.mxu0 %v2697
          %4087 = vmatpush1.msra.mxu0 %v2696
          %4088 = vmatprep.subr.mxu0 %v2703
          %4089 = vmatpush1.msra.mxu0 %v2702
          %4090 = vmatprep.subr.mxu0 %v2709
          %4091 = vmatpush1.msra.mxu0 %v2708
          %4092 = vmatprep.subr.mxu0 %v2715
          %4093 = vmatpush1.msra.mxu0 %v2714
          %4094 = vmatprep.subr.mxu0 %v2721
          %4095 = vmatpush1.msra.mxu0 %v2720
          %4096 = vmatprep.subr.mxu0 %v2727
          %4097 = vmatpush1.msra.mxu0 %v2726
          %4098 = vmatprep.subr.mxu0 %v2733
          %4099 = vmatpush1.msra.mxu0 %v2732
          %4100 = vmatprep.subr.mxu0 %v2739
          %4101 = vmatpush1.msra.mxu0 %v2738
          %4102 = vmatprep.subr.mxu0 %v2745
          %4103 = vmatpush1.msra.mxu0 %v2744
          %4104 = vmatprep.subr.mxu0 %v2751
          %4105 = vmatpush1.msra.mxu0 %v2750
          %4106 = vmatprep.subr.mxu0 %v2757
          %4107 = vmatpush1.msra.mxu0 %v2756
          %4108 = vmatprep.subr.mxu0 %v2763
          %4109 = vmatpush1.msra.mxu0 %v2762
          %4110 = vmatprep.mubr.f32.mxu0 %v3684
          %4111 = vmatmul.mubr.f32.gmra.mrb[0].mxu0 %v3683
          %v4112 = vpop.f32.mrb[0].mxu0
          %v4113 = vadd.f32 %v4042, %v4112
          %v4114 = vpop.f32.mrb[0].mxu0
          %v4115 = vadd.f32 %v4044, %v4114
          %4116 = vdwg.mxu0
          %4117 = vmatprep.subr.mxu0 %v2195
          %4118 = vmatpush1.msra.mxu0 %v2194
          %4119 = vmatprep.subr.mxu0 %v2201
          %4120 = vmatpush1.msra.mxu0 %v2200
          %4121 = vmatprep.subr.mxu0 %v2207
          %4122 = vmatpush1.msra.mxu0 %v2206
          %4123 = vmatprep.subr.mxu0 %v2213
          %4124 = vmatpush1.msra.mxu0 %v2212
          %4125 = vmatprep.subr.mxu0 %v2219
          %4126 = vmatpush1.msra.mxu0 %v2218
          %4127 = vmatprep.subr.mxu0 %v2225
          %4128 = vmatpush1.msra.mxu0 %v2224
          %4129 = vmatprep.subr.mxu0 %v2231
          %4130 = vmatpush1.msra.mxu0 %v2230
          %4131 = vmatprep.subr.mxu0 %v2237
          %4132 = vmatpush1.msra.mxu0 %v2236
          %4133 = vmatprep.subr.mxu0 %v2243
          %4134 = vmatpush1.msra.mxu0 %v2242
          %4135 = vmatprep.subr.mxu0 %v2249
          %4136 = vmatpush1.msra.mxu0 %v2248
          %4137 = vmatprep.subr.mxu0 %v2255
          %4138 = vmatpush1.msra.mxu0 %v2254
          %4139 = vmatprep.subr.mxu0 %v2261
          %4140 = vmatpush1.msra.mxu0 %v2260
          %4141 = vmatprep.subr.mxu0 %v2267
          %4142 = vmatpush1.msra.mxu0 %v2266
          %4143 = vmatprep.subr.mxu0 %v2273
          %4144 = vmatpush1.msra.mxu0 %v2272
          %4145 = vmatprep.subr.mxu0 %v2279
          %4146 = vmatpush1.msra.mxu0 %v2278
          %4147 = vmatprep.subr.mxu0 %v2285
          %4148 = vmatpush1.msra.mxu0 %v2284
          %4149 = vmatprep.subr.mxu0 %v2291
          %4150 = vmatpush1.msra.mxu0 %v2290
          %4151 = vmatprep.subr.mxu0 %v2297
          %4152 = vmatpush1.msra.mxu0 %v2296
          %4153 = vmatprep.subr.mxu0 %v2303
          %4154 = vmatpush1.msra.mxu0 %v2302
          %4155 = vmatprep.subr.mxu0 %v2309
          %4156 = vmatpush1.msra.mxu0 %v2308
          %4157 = vmatprep.subr.mxu0 %v2315
          %4158 = vmatpush1.msra.mxu0 %v2314
          %4159 = vmatprep.subr.mxu0 %v2321
          %4160 = vmatpush1.msra.mxu0 %v2320
          %4161 = vmatprep.subr.mxu0 %v2327
          %4162 = vmatpush1.msra.mxu0 %v2326
          %4163 = vmatprep.subr.mxu0 %v2333
          %4164 = vmatpush1.msra.mxu0 %v2332
          %4165 = vmatprep.subr.mxu0 %v2339
          %4166 = vmatpush1.msra.mxu0 %v2338
          %4167 = vmatprep.subr.mxu0 %v2345
          %4168 = vmatpush1.msra.mxu0 %v2344
          %4169 = vmatprep.subr.mxu0 %v2351
          %4170 = vmatpush1.msra.mxu0 %v2350
          %4171 = vmatprep.subr.mxu0 %v2357
          %4172 = vmatpush1.msra.mxu0 %v2356
          %4173 = vmatprep.subr.mxu0 %v2363
          %4174 = vmatpush1.msra.mxu0 %v2362
          %4175 = vmatprep.subr.mxu0 %v2369
          %4176 = vmatpush1.msra.mxu0 %v2368
          %4177 = vmatprep.subr.mxu0 %v2375
          %4178 = vmatpush1.msra.mxu0 %v2374
          %4179 = vmatprep.subr.mxu0 %v2381
          %4180 = vmatpush1.msra.mxu0 %v2380
          %4181 = vmatprep.mubr.f32.mxu0 %v3675
          %4182 = vmatmul.mubr.f32.gmra.mrb[0].mxu0 %v3667
          %v4183 = vpop.f32.mrb[0].mxu0
          %v4184 = vadd.f32 0.0, %v4183
          %v4185 = vpop.f32.mrb[0].mxu0
          %v4186 = vadd.f32 0.0, %v4185
          %4187 = vdwg.mxu0
          %4188 = vmatprep.subr.mxu0 %v2387
          %4189 = vmatpush1.msra.mxu0 %v2386
          %4190 = vmatprep.subr.mxu0 %v2393
          %4191 = vmatpush1.msra.mxu0 %v2392
          %4192 = vmatprep.subr.mxu0 %v2399
          %4193 = vmatpush1.msra.mxu0 %v2398
          %4194 = vmatprep.subr.mxu0 %v2405
          %4195 = vmatpush1.msra.mxu0 %v2404
          %4196 = vmatprep.subr.mxu0 %v2411
          %4197 = vmatpush1.msra.mxu0 %v2410
          %4198 = vmatprep.subr.mxu0 %v2417
          %4199 = vmatpush1.msra.mxu0 %v2416
          %4200 = vmatprep.subr.mxu0 %v2423
          %4201 = vmatpush1.msra.mxu0 %v2422
          %4202 = vmatprep.subr.mxu0 %v2429
          %4203 = vmatpush1.msra.mxu0 %v2428
          %4204 = vmatprep.subr.mxu0 %v2435
          %4205 = vmatpush1.msra.mxu0 %v2434
          %4206 = vmatprep.subr.mxu0 %v2441
          %4207 = vmatpush1.msra.mxu0 %v2440
          %4208 = vmatprep.subr.mxu0 %v2447
          %4209 = vmatpush1.msra.mxu0 %v2446
          %4210 = vmatprep.subr.mxu0 %v2453
          %4211 = vmatpush1.msra.mxu0 %v2452
          %4212 = vmatprep.subr.mxu0 %v2459
          %4213 = vmatpush1.msra.mxu0 %v2458
          %4214 = vmatprep.subr.mxu0 %v2465
          %4215 = vmatpush1.msra.mxu0 %v2464
          %4216 = vmatprep.subr.mxu0 %v2471
          %4217 = vmatpush1.msra.mxu0 %v2470
          %4218 = vmatprep.subr.mxu0 %v2477
          %4219 = vmatpush1.msra.mxu0 %v2476
          %4220 = vmatprep.subr.mxu0 %v2483
          %4221 = vmatpush1.msra.mxu0 %v2482
          %4222 = vmatprep.subr.mxu0 %v2489
          %4223 = vmatpush1.msra.mxu0 %v2488
          %4224 = vmatprep.subr.mxu0 %v2495
          %4225 = vmatpush1.msra.mxu0 %v2494
          %4226 = vmatprep.subr.mxu0 %v2501
          %4227 = vmatpush1.msra.mxu0 %v2500
          %4228 = vmatprep.subr.mxu0 %v2507
          %4229 = vmatpush1.msra.mxu0 %v2506
          %4230 = vmatprep.subr.mxu0 %v2513
          %4231 = vmatpush1.msra.mxu0 %v2512
          %4232 = vmatprep.subr.mxu0 %v2519
          %4233 = vmatpush1.msra.mxu0 %v2518
          %4234 = vmatprep.subr.mxu0 %v2525
          %4235 = vmatpush1.msra.mxu0 %v2524
          %4236 = vmatprep.subr.mxu0 %v2531
          %4237 = vmatpush1.msra.mxu0 %v2530
          %4238 = vmatprep.subr.mxu0 %v2537
          %4239 = vmatpush1.msra.mxu0 %v2536
          %4240 = vmatprep.subr.mxu0 %v2543
          %4241 = vmatpush1.msra.mxu0 %v2542
          %4242 = vmatprep.subr.mxu0 %v2549
          %4243 = vmatpush1.msra.mxu0 %v2548
          %4244 = vmatprep.subr.mxu0 %v2555
          %4245 = vmatpush1.msra.mxu0 %v2554
          %4246 = vmatprep.subr.mxu0 %v2561
          %4247 = vmatpush1.msra.mxu0 %v2560
          %4248 = vmatprep.subr.mxu0 %v2567
          %4249 = vmatpush1.msra.mxu0 %v2566
          %4250 = vmatprep.subr.mxu0 %v2573
          %4251 = vmatpush1.msra.mxu0 %v2572
          %4252 = vmatprep.mubr.f32.mxu0 %v3676
          %4253 = vmatmul.mubr.f32.gmra.mrb[0].mxu0 %v3674
          %v4254 = vpop.f32.mrb[0].mxu0
          %v4255 = vadd.f32 %v4184, %v4254
          %v4256 = vpop.f32.mrb[0].mxu0
          %v4257 = vadd.f32 %v4186, %v4256
          %4258 = vdwg.mxu0
          %4259 = vmatprep.subr.mxu0 %v2579
          %4260 = vmatpush1.msra.mxu0 %v2578
          %4261 = vmatprep.subr.mxu0 %v2585
          %4262 = vmatpush1.msra.mxu0 %v2584
          %4263 = vmatprep.subr.mxu0 %v2591
          %4264 = vmatpush1.msra.mxu0 %v2590
          %4265 = vmatprep.subr.mxu0 %v2597
          %4266 = vmatpush1.msra.mxu0 %v2596
          %4267 = vmatprep.subr.mxu0 %v2603
          %4268 = vmatpush1.msra.mxu0 %v2602
          %4269 = vmatprep.subr.mxu0 %v2609
          %4270 = vmatpush1.msra.mxu0 %v2608
          %4271 = vmatprep.subr.mxu0 %v2615
          %4272 = vmatpush1.msra.mxu0 %v2614
          %4273 = vmatprep.subr.mxu0 %v2621
          %4274 = vmatpush1.msra.mxu0 %v2620
          %4275 = vmatprep.subr.mxu0 %v2627
          %4276 = vmatpush1.msra.mxu0 %v2626
          %4277 = vmatprep.subr.mxu0 %v2633
          %4278 = vmatpush1.msra.mxu0 %v2632
          %4279 = vmatprep.subr.mxu0 %v2639
          %4280 = vmatpush1.msra.mxu0 %v2638
          %4281 = vmatprep.subr.mxu0 %v2645
          %4282 = vmatpush1.msra.mxu0 %v2644
          %4283 = vmatprep.subr.mxu0 %v2651
          %4284 = vmatpush1.msra.mxu0 %v2650
          %4285 = vmatprep.subr.mxu0 %v2657
          %4286 = vmatpush1.msra.mxu0 %v2656
          %4287 = vmatprep.subr.mxu0 %v2663
          %4288 = vmatpush1.msra.mxu0 %v2662
          %4289 = vmatprep.subr.mxu0 %v2669
          %4290 = vmatpush1.msra.mxu0 %v2668
          %4291 = vmatprep.subr.mxu0 %v2675
          %4292 = vmatpush1.msra.mxu0 %v2674
          %4293 = vmatprep.subr.mxu0 %v2681
          %4294 = vmatpush1.msra.mxu0 %v2680
          %4295 = vmatprep.subr.mxu0 %v2687
          %4296 = vmatpush1.msra.mxu0 %v2686
          %4297 = vmatprep.subr.mxu0 %v2693
          %4298 = vmatpush1.msra.mxu0 %v2692
          %4299 = vmatprep.subr.mxu0 %v2699
          %4300 = vmatpush1.msra.mxu0 %v2698
          %4301 = vmatprep.subr.mxu0 %v2705
          %4302 = vmatpush1.msra.mxu0 %v2704
          %4303 = vmatprep.subr.mxu0 %v2711
          %4304 = vmatpush1.msra.mxu0 %v2710
          %4305 = vmatprep.subr.mxu0 %v2717
          %4306 = vmatpush1.msra.mxu0 %v2716
          %4307 = vmatprep.subr.mxu0 %v2723
          %4308 = vmatpush1.msra.mxu0 %v2722
          %4309 = vmatprep.subr.mxu0 %v2729
          %4310 = vmatpush1.msra.mxu0 %v2728
          %4311 = vmatprep.subr.mxu0 %v2735
          %4312 = vmatpush1.msra.mxu0 %v2734
          %4313 = vmatprep.subr.mxu0 %v2741
          %4314 = vmatpush1.msra.mxu0 %v2740
          %4315 = vmatprep.subr.mxu0 %v2747
          %4316 = vmatpush1.msra.mxu0 %v2746
          %4317 = vmatprep.subr.mxu0 %v2753
          %4318 = vmatpush1.msra.mxu0 %v2752
          %4319 = vmatprep.subr.mxu0 %v2759
          %4320 = vmatpush1.msra.mxu0 %v2758
          %4321 = vmatprep.subr.mxu0 %v2765
          %4322 = vmatpush1.msra.mxu0 %v2764
          %4323 = vmatprep.mubr.f32.mxu0 %v3684
          %4324 = vmatmul.mubr.f32.gmra.mrb[0].mxu0 %v3683
          %v4325 = vpop.f32.mrb[0].mxu0
          %v4326 = vadd.f32 %v4255, %v4325
          %v4327 = vpop.f32.mrb[0].mxu0
          %v4328 = vadd.f32 %v4257, %v4327
          %4329 = vdwg.mxu0
          %v4330 = vadd.f32 %v3652, %v3900
          %v4331 = vadd.f32 %v3653, %v3902
          %v4332 = vadd.f32 %v3654, %v4113
          %v4333 = vadd.f32 %v3655, %v4115
          %v4334 = vadd.f32 %v3656, %v4326
          %v4335 = vadd.f32 %v3657, %v4328
          %v4337 = vlaneseq
          %v4338 = vshrl.u32 %v4337, 7
          %v4339 = vsub.s32 0, %v4338
          %v4340 = vrot.slane %v3630, %v4339
          %v4341 = vlaneseq
          %v4342 = vshrl.u32 %v4341, 7
          %v4343 = vsub.s32 1, %v4342
          %v4344 = vrot.slane %v3630, %v4343
          %v4345 = vlaneseq
          %v4346 = vshrl.u32 %v4345, 7
          %v4347 = vsub.s32 2, %v4346
          %v4348 = vrot.slane %v3630, %v4347
          %v4349 = vlaneseq
          %v4350 = vshrl.u32 %v4349, 7
          %v4351 = vsub.s32 3, %v4350
          %v4352 = vrot.slane %v3630, %v4351
          %v4353 = vlaneseq
          %v4354 = vshrl.u32 %v4353, 7
          %v4355 = vsub.s32 4, %v4354
          %v4356 = vrot.slane %v3630, %v4355
          %v4357 = vlaneseq
          %v4358 = vshrl.u32 %v4357, 7
          %v4359 = vsub.s32 5, %v4358
          %v4360 = vrot.slane %v3630, %v4359
          %v4367 = vadd.f32 %v4330, %v4340
          %v4368 = vadd.f32 %v4331, %v4344
          %v4369 = vadd.f32 %v4332, %v4348
          %v4370 = vadd.f32 %v4333, %v4352
          %v4371 = vadd.f32 %v4334, %v4356
          %v4372 = vadd.f32 %v4335, %v4360
          %v4373 = vrot.slane %v1896, 1
          %v4374 = vrot.slane %v1897, 1
          %v4375 = vrot.slane %v1898, 1
          %v4376 = vrot.slane %v1899, 1
          %v4377 = vrot.slane %v1900, 1
          %v4378 = vrot.slane %v1901, 1
          %v4385 = vrot.slane %v1896, 3
          %v4386 = vrot.slane %v1897, 3
          %v4387 = vrot.slane %v1898, 3
          %v4388 = vrot.slane %v1899, 3
          %v4389 = vrot.slane %v1900, 3
          %v4390 = vrot.slane %v1901, 3
          %v4397 = vsel %vm3651, %v4373, %v4385
          %v4398 = vsel %vm3651, %v4374, %v4386
          %v4399 = vsel %vm3651, %v4375, %v4387
          %v4400 = vsel %vm3651, %v4376, %v4388
          %v4401 = vsel %vm3651, %v4377, %v4389
          %v4402 = vsel %vm3651, %v4378, %v4390
          %4403 = vmatprep.subr.mxu0 %v2191
          %4404 = vmatpush1.msra.mxu0 %v2190
          %4405 = vmatprep.subr.mxu0 %v2197
          %4406 = vmatpush1.msra.mxu0 %v2196
          %4407 = vmatprep.subr.mxu0 %v2203
          %4408 = vmatpush1.msra.mxu0 %v2202
          %4409 = vmatprep.subr.mxu0 %v2209
          %4410 = vmatpush1.msra.mxu0 %v2208
          %4411 = vmatprep.subr.mxu0 %v2215
          %4412 = vmatpush1.msra.mxu0 %v2214
          %4413 = vmatprep.subr.mxu0 %v2221
          %4414 = vmatpush1.msra.mxu0 %v2220
          %4415 = vmatprep.subr.mxu0 %v2227
          %4416 = vmatpush1.msra.mxu0 %v2226
          %4417 = vmatprep.subr.mxu0 %v2233
          %4418 = vmatpush1.msra.mxu0 %v2232
          %4419 = vmatprep.subr.mxu0 %v2239
          %4420 = vmatpush1.msra.mxu0 %v2238
          %4421 = vmatprep.subr.mxu0 %v2245
          %4422 = vmatpush1.msra.mxu0 %v2244
          %4423 = vmatprep.subr.mxu0 %v2251
          %4424 = vmatpush1.msra.mxu0 %v2250
          %4425 = vmatprep.subr.mxu0 %v2257
          %4426 = vmatpush1.msra.mxu0 %v2256
          %4427 = vmatprep.subr.mxu0 %v2263
          %4428 = vmatpush1.msra.mxu0 %v2262
          %4429 = vmatprep.subr.mxu0 %v2269
          %4430 = vmatpush1.msra.mxu0 %v2268
          %4431 = vmatprep.subr.mxu0 %v2275
          %4432 = vmatpush1.msra.mxu0 %v2274
          %4433 = vmatprep.subr.mxu0 %v2281
          %4434 = vmatpush1.msra.mxu0 %v2280
          %4435 = vmatprep.subr.mxu0 %v2287
          %4436 = vmatpush1.msra.mxu0 %v2286
          %4437 = vmatprep.subr.mxu0 %v2293
          %4438 = vmatpush1.msra.mxu0 %v2292
          %4439 = vmatprep.subr.mxu0 %v2299
          %4440 = vmatpush1.msra.mxu0 %v2298
          %4441 = vmatprep.subr.mxu0 %v2305
          %4442 = vmatpush1.msra.mxu0 %v2304
          %4443 = vmatprep.subr.mxu0 %v2311
          %4444 = vmatpush1.msra.mxu0 %v2310
          %4445 = vmatprep.subr.mxu0 %v2317
          %4446 = vmatpush1.msra.mxu0 %v2316
          %4447 = vmatprep.subr.mxu0 %v2323
          %4448 = vmatpush1.msra.mxu0 %v2322
          %4449 = vmatprep.subr.mxu0 %v2329
          %4450 = vmatpush1.msra.mxu0 %v2328
          %4451 = vmatprep.subr.mxu0 %v2335
          %4452 = vmatpush1.msra.mxu0 %v2334
          %4453 = vmatprep.subr.mxu0 %v2341
          %4454 = vmatpush1.msra.mxu0 %v2340
          %4455 = vmatprep.subr.mxu0 %v2347
          %4456 = vmatpush1.msra.mxu0 %v2346
          %4457 = vmatprep.subr.mxu0 %v2353
          %4458 = vmatpush1.msra.mxu0 %v2352
          %4459 = vmatprep.subr.mxu0 %v2359
          %4460 = vmatpush1.msra.mxu0 %v2358
          %4461 = vmatprep.subr.mxu0 %v2365
          %4462 = vmatpush1.msra.mxu0 %v2364
          %4463 = vmatprep.subr.mxu0 %v2371
          %4464 = vmatpush1.msra.mxu0 %v2370
          %4465 = vmatprep.subr.mxu0 %v2377
          %4466 = vmatpush1.msra.mxu0 %v2376
          %4467 = vmatprep.mubr.f32.mxu0 %v4368
          %4468 = vmatmul.mubr.f32.gmra.mrb[0].mxu0 %v4367
          %v4469 = vpop.f32.mrb[0].mxu0
          %v4470 = vadd.f32 0.0, %v4469
          %v4471 = vpop.f32.mrb[0].mxu0
          %v4472 = vadd.f32 0.0, %v4471
          %4473 = vdwg.mxu0
          %4474 = vmatprep.subr.mxu0 %v2383
          %4475 = vmatpush1.msra.mxu0 %v2382
          %4476 = vmatprep.subr.mxu0 %v2389
          %4477 = vmatpush1.msra.mxu0 %v2388
          %4478 = vmatprep.subr.mxu0 %v2395
          %4479 = vmatpush1.msra.mxu0 %v2394
          %4480 = vmatprep.subr.mxu0 %v2401
          %4481 = vmatpush1.msra.mxu0 %v2400
          %4482 = vmatprep.subr.mxu0 %v2407
          %4483 = vmatpush1.msra.mxu0 %v2406
          %4484 = vmatprep.subr.mxu0 %v2413
          %4485 = vmatpush1.msra.mxu0 %v2412
          %4486 = vmatprep.subr.mxu0 %v2419
          %4487 = vmatpush1.msra.mxu0 %v2418
          %4488 = vmatprep.subr.mxu0 %v2425
          %4489 = vmatpush1.msra.mxu0 %v2424
          %4490 = vmatprep.subr.mxu0 %v2431
          %4491 = vmatpush1.msra.mxu0 %v2430
          %4492 = vmatprep.subr.mxu0 %v2437
          %4493 = vmatpush1.msra.mxu0 %v2436
          %4494 = vmatprep.subr.mxu0 %v2443
          %4495 = vmatpush1.msra.mxu0 %v2442
          %4496 = vmatprep.subr.mxu0 %v2449
          %4497 = vmatpush1.msra.mxu0 %v2448
          %4498 = vmatprep.subr.mxu0 %v2455
          %4499 = vmatpush1.msra.mxu0 %v2454
          %4500 = vmatprep.subr.mxu0 %v2461
          %4501 = vmatpush1.msra.mxu0 %v2460
          %4502 = vmatprep.subr.mxu0 %v2467
          %4503 = vmatpush1.msra.mxu0 %v2466
          %4504 = vmatprep.subr.mxu0 %v2473
          %4505 = vmatpush1.msra.mxu0 %v2472
          %4506 = vmatprep.subr.mxu0 %v2479
          %4507 = vmatpush1.msra.mxu0 %v2478
          %4508 = vmatprep.subr.mxu0 %v2485
          %4509 = vmatpush1.msra.mxu0 %v2484
          %4510 = vmatprep.subr.mxu0 %v2491
          %4511 = vmatpush1.msra.mxu0 %v2490
          %4512 = vmatprep.subr.mxu0 %v2497
          %4513 = vmatpush1.msra.mxu0 %v2496
          %4514 = vmatprep.subr.mxu0 %v2503
          %4515 = vmatpush1.msra.mxu0 %v2502
          %4516 = vmatprep.subr.mxu0 %v2509
          %4517 = vmatpush1.msra.mxu0 %v2508
          %4518 = vmatprep.subr.mxu0 %v2515
          %4519 = vmatpush1.msra.mxu0 %v2514
          %4520 = vmatprep.subr.mxu0 %v2521
          %4521 = vmatpush1.msra.mxu0 %v2520
          %4522 = vmatprep.subr.mxu0 %v2527
          %4523 = vmatpush1.msra.mxu0 %v2526
          %4524 = vmatprep.subr.mxu0 %v2533
          %4525 = vmatpush1.msra.mxu0 %v2532
          %4526 = vmatprep.subr.mxu0 %v2539
          %4527 = vmatpush1.msra.mxu0 %v2538
          %4528 = vmatprep.subr.mxu0 %v2545
          %4529 = vmatpush1.msra.mxu0 %v2544
          %4530 = vmatprep.subr.mxu0 %v2551
          %4531 = vmatpush1.msra.mxu0 %v2550
          %4532 = vmatprep.subr.mxu0 %v2557
          %4533 = vmatpush1.msra.mxu0 %v2556
          %4534 = vmatprep.subr.mxu0 %v2563
          %4535 = vmatpush1.msra.mxu0 %v2562
          %4536 = vmatprep.subr.mxu0 %v2569
          %4537 = vmatpush1.msra.mxu0 %v2568
          %4538 = vmatprep.mubr.f32.mxu0 %v4370
          %4539 = vmatmul.mubr.f32.gmra.mrb[0].mxu0 %v4369
          %v4540 = vpop.f32.mrb[0].mxu0
          %v4541 = vadd.f32 %v4470, %v4540
          %v4542 = vpop.f32.mrb[0].mxu0
          %v4543 = vadd.f32 %v4472, %v4542
          %4544 = vdwg.mxu0
          %4545 = vmatprep.subr.mxu0 %v2575
          %4546 = vmatpush1.msra.mxu0 %v2574
          %4547 = vmatprep.subr.mxu0 %v2581
          %4548 = vmatpush1.msra.mxu0 %v2580
          %4549 = vmatprep.subr.mxu0 %v2587
          %4550 = vmatpush1.msra.mxu0 %v2586
          %4551 = vmatprep.subr.mxu0 %v2593
          %4552 = vmatpush1.msra.mxu0 %v2592
          %4553 = vmatprep.subr.mxu0 %v2599
          %4554 = vmatpush1.msra.mxu0 %v2598
          %4555 = vmatprep.subr.mxu0 %v2605
          %4556 = vmatpush1.msra.mxu0 %v2604
          %4557 = vmatprep.subr.mxu0 %v2611
          %4558 = vmatpush1.msra.mxu0 %v2610
          %4559 = vmatprep.subr.mxu0 %v2617
          %4560 = vmatpush1.msra.mxu0 %v2616
          %4561 = vmatprep.subr.mxu0 %v2623
          %4562 = vmatpush1.msra.mxu0 %v2622
          %4563 = vmatprep.subr.mxu0 %v2629
          %4564 = vmatpush1.msra.mxu0 %v2628
          %4565 = vmatprep.subr.mxu0 %v2635
          %4566 = vmatpush1.msra.mxu0 %v2634
          %4567 = vmatprep.subr.mxu0 %v2641
          %4568 = vmatpush1.msra.mxu0 %v2640
          %4569 = vmatprep.subr.mxu0 %v2647
          %4570 = vmatpush1.msra.mxu0 %v2646
          %4571 = vmatprep.subr.mxu0 %v2653
          %4572 = vmatpush1.msra.mxu0 %v2652
          %4573 = vmatprep.subr.mxu0 %v2659
          %4574 = vmatpush1.msra.mxu0 %v2658
          %4575 = vmatprep.subr.mxu0 %v2665
          %4576 = vmatpush1.msra.mxu0 %v2664
          %4577 = vmatprep.subr.mxu0 %v2671
          %4578 = vmatpush1.msra.mxu0 %v2670
          %4579 = vmatprep.subr.mxu0 %v2677
          %4580 = vmatpush1.msra.mxu0 %v2676
          %4581 = vmatprep.subr.mxu0 %v2683
          %4582 = vmatpush1.msra.mxu0 %v2682
          %4583 = vmatprep.subr.mxu0 %v2689
          %4584 = vmatpush1.msra.mxu0 %v2688
          %4585 = vmatprep.subr.mxu0 %v2695
          %4586 = vmatpush1.msra.mxu0 %v2694
          %4587 = vmatprep.subr.mxu0 %v2701
          %4588 = vmatpush1.msra.mxu0 %v2700
          %4589 = vmatprep.subr.mxu0 %v2707
          %4590 = vmatpush1.msra.mxu0 %v2706
          %4591 = vmatprep.subr.mxu0 %v2713
          %4592 = vmatpush1.msra.mxu0 %v2712
          %4593 = vmatprep.subr.mxu0 %v2719
          %4594 = vmatpush1.msra.mxu0 %v2718
          %4595 = vmatprep.subr.mxu0 %v2725
          %4596 = vmatpush1.msra.mxu0 %v2724
          %4597 = vmatprep.subr.mxu0 %v2731
          %4598 = vmatpush1.msra.mxu0 %v2730
          %4599 = vmatprep.subr.mxu0 %v2737
          %4600 = vmatpush1.msra.mxu0 %v2736
          %4601 = vmatprep.subr.mxu0 %v2743
          %4602 = vmatpush1.msra.mxu0 %v2742
          %4603 = vmatprep.subr.mxu0 %v2749
          %4604 = vmatpush1.msra.mxu0 %v2748
          %4605 = vmatprep.subr.mxu0 %v2755
          %4606 = vmatpush1.msra.mxu0 %v2754
          %4607 = vmatprep.subr.mxu0 %v2761
          %4608 = vmatpush1.msra.mxu0 %v2760
          %4609 = vmatprep.mubr.f32.mxu0 %v4372
          %4610 = vmatmul.mubr.f32.gmra.mrb[0].mxu0 %v4371
          %v4611 = vpop.f32.mrb[0].mxu0
          %v4612 = vadd.f32 %v4541, %v4611
          %v4613 = vpop.f32.mrb[0].mxu0
          %v4614 = vadd.f32 %v4543, %v4613
          %4615 = vdwg.mxu0
          %4616 = vmatprep.subr.mxu0 %v2193
          %4617 = vmatpush1.msra.mxu0 %v2192
          %4618 = vmatprep.subr.mxu0 %v2199
          %4619 = vmatpush1.msra.mxu0 %v2198
          %4620 = vmatprep.subr.mxu0 %v2205
          %4621 = vmatpush1.msra.mxu0 %v2204
          %4622 = vmatprep.subr.mxu0 %v2211
          %4623 = vmatpush1.msra.mxu0 %v2210
          %4624 = vmatprep.subr.mxu0 %v2217
          %4625 = vmatpush1.msra.mxu0 %v2216
          %4626 = vmatprep.subr.mxu0 %v2223
          %4627 = vmatpush1.msra.mxu0 %v2222
          %4628 = vmatprep.subr.mxu0 %v2229
          %4629 = vmatpush1.msra.mxu0 %v2228
          %4630 = vmatprep.subr.mxu0 %v2235
          %4631 = vmatpush1.msra.mxu0 %v2234
          %4632 = vmatprep.subr.mxu0 %v2241
          %4633 = vmatpush1.msra.mxu0 %v2240
          %4634 = vmatprep.subr.mxu0 %v2247
          %4635 = vmatpush1.msra.mxu0 %v2246
          %4636 = vmatprep.subr.mxu0 %v2253
          %4637 = vmatpush1.msra.mxu0 %v2252
          %4638 = vmatprep.subr.mxu0 %v2259
          %4639 = vmatpush1.msra.mxu0 %v2258
          %4640 = vmatprep.subr.mxu0 %v2265
          %4641 = vmatpush1.msra.mxu0 %v2264
          %4642 = vmatprep.subr.mxu0 %v2271
          %4643 = vmatpush1.msra.mxu0 %v2270
          %4644 = vmatprep.subr.mxu0 %v2277
          %4645 = vmatpush1.msra.mxu0 %v2276
          %4646 = vmatprep.subr.mxu0 %v2283
          %4647 = vmatpush1.msra.mxu0 %v2282
          %4648 = vmatprep.subr.mxu0 %v2289
          %4649 = vmatpush1.msra.mxu0 %v2288
          %4650 = vmatprep.subr.mxu0 %v2295
          %4651 = vmatpush1.msra.mxu0 %v2294
          %4652 = vmatprep.subr.mxu0 %v2301
          %4653 = vmatpush1.msra.mxu0 %v2300
          %4654 = vmatprep.subr.mxu0 %v2307
          %4655 = vmatpush1.msra.mxu0 %v2306
          %4656 = vmatprep.subr.mxu0 %v2313
          %4657 = vmatpush1.msra.mxu0 %v2312
          %4658 = vmatprep.subr.mxu0 %v2319
          %4659 = vmatpush1.msra.mxu0 %v2318
          %4660 = vmatprep.subr.mxu0 %v2325
          %4661 = vmatpush1.msra.mxu0 %v2324
          %4662 = vmatprep.subr.mxu0 %v2331
          %4663 = vmatpush1.msra.mxu0 %v2330
          %4664 = vmatprep.subr.mxu0 %v2337
          %4665 = vmatpush1.msra.mxu0 %v2336
          %4666 = vmatprep.subr.mxu0 %v2343
          %4667 = vmatpush1.msra.mxu0 %v2342
          %4668 = vmatprep.subr.mxu0 %v2349
          %4669 = vmatpush1.msra.mxu0 %v2348
          %4670 = vmatprep.subr.mxu0 %v2355
          %4671 = vmatpush1.msra.mxu0 %v2354
          %4672 = vmatprep.subr.mxu0 %v2361
          %4673 = vmatpush1.msra.mxu0 %v2360
          %4674 = vmatprep.subr.mxu0 %v2367
          %4675 = vmatpush1.msra.mxu0 %v2366
          %4676 = vmatprep.subr.mxu0 %v2373
          %4677 = vmatpush1.msra.mxu0 %v2372
          %4678 = vmatprep.subr.mxu0 %v2379
          %4679 = vmatpush1.msra.mxu0 %v2378
          %4680 = vmatprep.mubr.f32.mxu0 %v4368
          %4681 = vmatmul.mubr.f32.gmra.mrb[0].mxu0 %v4367
          %v4682 = vpop.f32.mrb[0].mxu0
          %v4683 = vadd.f32 0.0, %v4682
          %v4684 = vpop.f32.mrb[0].mxu0
          %v4685 = vadd.f32 0.0, %v4684
          %4686 = vdwg.mxu0
          %4687 = vmatprep.subr.mxu0 %v2385
          %4688 = vmatpush1.msra.mxu0 %v2384
          %4689 = vmatprep.subr.mxu0 %v2391
          %4690 = vmatpush1.msra.mxu0 %v2390
          %4691 = vmatprep.subr.mxu0 %v2397
          %4692 = vmatpush1.msra.mxu0 %v2396
          %4693 = vmatprep.subr.mxu0 %v2403
          %4694 = vmatpush1.msra.mxu0 %v2402
          %4695 = vmatprep.subr.mxu0 %v2409
          %4696 = vmatpush1.msra.mxu0 %v2408
          %4697 = vmatprep.subr.mxu0 %v2415
          %4698 = vmatpush1.msra.mxu0 %v2414
          %4699 = vmatprep.subr.mxu0 %v2421
          %4700 = vmatpush1.msra.mxu0 %v2420
          %4701 = vmatprep.subr.mxu0 %v2427
          %4702 = vmatpush1.msra.mxu0 %v2426
          %4703 = vmatprep.subr.mxu0 %v2433
          %4704 = vmatpush1.msra.mxu0 %v2432
          %4705 = vmatprep.subr.mxu0 %v2439
          %4706 = vmatpush1.msra.mxu0 %v2438
          %4707 = vmatprep.subr.mxu0 %v2445
          %4708 = vmatpush1.msra.mxu0 %v2444
          %4709 = vmatprep.subr.mxu0 %v2451
          %4710 = vmatpush1.msra.mxu0 %v2450
          %4711 = vmatprep.subr.mxu0 %v2457
          %4712 = vmatpush1.msra.mxu0 %v2456
          %4713 = vmatprep.subr.mxu0 %v2463
          %4714 = vmatpush1.msra.mxu0 %v2462
          %4715 = vmatprep.subr.mxu0 %v2469
          %4716 = vmatpush1.msra.mxu0 %v2468
          %4717 = vmatprep.subr.mxu0 %v2475
          %4718 = vmatpush1.msra.mxu0 %v2474
          %4719 = vmatprep.subr.mxu0 %v2481
          %4720 = vmatpush1.msra.mxu0 %v2480
          %4721 = vmatprep.subr.mxu0 %v2487
          %4722 = vmatpush1.msra.mxu0 %v2486
          %4723 = vmatprep.subr.mxu0 %v2493
          %4724 = vmatpush1.msra.mxu0 %v2492
          %4725 = vmatprep.subr.mxu0 %v2499
          %4726 = vmatpush1.msra.mxu0 %v2498
          %4727 = vmatprep.subr.mxu0 %v2505
          %4728 = vmatpush1.msra.mxu0 %v2504
          %4729 = vmatprep.subr.mxu0 %v2511
          %4730 = vmatpush1.msra.mxu0 %v2510
          %4731 = vmatprep.subr.mxu0 %v2517
          %4732 = vmatpush1.msra.mxu0 %v2516
          %4733 = vmatprep.subr.mxu0 %v2523
          %4734 = vmatpush1.msra.mxu0 %v2522
          %4735 = vmatprep.subr.mxu0 %v2529
          %4736 = vmatpush1.msra.mxu0 %v2528
          %4737 = vmatprep.subr.mxu0 %v2535
          %4738 = vmatpush1.msra.mxu0 %v2534
          %4739 = vmatprep.subr.mxu0 %v2541
          %4740 = vmatpush1.msra.mxu0 %v2540
          %4741 = vmatprep.subr.mxu0 %v2547
          %4742 = vmatpush1.msra.mxu0 %v2546
          %4743 = vmatprep.subr.mxu0 %v2553
          %4744 = vmatpush1.msra.mxu0 %v2552
          %4745 = vmatprep.subr.mxu0 %v2559
          %4746 = vmatpush1.msra.mxu0 %v2558
          %4747 = vmatprep.subr.mxu0 %v2565
          %4748 = vmatpush1.msra.mxu0 %v2564
          %4749 = vmatprep.subr.mxu0 %v2571
          %4750 = vmatpush1.msra.mxu0 %v2570
          %4751 = vmatprep.mubr.f32.mxu0 %v4370
          %4752 = vmatmul.mubr.f32.gmra.mrb[0].mxu0 %v4369
          %v4753 = vpop.f32.mrb[0].mxu0
          %v4754 = vadd.f32 %v4683, %v4753
          %v4755 = vpop.f32.mrb[0].mxu0
          %v4756 = vadd.f32 %v4685, %v4755
          %4757 = vdwg.mxu0
          %4758 = vmatprep.subr.mxu0 %v2577
          %4759 = vmatpush1.msra.mxu0 %v2576
          %4760 = vmatprep.subr.mxu0 %v2583
          %4761 = vmatpush1.msra.mxu0 %v2582
          %4762 = vmatprep.subr.mxu0 %v2589
          %4763 = vmatpush1.msra.mxu0 %v2588
          %4764 = vmatprep.subr.mxu0 %v2595
          %4765 = vmatpush1.msra.mxu0 %v2594
          %4766 = vmatprep.subr.mxu0 %v2601
          %4767 = vmatpush1.msra.mxu0 %v2600
          %4768 = vmatprep.subr.mxu0 %v2607
          %4769 = vmatpush1.msra.mxu0 %v2606
          %4770 = vmatprep.subr.mxu0 %v2613
          %4771 = vmatpush1.msra.mxu0 %v2612
          %4772 = vmatprep.subr.mxu0 %v2619
          %4773 = vmatpush1.msra.mxu0 %v2618
          %4774 = vmatprep.subr.mxu0 %v2625
          %4775 = vmatpush1.msra.mxu0 %v2624
          %4776 = vmatprep.subr.mxu0 %v2631
          %4777 = vmatpush1.msra.mxu0 %v2630
          %4778 = vmatprep.subr.mxu0 %v2637
          %4779 = vmatpush1.msra.mxu0 %v2636
          %4780 = vmatprep.subr.mxu0 %v2643
          %4781 = vmatpush1.msra.mxu0 %v2642
          %4782 = vmatprep.subr.mxu0 %v2649
          %4783 = vmatpush1.msra.mxu0 %v2648
          %4784 = vmatprep.subr.mxu0 %v2655
          %4785 = vmatpush1.msra.mxu0 %v2654
          %4786 = vmatprep.subr.mxu0 %v2661
          %4787 = vmatpush1.msra.mxu0 %v2660
          %4788 = vmatprep.subr.mxu0 %v2667
          %4789 = vmatpush1.msra.mxu0 %v2666
          %4790 = vmatprep.subr.mxu0 %v2673
          %4791 = vmatpush1.msra.mxu0 %v2672
          %4792 = vmatprep.subr.mxu0 %v2679
          %4793 = vmatpush1.msra.mxu0 %v2678
          %4794 = vmatprep.subr.mxu0 %v2685
          %4795 = vmatpush1.msra.mxu0 %v2684
          %4796 = vmatprep.subr.mxu0 %v2691
          %4797 = vmatpush1.msra.mxu0 %v2690
          %4798 = vmatprep.subr.mxu0 %v2697
          %4799 = vmatpush1.msra.mxu0 %v2696
          %4800 = vmatprep.subr.mxu0 %v2703
          %4801 = vmatpush1.msra.mxu0 %v2702
          %4802 = vmatprep.subr.mxu0 %v2709
          %4803 = vmatpush1.msra.mxu0 %v2708
          %4804 = vmatprep.subr.mxu0 %v2715
          %4805 = vmatpush1.msra.mxu0 %v2714
          %4806 = vmatprep.subr.mxu0 %v2721
          %4807 = vmatpush1.msra.mxu0 %v2720
          %4808 = vmatprep.subr.mxu0 %v2727
          %4809 = vmatpush1.msra.mxu0 %v2726
          %4810 = vmatprep.subr.mxu0 %v2733
          %4811 = vmatpush1.msra.mxu0 %v2732
          %4812 = vmatprep.subr.mxu0 %v2739
          %4813 = vmatpush1.msra.mxu0 %v2738
          %4814 = vmatprep.subr.mxu0 %v2745
          %4815 = vmatpush1.msra.mxu0 %v2744
          %4816 = vmatprep.subr.mxu0 %v2751
          %4817 = vmatpush1.msra.mxu0 %v2750
          %4818 = vmatprep.subr.mxu0 %v2757
          %4819 = vmatpush1.msra.mxu0 %v2756
          %4820 = vmatprep.subr.mxu0 %v2763
          %4821 = vmatpush1.msra.mxu0 %v2762
          %4822 = vmatprep.mubr.f32.mxu0 %v4372
          %4823 = vmatmul.mubr.f32.gmra.mrb[0].mxu0 %v4371
          %v4824 = vpop.f32.mrb[0].mxu0
          %v4825 = vadd.f32 %v4754, %v4824
          %v4826 = vpop.f32.mrb[0].mxu0
          %v4827 = vadd.f32 %v4756, %v4826
          %4828 = vdwg.mxu0
          %4829 = vmatprep.subr.mxu0 %v2195
          %4830 = vmatpush1.msra.mxu0 %v2194
          %4831 = vmatprep.subr.mxu0 %v2201
          %4832 = vmatpush1.msra.mxu0 %v2200
          %4833 = vmatprep.subr.mxu0 %v2207
          %4834 = vmatpush1.msra.mxu0 %v2206
          %4835 = vmatprep.subr.mxu0 %v2213
          %4836 = vmatpush1.msra.mxu0 %v2212
          %4837 = vmatprep.subr.mxu0 %v2219
          %4838 = vmatpush1.msra.mxu0 %v2218
          %4839 = vmatprep.subr.mxu0 %v2225
          %4840 = vmatpush1.msra.mxu0 %v2224
          %4841 = vmatprep.subr.mxu0 %v2231
          %4842 = vmatpush1.msra.mxu0 %v2230
          %4843 = vmatprep.subr.mxu0 %v2237
          %4844 = vmatpush1.msra.mxu0 %v2236
          %4845 = vmatprep.subr.mxu0 %v2243
          %4846 = vmatpush1.msra.mxu0 %v2242
          %4847 = vmatprep.subr.mxu0 %v2249
          %4848 = vmatpush1.msra.mxu0 %v2248
          %4849 = vmatprep.subr.mxu0 %v2255
          %4850 = vmatpush1.msra.mxu0 %v2254
          %4851 = vmatprep.subr.mxu0 %v2261
          %4852 = vmatpush1.msra.mxu0 %v2260
          %4853 = vmatprep.subr.mxu0 %v2267
          %4854 = vmatpush1.msra.mxu0 %v2266
          %4855 = vmatprep.subr.mxu0 %v2273
          %4856 = vmatpush1.msra.mxu0 %v2272
          %4857 = vmatprep.subr.mxu0 %v2279
          %4858 = vmatpush1.msra.mxu0 %v2278
          %4859 = vmatprep.subr.mxu0 %v2285
          %4860 = vmatpush1.msra.mxu0 %v2284
          %4861 = vmatprep.subr.mxu0 %v2291
          %4862 = vmatpush1.msra.mxu0 %v2290
          %4863 = vmatprep.subr.mxu0 %v2297
          %4864 = vmatpush1.msra.mxu0 %v2296
          %4865 = vmatprep.subr.mxu0 %v2303
          %4866 = vmatpush1.msra.mxu0 %v2302
          %4867 = vmatprep.subr.mxu0 %v2309
          %4868 = vmatpush1.msra.mxu0 %v2308
          %4869 = vmatprep.subr.mxu0 %v2315
          %4870 = vmatpush1.msra.mxu0 %v2314
          %4871 = vmatprep.subr.mxu0 %v2321
          %4872 = vmatpush1.msra.mxu0 %v2320
          %4873 = vmatprep.subr.mxu0 %v2327
          %4874 = vmatpush1.msra.mxu0 %v2326
          %4875 = vmatprep.subr.mxu0 %v2333
          %4876 = vmatpush1.msra.mxu0 %v2332
          %4877 = vmatprep.subr.mxu0 %v2339
          %4878 = vmatpush1.msra.mxu0 %v2338
          %4879 = vmatprep.subr.mxu0 %v2345
          %4880 = vmatpush1.msra.mxu0 %v2344
          %4881 = vmatprep.subr.mxu0 %v2351
          %4882 = vmatpush1.msra.mxu0 %v2350
          %4883 = vmatprep.subr.mxu0 %v2357
          %4884 = vmatpush1.msra.mxu0 %v2356
          %4885 = vmatprep.subr.mxu0 %v2363
          %4886 = vmatpush1.msra.mxu0 %v2362
          %4887 = vmatprep.subr.mxu0 %v2369
          %4888 = vmatpush1.msra.mxu0 %v2368
          %4889 = vmatprep.subr.mxu0 %v2375
          %4890 = vmatpush1.msra.mxu0 %v2374
          %4891 = vmatprep.subr.mxu0 %v2381
          %4892 = vmatpush1.msra.mxu0 %v2380
          %4893 = vmatprep.mubr.f32.mxu0 %v4368
          %4894 = vmatmul.mubr.f32.gmra.mrb[0].mxu0 %v4367
          %v4895 = vpop.f32.mrb[0].mxu0
          %v4896 = vadd.f32 0.0, %v4895
          %v4897 = vpop.f32.mrb[0].mxu0
          %v4898 = vadd.f32 0.0, %v4897
          %4899 = vdwg.mxu0
          %4900 = vmatprep.subr.mxu0 %v2387
          %4901 = vmatpush1.msra.mxu0 %v2386
          %4902 = vmatprep.subr.mxu0 %v2393
          %4903 = vmatpush1.msra.mxu0 %v2392
          %4904 = vmatprep.subr.mxu0 %v2399
          %4905 = vmatpush1.msra.mxu0 %v2398
          %4906 = vmatprep.subr.mxu0 %v2405
          %4907 = vmatpush1.msra.mxu0 %v2404
          %4908 = vmatprep.subr.mxu0 %v2411
          %4909 = vmatpush1.msra.mxu0 %v2410
          %4910 = vmatprep.subr.mxu0 %v2417
          %4911 = vmatpush1.msra.mxu0 %v2416
          %4912 = vmatprep.subr.mxu0 %v2423
          %4913 = vmatpush1.msra.mxu0 %v2422
          %4914 = vmatprep.subr.mxu0 %v2429
          %4915 = vmatpush1.msra.mxu0 %v2428
          %4916 = vmatprep.subr.mxu0 %v2435
          %4917 = vmatpush1.msra.mxu0 %v2434
          %4918 = vmatprep.subr.mxu0 %v2441
          %4919 = vmatpush1.msra.mxu0 %v2440
          %4920 = vmatprep.subr.mxu0 %v2447
          %4921 = vmatpush1.msra.mxu0 %v2446
          %4922 = vmatprep.subr.mxu0 %v2453
          %4923 = vmatpush1.msra.mxu0 %v2452
          %4924 = vmatprep.subr.mxu0 %v2459
          %4925 = vmatpush1.msra.mxu0 %v2458
          %4926 = vmatprep.subr.mxu0 %v2465
          %4927 = vmatpush1.msra.mxu0 %v2464
          %4928 = vmatprep.subr.mxu0 %v2471
          %4929 = vmatpush1.msra.mxu0 %v2470
          %4930 = vmatprep.subr.mxu0 %v2477
          %4931 = vmatpush1.msra.mxu0 %v2476
          %4932 = vmatprep.subr.mxu0 %v2483
          %4933 = vmatpush1.msra.mxu0 %v2482
          %4934 = vmatprep.subr.mxu0 %v2489
          %4935 = vmatpush1.msra.mxu0 %v2488
          %4936 = vmatprep.subr.mxu0 %v2495
          %4937 = vmatpush1.msra.mxu0 %v2494
          %4938 = vmatprep.subr.mxu0 %v2501
          %4939 = vmatpush1.msra.mxu0 %v2500
          %4940 = vmatprep.subr.mxu0 %v2507
          %4941 = vmatpush1.msra.mxu0 %v2506
          %4942 = vmatprep.subr.mxu0 %v2513
          %4943 = vmatpush1.msra.mxu0 %v2512
          %4944 = vmatprep.subr.mxu0 %v2519
          %4945 = vmatpush1.msra.mxu0 %v2518
          %4946 = vmatprep.subr.mxu0 %v2525
          %4947 = vmatpush1.msra.mxu0 %v2524
          %4948 = vmatprep.subr.mxu0 %v2531
          %4949 = vmatpush1.msra.mxu0 %v2530
          %4950 = vmatprep.subr.mxu0 %v2537
          %4951 = vmatpush1.msra.mxu0 %v2536
          %4952 = vmatprep.subr.mxu0 %v2543
          %4953 = vmatpush1.msra.mxu0 %v2542
          %4954 = vmatprep.subr.mxu0 %v2549
          %4955 = vmatpush1.msra.mxu0 %v2548
          %4956 = vmatprep.subr.mxu0 %v2555
          %4957 = vmatpush1.msra.mxu0 %v2554
          %4958 = vmatprep.subr.mxu0 %v2561
          %4959 = vmatpush1.msra.mxu0 %v2560
          %4960 = vmatprep.subr.mxu0 %v2567
          %4961 = vmatpush1.msra.mxu0 %v2566
          %4962 = vmatprep.subr.mxu0 %v2573
          %4963 = vmatpush1.msra.mxu0 %v2572
          %4964 = vmatprep.mubr.f32.mxu0 %v4370
          %4965 = vmatmul.mubr.f32.gmra.mrb[0].mxu0 %v4369
          %v4966 = vpop.f32.mrb[0].mxu0
          %v4967 = vadd.f32 %v4896, %v4966
          %v4968 = vpop.f32.mrb[0].mxu0
          %v4969 = vadd.f32 %v4898, %v4968
          %4970 = vdwg.mxu0
          %4971 = vmatprep.subr.mxu0 %v2579
          %4972 = vmatpush1.msra.mxu0 %v2578
          %4973 = vmatprep.subr.mxu0 %v2585
          %4974 = vmatpush1.msra.mxu0 %v2584
          %4975 = vmatprep.subr.mxu0 %v2591
          %4976 = vmatpush1.msra.mxu0 %v2590
          %4977 = vmatprep.subr.mxu0 %v2597
          %4978 = vmatpush1.msra.mxu0 %v2596
          %4979 = vmatprep.subr.mxu0 %v2603
          %4980 = vmatpush1.msra.mxu0 %v2602
          %4981 = vmatprep.subr.mxu0 %v2609
          %4982 = vmatpush1.msra.mxu0 %v2608
          %4983 = vmatprep.subr.mxu0 %v2615
          %4984 = vmatpush1.msra.mxu0 %v2614
          %4985 = vmatprep.subr.mxu0 %v2621
          %4986 = vmatpush1.msra.mxu0 %v2620
          %4987 = vmatprep.subr.mxu0 %v2627
          %4988 = vmatpush1.msra.mxu0 %v2626
          %4989 = vmatprep.subr.mxu0 %v2633
          %4990 = vmatpush1.msra.mxu0 %v2632
          %4991 = vmatprep.subr.mxu0 %v2639
          %4992 = vmatpush1.msra.mxu0 %v2638
          %4993 = vmatprep.subr.mxu0 %v2645
          %4994 = vmatpush1.msra.mxu0 %v2644
          %4995 = vmatprep.subr.mxu0 %v2651
          %4996 = vmatpush1.msra.mxu0 %v2650
          %4997 = vmatprep.subr.mxu0 %v2657
          %4998 = vmatpush1.msra.mxu0 %v2656
          %4999 = vmatprep.subr.mxu0 %v2663
          %5000 = vmatpush1.msra.mxu0 %v2662
          %5001 = vmatprep.subr.mxu0 %v2669
          %5002 = vmatpush1.msra.mxu0 %v2668
          %5003 = vmatprep.subr.mxu0 %v2675
          %5004 = vmatpush1.msra.mxu0 %v2674
          %5005 = vmatprep.subr.mxu0 %v2681
          %5006 = vmatpush1.msra.mxu0 %v2680
          %5007 = vmatprep.subr.mxu0 %v2687
          %5008 = vmatpush1.msra.mxu0 %v2686
          %5009 = vmatprep.subr.mxu0 %v2693
          %5010 = vmatpush1.msra.mxu0 %v2692
          %5011 = vmatprep.subr.mxu0 %v2699
          %5012 = vmatpush1.msra.mxu0 %v2698
          %5013 = vmatprep.subr.mxu0 %v2705
          %5014 = vmatpush1.msra.mxu0 %v2704
          %5015 = vmatprep.subr.mxu0 %v2711
          %5016 = vmatpush1.msra.mxu0 %v2710
          %5017 = vmatprep.subr.mxu0 %v2717
          %5018 = vmatpush1.msra.mxu0 %v2716
          %5019 = vmatprep.subr.mxu0 %v2723
          %5020 = vmatpush1.msra.mxu0 %v2722
          %5021 = vmatprep.subr.mxu0 %v2729
          %5022 = vmatpush1.msra.mxu0 %v2728
          %5023 = vmatprep.subr.mxu0 %v2735
          %5024 = vmatpush1.msra.mxu0 %v2734
          %5025 = vmatprep.subr.mxu0 %v2741
          %5026 = vmatpush1.msra.mxu0 %v2740
          %5027 = vmatprep.subr.mxu0 %v2747
          %5028 = vmatpush1.msra.mxu0 %v2746
          %5029 = vmatprep.subr.mxu0 %v2753
          %5030 = vmatpush1.msra.mxu0 %v2752
          %5031 = vmatprep.subr.mxu0 %v2759
          %5032 = vmatpush1.msra.mxu0 %v2758
          %5033 = vmatprep.subr.mxu0 %v2765
          %5034 = vmatpush1.msra.mxu0 %v2764
          %5035 = vmatprep.mubr.f32.mxu0 %v4372
          %5036 = vmatmul.mubr.f32.gmra.mrb[0].mxu0 %v4371
          %v5037 = vpop.f32.mrb[0].mxu0
          %v5038 = vadd.f32 %v4967, %v5037
          %v5039 = vpop.f32.mrb[0].mxu0
          %v5040 = vadd.f32 %v4969, %v5039
          %5041 = vdwg.mxu0
          %v5042 = vadd.f32 %v4397, %v4612
          %v5043 = vadd.f32 %v4398, %v4614
          %v5044 = vadd.f32 %v4399, %v4825
          %v5045 = vadd.f32 %v4400, %v4827
          %v5046 = vadd.f32 %v4401, %v5038
          %v5047 = vadd.f32 %v4402, %v5040
          %v5048 = vadd.f32 %v5042, %v4340
          %v5049 = vadd.f32 %v5043, %v4344
          %v5050 = vadd.f32 %v5044, %v4348
          %v5051 = vadd.f32 %v5045, %v4352
          %v5052 = vadd.f32 %v5046, %v4356
          %v5053 = vadd.f32 %v5047, %v4360
          %5054 = vmatprep.subr.mxu0 %v3055
          %5055 = vmatpush1.msra.mxu0 %v3054
          %5056 = vmatprep.subr.mxu0 %v3061
          %5057 = vmatpush1.msra.mxu0 %v3060
          %5058 = vmatprep.subr.mxu0 %v3067
          %5059 = vmatpush1.msra.mxu0 %v3066
          %5060 = vmatprep.subr.mxu0 %v3073
          %5061 = vmatpush1.msra.mxu0 %v3072
          %5062 = vmatprep.subr.mxu0 %v3079
          %5063 = vmatpush1.msra.mxu0 %v3078
          %5064 = vmatprep.subr.mxu0 %v3085
          %5065 = vmatpush1.msra.mxu0 %v3084
          %5066 = vmatprep.subr.mxu0 %v3091
          %5067 = vmatpush1.msra.mxu0 %v3090
          %5068 = vmatprep.subr.mxu0 %v3097
          %5069 = vmatpush1.msra.mxu0 %v3096
          %5070 = vmatprep.subr.mxu0 %v3103
          %5071 = vmatpush1.msra.mxu0 %v3102
          %5072 = vmatprep.subr.mxu0 %v3109
          %5073 = vmatpush1.msra.mxu0 %v3108
          %5074 = vmatprep.subr.mxu0 %v3115
          %5075 = vmatpush1.msra.mxu0 %v3114
          %5076 = vmatprep.subr.mxu0 %v3121
          %5077 = vmatpush1.msra.mxu0 %v3120
          %5078 = vmatprep.subr.mxu0 %v3127
          %5079 = vmatpush1.msra.mxu0 %v3126
          %5080 = vmatprep.subr.mxu0 %v3133
          %5081 = vmatpush1.msra.mxu0 %v3132
          %5082 = vmatprep.subr.mxu0 %v3139
          %5083 = vmatpush1.msra.mxu0 %v3138
          %5084 = vmatprep.subr.mxu0 %v3145
          %5085 = vmatpush1.msra.mxu0 %v3144
          %5086 = vmatprep.subr.mxu0 %v3151
          %5087 = vmatpush1.msra.mxu0 %v3150
          %5088 = vmatprep.subr.mxu0 %v3157
          %5089 = vmatpush1.msra.mxu0 %v3156
          %5090 = vmatprep.subr.mxu0 %v3163
          %5091 = vmatpush1.msra.mxu0 %v3162
          %5092 = vmatprep.subr.mxu0 %v3169
          %5093 = vmatpush1.msra.mxu0 %v3168
          %5094 = vmatprep.subr.mxu0 %v3175
          %5095 = vmatpush1.msra.mxu0 %v3174
          %5096 = vmatprep.subr.mxu0 %v3181
          %5097 = vmatpush1.msra.mxu0 %v3180
          %5098 = vmatprep.subr.mxu0 %v3187
          %5099 = vmatpush1.msra.mxu0 %v3186
          %5100 = vmatprep.subr.mxu0 %v3193
          %5101 = vmatpush1.msra.mxu0 %v3192
          %5102 = vmatprep.subr.mxu0 %v3199
          %5103 = vmatpush1.msra.mxu0 %v3198
          %5104 = vmatprep.subr.mxu0 %v3205
          %5105 = vmatpush1.msra.mxu0 %v3204
          %5106 = vmatprep.subr.mxu0 %v3211
          %5107 = vmatpush1.msra.mxu0 %v3210
          %5108 = vmatprep.subr.mxu0 %v3217
          %5109 = vmatpush1.msra.mxu0 %v3216
          %5110 = vmatprep.subr.mxu0 %v3223
          %5111 = vmatpush1.msra.mxu0 %v3222
          %5112 = vmatprep.subr.mxu0 %v3229
          %5113 = vmatpush1.msra.mxu0 %v3228
          %5114 = vmatprep.subr.mxu0 %v3235
          %5115 = vmatpush1.msra.mxu0 %v3234
          %5116 = vmatprep.subr.mxu0 %v3241
          %5117 = vmatpush1.msra.mxu0 %v3240
          %5118 = vmatprep.mubr.f32.mxu0 %v5049
          %5119 = vmatmul.mubr.f32.gmra.mrb[0].mxu0 %v5048
          %v5120 = vpop.f32.mrb[0].mxu0
          %v5121 = vadd.f32 0.0, %v5120
          %v5122 = vpop.f32.mrb[0].mxu0
          %v5123 = vadd.f32 0.0, %v5122
          %5124 = vdwg.mxu0
          %5125 = vmatprep.subr.mxu0 %v3247
          %5126 = vmatpush1.msra.mxu0 %v3246
          %5127 = vmatprep.subr.mxu0 %v3253
          %5128 = vmatpush1.msra.mxu0 %v3252
          %5129 = vmatprep.subr.mxu0 %v3259
          %5130 = vmatpush1.msra.mxu0 %v3258
          %5131 = vmatprep.subr.mxu0 %v3265
          %5132 = vmatpush1.msra.mxu0 %v3264
          %5133 = vmatprep.subr.mxu0 %v3271
          %5134 = vmatpush1.msra.mxu0 %v3270
          %5135 = vmatprep.subr.mxu0 %v3277
          %5136 = vmatpush1.msra.mxu0 %v3276
          %5137 = vmatprep.subr.mxu0 %v3283
          %5138 = vmatpush1.msra.mxu0 %v3282
          %5139 = vmatprep.subr.mxu0 %v3289
          %5140 = vmatpush1.msra.mxu0 %v3288
          %5141 = vmatprep.subr.mxu0 %v3295
          %5142 = vmatpush1.msra.mxu0 %v3294
          %5143 = vmatprep.subr.mxu0 %v3301
          %5144 = vmatpush1.msra.mxu0 %v3300
          %5145 = vmatprep.subr.mxu0 %v3307
          %5146 = vmatpush1.msra.mxu0 %v3306
          %5147 = vmatprep.subr.mxu0 %v3313
          %5148 = vmatpush1.msra.mxu0 %v3312
          %5149 = vmatprep.subr.mxu0 %v3319
          %5150 = vmatpush1.msra.mxu0 %v3318
          %5151 = vmatprep.subr.mxu0 %v3325
          %5152 = vmatpush1.msra.mxu0 %v3324
          %5153 = vmatprep.subr.mxu0 %v3331
          %5154 = vmatpush1.msra.mxu0 %v3330
          %5155 = vmatprep.subr.mxu0 %v3337
          %5156 = vmatpush1.msra.mxu0 %v3336
          %5157 = vmatprep.subr.mxu0 %v3343
          %5158 = vmatpush1.msra.mxu0 %v3342
          %5159 = vmatprep.subr.mxu0 %v3349
          %5160 = vmatpush1.msra.mxu0 %v3348
          %5161 = vmatprep.subr.mxu0 %v3355
          %5162 = vmatpush1.msra.mxu0 %v3354
          %5163 = vmatprep.subr.mxu0 %v3361
          %5164 = vmatpush1.msra.mxu0 %v3360
          %5165 = vmatprep.subr.mxu0 %v3367
          %5166 = vmatpush1.msra.mxu0 %v3366
          %5167 = vmatprep.subr.mxu0 %v3373
          %5168 = vmatpush1.msra.mxu0 %v3372
          %5169 = vmatprep.subr.mxu0 %v3379
          %5170 = vmatpush1.msra.mxu0 %v3378
          %5171 = vmatprep.subr.mxu0 %v3385
          %5172 = vmatpush1.msra.mxu0 %v3384
          %5173 = vmatprep.subr.mxu0 %v3391
          %5174 = vmatpush1.msra.mxu0 %v3390
          %5175 = vmatprep.subr.mxu0 %v3397
          %5176 = vmatpush1.msra.mxu0 %v3396
          %5177 = vmatprep.subr.mxu0 %v3403
          %5178 = vmatpush1.msra.mxu0 %v3402
          %5179 = vmatprep.subr.mxu0 %v3409
          %5180 = vmatpush1.msra.mxu0 %v3408
          %5181 = vmatprep.subr.mxu0 %v3415
          %5182 = vmatpush1.msra.mxu0 %v3414
          %5183 = vmatprep.subr.mxu0 %v3421
          %5184 = vmatpush1.msra.mxu0 %v3420
          %5185 = vmatprep.subr.mxu0 %v3427
          %5186 = vmatpush1.msra.mxu0 %v3426
          %5187 = vmatprep.subr.mxu0 %v3433
          %5188 = vmatpush1.msra.mxu0 %v3432
          %5189 = vmatprep.mubr.f32.mxu0 %v5051
          %5190 = vmatmul.mubr.f32.gmra.mrb[0].mxu0 %v5050
          %v5191 = vpop.f32.mrb[0].mxu0
          %v5192 = vadd.f32 %v5121, %v5191
          %v5193 = vpop.f32.mrb[0].mxu0
          %v5194 = vadd.f32 %v5123, %v5193
          %5195 = vdwg.mxu0
          %5196 = vmatprep.subr.mxu0 %v3439
          %5197 = vmatpush1.msra.mxu0 %v3438
          %5198 = vmatprep.subr.mxu0 %v3445
          %5199 = vmatpush1.msra.mxu0 %v3444
          %5200 = vmatprep.subr.mxu0 %v3451
          %5201 = vmatpush1.msra.mxu0 %v3450
          %5202 = vmatprep.subr.mxu0 %v3457
          %5203 = vmatpush1.msra.mxu0 %v3456
          %5204 = vmatprep.subr.mxu0 %v3463
          %5205 = vmatpush1.msra.mxu0 %v3462
          %5206 = vmatprep.subr.mxu0 %v3469
          %5207 = vmatpush1.msra.mxu0 %v3468
          %5208 = vmatprep.subr.mxu0 %v3475
          %5209 = vmatpush1.msra.mxu0 %v3474
          %5210 = vmatprep.subr.mxu0 %v3481
          %5211 = vmatpush1.msra.mxu0 %v3480
          %5212 = vmatprep.subr.mxu0 %v3487
          %5213 = vmatpush1.msra.mxu0 %v3486
          %5214 = vmatprep.subr.mxu0 %v3493
          %5215 = vmatpush1.msra.mxu0 %v3492
          %5216 = vmatprep.subr.mxu0 %v3499
          %5217 = vmatpush1.msra.mxu0 %v3498
          %5218 = vmatprep.subr.mxu0 %v3505
          %5219 = vmatpush1.msra.mxu0 %v3504
          %5220 = vmatprep.subr.mxu0 %v3511
          %5221 = vmatpush1.msra.mxu0 %v3510
          %5222 = vmatprep.subr.mxu0 %v3517
          %5223 = vmatpush1.msra.mxu0 %v3516
          %5224 = vmatprep.subr.mxu0 %v3523
          %5225 = vmatpush1.msra.mxu0 %v3522
          %5226 = vmatprep.subr.mxu0 %v3529
          %5227 = vmatpush1.msra.mxu0 %v3528
          %5228 = vmatprep.subr.mxu0 %v3535
          %5229 = vmatpush1.msra.mxu0 %v3534
          %5230 = vmatprep.subr.mxu0 %v3541
          %5231 = vmatpush1.msra.mxu0 %v3540
          %5232 = vmatprep.subr.mxu0 %v3547
          %5233 = vmatpush1.msra.mxu0 %v3546
          %5234 = vmatprep.subr.mxu0 %v3553
          %5235 = vmatpush1.msra.mxu0 %v3552
          %5236 = vmatprep.subr.mxu0 %v3559
          %5237 = vmatpush1.msra.mxu0 %v3558
          %5238 = vmatprep.subr.mxu0 %v3565
          %5239 = vmatpush1.msra.mxu0 %v3564
          %5240 = vmatprep.subr.mxu0 %v3571
          %5241 = vmatpush1.msra.mxu0 %v3570
          %5242 = vmatprep.subr.mxu0 %v3577
          %5243 = vmatpush1.msra.mxu0 %v3576
          %5244 = vmatprep.subr.mxu0 %v3583
          %5245 = vmatpush1.msra.mxu0 %v3582
          %5246 = vmatprep.subr.mxu0 %v3589
          %5247 = vmatpush1.msra.mxu0 %v3588
          %5248 = vmatprep.subr.mxu0 %v3595
          %5249 = vmatpush1.msra.mxu0 %v3594
          %5250 = vmatprep.subr.mxu0 %v3601
          %5251 = vmatpush1.msra.mxu0 %v3600
          %5252 = vmatprep.subr.mxu0 %v3607
          %5253 = vmatpush1.msra.mxu0 %v3606
          %5254 = vmatprep.subr.mxu0 %v3613
          %5255 = vmatpush1.msra.mxu0 %v3612
          %5256 = vmatprep.subr.mxu0 %v3619
          %5257 = vmatpush1.msra.mxu0 %v3618
          %5258 = vmatprep.subr.mxu0 %v3625
          %5259 = vmatpush1.msra.mxu0 %v3624
          %5260 = vmatprep.mubr.f32.mxu0 %v5053
          %5261 = vmatmul.mubr.f32.gmra.mrb[0].mxu0 %v5052
          %v5262 = vpop.f32.mrb[0].mxu0
          %v5263 = vadd.f32 %v5192, %v5262
          %v5264 = vpop.f32.mrb[0].mxu0
          %v5265 = vadd.f32 %v5194, %v5264
          %5266 = vdwg.mxu0
          %5267 = vmatprep.subr.mxu0 %v3057
          %5268 = vmatpush1.msra.mxu0 %v3056
          %5269 = vmatprep.subr.mxu0 %v3063
          %5270 = vmatpush1.msra.mxu0 %v3062
          %5271 = vmatprep.subr.mxu0 %v3069
          %5272 = vmatpush1.msra.mxu0 %v3068
          %5273 = vmatprep.subr.mxu0 %v3075
          %5274 = vmatpush1.msra.mxu0 %v3074
          %5275 = vmatprep.subr.mxu0 %v3081
          %5276 = vmatpush1.msra.mxu0 %v3080
          %5277 = vmatprep.subr.mxu0 %v3087
          %5278 = vmatpush1.msra.mxu0 %v3086
          %5279 = vmatprep.subr.mxu0 %v3093
          %5280 = vmatpush1.msra.mxu0 %v3092
          %5281 = vmatprep.subr.mxu0 %v3099
          %5282 = vmatpush1.msra.mxu0 %v3098
          %5283 = vmatprep.subr.mxu0 %v3105
          %5284 = vmatpush1.msra.mxu0 %v3104
          %5285 = vmatprep.subr.mxu0 %v3111
          %5286 = vmatpush1.msra.mxu0 %v3110
          %5287 = vmatprep.subr.mxu0 %v3117
          %5288 = vmatpush1.msra.mxu0 %v3116
          %5289 = vmatprep.subr.mxu0 %v3123
          %5290 = vmatpush1.msra.mxu0 %v3122
          %5291 = vmatprep.subr.mxu0 %v3129
          %5292 = vmatpush1.msra.mxu0 %v3128
          %5293 = vmatprep.subr.mxu0 %v3135
          %5294 = vmatpush1.msra.mxu0 %v3134
          %5295 = vmatprep.subr.mxu0 %v3141
          %5296 = vmatpush1.msra.mxu0 %v3140
          %5297 = vmatprep.subr.mxu0 %v3147
          %5298 = vmatpush1.msra.mxu0 %v3146
          %5299 = vmatprep.subr.mxu0 %v3153
          %5300 = vmatpush1.msra.mxu0 %v3152
          %5301 = vmatprep.subr.mxu0 %v3159
          %5302 = vmatpush1.msra.mxu0 %v3158
          %5303 = vmatprep.subr.mxu0 %v3165
          %5304 = vmatpush1.msra.mxu0 %v3164
          %5305 = vmatprep.subr.mxu0 %v3171
          %5306 = vmatpush1.msra.mxu0 %v3170
          %5307 = vmatprep.subr.mxu0 %v3177
          %5308 = vmatpush1.msra.mxu0 %v3176
          %5309 = vmatprep.subr.mxu0 %v3183
          %5310 = vmatpush1.msra.mxu0 %v3182
          %5311 = vmatprep.subr.mxu0 %v3189
          %5312 = vmatpush1.msra.mxu0 %v3188
          %5313 = vmatprep.subr.mxu0 %v3195
          %5314 = vmatpush1.msra.mxu0 %v3194
          %5315 = vmatprep.subr.mxu0 %v3201
          %5316 = vmatpush1.msra.mxu0 %v3200
          %5317 = vmatprep.subr.mxu0 %v3207
          %5318 = vmatpush1.msra.mxu0 %v3206
          %5319 = vmatprep.subr.mxu0 %v3213
          %5320 = vmatpush1.msra.mxu0 %v3212
          %5321 = vmatprep.subr.mxu0 %v3219
          %5322 = vmatpush1.msra.mxu0 %v3218
          %5323 = vmatprep.subr.mxu0 %v3225
          %5324 = vmatpush1.msra.mxu0 %v3224
          %5325 = vmatprep.subr.mxu0 %v3231
          %5326 = vmatpush1.msra.mxu0 %v3230
          %5327 = vmatprep.subr.mxu0 %v3237
          %5328 = vmatpush1.msra.mxu0 %v3236
          %5329 = vmatprep.subr.mxu0 %v3243
          %5330 = vmatpush1.msra.mxu0 %v3242
          %5331 = vmatprep.mubr.f32.mxu0 %v5049
          %5332 = vmatmul.mubr.f32.gmra.mrb[0].mxu0 %v5048
          %v5333 = vpop.f32.mrb[0].mxu0
          %v5334 = vadd.f32 0.0, %v5333
          %v5335 = vpop.f32.mrb[0].mxu0
          %v5336 = vadd.f32 0.0, %v5335
          %5337 = vdwg.mxu0
          %5338 = vmatprep.subr.mxu0 %v3249
          %5339 = vmatpush1.msra.mxu0 %v3248
          %5340 = vmatprep.subr.mxu0 %v3255
          %5341 = vmatpush1.msra.mxu0 %v3254
          %5342 = vmatprep.subr.mxu0 %v3261
          %5343 = vmatpush1.msra.mxu0 %v3260
          %5344 = vmatprep.subr.mxu0 %v3267
          %5345 = vmatpush1.msra.mxu0 %v3266
          %5346 = vmatprep.subr.mxu0 %v3273
          %5347 = vmatpush1.msra.mxu0 %v3272
          %5348 = vmatprep.subr.mxu0 %v3279
          %5349 = vmatpush1.msra.mxu0 %v3278
          %5350 = vmatprep.subr.mxu0 %v3285
          %5351 = vmatpush1.msra.mxu0 %v3284
          %5352 = vmatprep.subr.mxu0 %v3291
          %5353 = vmatpush1.msra.mxu0 %v3290
          %5354 = vmatprep.subr.mxu0 %v3297
          %5355 = vmatpush1.msra.mxu0 %v3296
          %5356 = vmatprep.subr.mxu0 %v3303
          %5357 = vmatpush1.msra.mxu0 %v3302
          %5358 = vmatprep.subr.mxu0 %v3309
          %5359 = vmatpush1.msra.mxu0 %v3308
          %5360 = vmatprep.subr.mxu0 %v3315
          %5361 = vmatpush1.msra.mxu0 %v3314
          %5362 = vmatprep.subr.mxu0 %v3321
          %5363 = vmatpush1.msra.mxu0 %v3320
          %5364 = vmatprep.subr.mxu0 %v3327
          %5365 = vmatpush1.msra.mxu0 %v3326
          %5366 = vmatprep.subr.mxu0 %v3333
          %5367 = vmatpush1.msra.mxu0 %v3332
          %5368 = vmatprep.subr.mxu0 %v3339
          %5369 = vmatpush1.msra.mxu0 %v3338
          %5370 = vmatprep.subr.mxu0 %v3345
          %5371 = vmatpush1.msra.mxu0 %v3344
          %5372 = vmatprep.subr.mxu0 %v3351
          %5373 = vmatpush1.msra.mxu0 %v3350
          %5374 = vmatprep.subr.mxu0 %v3357
          %5375 = vmatpush1.msra.mxu0 %v3356
          %5376 = vmatprep.subr.mxu0 %v3363
          %5377 = vmatpush1.msra.mxu0 %v3362
          %5378 = vmatprep.subr.mxu0 %v3369
          %5379 = vmatpush1.msra.mxu0 %v3368
          %5380 = vmatprep.subr.mxu0 %v3375
          %5381 = vmatpush1.msra.mxu0 %v3374
          %5382 = vmatprep.subr.mxu0 %v3381
          %5383 = vmatpush1.msra.mxu0 %v3380
          %5384 = vmatprep.subr.mxu0 %v3387
          %5385 = vmatpush1.msra.mxu0 %v3386
          %5386 = vmatprep.subr.mxu0 %v3393
          %5387 = vmatpush1.msra.mxu0 %v3392
          %5388 = vmatprep.subr.mxu0 %v3399
          %5389 = vmatpush1.msra.mxu0 %v3398
          %5390 = vmatprep.subr.mxu0 %v3405
          %5391 = vmatpush1.msra.mxu0 %v3404
          %5392 = vmatprep.subr.mxu0 %v3411
          %5393 = vmatpush1.msra.mxu0 %v3410
          %5394 = vmatprep.subr.mxu0 %v3417
          %5395 = vmatpush1.msra.mxu0 %v3416
          %5396 = vmatprep.subr.mxu0 %v3423
          %5397 = vmatpush1.msra.mxu0 %v3422
          %5398 = vmatprep.subr.mxu0 %v3429
          %5399 = vmatpush1.msra.mxu0 %v3428
          %5400 = vmatprep.subr.mxu0 %v3435
          %5401 = vmatpush1.msra.mxu0 %v3434
          %5402 = vmatprep.mubr.f32.mxu0 %v5051
          %5403 = vmatmul.mubr.f32.gmra.mrb[0].mxu0 %v5050
          %v5404 = vpop.f32.mrb[0].mxu0
          %v5405 = vadd.f32 %v5334, %v5404
          %v5406 = vpop.f32.mrb[0].mxu0
          %v5407 = vadd.f32 %v5336, %v5406
          %5408 = vdwg.mxu0
          %5409 = vmatprep.subr.mxu0 %v3441
          %5410 = vmatpush1.msra.mxu0 %v3440
          %5411 = vmatprep.subr.mxu0 %v3447
          %5412 = vmatpush1.msra.mxu0 %v3446
          %5413 = vmatprep.subr.mxu0 %v3453
          %5414 = vmatpush1.msra.mxu0 %v3452
          %5415 = vmatprep.subr.mxu0 %v3459
          %5416 = vmatpush1.msra.mxu0 %v3458
          %5417 = vmatprep.subr.mxu0 %v3465
          %5418 = vmatpush1.msra.mxu0 %v3464
          %5419 = vmatprep.subr.mxu0 %v3471
          %5420 = vmatpush1.msra.mxu0 %v3470
          %5421 = vmatprep.subr.mxu0 %v3477
          %5422 = vmatpush1.msra.mxu0 %v3476
          %5423 = vmatprep.subr.mxu0 %v3483
          %5424 = vmatpush1.msra.mxu0 %v3482
          %5425 = vmatprep.subr.mxu0 %v3489
          %5426 = vmatpush1.msra.mxu0 %v3488
          %5427 = vmatprep.subr.mxu0 %v3495
          %5428 = vmatpush1.msra.mxu0 %v3494
          %5429 = vmatprep.subr.mxu0 %v3501
          %5430 = vmatpush1.msra.mxu0 %v3500
          %5431 = vmatprep.subr.mxu0 %v3507
          %5432 = vmatpush1.msra.mxu0 %v3506
          %5433 = vmatprep.subr.mxu0 %v3513
          %5434 = vmatpush1.msra.mxu0 %v3512
          %5435 = vmatprep.subr.mxu0 %v3519
          %5436 = vmatpush1.msra.mxu0 %v3518
          %5437 = vmatprep.subr.mxu0 %v3525
          %5438 = vmatpush1.msra.mxu0 %v3524
          %5439 = vmatprep.subr.mxu0 %v3531
          %5440 = vmatpush1.msra.mxu0 %v3530
          %5441 = vmatprep.subr.mxu0 %v3537
          %5442 = vmatpush1.msra.mxu0 %v3536
          %5443 = vmatprep.subr.mxu0 %v3543
          %5444 = vmatpush1.msra.mxu0 %v3542
          %5445 = vmatprep.subr.mxu0 %v3549
          %5446 = vmatpush1.msra.mxu0 %v3548
          %5447 = vmatprep.subr.mxu0 %v3555
          %5448 = vmatpush1.msra.mxu0 %v3554
          %5449 = vmatprep.subr.mxu0 %v3561
          %5450 = vmatpush1.msra.mxu0 %v3560
          %5451 = vmatprep.subr.mxu0 %v3567
          %5452 = vmatpush1.msra.mxu0 %v3566
          %5453 = vmatprep.subr.mxu0 %v3573
          %5454 = vmatpush1.msra.mxu0 %v3572
          %5455 = vmatprep.subr.mxu0 %v3579
          %5456 = vmatpush1.msra.mxu0 %v3578
          %5457 = vmatprep.subr.mxu0 %v3585
          %5458 = vmatpush1.msra.mxu0 %v3584
          %5459 = vmatprep.subr.mxu0 %v3591
          %5460 = vmatpush1.msra.mxu0 %v3590
          %5461 = vmatprep.subr.mxu0 %v3597
          %5462 = vmatpush1.msra.mxu0 %v3596
          %5463 = vmatprep.subr.mxu0 %v3603
          %5464 = vmatpush1.msra.mxu0 %v3602
          %5465 = vmatprep.subr.mxu0 %v3609
          %5466 = vmatpush1.msra.mxu0 %v3608
          %5467 = vmatprep.subr.mxu0 %v3615
          %5468 = vmatpush1.msra.mxu0 %v3614
          %5469 = vmatprep.subr.mxu0 %v3621
          %5470 = vmatpush1.msra.mxu0 %v3620
          %5471 = vmatprep.subr.mxu0 %v3627
          %5472 = vmatpush1.msra.mxu0 %v3626
          %5473 = vmatprep.mubr.f32.mxu0 %v5053
          %5474 = vmatmul.mubr.f32.gmra.mrb[0].mxu0 %v5052
          %v5475 = vpop.f32.mrb[0].mxu0
          %v5476 = vadd.f32 %v5405, %v5475
          %v5477 = vpop.f32.mrb[0].mxu0
          %v5478 = vadd.f32 %v5407, %v5477
          %5479 = vdwg.mxu0
          %5480 = vmatprep.subr.mxu0 %v3059
          %5481 = vmatpush1.msra.mxu0 %v3058
          %5482 = vmatprep.subr.mxu0 %v3065
          %5483 = vmatpush1.msra.mxu0 %v3064
          %5484 = vmatprep.subr.mxu0 %v3071
          %5485 = vmatpush1.msra.mxu0 %v3070
          %5486 = vmatprep.subr.mxu0 %v3077
          %5487 = vmatpush1.msra.mxu0 %v3076
          %5488 = vmatprep.subr.mxu0 %v3083
          %5489 = vmatpush1.msra.mxu0 %v3082
          %5490 = vmatprep.subr.mxu0 %v3089
          %5491 = vmatpush1.msra.mxu0 %v3088
          %5492 = vmatprep.subr.mxu0 %v3095
          %5493 = vmatpush1.msra.mxu0 %v3094
          %5494 = vmatprep.subr.mxu0 %v3101
          %5495 = vmatpush1.msra.mxu0 %v3100
          %5496 = vmatprep.subr.mxu0 %v3107
          %5497 = vmatpush1.msra.mxu0 %v3106
          %5498 = vmatprep.subr.mxu0 %v3113
          %5499 = vmatpush1.msra.mxu0 %v3112
          %5500 = vmatprep.subr.mxu0 %v3119
          %5501 = vmatpush1.msra.mxu0 %v3118
          %5502 = vmatprep.subr.mxu0 %v3125
          %5503 = vmatpush1.msra.mxu0 %v3124
          %5504 = vmatprep.subr.mxu0 %v3131
          %5505 = vmatpush1.msra.mxu0 %v3130
          %5506 = vmatprep.subr.mxu0 %v3137
          %5507 = vmatpush1.msra.mxu0 %v3136
          %5508 = vmatprep.subr.mxu0 %v3143
          %5509 = vmatpush1.msra.mxu0 %v3142
          %5510 = vmatprep.subr.mxu0 %v3149
          %5511 = vmatpush1.msra.mxu0 %v3148
          %5512 = vmatprep.subr.mxu0 %v3155
          %5513 = vmatpush1.msra.mxu0 %v3154
          %5514 = vmatprep.subr.mxu0 %v3161
          %5515 = vmatpush1.msra.mxu0 %v3160
          %5516 = vmatprep.subr.mxu0 %v3167
          %5517 = vmatpush1.msra.mxu0 %v3166
          %5518 = vmatprep.subr.mxu0 %v3173
          %5519 = vmatpush1.msra.mxu0 %v3172
          %5520 = vmatprep.subr.mxu0 %v3179
          %5521 = vmatpush1.msra.mxu0 %v3178
          %5522 = vmatprep.subr.mxu0 %v3185
          %5523 = vmatpush1.msra.mxu0 %v3184
          %5524 = vmatprep.subr.mxu0 %v3191
          %5525 = vmatpush1.msra.mxu0 %v3190
          %5526 = vmatprep.subr.mxu0 %v3197
          %5527 = vmatpush1.msra.mxu0 %v3196
          %5528 = vmatprep.subr.mxu0 %v3203
          %5529 = vmatpush1.msra.mxu0 %v3202
          %5530 = vmatprep.subr.mxu0 %v3209
          %5531 = vmatpush1.msra.mxu0 %v3208
          %5532 = vmatprep.subr.mxu0 %v3215
          %5533 = vmatpush1.msra.mxu0 %v3214
          %5534 = vmatprep.subr.mxu0 %v3221
          %5535 = vmatpush1.msra.mxu0 %v3220
          %5536 = vmatprep.subr.mxu0 %v3227
          %5537 = vmatpush1.msra.mxu0 %v3226
          %5538 = vmatprep.subr.mxu0 %v3233
          %5539 = vmatpush1.msra.mxu0 %v3232
          %5540 = vmatprep.subr.mxu0 %v3239
          %5541 = vmatpush1.msra.mxu0 %v3238
          %5542 = vmatprep.subr.mxu0 %v3245
          %5543 = vmatpush1.msra.mxu0 %v3244
          %5544 = vmatprep.mubr.f32.mxu0 %v5049
          %5545 = vmatmul.mubr.f32.gmra.mrb[0].mxu0 %v5048
          %v5546 = vpop.f32.mrb[0].mxu0
          %v5547 = vadd.f32 0.0, %v5546
          %v5548 = vpop.f32.mrb[0].mxu0
          %v5549 = vadd.f32 0.0, %v5548
          %5550 = vdwg.mxu0
          %5551 = vmatprep.subr.mxu0 %v3251
          %5552 = vmatpush1.msra.mxu0 %v3250
          %5553 = vmatprep.subr.mxu0 %v3257
          %5554 = vmatpush1.msra.mxu0 %v3256
          %5555 = vmatprep.subr.mxu0 %v3263
          %5556 = vmatpush1.msra.mxu0 %v3262
          %5557 = vmatprep.subr.mxu0 %v3269
          %5558 = vmatpush1.msra.mxu0 %v3268
          %5559 = vmatprep.subr.mxu0 %v3275
          %5560 = vmatpush1.msra.mxu0 %v3274
          %5561 = vmatprep.subr.mxu0 %v3281
          %5562 = vmatpush1.msra.mxu0 %v3280
          %5563 = vmatprep.subr.mxu0 %v3287
          %5564 = vmatpush1.msra.mxu0 %v3286
          %5565 = vmatprep.subr.mxu0 %v3293
          %5566 = vmatpush1.msra.mxu0 %v3292
          %5567 = vmatprep.subr.mxu0 %v3299
          %5568 = vmatpush1.msra.mxu0 %v3298
          %5569 = vmatprep.subr.mxu0 %v3305
          %5570 = vmatpush1.msra.mxu0 %v3304
          %5571 = vmatprep.subr.mxu0 %v3311
          %5572 = vmatpush1.msra.mxu0 %v3310
          %5573 = vmatprep.subr.mxu0 %v3317
          %5574 = vmatpush1.msra.mxu0 %v3316
          %5575 = vmatprep.subr.mxu0 %v3323
          %5576 = vmatpush1.msra.mxu0 %v3322
          %5577 = vmatprep.subr.mxu0 %v3329
          %5578 = vmatpush1.msra.mxu0 %v3328
          %5579 = vmatprep.subr.mxu0 %v3335
          %5580 = vmatpush1.msra.mxu0 %v3334
          %5581 = vmatprep.subr.mxu0 %v3341
          %5582 = vmatpush1.msra.mxu0 %v3340
          %5583 = vmatprep.subr.mxu0 %v3347
          %5584 = vmatpush1.msra.mxu0 %v3346
          %5585 = vmatprep.subr.mxu0 %v3353
          %5586 = vmatpush1.msra.mxu0 %v3352
          %5587 = vmatprep.subr.mxu0 %v3359
          %5588 = vmatpush1.msra.mxu0 %v3358
          %5589 = vmatprep.subr.mxu0 %v3365
          %5590 = vmatpush1.msra.mxu0 %v3364
          %5591 = vmatprep.subr.mxu0 %v3371
          %5592 = vmatpush1.msra.mxu0 %v3370
          %5593 = vmatprep.subr.mxu0 %v3377
          %5594 = vmatpush1.msra.mxu0 %v3376
          %5595 = vmatprep.subr.mxu0 %v3383
          %5596 = vmatpush1.msra.mxu0 %v3382
          %5597 = vmatprep.subr.mxu0 %v3389
          %5598 = vmatpush1.msra.mxu0 %v3388
          %5599 = vmatprep.subr.mxu0 %v3395
          %5600 = vmatpush1.msra.mxu0 %v3394
          %5601 = vmatprep.subr.mxu0 %v3401
          %5602 = vmatpush1.msra.mxu0 %v3400
          %5603 = vmatprep.subr.mxu0 %v3407
          %5604 = vmatpush1.msra.mxu0 %v3406
          %5605 = vmatprep.subr.mxu0 %v3413
          %5606 = vmatpush1.msra.mxu0 %v3412
          %5607 = vmatprep.subr.mxu0 %v3419
          %5608 = vmatpush1.msra.mxu0 %v3418
          %5609 = vmatprep.subr.mxu0 %v3425
          %5610 = vmatpush1.msra.mxu0 %v3424
          %5611 = vmatprep.subr.mxu0 %v3431
          %5612 = vmatpush1.msra.mxu0 %v3430
          %5613 = vmatprep.subr.mxu0 %v3437
          %5614 = vmatpush1.msra.mxu0 %v3436
          %5615 = vmatprep.mubr.f32.mxu0 %v5051
          %5616 = vmatmul.mubr.f32.gmra.mrb[0].mxu0 %v5050
          %v5617 = vpop.f32.mrb[0].mxu0
          %v5618 = vadd.f32 %v5547, %v5617
          %v5619 = vpop.f32.mrb[0].mxu0
          %v5620 = vadd.f32 %v5549, %v5619
          %5621 = vdwg.mxu0
          %5622 = vmatprep.subr.mxu0 %v3443
          %5623 = vmatpush1.msra.mxu0 %v3442
          %5624 = vmatprep.subr.mxu0 %v3449
          %5625 = vmatpush1.msra.mxu0 %v3448
          %5626 = vmatprep.subr.mxu0 %v3455
          %5627 = vmatpush1.msra.mxu0 %v3454
          %5628 = vmatprep.subr.mxu0 %v3461
          %5629 = vmatpush1.msra.mxu0 %v3460
          %5630 = vmatprep.subr.mxu0 %v3467
          %5631 = vmatpush1.msra.mxu0 %v3466
          %5632 = vmatprep.subr.mxu0 %v3473
          %5633 = vmatpush1.msra.mxu0 %v3472
          %5634 = vmatprep.subr.mxu0 %v3479
          %5635 = vmatpush1.msra.mxu0 %v3478
          %5636 = vmatprep.subr.mxu0 %v3485
          %5637 = vmatpush1.msra.mxu0 %v3484
          %5638 = vmatprep.subr.mxu0 %v3491
          %5639 = vmatpush1.msra.mxu0 %v3490
          %5640 = vmatprep.subr.mxu0 %v3497
          %5641 = vmatpush1.msra.mxu0 %v3496
          %5642 = vmatprep.subr.mxu0 %v3503
          %5643 = vmatpush1.msra.mxu0 %v3502
          %5644 = vmatprep.subr.mxu0 %v3509
          %5645 = vmatpush1.msra.mxu0 %v3508
          %5646 = vmatprep.subr.mxu0 %v3515
          %5647 = vmatpush1.msra.mxu0 %v3514
          %5648 = vmatprep.subr.mxu0 %v3521
          %5649 = vmatpush1.msra.mxu0 %v3520
          %5650 = vmatprep.subr.mxu0 %v3527
          %5651 = vmatpush1.msra.mxu0 %v3526
          %5652 = vmatprep.subr.mxu0 %v3533
          %5653 = vmatpush1.msra.mxu0 %v3532
          %5654 = vmatprep.subr.mxu0 %v3539
          %5655 = vmatpush1.msra.mxu0 %v3538
          %5656 = vmatprep.subr.mxu0 %v3545
          %5657 = vmatpush1.msra.mxu0 %v3544
          %5658 = vmatprep.subr.mxu0 %v3551
          %5659 = vmatpush1.msra.mxu0 %v3550
          %5660 = vmatprep.subr.mxu0 %v3557
          %5661 = vmatpush1.msra.mxu0 %v3556
          %5662 = vmatprep.subr.mxu0 %v3563
          %5663 = vmatpush1.msra.mxu0 %v3562
          %5664 = vmatprep.subr.mxu0 %v3569
          %5665 = vmatpush1.msra.mxu0 %v3568
          %5666 = vmatprep.subr.mxu0 %v3575
          %5667 = vmatpush1.msra.mxu0 %v3574
          %5668 = vmatprep.subr.mxu0 %v3581
          %5669 = vmatpush1.msra.mxu0 %v3580
          %5670 = vmatprep.subr.mxu0 %v3587
          %5671 = vmatpush1.msra.mxu0 %v3586
          %5672 = vmatprep.subr.mxu0 %v3593
          %5673 = vmatpush1.msra.mxu0 %v3592
          %5674 = vmatprep.subr.mxu0 %v3599
          %5675 = vmatpush1.msra.mxu0 %v3598
          %5676 = vmatprep.subr.mxu0 %v3605
          %5677 = vmatpush1.msra.mxu0 %v3604
          %5678 = vmatprep.subr.mxu0 %v3611
          %5679 = vmatpush1.msra.mxu0 %v3610
          %5680 = vmatprep.subr.mxu0 %v3617
          %5681 = vmatpush1.msra.mxu0 %v3616
          %5682 = vmatprep.subr.mxu0 %v3623
          %5683 = vmatpush1.msra.mxu0 %v3622
          %5684 = vmatprep.subr.mxu0 %v3629
          %5685 = vmatpush1.msra.mxu0 %v3628
          %5686 = vmatprep.mubr.f32.mxu0 %v5053
          %5687 = vmatmul.mubr.f32.gmra.mrb[0].mxu0 %v5052
          %v5688 = vpop.f32.mrb[0].mxu0
          %v5689 = vadd.f32 %v5618, %v5688
          %v5690 = vpop.f32.mrb[0].mxu0
          %v5691 = vadd.f32 %v5620, %v5690
          %5692 = vdwg.mxu0
          %v5693 = vxor.u32 %v5263, 2147483648
          %v5694 = vxor.u32 %v5265, 2147483648
          %v5695 = vxor.u32 %v5476, 2147483648
          %v5696 = vxor.u32 %v5478, 2147483648
          %v5697 = vxor.u32 %v5689, 2147483648
          %v5698 = vxor.u32 %v5691, 2147483648
          %v5699 = vmul.f32 %v5693, 1.442695
          %v5700 = vpow.pop %v5699
          %v5701 = vmul.f32 %v5694, 1.442695
          %v5702 = vpow.pop %v5701
          %v5703 = vmul.f32 %v5695, 1.442695
          %v5704 = vpow.pop %v5703
          %v5705 = vmul.f32 %v5696, 1.442695
          %v5706 = vpow.pop %v5705
          %v5707 = vmul.f32 %v5697, 1.442695
          %v5708 = vpow.pop %v5707
          %v5709 = vmul.f32 %v5698, 1.442695
          %v5710 = vpow.pop %v5709
          %v5711 = vadd.f32 %v5700, 1.0
          %v5712 = vadd.f32 %v5702, 1.0
          %v5713 = vadd.f32 %v5704, 1.0
          %v5714 = vadd.f32 %v5706, 1.0
          %v5715 = vadd.f32 %v5708, 1.0
          %v5716 = vadd.f32 %v5710, 1.0
          %v5717 = vrcp.pop %v5711
          %v5718 = vmul.f32 1.0, %v5717
          %v5719 = vrcp.pop %v5712
          %v5720 = vmul.f32 1.0, %v5719
          %v5721 = vrcp.pop %v5713
          %v5722 = vmul.f32 1.0, %v5721
          %v5723 = vrcp.pop %v5714
          %v5724 = vmul.f32 1.0, %v5723
          %v5725 = vrcp.pop %v5715
          %v5726 = vmul.f32 1.0, %v5725
          %v5727 = vrcp.pop %v5716
          %v5728 = vmul.f32 1.0, %v5727
          %v5729 = vmul.f32 %v5718, %v5048
          %v5730 = vmul.f32 %v5720, %v5049
          %v5731 = vmul.f32 %v5722, %v5050
          %v5732 = vmul.f32 %v5724, %v5051
          %v5733 = vmul.f32 %v5726, %v5052
          %v5734 = vmul.f32 %v5728, %v5053
          %v5735 = vsub.f32 1.0, %v5718
          %v5736 = vsub.f32 1.0, %v5720
          %v5737 = vsub.f32 1.0, %v5722
          %v5738 = vsub.f32 1.0, %v5724
          %v5739 = vsub.f32 1.0, %v5726
          %v5740 = vsub.f32 1.0, %v5728
          %v5741 = vmul.f32 %v5735, %v4367
          %v5742 = vmul.f32 %v5736, %v4368
          %v5743 = vmul.f32 %v5737, %v4369
          %v5744 = vmul.f32 %v5738, %v4370
          %v5745 = vmul.f32 %v5739, %v4371
          %v5746 = vmul.f32 %v5740, %v4372
          %v5747 = vadd.f32 %v5729, %v5741
          %v5748 = vadd.f32 %v5730, %v5742
          %v5749 = vadd.f32 %v5731, %v5743
          %v5750 = vadd.f32 %v5732, %v5744
          %v5751 = vadd.f32 %v5733, %v5745
          %v5752 = vadd.f32 %v5734, %v5746
          %v5753 = vrot.slane %v1896, 4
          %v5754 = vrot.slane %v1897, 4
          %v5755 = vrot.slane %v1898, 4
          %v5756 = vrot.slane %v1899, 4
          %v5757 = vrot.slane %v1900, 4
          %v5758 = vrot.slane %v1901, 4
          %v5765 = vsel %vm3651, %v3639, %v5753
          %v5766 = vsel %vm3651, %v3640, %v5754
          %v5767 = vsel %vm3651, %v3641, %v5755
          %v5768 = vsel %vm3651, %v3642, %v5756
          %v5769 = vsel %vm3651, %v3643, %v5757
          %v5770 = vsel %vm3651, %v3644, %v5758
          %5771 = vmatprep.subr.mxu0 %v2191
          %5772 = vmatpush1.msra.mxu0 %v2190
          %5773 = vmatprep.subr.mxu0 %v2197
          %5774 = vmatpush1.msra.mxu0 %v2196
          %5775 = vmatprep.subr.mxu0 %v2203
          %5776 = vmatpush1.msra.mxu0 %v2202
          %5777 = vmatprep.subr.mxu0 %v2209
          %5778 = vmatpush1.msra.mxu0 %v2208
          %5779 = vmatprep.subr.mxu0 %v2215
          %5780 = vmatpush1.msra.mxu0 %v2214
          %5781 = vmatprep.subr.mxu0 %v2221
          %5782 = vmatpush1.msra.mxu0 %v2220
          %5783 = vmatprep.subr.mxu0 %v2227
          %5784 = vmatpush1.msra.mxu0 %v2226
          %5785 = vmatprep.subr.mxu0 %v2233
          %5786 = vmatpush1.msra.mxu0 %v2232
          %5787 = vmatprep.subr.mxu0 %v2239
          %5788 = vmatpush1.msra.mxu0 %v2238
          %5789 = vmatprep.subr.mxu0 %v2245
          %5790 = vmatpush1.msra.mxu0 %v2244
          %5791 = vmatprep.subr.mxu0 %v2251
          %5792 = vmatpush1.msra.mxu0 %v2250
          %5793 = vmatprep.subr.mxu0 %v2257
          %5794 = vmatpush1.msra.mxu0 %v2256
          %5795 = vmatprep.subr.mxu0 %v2263
          %5796 = vmatpush1.msra.mxu0 %v2262
          %5797 = vmatprep.subr.mxu0 %v2269
          %5798 = vmatpush1.msra.mxu0 %v2268
          %5799 = vmatprep.subr.mxu0 %v2275
          %5800 = vmatpush1.msra.mxu0 %v2274
          %5801 = vmatprep.subr.mxu0 %v2281
          %5802 = vmatpush1.msra.mxu0 %v2280
          %5803 = vmatprep.subr.mxu0 %v2287
          %5804 = vmatpush1.msra.mxu0 %v2286
          %5805 = vmatprep.subr.mxu0 %v2293
          %5806 = vmatpush1.msra.mxu0 %v2292
          %5807 = vmatprep.subr.mxu0 %v2299
          %5808 = vmatpush1.msra.mxu0 %v2298
          %5809 = vmatprep.subr.mxu0 %v2305
          %5810 = vmatpush1.msra.mxu0 %v2304
          %5811 = vmatprep.subr.mxu0 %v2311
          %5812 = vmatpush1.msra.mxu0 %v2310
          %5813 = vmatprep.subr.mxu0 %v2317
          %5814 = vmatpush1.msra.mxu0 %v2316
          %5815 = vmatprep.subr.mxu0 %v2323
          %5816 = vmatpush1.msra.mxu0 %v2322
          %5817 = vmatprep.subr.mxu0 %v2329
          %5818 = vmatpush1.msra.mxu0 %v2328
          %5819 = vmatprep.subr.mxu0 %v2335
          %5820 = vmatpush1.msra.mxu0 %v2334
          %5821 = vmatprep.subr.mxu0 %v2341
          %5822 = vmatpush1.msra.mxu0 %v2340
          %5823 = vmatprep.subr.mxu0 %v2347
          %5824 = vmatpush1.msra.mxu0 %v2346
          %5825 = vmatprep.subr.mxu0 %v2353
          %5826 = vmatpush1.msra.mxu0 %v2352
          %5827 = vmatprep.subr.mxu0 %v2359
          %5828 = vmatpush1.msra.mxu0 %v2358
          %5829 = vmatprep.subr.mxu0 %v2365
          %5830 = vmatpush1.msra.mxu0 %v2364
          %5831 = vmatprep.subr.mxu0 %v2371
          %5832 = vmatpush1.msra.mxu0 %v2370
          %5833 = vmatprep.subr.mxu0 %v2377
          %5834 = vmatpush1.msra.mxu0 %v2376
          %5835 = vmatprep.mubr.f32.mxu0 %v5748
          %5836 = vmatmul.mubr.f32.gmra.mrb[0].mxu0 %v5747
          %v5837 = vpop.f32.mrb[0].mxu0
          %v5838 = vadd.f32 0.0, %v5837
          %v5839 = vpop.f32.mrb[0].mxu0
          %v5840 = vadd.f32 0.0, %v5839
          %5841 = vdwg.mxu0
          %5842 = vmatprep.subr.mxu0 %v2383
          %5843 = vmatpush1.msra.mxu0 %v2382
          %5844 = vmatprep.subr.mxu0 %v2389
          %5845 = vmatpush1.msra.mxu0 %v2388
          %5846 = vmatprep.subr.mxu0 %v2395
          %5847 = vmatpush1.msra.mxu0 %v2394
          %5848 = vmatprep.subr.mxu0 %v2401
          %5849 = vmatpush1.msra.mxu0 %v2400
          %5850 = vmatprep.subr.mxu0 %v2407
          %5851 = vmatpush1.msra.mxu0 %v2406
          %5852 = vmatprep.subr.mxu0 %v2413
          %5853 = vmatpush1.msra.mxu0 %v2412
          %5854 = vmatprep.subr.mxu0 %v2419
          %5855 = vmatpush1.msra.mxu0 %v2418
          %5856 = vmatprep.subr.mxu0 %v2425
          %5857 = vmatpush1.msra.mxu0 %v2424
          %5858 = vmatprep.subr.mxu0 %v2431
          %5859 = vmatpush1.msra.mxu0 %v2430
          %5860 = vmatprep.subr.mxu0 %v2437
          %5861 = vmatpush1.msra.mxu0 %v2436
          %5862 = vmatprep.subr.mxu0 %v2443
          %5863 = vmatpush1.msra.mxu0 %v2442
          %5864 = vmatprep.subr.mxu0 %v2449
          %5865 = vmatpush1.msra.mxu0 %v2448
          %5866 = vmatprep.subr.mxu0 %v2455
          %5867 = vmatpush1.msra.mxu0 %v2454
          %5868 = vmatprep.subr.mxu0 %v2461
          %5869 = vmatpush1.msra.mxu0 %v2460
          %5870 = vmatprep.subr.mxu0 %v2467
          %5871 = vmatpush1.msra.mxu0 %v2466
          %5872 = vmatprep.subr.mxu0 %v2473
          %5873 = vmatpush1.msra.mxu0 %v2472
          %5874 = vmatprep.subr.mxu0 %v2479
          %5875 = vmatpush1.msra.mxu0 %v2478
          %5876 = vmatprep.subr.mxu0 %v2485
          %5877 = vmatpush1.msra.mxu0 %v2484
          %5878 = vmatprep.subr.mxu0 %v2491
          %5879 = vmatpush1.msra.mxu0 %v2490
          %5880 = vmatprep.subr.mxu0 %v2497
          %5881 = vmatpush1.msra.mxu0 %v2496
          %5882 = vmatprep.subr.mxu0 %v2503
          %5883 = vmatpush1.msra.mxu0 %v2502
          %5884 = vmatprep.subr.mxu0 %v2509
          %5885 = vmatpush1.msra.mxu0 %v2508
          %5886 = vmatprep.subr.mxu0 %v2515
          %5887 = vmatpush1.msra.mxu0 %v2514
          %5888 = vmatprep.subr.mxu0 %v2521
          %5889 = vmatpush1.msra.mxu0 %v2520
          %5890 = vmatprep.subr.mxu0 %v2527
          %5891 = vmatpush1.msra.mxu0 %v2526
          %5892 = vmatprep.subr.mxu0 %v2533
          %5893 = vmatpush1.msra.mxu0 %v2532
          %5894 = vmatprep.subr.mxu0 %v2539
          %5895 = vmatpush1.msra.mxu0 %v2538
          %5896 = vmatprep.subr.mxu0 %v2545
          %5897 = vmatpush1.msra.mxu0 %v2544
          %5898 = vmatprep.subr.mxu0 %v2551
          %5899 = vmatpush1.msra.mxu0 %v2550
          %5900 = vmatprep.subr.mxu0 %v2557
          %5901 = vmatpush1.msra.mxu0 %v2556
          %5902 = vmatprep.subr.mxu0 %v2563
          %5903 = vmatpush1.msra.mxu0 %v2562
          %5904 = vmatprep.subr.mxu0 %v2569
          %5905 = vmatpush1.msra.mxu0 %v2568
          %5906 = vmatprep.mubr.f32.mxu0 %v5750
          %5907 = vmatmul.mubr.f32.gmra.mrb[0].mxu0 %v5749
          %v5908 = vpop.f32.mrb[0].mxu0
          %v5909 = vadd.f32 %v5838, %v5908
          %v5910 = vpop.f32.mrb[0].mxu0
          %v5911 = vadd.f32 %v5840, %v5910
          %5912 = vdwg.mxu0
          %5913 = vmatprep.subr.mxu0 %v2575
          %5914 = vmatpush1.msra.mxu0 %v2574
          %5915 = vmatprep.subr.mxu0 %v2581
          %5916 = vmatpush1.msra.mxu0 %v2580
          %5917 = vmatprep.subr.mxu0 %v2587
          %5918 = vmatpush1.msra.mxu0 %v2586
          %5919 = vmatprep.subr.mxu0 %v2593
          %5920 = vmatpush1.msra.mxu0 %v2592
          %5921 = vmatprep.subr.mxu0 %v2599
          %5922 = vmatpush1.msra.mxu0 %v2598
          %5923 = vmatprep.subr.mxu0 %v2605
          %5924 = vmatpush1.msra.mxu0 %v2604
          %5925 = vmatprep.subr.mxu0 %v2611
          %5926 = vmatpush1.msra.mxu0 %v2610
          %5927 = vmatprep.subr.mxu0 %v2617
          %5928 = vmatpush1.msra.mxu0 %v2616
          %5929 = vmatprep.subr.mxu0 %v2623
          %5930 = vmatpush1.msra.mxu0 %v2622
          %5931 = vmatprep.subr.mxu0 %v2629
          %5932 = vmatpush1.msra.mxu0 %v2628
          %5933 = vmatprep.subr.mxu0 %v2635
          %5934 = vmatpush1.msra.mxu0 %v2634
          %5935 = vmatprep.subr.mxu0 %v2641
          %5936 = vmatpush1.msra.mxu0 %v2640
          %5937 = vmatprep.subr.mxu0 %v2647
          %5938 = vmatpush1.msra.mxu0 %v2646
          %5939 = vmatprep.subr.mxu0 %v2653
          %5940 = vmatpush1.msra.mxu0 %v2652
          %5941 = vmatprep.subr.mxu0 %v2659
          %5942 = vmatpush1.msra.mxu0 %v2658
          %5943 = vmatprep.subr.mxu0 %v2665
          %5944 = vmatpush1.msra.mxu0 %v2664
          %5945 = vmatprep.subr.mxu0 %v2671
          %5946 = vmatpush1.msra.mxu0 %v2670
          %5947 = vmatprep.subr.mxu0 %v2677
          %5948 = vmatpush1.msra.mxu0 %v2676
          %5949 = vmatprep.subr.mxu0 %v2683
          %5950 = vmatpush1.msra.mxu0 %v2682
          %5951 = vmatprep.subr.mxu0 %v2689
          %5952 = vmatpush1.msra.mxu0 %v2688
          %5953 = vmatprep.subr.mxu0 %v2695
          %5954 = vmatpush1.msra.mxu0 %v2694
          %5955 = vmatprep.subr.mxu0 %v2701
          %5956 = vmatpush1.msra.mxu0 %v2700
          %5957 = vmatprep.subr.mxu0 %v2707
          %5958 = vmatpush1.msra.mxu0 %v2706
          %5959 = vmatprep.subr.mxu0 %v2713
          %5960 = vmatpush1.msra.mxu0 %v2712
          %5961 = vmatprep.subr.mxu0 %v2719
          %5962 = vmatpush1.msra.mxu0 %v2718
          %5963 = vmatprep.subr.mxu0 %v2725
          %5964 = vmatpush1.msra.mxu0 %v2724
          %5965 = vmatprep.subr.mxu0 %v2731
          %5966 = vmatpush1.msra.mxu0 %v2730
          %5967 = vmatprep.subr.mxu0 %v2737
          %5968 = vmatpush1.msra.mxu0 %v2736
          %5969 = vmatprep.subr.mxu0 %v2743
          %5970 = vmatpush1.msra.mxu0 %v2742
          %5971 = vmatprep.subr.mxu0 %v2749
          %5972 = vmatpush1.msra.mxu0 %v2748
          %5973 = vmatprep.subr.mxu0 %v2755
          %5974 = vmatpush1.msra.mxu0 %v2754
          %5975 = vmatprep.subr.mxu0 %v2761
          %5976 = vmatpush1.msra.mxu0 %v2760
          %5977 = vmatprep.mubr.f32.mxu0 %v5752
          %5978 = vmatmul.mubr.f32.gmra.mrb[0].mxu0 %v5751
          %v5979 = vpop.f32.mrb[0].mxu0
          %v5980 = vadd.f32 %v5909, %v5979
          %v5981 = vpop.f32.mrb[0].mxu0
          %v5982 = vadd.f32 %v5911, %v5981
          %5983 = vdwg.mxu0
          %5984 = vmatprep.subr.mxu0 %v2193
          %5985 = vmatpush1.msra.mxu0 %v2192
          %5986 = vmatprep.subr.mxu0 %v2199
          %5987 = vmatpush1.msra.mxu0 %v2198
          %5988 = vmatprep.subr.mxu0 %v2205
          %5989 = vmatpush1.msra.mxu0 %v2204
          %5990 = vmatprep.subr.mxu0 %v2211
          %5991 = vmatpush1.msra.mxu0 %v2210
          %5992 = vmatprep.subr.mxu0 %v2217
          %5993 = vmatpush1.msra.mxu0 %v2216
          %5994 = vmatprep.subr.mxu0 %v2223
          %5995 = vmatpush1.msra.mxu0 %v2222
          %5996 = vmatprep.subr.mxu0 %v2229
          %5997 = vmatpush1.msra.mxu0 %v2228
          %5998 = vmatprep.subr.mxu0 %v2235
          %5999 = vmatpush1.msra.mxu0 %v2234
          %6000 = vmatprep.subr.mxu0 %v2241
          %6001 = vmatpush1.msra.mxu0 %v2240
          %6002 = vmatprep.subr.mxu0 %v2247
          %6003 = vmatpush1.msra.mxu0 %v2246
          %6004 = vmatprep.subr.mxu0 %v2253
          %6005 = vmatpush1.msra.mxu0 %v2252
          %6006 = vmatprep.subr.mxu0 %v2259
          %6007 = vmatpush1.msra.mxu0 %v2258
          %6008 = vmatprep.subr.mxu0 %v2265
          %6009 = vmatpush1.msra.mxu0 %v2264
          %6010 = vmatprep.subr.mxu0 %v2271
          %6011 = vmatpush1.msra.mxu0 %v2270
          %6012 = vmatprep.subr.mxu0 %v2277
          %6013 = vmatpush1.msra.mxu0 %v2276
          %6014 = vmatprep.subr.mxu0 %v2283
          %6015 = vmatpush1.msra.mxu0 %v2282
          %6016 = vmatprep.subr.mxu0 %v2289
          %6017 = vmatpush1.msra.mxu0 %v2288
          %6018 = vmatprep.subr.mxu0 %v2295
          %6019 = vmatpush1.msra.mxu0 %v2294
          %6020 = vmatprep.subr.mxu0 %v2301
          %6021 = vmatpush1.msra.mxu0 %v2300
          %6022 = vmatprep.subr.mxu0 %v2307
          %6023 = vmatpush1.msra.mxu0 %v2306
          %6024 = vmatprep.subr.mxu0 %v2313
          %6025 = vmatpush1.msra.mxu0 %v2312
          %6026 = vmatprep.subr.mxu0 %v2319
          %6027 = vmatpush1.msra.mxu0 %v2318
          %6028 = vmatprep.subr.mxu0 %v2325
          %6029 = vmatpush1.msra.mxu0 %v2324
          %6030 = vmatprep.subr.mxu0 %v2331
          %6031 = vmatpush1.msra.mxu0 %v2330
          %6032 = vmatprep.subr.mxu0 %v2337
          %6033 = vmatpush1.msra.mxu0 %v2336
          %6034 = vmatprep.subr.mxu0 %v2343
          %6035 = vmatpush1.msra.mxu0 %v2342
          %6036 = vmatprep.subr.mxu0 %v2349
          %6037 = vmatpush1.msra.mxu0 %v2348
          %6038 = vmatprep.subr.mxu0 %v2355
          %6039 = vmatpush1.msra.mxu0 %v2354
          %6040 = vmatprep.subr.mxu0 %v2361
          %6041 = vmatpush1.msra.mxu0 %v2360
          %6042 = vmatprep.subr.mxu0 %v2367
          %6043 = vmatpush1.msra.mxu0 %v2366
          %6044 = vmatprep.subr.mxu0 %v2373
          %6045 = vmatpush1.msra.mxu0 %v2372
          %6046 = vmatprep.subr.mxu0 %v2379
          %6047 = vmatpush1.msra.mxu0 %v2378
          %6048 = vmatprep.mubr.f32.mxu0 %v5748
          %6049 = vmatmul.mubr.f32.gmra.mrb[0].mxu0 %v5747
          %v6050 = vpop.f32.mrb[0].mxu0
          %v6051 = vadd.f32 0.0, %v6050
          %v6052 = vpop.f32.mrb[0].mxu0
          %v6053 = vadd.f32 0.0, %v6052
          %6054 = vdwg.mxu0
          %6055 = vmatprep.subr.mxu0 %v2385
          %6056 = vmatpush1.msra.mxu0 %v2384
          %6057 = vmatprep.subr.mxu0 %v2391
          %6058 = vmatpush1.msra.mxu0 %v2390
          %6059 = vmatprep.subr.mxu0 %v2397
          %6060 = vmatpush1.msra.mxu0 %v2396
          %6061 = vmatprep.subr.mxu0 %v2403
          %6062 = vmatpush1.msra.mxu0 %v2402
          %6063 = vmatprep.subr.mxu0 %v2409
          %6064 = vmatpush1.msra.mxu0 %v2408
          %6065 = vmatprep.subr.mxu0 %v2415
          %6066 = vmatpush1.msra.mxu0 %v2414
          %6067 = vmatprep.subr.mxu0 %v2421
          %6068 = vmatpush1.msra.mxu0 %v2420
          %6069 = vmatprep.subr.mxu0 %v2427
          %6070 = vmatpush1.msra.mxu0 %v2426
          %6071 = vmatprep.subr.mxu0 %v2433
          %6072 = vmatpush1.msra.mxu0 %v2432
          %6073 = vmatprep.subr.mxu0 %v2439
          %6074 = vmatpush1.msra.mxu0 %v2438
          %6075 = vmatprep.subr.mxu0 %v2445
          %6076 = vmatpush1.msra.mxu0 %v2444
          %6077 = vmatprep.subr.mxu0 %v2451
          %6078 = vmatpush1.msra.mxu0 %v2450
          %6079 = vmatprep.subr.mxu0 %v2457
          %6080 = vmatpush1.msra.mxu0 %v2456
          %6081 = vmatprep.subr.mxu0 %v2463
          %6082 = vmatpush1.msra.mxu0 %v2462
          %6083 = vmatprep.subr.mxu0 %v2469
          %6084 = vmatpush1.msra.mxu0 %v2468
          %6085 = vmatprep.subr.mxu0 %v2475
          %6086 = vmatpush1.msra.mxu0 %v2474
          %6087 = vmatprep.subr.mxu0 %v2481
          %6088 = vmatpush1.msra.mxu0 %v2480
          %6089 = vmatprep.subr.mxu0 %v2487
          %6090 = vmatpush1.msra.mxu0 %v2486
          %6091 = vmatprep.subr.mxu0 %v2493
          %6092 = vmatpush1.msra.mxu0 %v2492
          %6093 = vmatprep.subr.mxu0 %v2499
          %6094 = vmatpush1.msra.mxu0 %v2498
          %6095 = vmatprep.subr.mxu0 %v2505
          %6096 = vmatpush1.msra.mxu0 %v2504
          %6097 = vmatprep.subr.mxu0 %v2511
          %6098 = vmatpush1.msra.mxu0 %v2510
          %6099 = vmatprep.subr.mxu0 %v2517
          %6100 = vmatpush1.msra.mxu0 %v2516
          %6101 = vmatprep.subr.mxu0 %v2523
          %6102 = vmatpush1.msra.mxu0 %v2522
          %6103 = vmatprep.subr.mxu0 %v2529
          %6104 = vmatpush1.msra.mxu0 %v2528
          %6105 = vmatprep.subr.mxu0 %v2535
          %6106 = vmatpush1.msra.mxu0 %v2534
          %6107 = vmatprep.subr.mxu0 %v2541
          %6108 = vmatpush1.msra.mxu0 %v2540
          %6109 = vmatprep.subr.mxu0 %v2547
          %6110 = vmatpush1.msra.mxu0 %v2546
          %6111 = vmatprep.subr.mxu0 %v2553
          %6112 = vmatpush1.msra.mxu0 %v2552
          %6113 = vmatprep.subr.mxu0 %v2559
          %6114 = vmatpush1.msra.mxu0 %v2558
          %6115 = vmatprep.subr.mxu0 %v2565
          %6116 = vmatpush1.msra.mxu0 %v2564
          %6117 = vmatprep.subr.mxu0 %v2571
          %6118 = vmatpush1.msra.mxu0 %v2570
          %6119 = vmatprep.mubr.f32.mxu0 %v5750
          %6120 = vmatmul.mubr.f32.gmra.mrb[0].mxu0 %v5749
          %v6121 = vpop.f32.mrb[0].mxu0
          %v6122 = vadd.f32 %v6051, %v6121
          %v6123 = vpop.f32.mrb[0].mxu0
          %v6124 = vadd.f32 %v6053, %v6123
          %6125 = vdwg.mxu0
          %6126 = vmatprep.subr.mxu0 %v2577
          %6127 = vmatpush1.msra.mxu0 %v2576
          %6128 = vmatprep.subr.mxu0 %v2583
          %6129 = vmatpush1.msra.mxu0 %v2582
          %6130 = vmatprep.subr.mxu0 %v2589
          %6131 = vmatpush1.msra.mxu0 %v2588
          %6132 = vmatprep.subr.mxu0 %v2595
          %6133 = vmatpush1.msra.mxu0 %v2594
          %6134 = vmatprep.subr.mxu0 %v2601
          %6135 = vmatpush1.msra.mxu0 %v2600
          %6136 = vmatprep.subr.mxu0 %v2607
          %6137 = vmatpush1.msra.mxu0 %v2606
          %6138 = vmatprep.subr.mxu0 %v2613
          %6139 = vmatpush1.msra.mxu0 %v2612
          %6140 = vmatprep.subr.mxu0 %v2619
          %6141 = vmatpush1.msra.mxu0 %v2618
          %6142 = vmatprep.subr.mxu0 %v2625
          %6143 = vmatpush1.msra.mxu0 %v2624
          %6144 = vmatprep.subr.mxu0 %v2631
          %6145 = vmatpush1.msra.mxu0 %v2630
          %6146 = vmatprep.subr.mxu0 %v2637
          %6147 = vmatpush1.msra.mxu0 %v2636
          %6148 = vmatprep.subr.mxu0 %v2643
          %6149 = vmatpush1.msra.mxu0 %v2642
          %6150 = vmatprep.subr.mxu0 %v2649
          %6151 = vmatpush1.msra.mxu0 %v2648
          %6152 = vmatprep.subr.mxu0 %v2655
          %6153 = vmatpush1.msra.mxu0 %v2654
          %6154 = vmatprep.subr.mxu0 %v2661
          %6155 = vmatpush1.msra.mxu0 %v2660
          %6156 = vmatprep.subr.mxu0 %v2667
          %6157 = vmatpush1.msra.mxu0 %v2666
          %6158 = vmatprep.subr.mxu0 %v2673
          %6159 = vmatpush1.msra.mxu0 %v2672
          %6160 = vmatprep.subr.mxu0 %v2679
          %6161 = vmatpush1.msra.mxu0 %v2678
          %6162 = vmatprep.subr.mxu0 %v2685
          %6163 = vmatpush1.msra.mxu0 %v2684
          %6164 = vmatprep.subr.mxu0 %v2691
          %6165 = vmatpush1.msra.mxu0 %v2690
          %6166 = vmatprep.subr.mxu0 %v2697
          %6167 = vmatpush1.msra.mxu0 %v2696
          %6168 = vmatprep.subr.mxu0 %v2703
          %6169 = vmatpush1.msra.mxu0 %v2702
          %6170 = vmatprep.subr.mxu0 %v2709
          %6171 = vmatpush1.msra.mxu0 %v2708
          %6172 = vmatprep.subr.mxu0 %v2715
          %6173 = vmatpush1.msra.mxu0 %v2714
          %6174 = vmatprep.subr.mxu0 %v2721
          %6175 = vmatpush1.msra.mxu0 %v2720
          %6176 = vmatprep.subr.mxu0 %v2727
          %6177 = vmatpush1.msra.mxu0 %v2726
          %6178 = vmatprep.subr.mxu0 %v2733
          %6179 = vmatpush1.msra.mxu0 %v2732
          %6180 = vmatprep.subr.mxu0 %v2739
          %6181 = vmatpush1.msra.mxu0 %v2738
          %6182 = vmatprep.subr.mxu0 %v2745
          %6183 = vmatpush1.msra.mxu0 %v2744
          %6184 = vmatprep.subr.mxu0 %v2751
          %6185 = vmatpush1.msra.mxu0 %v2750
          %6186 = vmatprep.subr.mxu0 %v2757
          %6187 = vmatpush1.msra.mxu0 %v2756
          %6188 = vmatprep.subr.mxu0 %v2763
          %6189 = vmatpush1.msra.mxu0 %v2762
          %6190 = vmatprep.mubr.f32.mxu0 %v5752
          %6191 = vmatmul.mubr.f32.gmra.mrb[0].mxu0 %v5751
          %v6192 = vpop.f32.mrb[0].mxu0
          %v6193 = vadd.f32 %v6122, %v6192
          %v6194 = vpop.f32.mrb[0].mxu0
          %v6195 = vadd.f32 %v6124, %v6194
          %6196 = vdwg.mxu0
          %6197 = vmatprep.subr.mxu0 %v2195
          %6198 = vmatpush1.msra.mxu0 %v2194
          %6199 = vmatprep.subr.mxu0 %v2201
          %6200 = vmatpush1.msra.mxu0 %v2200
          %6201 = vmatprep.subr.mxu0 %v2207
          %6202 = vmatpush1.msra.mxu0 %v2206
          %6203 = vmatprep.subr.mxu0 %v2213
          %6204 = vmatpush1.msra.mxu0 %v2212
          %6205 = vmatprep.subr.mxu0 %v2219
          %6206 = vmatpush1.msra.mxu0 %v2218
          %6207 = vmatprep.subr.mxu0 %v2225
          %6208 = vmatpush1.msra.mxu0 %v2224
          %6209 = vmatprep.subr.mxu0 %v2231
          %6210 = vmatpush1.msra.mxu0 %v2230
          %6211 = vmatprep.subr.mxu0 %v2237
          %6212 = vmatpush1.msra.mxu0 %v2236
          %6213 = vmatprep.subr.mxu0 %v2243
          %6214 = vmatpush1.msra.mxu0 %v2242
          %6215 = vmatprep.subr.mxu0 %v2249
          %6216 = vmatpush1.msra.mxu0 %v2248
          %6217 = vmatprep.subr.mxu0 %v2255
          %6218 = vmatpush1.msra.mxu0 %v2254
          %6219 = vmatprep.subr.mxu0 %v2261
          %6220 = vmatpush1.msra.mxu0 %v2260
          %6221 = vmatprep.subr.mxu0 %v2267
          %6222 = vmatpush1.msra.mxu0 %v2266
          %6223 = vmatprep.subr.mxu0 %v2273
          %6224 = vmatpush1.msra.mxu0 %v2272
          %6225 = vmatprep.subr.mxu0 %v2279
          %6226 = vmatpush1.msra.mxu0 %v2278
          %6227 = vmatprep.subr.mxu0 %v2285
          %6228 = vmatpush1.msra.mxu0 %v2284
          %6229 = vmatprep.subr.mxu0 %v2291
          %6230 = vmatpush1.msra.mxu0 %v2290
          %6231 = vmatprep.subr.mxu0 %v2297
          %6232 = vmatpush1.msra.mxu0 %v2296
          %6233 = vmatprep.subr.mxu0 %v2303
          %6234 = vmatpush1.msra.mxu0 %v2302
          %6235 = vmatprep.subr.mxu0 %v2309
          %6236 = vmatpush1.msra.mxu0 %v2308
          %6237 = vmatprep.subr.mxu0 %v2315
          %6238 = vmatpush1.msra.mxu0 %v2314
          %6239 = vmatprep.subr.mxu0 %v2321
          %6240 = vmatpush1.msra.mxu0 %v2320
          %6241 = vmatprep.subr.mxu0 %v2327
          %6242 = vmatpush1.msra.mxu0 %v2326
          %6243 = vmatprep.subr.mxu0 %v2333
          %6244 = vmatpush1.msra.mxu0 %v2332
          %6245 = vmatprep.subr.mxu0 %v2339
          %6246 = vmatpush1.msra.mxu0 %v2338
          %6247 = vmatprep.subr.mxu0 %v2345
          %6248 = vmatpush1.msra.mxu0 %v2344
          %6249 = vmatprep.subr.mxu0 %v2351
          %6250 = vmatpush1.msra.mxu0 %v2350
          %6251 = vmatprep.subr.mxu0 %v2357
          %6252 = vmatpush1.msra.mxu0 %v2356
          %6253 = vmatprep.subr.mxu0 %v2363
          %6254 = vmatpush1.msra.mxu0 %v2362
          %6255 = vmatprep.subr.mxu0 %v2369
          %6256 = vmatpush1.msra.mxu0 %v2368
          %6257 = vmatprep.subr.mxu0 %v2375
          %6258 = vmatpush1.msra.mxu0 %v2374
          %6259 = vmatprep.subr.mxu0 %v2381
          %6260 = vmatpush1.msra.mxu0 %v2380
          %6261 = vmatprep.mubr.f32.mxu0 %v5748
          %6262 = vmatmul.mubr.f32.gmra.mrb[0].mxu0 %v5747
          %v6263 = vpop.f32.mrb[0].mxu0
          %v6264 = vadd.f32 0.0, %v6263
          %v6265 = vpop.f32.mrb[0].mxu0
          %v6266 = vadd.f32 0.0, %v6265
          %6267 = vdwg.mxu0
          %6268 = vmatprep.subr.mxu0 %v2387
          %6269 = vmatpush1.msra.mxu0 %v2386
          %6270 = vmatprep.subr.mxu0 %v2393
          %6271 = vmatpush1.msra.mxu0 %v2392
          %6272 = vmatprep.subr.mxu0 %v2399
          %6273 = vmatpush1.msra.mxu0 %v2398
          %6274 = vmatprep.subr.mxu0 %v2405
          %6275 = vmatpush1.msra.mxu0 %v2404
          %6276 = vmatprep.subr.mxu0 %v2411
          %6277 = vmatpush1.msra.mxu0 %v2410
          %6278 = vmatprep.subr.mxu0 %v2417
          %6279 = vmatpush1.msra.mxu0 %v2416
          %6280 = vmatprep.subr.mxu0 %v2423
          %6281 = vmatpush1.msra.mxu0 %v2422
          %6282 = vmatprep.subr.mxu0 %v2429
          %6283 = vmatpush1.msra.mxu0 %v2428
          %6284 = vmatprep.subr.mxu0 %v2435
          %6285 = vmatpush1.msra.mxu0 %v2434
          %6286 = vmatprep.subr.mxu0 %v2441
          %6287 = vmatpush1.msra.mxu0 %v2440
          %6288 = vmatprep.subr.mxu0 %v2447
          %6289 = vmatpush1.msra.mxu0 %v2446
          %6290 = vmatprep.subr.mxu0 %v2453
          %6291 = vmatpush1.msra.mxu0 %v2452
          %6292 = vmatprep.subr.mxu0 %v2459
          %6293 = vmatpush1.msra.mxu0 %v2458
          %6294 = vmatprep.subr.mxu0 %v2465
          %6295 = vmatpush1.msra.mxu0 %v2464
          %6296 = vmatprep.subr.mxu0 %v2471
          %6297 = vmatpush1.msra.mxu0 %v2470
          %6298 = vmatprep.subr.mxu0 %v2477
          %6299 = vmatpush1.msra.mxu0 %v2476
          %6300 = vmatprep.subr.mxu0 %v2483
          %6301 = vmatpush1.msra.mxu0 %v2482
          %6302 = vmatprep.subr.mxu0 %v2489
          %6303 = vmatpush1.msra.mxu0 %v2488
          %6304 = vmatprep.subr.mxu0 %v2495
          %6305 = vmatpush1.msra.mxu0 %v2494
          %6306 = vmatprep.subr.mxu0 %v2501
          %6307 = vmatpush1.msra.mxu0 %v2500
          %6308 = vmatprep.subr.mxu0 %v2507
          %6309 = vmatpush1.msra.mxu0 %v2506
          %6310 = vmatprep.subr.mxu0 %v2513
          %6311 = vmatpush1.msra.mxu0 %v2512
          %6312 = vmatprep.subr.mxu0 %v2519
          %6313 = vmatpush1.msra.mxu0 %v2518
          %6314 = vmatprep.subr.mxu0 %v2525
          %6315 = vmatpush1.msra.mxu0 %v2524
          %6316 = vmatprep.subr.mxu0 %v2531
          %6317 = vmatpush1.msra.mxu0 %v2530
          %6318 = vmatprep.subr.mxu0 %v2537
          %6319 = vmatpush1.msra.mxu0 %v2536
          %6320 = vmatprep.subr.mxu0 %v2543
          %6321 = vmatpush1.msra.mxu0 %v2542
          %6322 = vmatprep.subr.mxu0 %v2549
          %6323 = vmatpush1.msra.mxu0 %v2548
          %6324 = vmatprep.subr.mxu0 %v2555
          %6325 = vmatpush1.msra.mxu0 %v2554
          %6326 = vmatprep.subr.mxu0 %v2561
          %6327 = vmatpush1.msra.mxu0 %v2560
          %6328 = vmatprep.subr.mxu0 %v2567
          %6329 = vmatpush1.msra.mxu0 %v2566
          %6330 = vmatprep.subr.mxu0 %v2573
          %6331 = vmatpush1.msra.mxu0 %v2572
          %6332 = vmatprep.mubr.f32.mxu0 %v5750
          %6333 = vmatmul.mubr.f32.gmra.mrb[0].mxu0 %v5749
          %v6334 = vpop.f32.mrb[0].mxu0
          %v6335 = vadd.f32 %v6264, %v6334
          %v6336 = vpop.f32.mrb[0].mxu0
          %v6337 = vadd.f32 %v6266, %v6336
          %6338 = vdwg.mxu0
          %6339 = vmatprep.subr.mxu0 %v2579
          %6340 = vmatpush1.msra.mxu0 %v2578
          %6341 = vmatprep.subr.mxu0 %v2585
          %6342 = vmatpush1.msra.mxu0 %v2584
          %6343 = vmatprep.subr.mxu0 %v2591
          %6344 = vmatpush1.msra.mxu0 %v2590
          %6345 = vmatprep.subr.mxu0 %v2597
          %6346 = vmatpush1.msra.mxu0 %v2596
          %6347 = vmatprep.subr.mxu0 %v2603
          %6348 = vmatpush1.msra.mxu0 %v2602
          %6349 = vmatprep.subr.mxu0 %v2609
          %6350 = vmatpush1.msra.mxu0 %v2608
          %6351 = vmatprep.subr.mxu0 %v2615
          %6352 = vmatpush1.msra.mxu0 %v2614
          %6353 = vmatprep.subr.mxu0 %v2621
          %6354 = vmatpush1.msra.mxu0 %v2620
          %6355 = vmatprep.subr.mxu0 %v2627
          %6356 = vmatpush1.msra.mxu0 %v2626
          %6357 = vmatprep.subr.mxu0 %v2633
          %6358 = vmatpush1.msra.mxu0 %v2632
          %6359 = vmatprep.subr.mxu0 %v2639
          %6360 = vmatpush1.msra.mxu0 %v2638
          %6361 = vmatprep.subr.mxu0 %v2645
          %6362 = vmatpush1.msra.mxu0 %v2644
          %6363 = vmatprep.subr.mxu0 %v2651
          %6364 = vmatpush1.msra.mxu0 %v2650
          %6365 = vmatprep.subr.mxu0 %v2657
          %6366 = vmatpush1.msra.mxu0 %v2656
          %6367 = vmatprep.subr.mxu0 %v2663
          %6368 = vmatpush1.msra.mxu0 %v2662
          %6369 = vmatprep.subr.mxu0 %v2669
          %6370 = vmatpush1.msra.mxu0 %v2668
          %6371 = vmatprep.subr.mxu0 %v2675
          %6372 = vmatpush1.msra.mxu0 %v2674
          %6373 = vmatprep.subr.mxu0 %v2681
          %6374 = vmatpush1.msra.mxu0 %v2680
          %6375 = vmatprep.subr.mxu0 %v2687
          %6376 = vmatpush1.msra.mxu0 %v2686
          %6377 = vmatprep.subr.mxu0 %v2693
          %6378 = vmatpush1.msra.mxu0 %v2692
          %6379 = vmatprep.subr.mxu0 %v2699
          %6380 = vmatpush1.msra.mxu0 %v2698
          %6381 = vmatprep.subr.mxu0 %v2705
          %6382 = vmatpush1.msra.mxu0 %v2704
          %6383 = vmatprep.subr.mxu0 %v2711
          %6384 = vmatpush1.msra.mxu0 %v2710
          %6385 = vmatprep.subr.mxu0 %v2717
          %6386 = vmatpush1.msra.mxu0 %v2716
          %6387 = vmatprep.subr.mxu0 %v2723
          %6388 = vmatpush1.msra.mxu0 %v2722
          %6389 = vmatprep.subr.mxu0 %v2729
          %6390 = vmatpush1.msra.mxu0 %v2728
          %6391 = vmatprep.subr.mxu0 %v2735
          %6392 = vmatpush1.msra.mxu0 %v2734
          %6393 = vmatprep.subr.mxu0 %v2741
          %6394 = vmatpush1.msra.mxu0 %v2740
          %6395 = vmatprep.subr.mxu0 %v2747
          %6396 = vmatpush1.msra.mxu0 %v2746
          %6397 = vmatprep.subr.mxu0 %v2753
          %6398 = vmatpush1.msra.mxu0 %v2752
          %6399 = vmatprep.subr.mxu0 %v2759
          %6400 = vmatpush1.msra.mxu0 %v2758
          %6401 = vmatprep.subr.mxu0 %v2765
          %6402 = vmatpush1.msra.mxu0 %v2764
          %6403 = vmatprep.mubr.f32.mxu0 %v5752
          %6404 = vmatmul.mubr.f32.gmra.mrb[0].mxu0 %v5751
          %v6405 = vpop.f32.mrb[0].mxu0
          %v6406 = vadd.f32 %v6335, %v6405
          %v6407 = vpop.f32.mrb[0].mxu0
          %v6408 = vadd.f32 %v6337, %v6407
          %6409 = vdwg.mxu0
          %v6410 = vadd.f32 %v5765, %v5980
          %v6411 = vadd.f32 %v5766, %v5982
          %v6412 = vadd.f32 %v5767, %v6193
          %v6413 = vadd.f32 %v5768, %v6195
          %v6414 = vadd.f32 %v5769, %v6406
          %v6415 = vadd.f32 %v5770, %v6408
          %v6416 = vadd.f32 %v6410, %v4340
          %v6417 = vadd.f32 %v6411, %v4344
          %v6418 = vadd.f32 %v6412, %v4348
          %v6419 = vadd.f32 %v6413, %v4352
          %v6420 = vadd.f32 %v6414, %v4356
          %v6421 = vadd.f32 %v6415, %v4360
          %6422 = vmatprep.subr.mxu0 %v3055
          %6423 = vmatpush1.msra.mxu0 %v3054
          %6424 = vmatprep.subr.mxu0 %v3061
          %6425 = vmatpush1.msra.mxu0 %v3060
          %6426 = vmatprep.subr.mxu0 %v3067
          %6427 = vmatpush1.msra.mxu0 %v3066
          %6428 = vmatprep.subr.mxu0 %v3073
          %6429 = vmatpush1.msra.mxu0 %v3072
          %6430 = vmatprep.subr.mxu0 %v3079
          %6431 = vmatpush1.msra.mxu0 %v3078
          %6432 = vmatprep.subr.mxu0 %v3085
          %6433 = vmatpush1.msra.mxu0 %v3084
          %6434 = vmatprep.subr.mxu0 %v3091
          %6435 = vmatpush1.msra.mxu0 %v3090
          %6436 = vmatprep.subr.mxu0 %v3097
          %6437 = vmatpush1.msra.mxu0 %v3096
          %6438 = vmatprep.subr.mxu0 %v3103
          %6439 = vmatpush1.msra.mxu0 %v3102
          %6440 = vmatprep.subr.mxu0 %v3109
          %6441 = vmatpush1.msra.mxu0 %v3108
          %6442 = vmatprep.subr.mxu0 %v3115
          %6443 = vmatpush1.msra.mxu0 %v3114
          %6444 = vmatprep.subr.mxu0 %v3121
          %6445 = vmatpush1.msra.mxu0 %v3120
          %6446 = vmatprep.subr.mxu0 %v3127
          %6447 = vmatpush1.msra.mxu0 %v3126
          %6448 = vmatprep.subr.mxu0 %v3133
          %6449 = vmatpush1.msra.mxu0 %v3132
          %6450 = vmatprep.subr.mxu0 %v3139
          %6451 = vmatpush1.msra.mxu0 %v3138
          %6452 = vmatprep.subr.mxu0 %v3145
          %6453 = vmatpush1.msra.mxu0 %v3144
          %6454 = vmatprep.subr.mxu0 %v3151
          %6455 = vmatpush1.msra.mxu0 %v3150
          %6456 = vmatprep.subr.mxu0 %v3157
          %6457 = vmatpush1.msra.mxu0 %v3156
          %6458 = vmatprep.subr.mxu0 %v3163
          %6459 = vmatpush1.msra.mxu0 %v3162
          %6460 = vmatprep.subr.mxu0 %v3169
          %6461 = vmatpush1.msra.mxu0 %v3168
          %6462 = vmatprep.subr.mxu0 %v3175
          %6463 = vmatpush1.msra.mxu0 %v3174
          %6464 = vmatprep.subr.mxu0 %v3181
          %6465 = vmatpush1.msra.mxu0 %v3180
          %6466 = vmatprep.subr.mxu0 %v3187
          %6467 = vmatpush1.msra.mxu0 %v3186
          %6468 = vmatprep.subr.mxu0 %v3193
          %6469 = vmatpush1.msra.mxu0 %v3192
          %6470 = vmatprep.subr.mxu0 %v3199
          %6471 = vmatpush1.msra.mxu0 %v3198
          %6472 = vmatprep.subr.mxu0 %v3205
          %6473 = vmatpush1.msra.mxu0 %v3204
          %6474 = vmatprep.subr.mxu0 %v3211
          %6475 = vmatpush1.msra.mxu0 %v3210
          %6476 = vmatprep.subr.mxu0 %v3217
          %6477 = vmatpush1.msra.mxu0 %v3216
          %6478 = vmatprep.subr.mxu0 %v3223
          %6479 = vmatpush1.msra.mxu0 %v3222
          %6480 = vmatprep.subr.mxu0 %v3229
          %6481 = vmatpush1.msra.mxu0 %v3228
          %6482 = vmatprep.subr.mxu0 %v3235
          %6483 = vmatpush1.msra.mxu0 %v3234
          %6484 = vmatprep.subr.mxu0 %v3241
          %6485 = vmatpush1.msra.mxu0 %v3240
          %6486 = vmatprep.mubr.f32.mxu0 %v6417
          %6487 = vmatmul.mubr.f32.gmra.mrb[0].mxu0 %v6416
          %v6488 = vpop.f32.mrb[0].mxu0
          %v6489 = vadd.f32 0.0, %v6488
          %v6490 = vpop.f32.mrb[0].mxu0
          %v6491 = vadd.f32 0.0, %v6490
          %6492 = vdwg.mxu0
          %6493 = vmatprep.subr.mxu0 %v3247
          %6494 = vmatpush1.msra.mxu0 %v3246
          %6495 = vmatprep.subr.mxu0 %v3253
          %6496 = vmatpush1.msra.mxu0 %v3252
          %6497 = vmatprep.subr.mxu0 %v3259
          %6498 = vmatpush1.msra.mxu0 %v3258
          %6499 = vmatprep.subr.mxu0 %v3265
          %6500 = vmatpush1.msra.mxu0 %v3264
          %6501 = vmatprep.subr.mxu0 %v3271
          %6502 = vmatpush1.msra.mxu0 %v3270
          %6503 = vmatprep.subr.mxu0 %v3277
          %6504 = vmatpush1.msra.mxu0 %v3276
          %6505 = vmatprep.subr.mxu0 %v3283
          %6506 = vmatpush1.msra.mxu0 %v3282
          %6507 = vmatprep.subr.mxu0 %v3289
          %6508 = vmatpush1.msra.mxu0 %v3288
          %6509 = vmatprep.subr.mxu0 %v3295
          %6510 = vmatpush1.msra.mxu0 %v3294
          %6511 = vmatprep.subr.mxu0 %v3301
          %6512 = vmatpush1.msra.mxu0 %v3300
          %6513 = vmatprep.subr.mxu0 %v3307
          %6514 = vmatpush1.msra.mxu0 %v3306
          %6515 = vmatprep.subr.mxu0 %v3313
          %6516 = vmatpush1.msra.mxu0 %v3312
          %6517 = vmatprep.subr.mxu0 %v3319
          %6518 = vmatpush1.msra.mxu0 %v3318
          %6519 = vmatprep.subr.mxu0 %v3325
          %6520 = vmatpush1.msra.mxu0 %v3324
          %6521 = vmatprep.subr.mxu0 %v3331
          %6522 = vmatpush1.msra.mxu0 %v3330
          %6523 = vmatprep.subr.mxu0 %v3337
          %6524 = vmatpush1.msra.mxu0 %v3336
          %6525 = vmatprep.subr.mxu0 %v3343
          %6526 = vmatpush1.msra.mxu0 %v3342
          %6527 = vmatprep.subr.mxu0 %v3349
          %6528 = vmatpush1.msra.mxu0 %v3348
          %6529 = vmatprep.subr.mxu0 %v3355
          %6530 = vmatpush1.msra.mxu0 %v3354
          %6531 = vmatprep.subr.mxu0 %v3361
          %6532 = vmatpush1.msra.mxu0 %v3360
          %6533 = vmatprep.subr.mxu0 %v3367
          %6534 = vmatpush1.msra.mxu0 %v3366
          %6535 = vmatprep.subr.mxu0 %v3373
          %6536 = vmatpush1.msra.mxu0 %v3372
          %6537 = vmatprep.subr.mxu0 %v3379
          %6538 = vmatpush1.msra.mxu0 %v3378
          %6539 = vmatprep.subr.mxu0 %v3385
          %6540 = vmatpush1.msra.mxu0 %v3384
          %6541 = vmatprep.subr.mxu0 %v3391
          %6542 = vmatpush1.msra.mxu0 %v3390
          %6543 = vmatprep.subr.mxu0 %v3397
          %6544 = vmatpush1.msra.mxu0 %v3396
          %6545 = vmatprep.subr.mxu0 %v3403
          %6546 = vmatpush1.msra.mxu0 %v3402
          %6547 = vmatprep.subr.mxu0 %v3409
          %6548 = vmatpush1.msra.mxu0 %v3408
          %6549 = vmatprep.subr.mxu0 %v3415
          %6550 = vmatpush1.msra.mxu0 %v3414
          %6551 = vmatprep.subr.mxu0 %v3421
          %6552 = vmatpush1.msra.mxu0 %v3420
          %6553 = vmatprep.subr.mxu0 %v3427
          %6554 = vmatpush1.msra.mxu0 %v3426
          %6555 = vmatprep.subr.mxu0 %v3433
          %6556 = vmatpush1.msra.mxu0 %v3432
          %6557 = vmatprep.mubr.f32.mxu0 %v6419
          %6558 = vmatmul.mubr.f32.gmra.mrb[0].mxu0 %v6418
          %v6559 = vpop.f32.mrb[0].mxu0
          %v6560 = vadd.f32 %v6489, %v6559
          %v6561 = vpop.f32.mrb[0].mxu0
          %v6562 = vadd.f32 %v6491, %v6561
          %6563 = vdwg.mxu0
          %6564 = vmatprep.subr.mxu0 %v3439
          %6565 = vmatpush1.msra.mxu0 %v3438
          %6566 = vmatprep.subr.mxu0 %v3445
          %6567 = vmatpush1.msra.mxu0 %v3444
          %6568 = vmatprep.subr.mxu0 %v3451
          %6569 = vmatpush1.msra.mxu0 %v3450
          %6570 = vmatprep.subr.mxu0 %v3457
          %6571 = vmatpush1.msra.mxu0 %v3456
          %6572 = vmatprep.subr.mxu0 %v3463
          %6573 = vmatpush1.msra.mxu0 %v3462
          %6574 = vmatprep.subr.mxu0 %v3469
          %6575 = vmatpush1.msra.mxu0 %v3468
          %6576 = vmatprep.subr.mxu0 %v3475
          %6577 = vmatpush1.msra.mxu0 %v3474
          %6578 = vmatprep.subr.mxu0 %v3481
          %6579 = vmatpush1.msra.mxu0 %v3480
          %6580 = vmatprep.subr.mxu0 %v3487
          %6581 = vmatpush1.msra.mxu0 %v3486
          %6582 = vmatprep.subr.mxu0 %v3493
          %6583 = vmatpush1.msra.mxu0 %v3492
          %6584 = vmatprep.subr.mxu0 %v3499
          %6585 = vmatpush1.msra.mxu0 %v3498
          %6586 = vmatprep.subr.mxu0 %v3505
          %6587 = vmatpush1.msra.mxu0 %v3504
          %6588 = vmatprep.subr.mxu0 %v3511
          %6589 = vmatpush1.msra.mxu0 %v3510
          %6590 = vmatprep.subr.mxu0 %v3517
          %6591 = vmatpush1.msra.mxu0 %v3516
          %6592 = vmatprep.subr.mxu0 %v3523
          %6593 = vmatpush1.msra.mxu0 %v3522
          %6594 = vmatprep.subr.mxu0 %v3529
          %6595 = vmatpush1.msra.mxu0 %v3528
          %6596 = vmatprep.subr.mxu0 %v3535
          %6597 = vmatpush1.msra.mxu0 %v3534
          %6598 = vmatprep.subr.mxu0 %v3541
          %6599 = vmatpush1.msra.mxu0 %v3540
          %6600 = vmatprep.subr.mxu0 %v3547
          %6601 = vmatpush1.msra.mxu0 %v3546
          %6602 = vmatprep.subr.mxu0 %v3553
          %6603 = vmatpush1.msra.mxu0 %v3552
          %6604 = vmatprep.subr.mxu0 %v3559
          %6605 = vmatpush1.msra.mxu0 %v3558
          %6606 = vmatprep.subr.mxu0 %v3565
          %6607 = vmatpush1.msra.mxu0 %v3564
          %6608 = vmatprep.subr.mxu0 %v3571
          %6609 = vmatpush1.msra.mxu0 %v3570
          %6610 = vmatprep.subr.mxu0 %v3577
          %6611 = vmatpush1.msra.mxu0 %v3576
          %6612 = vmatprep.subr.mxu0 %v3583
          %6613 = vmatpush1.msra.mxu0 %v3582
          %6614 = vmatprep.subr.mxu0 %v3589
          %6615 = vmatpush1.msra.mxu0 %v3588
          %6616 = vmatprep.subr.mxu0 %v3595
          %6617 = vmatpush1.msra.mxu0 %v3594
          %6618 = vmatprep.subr.mxu0 %v3601
          %6619 = vmatpush1.msra.mxu0 %v3600
          %6620 = vmatprep.subr.mxu0 %v3607
          %6621 = vmatpush1.msra.mxu0 %v3606
          %6622 = vmatprep.subr.mxu0 %v3613
          %6623 = vmatpush1.msra.mxu0 %v3612
          %6624 = vmatprep.subr.mxu0 %v3619
          %6625 = vmatpush1.msra.mxu0 %v3618
          %6626 = vmatprep.subr.mxu0 %v3625
          %6627 = vmatpush1.msra.mxu0 %v3624
          %6628 = vmatprep.mubr.f32.mxu0 %v6421
          %6629 = vmatmul.mubr.f32.gmra.mrb[0].mxu0 %v6420
          %v6630 = vpop.f32.mrb[0].mxu0
          %v6631 = vadd.f32 %v6560, %v6630
          %v6632 = vpop.f32.mrb[0].mxu0
          %v6633 = vadd.f32 %v6562, %v6632
          %6634 = vdwg.mxu0
          %6635 = vmatprep.subr.mxu0 %v3057
          %6636 = vmatpush1.msra.mxu0 %v3056
          %6637 = vmatprep.subr.mxu0 %v3063
          %6638 = vmatpush1.msra.mxu0 %v3062
          %6639 = vmatprep.subr.mxu0 %v3069
          %6640 = vmatpush1.msra.mxu0 %v3068
          %6641 = vmatprep.subr.mxu0 %v3075
          %6642 = vmatpush1.msra.mxu0 %v3074
          %6643 = vmatprep.subr.mxu0 %v3081
          %6644 = vmatpush1.msra.mxu0 %v3080
          %6645 = vmatprep.subr.mxu0 %v3087
          %6646 = vmatpush1.msra.mxu0 %v3086
          %6647 = vmatprep.subr.mxu0 %v3093
          %6648 = vmatpush1.msra.mxu0 %v3092
          %6649 = vmatprep.subr.mxu0 %v3099
          %6650 = vmatpush1.msra.mxu0 %v3098
          %6651 = vmatprep.subr.mxu0 %v3105
          %6652 = vmatpush1.msra.mxu0 %v3104
          %6653 = vmatprep.subr.mxu0 %v3111
          %6654 = vmatpush1.msra.mxu0 %v3110
          %6655 = vmatprep.subr.mxu0 %v3117
          %6656 = vmatpush1.msra.mxu0 %v3116
          %6657 = vmatprep.subr.mxu0 %v3123
          %6658 = vmatpush1.msra.mxu0 %v3122
          %6659 = vmatprep.subr.mxu0 %v3129
          %6660 = vmatpush1.msra.mxu0 %v3128
          %6661 = vmatprep.subr.mxu0 %v3135
          %6662 = vmatpush1.msra.mxu0 %v3134
          %6663 = vmatprep.subr.mxu0 %v3141
          %6664 = vmatpush1.msra.mxu0 %v3140
          %6665 = vmatprep.subr.mxu0 %v3147
          %6666 = vmatpush1.msra.mxu0 %v3146
          %6667 = vmatprep.subr.mxu0 %v3153
          %6668 = vmatpush1.msra.mxu0 %v3152
          %6669 = vmatprep.subr.mxu0 %v3159
          %6670 = vmatpush1.msra.mxu0 %v3158
          %6671 = vmatprep.subr.mxu0 %v3165
          %6672 = vmatpush1.msra.mxu0 %v3164
          %6673 = vmatprep.subr.mxu0 %v3171
          %6674 = vmatpush1.msra.mxu0 %v3170
          %6675 = vmatprep.subr.mxu0 %v3177
          %6676 = vmatpush1.msra.mxu0 %v3176
          %6677 = vmatprep.subr.mxu0 %v3183
          %6678 = vmatpush1.msra.mxu0 %v3182
          %6679 = vmatprep.subr.mxu0 %v3189
          %6680 = vmatpush1.msra.mxu0 %v3188
          %6681 = vmatprep.subr.mxu0 %v3195
          %6682 = vmatpush1.msra.mxu0 %v3194
          %6683 = vmatprep.subr.mxu0 %v3201
          %6684 = vmatpush1.msra.mxu0 %v3200
          %6685 = vmatprep.subr.mxu0 %v3207
          %6686 = vmatpush1.msra.mxu0 %v3206
          %6687 = vmatprep.subr.mxu0 %v3213
          %6688 = vmatpush1.msra.mxu0 %v3212
          %6689 = vmatprep.subr.mxu0 %v3219
          %6690 = vmatpush1.msra.mxu0 %v3218
          %6691 = vmatprep.subr.mxu0 %v3225
          %6692 = vmatpush1.msra.mxu0 %v3224
          %6693 = vmatprep.subr.mxu0 %v3231
          %6694 = vmatpush1.msra.mxu0 %v3230
          %6695 = vmatprep.subr.mxu0 %v3237
          %6696 = vmatpush1.msra.mxu0 %v3236
          %6697 = vmatprep.subr.mxu0 %v3243
          %6698 = vmatpush1.msra.mxu0 %v3242
          %6699 = vmatprep.mubr.f32.mxu0 %v6417
          %6700 = vmatmul.mubr.f32.gmra.mrb[0].mxu0 %v6416
          %v6701 = vpop.f32.mrb[0].mxu0
          %v6702 = vadd.f32 0.0, %v6701
          %v6703 = vpop.f32.mrb[0].mxu0
          %v6704 = vadd.f32 0.0, %v6703
          %6705 = vdwg.mxu0
          %6706 = vmatprep.subr.mxu0 %v3249
          %6707 = vmatpush1.msra.mxu0 %v3248
          %6708 = vmatprep.subr.mxu0 %v3255
          %6709 = vmatpush1.msra.mxu0 %v3254
          %6710 = vmatprep.subr.mxu0 %v3261
          %6711 = vmatpush1.msra.mxu0 %v3260
          %6712 = vmatprep.subr.mxu0 %v3267
          %6713 = vmatpush1.msra.mxu0 %v3266
          %6714 = vmatprep.subr.mxu0 %v3273
          %6715 = vmatpush1.msra.mxu0 %v3272
          %6716 = vmatprep.subr.mxu0 %v3279
          %6717 = vmatpush1.msra.mxu0 %v3278
          %6718 = vmatprep.subr.mxu0 %v3285
          %6719 = vmatpush1.msra.mxu0 %v3284
          %6720 = vmatprep.subr.mxu0 %v3291
          %6721 = vmatpush1.msra.mxu0 %v3290
          %6722 = vmatprep.subr.mxu0 %v3297
          %6723 = vmatpush1.msra.mxu0 %v3296
          %6724 = vmatprep.subr.mxu0 %v3303
          %6725 = vmatpush1.msra.mxu0 %v3302
          %6726 = vmatprep.subr.mxu0 %v3309
          %6727 = vmatpush1.msra.mxu0 %v3308
          %6728 = vmatprep.subr.mxu0 %v3315
          %6729 = vmatpush1.msra.mxu0 %v3314
          %6730 = vmatprep.subr.mxu0 %v3321
          %6731 = vmatpush1.msra.mxu0 %v3320
          %6732 = vmatprep.subr.mxu0 %v3327
          %6733 = vmatpush1.msra.mxu0 %v3326
          %6734 = vmatprep.subr.mxu0 %v3333
          %6735 = vmatpush1.msra.mxu0 %v3332
          %6736 = vmatprep.subr.mxu0 %v3339
          %6737 = vmatpush1.msra.mxu0 %v3338
          %6738 = vmatprep.subr.mxu0 %v3345
          %6739 = vmatpush1.msra.mxu0 %v3344
          %6740 = vmatprep.subr.mxu0 %v3351
          %6741 = vmatpush1.msra.mxu0 %v3350
          %6742 = vmatprep.subr.mxu0 %v3357
          %6743 = vmatpush1.msra.mxu0 %v3356
          %6744 = vmatprep.subr.mxu0 %v3363
          %6745 = vmatpush1.msra.mxu0 %v3362
          %6746 = vmatprep.subr.mxu0 %v3369
          %6747 = vmatpush1.msra.mxu0 %v3368
          %6748 = vmatprep.subr.mxu0 %v3375
          %6749 = vmatpush1.msra.mxu0 %v3374
          %6750 = vmatprep.subr.mxu0 %v3381
          %6751 = vmatpush1.msra.mxu0 %v3380
          %6752 = vmatprep.subr.mxu0 %v3387
          %6753 = vmatpush1.msra.mxu0 %v3386
          %6754 = vmatprep.subr.mxu0 %v3393
          %6755 = vmatpush1.msra.mxu0 %v3392
          %6756 = vmatprep.subr.mxu0 %v3399
          %6757 = vmatpush1.msra.mxu0 %v3398
          %6758 = vmatprep.subr.mxu0 %v3405
          %6759 = vmatpush1.msra.mxu0 %v3404
          %6760 = vmatprep.subr.mxu0 %v3411
          %6761 = vmatpush1.msra.mxu0 %v3410
          %6762 = vmatprep.subr.mxu0 %v3417
          %6763 = vmatpush1.msra.mxu0 %v3416
          %6764 = vmatprep.subr.mxu0 %v3423
          %6765 = vmatpush1.msra.mxu0 %v3422
          %6766 = vmatprep.subr.mxu0 %v3429
          %6767 = vmatpush1.msra.mxu0 %v3428
          %6768 = vmatprep.subr.mxu0 %v3435
          %6769 = vmatpush1.msra.mxu0 %v3434
          %6770 = vmatprep.mubr.f32.mxu0 %v6419
          %6771 = vmatmul.mubr.f32.gmra.mrb[0].mxu0 %v6418
          %v6772 = vpop.f32.mrb[0].mxu0
          %v6773 = vadd.f32 %v6702, %v6772
          %v6774 = vpop.f32.mrb[0].mxu0
          %v6775 = vadd.f32 %v6704, %v6774
          %6776 = vdwg.mxu0
          %6777 = vmatprep.subr.mxu0 %v3441
          %6778 = vmatpush1.msra.mxu0 %v3440
          %6779 = vmatprep.subr.mxu0 %v3447
          %6780 = vmatpush1.msra.mxu0 %v3446
          %6781 = vmatprep.subr.mxu0 %v3453
          %6782 = vmatpush1.msra.mxu0 %v3452
          %6783 = vmatprep.subr.mxu0 %v3459
          %6784 = vmatpush1.msra.mxu0 %v3458
          %6785 = vmatprep.subr.mxu0 %v3465
          %6786 = vmatpush1.msra.mxu0 %v3464
          %6787 = vmatprep.subr.mxu0 %v3471
          %6788 = vmatpush1.msra.mxu0 %v3470
          %6789 = vmatprep.subr.mxu0 %v3477
          %6790 = vmatpush1.msra.mxu0 %v3476
          %6791 = vmatprep.subr.mxu0 %v3483
          %6792 = vmatpush1.msra.mxu0 %v3482
          %6793 = vmatprep.subr.mxu0 %v3489
          %6794 = vmatpush1.msra.mxu0 %v3488
          %6795 = vmatprep.subr.mxu0 %v3495
          %6796 = vmatpush1.msra.mxu0 %v3494
          %6797 = vmatprep.subr.mxu0 %v3501
          %6798 = vmatpush1.msra.mxu0 %v3500
          %6799 = vmatprep.subr.mxu0 %v3507
          %6800 = vmatpush1.msra.mxu0 %v3506
          %6801 = vmatprep.subr.mxu0 %v3513
          %6802 = vmatpush1.msra.mxu0 %v3512
          %6803 = vmatprep.subr.mxu0 %v3519
          %6804 = vmatpush1.msra.mxu0 %v3518
          %6805 = vmatprep.subr.mxu0 %v3525
          %6806 = vmatpush1.msra.mxu0 %v3524
          %6807 = vmatprep.subr.mxu0 %v3531
          %6808 = vmatpush1.msra.mxu0 %v3530
          %6809 = vmatprep.subr.mxu0 %v3537
          %6810 = vmatpush1.msra.mxu0 %v3536
          %6811 = vmatprep.subr.mxu0 %v3543
          %6812 = vmatpush1.msra.mxu0 %v3542
          %6813 = vmatprep.subr.mxu0 %v3549
          %6814 = vmatpush1.msra.mxu0 %v3548
          %6815 = vmatprep.subr.mxu0 %v3555
          %6816 = vmatpush1.msra.mxu0 %v3554
          %6817 = vmatprep.subr.mxu0 %v3561
          %6818 = vmatpush1.msra.mxu0 %v3560
          %6819 = vmatprep.subr.mxu0 %v3567
          %6820 = vmatpush1.msra.mxu0 %v3566
          %6821 = vmatprep.subr.mxu0 %v3573
          %6822 = vmatpush1.msra.mxu0 %v3572
          %6823 = vmatprep.subr.mxu0 %v3579
          %6824 = vmatpush1.msra.mxu0 %v3578
          %6825 = vmatprep.subr.mxu0 %v3585
          %6826 = vmatpush1.msra.mxu0 %v3584
          %6827 = vmatprep.subr.mxu0 %v3591
          %6828 = vmatpush1.msra.mxu0 %v3590
          %6829 = vmatprep.subr.mxu0 %v3597
          %6830 = vmatpush1.msra.mxu0 %v3596
          %6831 = vmatprep.subr.mxu0 %v3603
          %6832 = vmatpush1.msra.mxu0 %v3602
          %6833 = vmatprep.subr.mxu0 %v3609
          %6834 = vmatpush1.msra.mxu0 %v3608
          %6835 = vmatprep.subr.mxu0 %v3615
          %6836 = vmatpush1.msra.mxu0 %v3614
          %6837 = vmatprep.subr.mxu0 %v3621
          %6838 = vmatpush1.msra.mxu0 %v3620
          %6839 = vmatprep.subr.mxu0 %v3627
          %6840 = vmatpush1.msra.mxu0 %v3626
          %6841 = vmatprep.mubr.f32.mxu0 %v6421
          %6842 = vmatmul.mubr.f32.gmra.mrb[0].mxu0 %v6420
          %v6843 = vpop.f32.mrb[0].mxu0
          %v6844 = vadd.f32 %v6773, %v6843
          %v6845 = vpop.f32.mrb[0].mxu0
          %v6846 = vadd.f32 %v6775, %v6845
          %6847 = vdwg.mxu0
          %6848 = vmatprep.subr.mxu0 %v3059
          %6849 = vmatpush1.msra.mxu0 %v3058
          %6850 = vmatprep.subr.mxu0 %v3065
          %6851 = vmatpush1.msra.mxu0 %v3064
          %6852 = vmatprep.subr.mxu0 %v3071
          %6853 = vmatpush1.msra.mxu0 %v3070
          %6854 = vmatprep.subr.mxu0 %v3077
          %6855 = vmatpush1.msra.mxu0 %v3076
          %6856 = vmatprep.subr.mxu0 %v3083
          %6857 = vmatpush1.msra.mxu0 %v3082
          %6858 = vmatprep.subr.mxu0 %v3089
          %6859 = vmatpush1.msra.mxu0 %v3088
          %6860 = vmatprep.subr.mxu0 %v3095
          %6861 = vmatpush1.msra.mxu0 %v3094
          %6862 = vmatprep.subr.mxu0 %v3101
          %6863 = vmatpush1.msra.mxu0 %v3100
          %6864 = vmatprep.subr.mxu0 %v3107
          %6865 = vmatpush1.msra.mxu0 %v3106
          %6866 = vmatprep.subr.mxu0 %v3113
          %6867 = vmatpush1.msra.mxu0 %v3112
          %6868 = vmatprep.subr.mxu0 %v3119
          %6869 = vmatpush1.msra.mxu0 %v3118
          %6870 = vmatprep.subr.mxu0 %v3125
          %6871 = vmatpush1.msra.mxu0 %v3124
          %6872 = vmatprep.subr.mxu0 %v3131
          %6873 = vmatpush1.msra.mxu0 %v3130
          %6874 = vmatprep.subr.mxu0 %v3137
          %6875 = vmatpush1.msra.mxu0 %v3136
          %6876 = vmatprep.subr.mxu0 %v3143
          %6877 = vmatpush1.msra.mxu0 %v3142
          %6878 = vmatprep.subr.mxu0 %v3149
          %6879 = vmatpush1.msra.mxu0 %v3148
          %6880 = vmatprep.subr.mxu0 %v3155
          %6881 = vmatpush1.msra.mxu0 %v3154
          %6882 = vmatprep.subr.mxu0 %v3161
          %6883 = vmatpush1.msra.mxu0 %v3160
          %6884 = vmatprep.subr.mxu0 %v3167
          %6885 = vmatpush1.msra.mxu0 %v3166
          %6886 = vmatprep.subr.mxu0 %v3173
          %6887 = vmatpush1.msra.mxu0 %v3172
          %6888 = vmatprep.subr.mxu0 %v3179
          %6889 = vmatpush1.msra.mxu0 %v3178
          %6890 = vmatprep.subr.mxu0 %v3185
          %6891 = vmatpush1.msra.mxu0 %v3184
          %6892 = vmatprep.subr.mxu0 %v3191
          %6893 = vmatpush1.msra.mxu0 %v3190
          %6894 = vmatprep.subr.mxu0 %v3197
          %6895 = vmatpush1.msra.mxu0 %v3196
          %6896 = vmatprep.subr.mxu0 %v3203
          %6897 = vmatpush1.msra.mxu0 %v3202
          %6898 = vmatprep.subr.mxu0 %v3209
          %6899 = vmatpush1.msra.mxu0 %v3208
          %6900 = vmatprep.subr.mxu0 %v3215
          %6901 = vmatpush1.msra.mxu0 %v3214
          %6902 = vmatprep.subr.mxu0 %v3221
          %6903 = vmatpush1.msra.mxu0 %v3220
          %6904 = vmatprep.subr.mxu0 %v3227
          %6905 = vmatpush1.msra.mxu0 %v3226
          %6906 = vmatprep.subr.mxu0 %v3233
          %6907 = vmatpush1.msra.mxu0 %v3232
          %6908 = vmatprep.subr.mxu0 %v3239
          %6909 = vmatpush1.msra.mxu0 %v3238
          %6910 = vmatprep.subr.mxu0 %v3245
          %6911 = vmatpush1.msra.mxu0 %v3244
          %6912 = vmatprep.mubr.f32.mxu0 %v6417
          %6913 = vmatmul.mubr.f32.gmra.mrb[0].mxu0 %v6416
          %v6914 = vpop.f32.mrb[0].mxu0
          %v6915 = vadd.f32 0.0, %v6914
          %v6916 = vpop.f32.mrb[0].mxu0
          %v6917 = vadd.f32 0.0, %v6916
          %6918 = vdwg.mxu0
          %6919 = vmatprep.subr.mxu0 %v3251
          %6920 = vmatpush1.msra.mxu0 %v3250
          %6921 = vmatprep.subr.mxu0 %v3257
          %6922 = vmatpush1.msra.mxu0 %v3256
          %6923 = vmatprep.subr.mxu0 %v3263
          %6924 = vmatpush1.msra.mxu0 %v3262
          %6925 = vmatprep.subr.mxu0 %v3269
          %6926 = vmatpush1.msra.mxu0 %v3268
          %6927 = vmatprep.subr.mxu0 %v3275
          %6928 = vmatpush1.msra.mxu0 %v3274
          %6929 = vmatprep.subr.mxu0 %v3281
          %6930 = vmatpush1.msra.mxu0 %v3280
          %6931 = vmatprep.subr.mxu0 %v3287
          %6932 = vmatpush1.msra.mxu0 %v3286
          %6933 = vmatprep.subr.mxu0 %v3293
          %6934 = vmatpush1.msra.mxu0 %v3292
          %6935 = vmatprep.subr.mxu0 %v3299
          %6936 = vmatpush1.msra.mxu0 %v3298
          %6937 = vmatprep.subr.mxu0 %v3305
          %6938 = vmatpush1.msra.mxu0 %v3304
          %6939 = vmatprep.subr.mxu0 %v3311
          %6940 = vmatpush1.msra.mxu0 %v3310
          %6941 = vmatprep.subr.mxu0 %v3317
          %6942 = vmatpush1.msra.mxu0 %v3316
          %6943 = vmatprep.subr.mxu0 %v3323
          %6944 = vmatpush1.msra.mxu0 %v3322
          %6945 = vmatprep.subr.mxu0 %v3329
          %6946 = vmatpush1.msra.mxu0 %v3328
          %6947 = vmatprep.subr.mxu0 %v3335
          %6948 = vmatpush1.msra.mxu0 %v3334
          %6949 = vmatprep.subr.mxu0 %v3341
          %6950 = vmatpush1.msra.mxu0 %v3340
          %6951 = vmatprep.subr.mxu0 %v3347
          %6952 = vmatpush1.msra.mxu0 %v3346
          %6953 = vmatprep.subr.mxu0 %v3353
          %6954 = vmatpush1.msra.mxu0 %v3352
          %6955 = vmatprep.subr.mxu0 %v3359
          %6956 = vmatpush1.msra.mxu0 %v3358
          %6957 = vmatprep.subr.mxu0 %v3365
          %6958 = vmatpush1.msra.mxu0 %v3364
          %6959 = vmatprep.subr.mxu0 %v3371
          %6960 = vmatpush1.msra.mxu0 %v3370
          %6961 = vmatprep.subr.mxu0 %v3377
          %6962 = vmatpush1.msra.mxu0 %v3376
          %6963 = vmatprep.subr.mxu0 %v3383
          %6964 = vmatpush1.msra.mxu0 %v3382
          %6965 = vmatprep.subr.mxu0 %v3389
          %6966 = vmatpush1.msra.mxu0 %v3388
          %6967 = vmatprep.subr.mxu0 %v3395
          %6968 = vmatpush1.msra.mxu0 %v3394
          %6969 = vmatprep.subr.mxu0 %v3401
          %6970 = vmatpush1.msra.mxu0 %v3400
          %6971 = vmatprep.subr.mxu0 %v3407
          %6972 = vmatpush1.msra.mxu0 %v3406
          %6973 = vmatprep.subr.mxu0 %v3413
          %6974 = vmatpush1.msra.mxu0 %v3412
          %6975 = vmatprep.subr.mxu0 %v3419
          %6976 = vmatpush1.msra.mxu0 %v3418
          %6977 = vmatprep.subr.mxu0 %v3425
          %6978 = vmatpush1.msra.mxu0 %v3424
          %6979 = vmatprep.subr.mxu0 %v3431
          %6980 = vmatpush1.msra.mxu0 %v3430
          %6981 = vmatprep.subr.mxu0 %v3437
          %6982 = vmatpush1.msra.mxu0 %v3436
          %6983 = vmatprep.mubr.f32.mxu0 %v6419
          %6984 = vmatmul.mubr.f32.gmra.mrb[0].mxu0 %v6418
          %v6985 = vpop.f32.mrb[0].mxu0
          %v6986 = vadd.f32 %v6915, %v6985
          %v6987 = vpop.f32.mrb[0].mxu0
          %v6988 = vadd.f32 %v6917, %v6987
          %6989 = vdwg.mxu0
          %6990 = vmatprep.subr.mxu0 %v3443
          %6991 = vmatpush1.msra.mxu0 %v3442
          %6992 = vmatprep.subr.mxu0 %v3449
          %6993 = vmatpush1.msra.mxu0 %v3448
          %6994 = vmatprep.subr.mxu0 %v3455
          %6995 = vmatpush1.msra.mxu0 %v3454
          %6996 = vmatprep.subr.mxu0 %v3461
          %6997 = vmatpush1.msra.mxu0 %v3460
          %6998 = vmatprep.subr.mxu0 %v3467
          %6999 = vmatpush1.msra.mxu0 %v3466
          %7000 = vmatprep.subr.mxu0 %v3473
          %7001 = vmatpush1.msra.mxu0 %v3472
          %7002 = vmatprep.subr.mxu0 %v3479
          %7003 = vmatpush1.msra.mxu0 %v3478
          %7004 = vmatprep.subr.mxu0 %v3485
          %7005 = vmatpush1.msra.mxu0 %v3484
          %7006 = vmatprep.subr.mxu0 %v3491
          %7007 = vmatpush1.msra.mxu0 %v3490
          %7008 = vmatprep.subr.mxu0 %v3497
          %7009 = vmatpush1.msra.mxu0 %v3496
          %7010 = vmatprep.subr.mxu0 %v3503
          %7011 = vmatpush1.msra.mxu0 %v3502
          %7012 = vmatprep.subr.mxu0 %v3509
          %7013 = vmatpush1.msra.mxu0 %v3508
          %7014 = vmatprep.subr.mxu0 %v3515
          %7015 = vmatpush1.msra.mxu0 %v3514
          %7016 = vmatprep.subr.mxu0 %v3521
          %7017 = vmatpush1.msra.mxu0 %v3520
          %7018 = vmatprep.subr.mxu0 %v3527
          %7019 = vmatpush1.msra.mxu0 %v3526
          %7020 = vmatprep.subr.mxu0 %v3533
          %7021 = vmatpush1.msra.mxu0 %v3532
          %7022 = vmatprep.subr.mxu0 %v3539
          %7023 = vmatpush1.msra.mxu0 %v3538
          %7024 = vmatprep.subr.mxu0 %v3545
          %7025 = vmatpush1.msra.mxu0 %v3544
          %7026 = vmatprep.subr.mxu0 %v3551
          %7027 = vmatpush1.msra.mxu0 %v3550
          %7028 = vmatprep.subr.mxu0 %v3557
          %7029 = vmatpush1.msra.mxu0 %v3556
          %7030 = vmatprep.subr.mxu0 %v3563
          %7031 = vmatpush1.msra.mxu0 %v3562
          %7032 = vmatprep.subr.mxu0 %v3569
          %7033 = vmatpush1.msra.mxu0 %v3568
          %7034 = vmatprep.subr.mxu0 %v3575
          %7035 = vmatpush1.msra.mxu0 %v3574
          %7036 = vmatprep.subr.mxu0 %v3581
          %7037 = vmatpush1.msra.mxu0 %v3580
          %7038 = vmatprep.subr.mxu0 %v3587
          %7039 = vmatpush1.msra.mxu0 %v3586
          %7040 = vmatprep.subr.mxu0 %v3593
          %7041 = vmatpush1.msra.mxu0 %v3592
          %7042 = vmatprep.subr.mxu0 %v3599
          %7043 = vmatpush1.msra.mxu0 %v3598
          %7044 = vmatprep.subr.mxu0 %v3605
          %7045 = vmatpush1.msra.mxu0 %v3604
          %7046 = vmatprep.subr.mxu0 %v3611
          %7047 = vmatpush1.msra.mxu0 %v3610
          %7048 = vmatprep.subr.mxu0 %v3617
          %7049 = vmatpush1.msra.mxu0 %v3616
          %7050 = vmatprep.subr.mxu0 %v3623
          %7051 = vmatpush1.msra.mxu0 %v3622
          %7052 = vmatprep.subr.mxu0 %v3629
          %7053 = vmatpush1.msra.mxu0 %v3628
          %7054 = vmatprep.mubr.f32.mxu0 %v6421
          %7055 = vmatmul.mubr.f32.gmra.mrb[0].mxu0 %v6420
          %v7056 = vpop.f32.mrb[0].mxu0
          %v7057 = vadd.f32 %v6986, %v7056
          %v7058 = vpop.f32.mrb[0].mxu0
          %v7059 = vadd.f32 %v6988, %v7058
          %7060 = vdwg.mxu0
          %v7061 = vxor.u32 %v6631, 2147483648
          %v7062 = vxor.u32 %v6633, 2147483648
          %v7063 = vxor.u32 %v6844, 2147483648
          %v7064 = vxor.u32 %v6846, 2147483648
          %v7065 = vxor.u32 %v7057, 2147483648
          %v7066 = vxor.u32 %v7059, 2147483648
          %v7067 = vmul.f32 %v7061, 1.442695
          %v7068 = vpow.pop %v7067
          %v7069 = vmul.f32 %v7062, 1.442695
          %v7070 = vpow.pop %v7069
          %v7071 = vmul.f32 %v7063, 1.442695
          %v7072 = vpow.pop %v7071
          %v7073 = vmul.f32 %v7064, 1.442695
          %v7074 = vpow.pop %v7073
          %v7075 = vmul.f32 %v7065, 1.442695
          %v7076 = vpow.pop %v7075
          %v7077 = vmul.f32 %v7066, 1.442695
          %v7078 = vpow.pop %v7077
          %v7079 = vadd.f32 %v7068, 1.0
          %v7080 = vadd.f32 %v7070, 1.0
          %v7081 = vadd.f32 %v7072, 1.0
          %v7082 = vadd.f32 %v7074, 1.0
          %v7083 = vadd.f32 %v7076, 1.0
          %v7084 = vadd.f32 %v7078, 1.0
          %v7085 = vrcp.pop %v7079
          %v7086 = vmul.f32 1.0, %v7085
          %v7087 = vrcp.pop %v7080
          %v7088 = vmul.f32 1.0, %v7087
          %v7089 = vrcp.pop %v7081
          %v7090 = vmul.f32 1.0, %v7089
          %v7091 = vrcp.pop %v7082
          %v7092 = vmul.f32 1.0, %v7091
          %v7093 = vrcp.pop %v7083
          %v7094 = vmul.f32 1.0, %v7093
          %v7095 = vrcp.pop %v7084
          %v7096 = vmul.f32 1.0, %v7095
          %v7097 = vmul.f32 %v7086, %v6416
          %v7098 = vmul.f32 %v7088, %v6417
          %v7099 = vmul.f32 %v7090, %v6418
          %v7100 = vmul.f32 %v7092, %v6419
          %v7101 = vmul.f32 %v7094, %v6420
          %v7102 = vmul.f32 %v7096, %v6421
          %v7103 = vsub.f32 1.0, %v7086
          %v7104 = vsub.f32 1.0, %v7088
          %v7105 = vsub.f32 1.0, %v7090
          %v7106 = vsub.f32 1.0, %v7092
          %v7107 = vsub.f32 1.0, %v7094
          %v7108 = vsub.f32 1.0, %v7096
          %v7109 = vmul.f32 %v7103, %v5747
          %v7110 = vmul.f32 %v7104, %v5748
          %v7111 = vmul.f32 %v7105, %v5749
          %v7112 = vmul.f32 %v7106, %v5750
          %v7113 = vmul.f32 %v7107, %v5751
          %v7114 = vmul.f32 %v7108, %v5752
          %v7115 = vadd.f32 %v7097, %v7109
          %v7116 = vadd.f32 %v7098, %v7110
          %v7117 = vadd.f32 %v7099, %v7111
          %v7118 = vadd.f32 %v7100, %v7112
          %v7119 = vadd.f32 %v7101, %v7113
          %v7120 = vadd.f32 %v7102, %v7114
          %v7121 = vadd.f32 %v4367, %v7115
          %v7122 = vadd.f32 %v4368, %v7116
          %v7123 = vadd.f32 %v4369, %v7117
          %v7124 = vadd.f32 %v4370, %v7118
          %v7125 = vadd.f32 %v4371, %v7119
          %v7126 = vadd.f32 %v4372, %v7120
          %v7127 = vpack.c.bf16 %v7121, %v7121
          %v7128 = vpack.c.bf16 %v7122, %v7122
          %v7129 = vpack.c.bf16 %v7123, %v7123
          %v7130 = vpack.c.bf16 %v7124, %v7124
          %v7131 = vpack.c.bf16 %v7125, %v7125
          %v7132 = vpack.c.bf16 %v7126, %v7126
          %v7133 = vld [vmem:[%s6] sm:$0xf]
          %v7134 = vld [vmem:[%s6 + $0x4] sm:$0xf]
          %v7135 = vld [vmem:[%s6 + $0x8] sm:$0xf]
          %v7136 = vld [vmem:[%s6 + $0xc] sm:$0xf]
          %v7137 = vld [vmem:[%s6 + $0x10] sm:$0xf]
          %v7138 = vld [vmem:[%s6 + $0x14] sm:$0xf]
          %v7139 = vld [vmem:[%s6 + $0x18] sm:$0xf]
          %v7140 = vld [vmem:[%s6 + $0x1c] sm:$0xf]
          %v7141 = vld [vmem:[%s6 + $0x20] sm:$0xf]
          %v7142 = vld [vmem:[%s6 + $0x24] sm:$0xf]
          %v7143 = vld [vmem:[%s6 + $0x28] sm:$0xf]
          %v7144 = vld [vmem:[%s6 + $0x2c] sm:$0xf]
          %v7145 = vld [vmem:[%s6 + $0x30] sm:$0xf]
          %v7146 = vld [vmem:[%s6 + $0x34] sm:$0xf]
          %v7147 = vld [vmem:[%s6 + $0x38] sm:$0xf]
          %v7148 = vld [vmem:[%s6 + $0x3c] sm:$0xf]
          %v7149 = vld [vmem:[%s6 + $0x40] sm:$0xf]
          %v7150 = vld [vmem:[%s6 + $0x44] sm:$0xf]
          %v7151 = vld [vmem:[%s6 + $0x48] sm:$0xf]
          %v7152 = vld [vmem:[%s6 + $0x4c] sm:$0xf]
          %v7153 = vld [vmem:[%s6 + $0x50] sm:$0xf]
          %v7154 = vld [vmem:[%s6 + $0x54] sm:$0xf]
          %v7155 = vld [vmem:[%s6 + $0x58] sm:$0xf]
          %v7156 = vld [vmem:[%s6 + $0x5c] sm:$0xf]
          %v7157 = vld [vmem:[%s6 + $0x60] sm:$0xf]
          %v7158 = vld [vmem:[%s6 + $0x64] sm:$0xf]
          %v7159 = vld [vmem:[%s6 + $0x68] sm:$0xf]
          %v7160 = vld [vmem:[%s6 + $0x6c] sm:$0xf]
          %v7161 = vld [vmem:[%s6 + $0x70] sm:$0xf]
          %v7162 = vld [vmem:[%s6 + $0x74] sm:$0xf]
          %v7163 = vld [vmem:[%s6 + $0x78] sm:$0xf]
          %v7164 = vld [vmem:[%s6 + $0x7c] sm:$0xf]
          %v7165 = vld [vmem:[%s6 + $0x80] sm:$0xf]
          %v7166 = vld [vmem:[%s6 + $0x84] sm:$0xf]
          %v7167 = vld [vmem:[%s6 + $0x88] sm:$0xf]
          %v7168 = vld [vmem:[%s6 + $0x8c] sm:$0xf]
          %v7169 = vld [vmem:[%s6 + $0x90] sm:$0xf]
          %v7170 = vld [vmem:[%s6 + $0x94] sm:$0xf]
          %v7171 = vld [vmem:[%s6 + $0x98] sm:$0xf]
          %v7172 = vld [vmem:[%s6 + $0x9c] sm:$0xf]
          %v7173 = vld [vmem:[%s6 + $0xa0] sm:$0xf]
          %v7174 = vld [vmem:[%s6 + $0xa4] sm:$0xf]
          %v7175 = vld [vmem:[%s6 + $0xa8] sm:$0xf]
          %v7176 = vld [vmem:[%s6 + $0xac] sm:$0xf]
          %v7177 = vld [vmem:[%s6 + $0xb0] sm:$0xf]
          %v7178 = vld [vmem:[%s6 + $0xb4] sm:$0xf]
          %v7179 = vld [vmem:[%s6 + $0xb8] sm:$0xf]
          %v7180 = vld [vmem:[%s6 + $0xbc] sm:$0xf]
          %v7181 = vld [vmem:[%s6 + $0xc0] sm:$0xf]
          %v7182 = vld [vmem:[%s6 + $0xc4] sm:$0xf]
          %v7183 = vld [vmem:[%s6 + $0xc8] sm:$0xf]
          %v7184 = vld [vmem:[%s6 + $0xcc] sm:$0xf]
          %v7185 = vld [vmem:[%s6 + $0xd0] sm:$0xf]
          %v7186 = vld [vmem:[%s6 + $0xd4] sm:$0xf]
          %v7187 = vld [vmem:[%s6 + $0xd8] sm:$0xf]
          %v7188 = vld [vmem:[%s6 + $0xdc] sm:$0xf]
          %v7189 = vld [vmem:[%s6 + $0xe0] sm:$0xf]
          %v7190 = vld [vmem:[%s6 + $0xe4] sm:$0xf]
          %v7191 = vld [vmem:[%s6 + $0xe8] sm:$0xf]
          %v7192 = vld [vmem:[%s6 + $0xec] sm:$0xf]
          %v7193 = vld [vmem:[%s6 + $0xf0] sm:$0xf]
          %v7194 = vld [vmem:[%s6 + $0xf4] sm:$0xf]
          %v7195 = vld [vmem:[%s6 + $0xf8] sm:$0xf]
          %v7196 = vld [vmem:[%s6 + $0xfc] sm:$0xf]
          %v7197 = vld [vmem:[%s6 + $0x100] sm:$0xf]
          %v7198 = vld [vmem:[%s6 + $0x104] sm:$0xf]
          %v7199 = vld [vmem:[%s6 + $0x108] sm:$0xf]
          %v7200 = vld [vmem:[%s6 + $0x10c] sm:$0xf]
          %v7201 = vld [vmem:[%s6 + $0x110] sm:$0xf]
          %v7202 = vld [vmem:[%s6 + $0x114] sm:$0xf]
          %v7203 = vld [vmem:[%s6 + $0x118] sm:$0xf]
          %v7204 = vld [vmem:[%s6 + $0x11c] sm:$0xf]
          %v7205 = vld [vmem:[%s6 + $0x120] sm:$0xf]
          %v7206 = vld [vmem:[%s6 + $0x124] sm:$0xf]
          %v7207 = vld [vmem:[%s6 + $0x128] sm:$0xf]
          %v7208 = vld [vmem:[%s6 + $0x12c] sm:$0xf]
          %v7209 = vld [vmem:[%s6 + $0x130] sm:$0xf]
          %v7210 = vld [vmem:[%s6 + $0x134] sm:$0xf]
          %v7211 = vld [vmem:[%s6 + $0x138] sm:$0xf]
          %v7212 = vld [vmem:[%s6 + $0x13c] sm:$0xf]
          %v7213 = vld [vmem:[%s6 + $0x140] sm:$0xf]
          %v7214 = vld [vmem:[%s6 + $0x144] sm:$0xf]
          %v7215 = vld [vmem:[%s6 + $0x148] sm:$0xf]
          %v7216 = vld [vmem:[%s6 + $0x14c] sm:$0xf]
          %v7217 = vld [vmem:[%s6 + $0x150] sm:$0xf]
          %v7218 = vld [vmem:[%s6 + $0x154] sm:$0xf]
          %v7219 = vld [vmem:[%s6 + $0x158] sm:$0xf]
          %v7220 = vld [vmem:[%s6 + $0x15c] sm:$0xf]
          %v7221 = vld [vmem:[%s6 + $0x160] sm:$0xf]
          %v7222 = vld [vmem:[%s6 + $0x164] sm:$0xf]
          %v7223 = vld [vmem:[%s6 + $0x168] sm:$0xf]
          %v7224 = vld [vmem:[%s6 + $0x16c] sm:$0xf]
          %v7225 = vld [vmem:[%s6 + $0x170] sm:$0xf]
          %v7226 = vld [vmem:[%s6 + $0x174] sm:$0xf]
          %v7227 = vld [vmem:[%s6 + $0x178] sm:$0xf]
          %v7228 = vld [vmem:[%s6 + $0x17c] sm:$0xf]
          %v7229 = vld [vmem:[#allocation11] sm:$0x1]
          %v7231 = vlaneseq
          %v7232 = vshrl.u32 %v7231, 7
          %v7233 = vsub.s32 0, %v7232
          %v7234 = vrot.slane %v7229, %v7233
          %v7332 = vunpack.c.l.b16 %v7133
          %v7333 = vunpack.c.l.b16 %v7134
          %v7334 = vunpack.c.l.b16 %v7135
          %v7335 = vunpack.c.l.b16 %v7136
          %v7336 = vunpack.c.l.b16 %v7137
          %v7337 = vunpack.c.l.b16 %v7138
          %v7338 = vunpack.c.l.b16 %v7139
          %v7339 = vunpack.c.l.b16 %v7140
          %v7340 = vunpack.c.l.b16 %v7141
          %v7341 = vunpack.c.l.b16 %v7142
          %v7342 = vunpack.c.l.b16 %v7143
          %v7343 = vunpack.c.l.b16 %v7144
          %v7344 = vunpack.c.l.b16 %v7145
          %v7345 = vunpack.c.l.b16 %v7146
          %v7346 = vunpack.c.l.b16 %v7147
          %v7347 = vunpack.c.l.b16 %v7148
          %v7348 = vunpack.c.l.b16 %v7149
          %v7349 = vunpack.c.l.b16 %v7150
          %v7350 = vunpack.c.l.b16 %v7151
          %v7351 = vunpack.c.l.b16 %v7152
          %v7352 = vunpack.c.l.b16 %v7153
          %v7353 = vunpack.c.l.b16 %v7154
          %v7354 = vunpack.c.l.b16 %v7155
          %v7355 = vunpack.c.l.b16 %v7156
          %v7356 = vunpack.c.l.b16 %v7157
          %v7357 = vunpack.c.l.b16 %v7158
          %v7358 = vunpack.c.l.b16 %v7159
          %v7359 = vunpack.c.l.b16 %v7160
          %v7360 = vunpack.c.l.b16 %v7161
          %v7361 = vunpack.c.l.b16 %v7162
          %v7362 = vunpack.c.l.b16 %v7163
          %v7363 = vunpack.c.l.b16 %v7164
          %v7364 = vunpack.c.l.b16 %v7165
          %v7365 = vunpack.c.l.b16 %v7166
          %v7366 = vunpack.c.l.b16 %v7167
          %v7367 = vunpack.c.l.b16 %v7168
          %v7368 = vunpack.c.l.b16 %v7169
          %v7369 = vunpack.c.l.b16 %v7170
          %v7370 = vunpack.c.l.b16 %v7171
          %v7371 = vunpack.c.l.b16 %v7172
          %v7372 = vunpack.c.l.b16 %v7173
          %v7373 = vunpack.c.l.b16 %v7174
          %v7374 = vunpack.c.l.b16 %v7175
          %v7375 = vunpack.c.l.b16 %v7176
          %v7376 = vunpack.c.l.b16 %v7177
          %v7377 = vunpack.c.l.b16 %v7178
          %v7378 = vunpack.c.l.b16 %v7179
          %v7379 = vunpack.c.l.b16 %v7180
          %v7380 = vunpack.c.l.b16 %v7181
          %v7381 = vunpack.c.l.b16 %v7182
          %v7382 = vunpack.c.l.b16 %v7183
          %v7383 = vunpack.c.l.b16 %v7184
          %v7384 = vunpack.c.l.b16 %v7185
          %v7385 = vunpack.c.l.b16 %v7186
          %v7386 = vunpack.c.l.b16 %v7187
          %v7387 = vunpack.c.l.b16 %v7188
          %v7388 = vunpack.c.l.b16 %v7189
          %v7389 = vunpack.c.l.b16 %v7190
          %v7390 = vunpack.c.l.b16 %v7191
          %v7391 = vunpack.c.l.b16 %v7192
          %v7392 = vunpack.c.l.b16 %v7193
          %v7393 = vunpack.c.l.b16 %v7194
          %v7394 = vunpack.c.l.b16 %v7195
          %v7395 = vunpack.c.l.b16 %v7196
          %v7396 = vunpack.c.l.b16 %v7197
          %v7397 = vunpack.c.l.b16 %v7198
          %v7398 = vunpack.c.l.b16 %v7199
          %v7399 = vunpack.c.l.b16 %v7200
          %v7400 = vunpack.c.l.b16 %v7201
          %v7401 = vunpack.c.l.b16 %v7202
          %v7402 = vunpack.c.l.b16 %v7203
          %v7403 = vunpack.c.l.b16 %v7204
          %v7404 = vunpack.c.l.b16 %v7205
          %v7405 = vunpack.c.l.b16 %v7206
          %v7406 = vunpack.c.l.b16 %v7207
          %v7407 = vunpack.c.l.b16 %v7208
          %v7408 = vunpack.c.l.b16 %v7209
          %v7409 = vunpack.c.l.b16 %v7210
          %v7410 = vunpack.c.l.b16 %v7211
          %v7411 = vunpack.c.l.b16 %v7212
          %v7412 = vunpack.c.l.b16 %v7213
          %v7413 = vunpack.c.l.b16 %v7214
          %v7414 = vunpack.c.l.b16 %v7215
          %v7415 = vunpack.c.l.b16 %v7216
          %v7416 = vunpack.c.l.b16 %v7217
          %v7417 = vunpack.c.l.b16 %v7218
          %v7418 = vunpack.c.l.b16 %v7219
          %v7419 = vunpack.c.l.b16 %v7220
          %v7420 = vunpack.c.l.b16 %v7221
          %v7421 = vunpack.c.l.b16 %v7222
          %v7422 = vunpack.c.l.b16 %v7223
          %v7423 = vunpack.c.l.b16 %v7224
          %v7424 = vunpack.c.l.b16 %v7225
          %v7425 = vunpack.c.l.b16 %v7226
          %v7426 = vunpack.c.l.b16 %v7227
          %v7427 = vunpack.c.l.b16 %v7228
          %v7428 = vpack.c.b16 %v7333, %v7332
          %v7429 = vpack.c.b16 %v7335, %v7334
          %v7430 = vpack.c.b16 %v7337, %v7336
          %v7431 = vpack.c.b16 %v7339, %v7338
          %v7432 = vpack.c.b16 %v7341, %v7340
          %v7433 = vpack.c.b16 %v7343, %v7342
          %v7434 = vpack.c.b16 %v7345, %v7344
          %v7435 = vpack.c.b16 %v7347, %v7346
          %v7436 = vpack.c.b16 %v7349, %v7348
          %v7437 = vpack.c.b16 %v7351, %v7350
          %v7438 = vpack.c.b16 %v7353, %v7352
          %v7439 = vpack.c.b16 %v7355, %v7354
          %v7440 = vpack.c.b16 %v7357, %v7356
          %v7441 = vpack.c.b16 %v7359, %v7358
          %v7442 = vpack.c.b16 %v7361, %v7360
          %v7443 = vpack.c.b16 %v7363, %v7362
          %v7444 = vpack.c.b16 %v7365, %v7364
          %v7445 = vpack.c.b16 %v7367, %v7366
          %v7446 = vpack.c.b16 %v7369, %v7368
          %v7447 = vpack.c.b16 %v7371, %v7370
          %v7448 = vpack.c.b16 %v7373, %v7372
          %v7449 = vpack.c.b16 %v7375, %v7374
          %v7450 = vpack.c.b16 %v7377, %v7376
          %v7451 = vpack.c.b16 %v7379, %v7378
          %v7452 = vpack.c.b16 %v7381, %v7380
          %v7453 = vpack.c.b16 %v7383, %v7382
          %v7454 = vpack.c.b16 %v7385, %v7384
          %v7455 = vpack.c.b16 %v7387, %v7386
          %v7456 = vpack.c.b16 %v7389, %v7388
          %v7457 = vpack.c.b16 %v7391, %v7390
          %v7458 = vpack.c.b16 %v7393, %v7392
          %v7459 = vpack.c.b16 %v7395, %v7394
          %v7460 = vpack.c.b16 %v7397, %v7396
          %v7461 = vpack.c.b16 %v7399, %v7398
          %v7462 = vpack.c.b16 %v7401, %v7400
          %v7463 = vpack.c.b16 %v7403, %v7402
          %v7464 = vpack.c.b16 %v7405, %v7404
          %v7465 = vpack.c.b16 %v7407, %v7406
          %v7466 = vpack.c.b16 %v7409, %v7408
          %v7467 = vpack.c.b16 %v7411, %v7410
          %v7468 = vpack.c.b16 %v7413, %v7412
          %v7469 = vpack.c.b16 %v7415, %v7414
          %v7470 = vpack.c.b16 %v7417, %v7416
          %v7471 = vpack.c.b16 %v7419, %v7418
          %v7472 = vpack.c.b16 %v7421, %v7420
          %v7473 = vpack.c.b16 %v7423, %v7422
          %v7474 = vpack.c.b16 %v7425, %v7424
          %v7475 = vpack.c.b16 %v7427, %v7426
          %7524 = vmatprep.subr.bf16.mxu0 0
          %7525 = vmatpush1.bf16.msra.mxu0 %v7428
          %7526 = vmatprep.subr.bf16.mxu0 0
          %7527 = vmatpush1.bf16.msra.mxu0 %v7429
          %7528 = vmatprep.subr.bf16.mxu0 0
          %7529 = vmatpush1.bf16.msra.mxu0 %v7430
          %7530 = vmatprep.subr.bf16.mxu0 0
          %7531 = vmatpush1.bf16.msra.mxu0 %v7431
          %7532 = vmatprep.subr.bf16.mxu0 0
          %7533 = vmatpush1.bf16.msra.mxu0 %v7432
          %7534 = vmatprep.subr.bf16.mxu0 0
          %7535 = vmatpush1.bf16.msra.mxu0 %v7433
          %7536 = vmatprep.subr.bf16.mxu0 0
          %7537 = vmatpush1.bf16.msra.mxu0 %v7434
          %7538 = vmatprep.subr.bf16.mxu0 0
          %7539 = vmatpush1.bf16.msra.mxu0 %v7435
          %7540 = vmatprep.subr.bf16.mxu0 0
          %7541 = vmatpush1.bf16.msra.mxu0 %v7436
          %7542 = vmatprep.subr.bf16.mxu0 0
          %7543 = vmatpush1.bf16.msra.mxu0 %v7437
          %7544 = vmatprep.subr.bf16.mxu0 0
          %7545 = vmatpush1.bf16.msra.mxu0 %v7438
          %7546 = vmatprep.subr.bf16.mxu0 0
          %7547 = vmatpush1.bf16.msra.mxu0 %v7439
          %7548 = vmatprep.subr.bf16.mxu0 0
          %7549 = vmatpush1.bf16.msra.mxu0 %v7440
          %7550 = vmatprep.subr.bf16.mxu0 0
          %7551 = vmatpush1.bf16.msra.mxu0 %v7441
          %7552 = vmatprep.subr.bf16.mxu0 0
          %7553 = vmatpush1.bf16.msra.mxu0 %v7442
          %7554 = vmatprep.subr.bf16.mxu0 0
          %7555 = vmatpush1.bf16.msra.mxu0 %v7443
          %7556 = vmatprep.mubr.bf16.mxu0 %v7128
          %7557 = vmatmul.mubr.bf16.gmra.mrb[0].mxu0 %v7127
          %v7558 = vpop.f32.mrb[0].mxu0
          %v7559 = vadd.f32 %v7234, %v7558
          %v7560 = vpop.f32.mrb[0].mxu0
          %v7561 = vpop.f32.mrb[0].mxu0
          %v7562 = vpop.f32.mrb[0].mxu0
          %7563 = vdwg.mxu0
          %7564 = vmatprep.subr.bf16.mxu0 0
          %7565 = vmatpush1.bf16.msra.mxu0 %v7444
          %7566 = vmatprep.subr.bf16.mxu0 0
          %7567 = vmatpush1.bf16.msra.mxu0 %v7445
          %7568 = vmatprep.subr.bf16.mxu0 0
          %7569 = vmatpush1.bf16.msra.mxu0 %v7446
          %7570 = vmatprep.subr.bf16.mxu0 0
          %7571 = vmatpush1.bf16.msra.mxu0 %v7447
          %7572 = vmatprep.subr.bf16.mxu0 0
          %7573 = vmatpush1.bf16.msra.mxu0 %v7448
          %7574 = vmatprep.subr.bf16.mxu0 0
          %7575 = vmatpush1.bf16.msra.mxu0 %v7449
          %7576 = vmatprep.subr.bf16.mxu0 0
          %7577 = vmatpush1.bf16.msra.mxu0 %v7450
          %7578 = vmatprep.subr.bf16.mxu0 0
          %7579 = vmatpush1.bf16.msra.mxu0 %v7451
          %7580 = vmatprep.subr.bf16.mxu0 0
          %7581 = vmatpush1.bf16.msra.mxu0 %v7452
          %7582 = vmatprep.subr.bf16.mxu0 0
          %7583 = vmatpush1.bf16.msra.mxu0 %v7453
          %7584 = vmatprep.subr.bf16.mxu0 0
          %7585 = vmatpush1.bf16.msra.mxu0 %v7454
          %7586 = vmatprep.subr.bf16.mxu0 0
          %7587 = vmatpush1.bf16.msra.mxu0 %v7455
          %7588 = vmatprep.subr.bf16.mxu0 0
          %7589 = vmatpush1.bf16.msra.mxu0 %v7456
          %7590 = vmatprep.subr.bf16.mxu0 0
          %7591 = vmatpush1.bf16.msra.mxu0 %v7457
          %7592 = vmatprep.subr.bf16.mxu0 0
          %7593 = vmatpush1.bf16.msra.mxu0 %v7458
          %7594 = vmatprep.subr.bf16.mxu0 0
          %7595 = vmatpush1.bf16.msra.mxu0 %v7459
          %7596 = vmatprep.mubr.bf16.mxu0 %v7130
          %7597 = vmatmul.mubr.bf16.gmra.mrb[0].mxu0 %v7129
          %v7598 = vpop.f32.mrb[0].mxu0
          %v7599 = vadd.f32 %v7559, %v7598
          %v7600 = vpop.f32.mrb[0].mxu0
          %v7601 = vpop.f32.mrb[0].mxu0
          %v7602 = vpop.f32.mrb[0].mxu0
          %7603 = vdwg.mxu0
          %7604 = vmatprep.subr.bf16.mxu0 0
          %7605 = vmatpush1.bf16.msra.mxu0 %v7460
          %7606 = vmatprep.subr.bf16.mxu0 0
          %7607 = vmatpush1.bf16.msra.mxu0 %v7461
          %7608 = vmatprep.subr.bf16.mxu0 0
          %7609 = vmatpush1.bf16.msra.mxu0 %v7462
          %7610 = vmatprep.subr.bf16.mxu0 0
          %7611 = vmatpush1.bf16.msra.mxu0 %v7463
          %7612 = vmatprep.subr.bf16.mxu0 0
          %7613 = vmatpush1.bf16.msra.mxu0 %v7464
          %7614 = vmatprep.subr.bf16.mxu0 0
          %7615 = vmatpush1.bf16.msra.mxu0 %v7465
          %7616 = vmatprep.subr.bf16.mxu0 0
          %7617 = vmatpush1.bf16.msra.mxu0 %v7466
          %7618 = vmatprep.subr.bf16.mxu0 0
          %7619 = vmatpush1.bf16.msra.mxu0 %v7467
          %7620 = vmatprep.subr.bf16.mxu0 0
          %7621 = vmatpush1.bf16.msra.mxu0 %v7468
          %7622 = vmatprep.subr.bf16.mxu0 0
          %7623 = vmatpush1.bf16.msra.mxu0 %v7469
          %7624 = vmatprep.subr.bf16.mxu0 0
          %7625 = vmatpush1.bf16.msra.mxu0 %v7470
          %7626 = vmatprep.subr.bf16.mxu0 0
          %7627 = vmatpush1.bf16.msra.mxu0 %v7471
          %7628 = vmatprep.subr.bf16.mxu0 0
          %7629 = vmatpush1.bf16.msra.mxu0 %v7472
          %7630 = vmatprep.subr.bf16.mxu0 0
          %7631 = vmatpush1.bf16.msra.mxu0 %v7473
          %7632 = vmatprep.subr.bf16.mxu0 0
          %7633 = vmatpush1.bf16.msra.mxu0 %v7474
          %7634 = vmatprep.subr.bf16.mxu0 0
          %7635 = vmatpush1.bf16.msra.mxu0 %v7475
          %7636 = vmatprep.mubr.bf16.mxu0 %v7132
          %7637 = vmatmul.mubr.bf16.gmra.mrb[0].mxu0 %v7131
          %v7638 = vpop.f32.mrb[0].mxu0
          %v7639 = vadd.f32 %v7599, %v7638
          %v7640 = vpop.f32.mrb[0].mxu0
          %v7641 = vpop.f32.mrb[0].mxu0
          %v7642 = vpop.f32.mrb[0].mxu0
          %7643 = vdwg.mxu0
          %v7644 = vmax.f32 %v7639, 0.0
          %v7645 = vpack.c.bf16 %v7644, %v7644
          %v7646 = vld [vmem:[%s8] sm:$0xf]
          %v7647 = vld [vmem:[%s8 + $0x4] sm:$0xf]
          %v7648 = vld [vmem:[%s8 + $0x8] sm:$0xf]
          %v7649 = vld [vmem:[%s8 + $0xc] sm:$0xf]
          %v7650 = vld [vmem:[%s8 + $0x10] sm:$0xf]
          %v7651 = vld [vmem:[%s8 + $0x14] sm:$0xf]
          %v7652 = vld [vmem:[%s8 + $0x18] sm:$0xf]
          %v7653 = vld [vmem:[%s8 + $0x1c] sm:$0xf]
          %v7654 = vld [vmem:[#allocation12] sm:$0x1]
          %v7656 = vlaneseq
          %v7657 = vshrl.u32 %v7656, 7
          %v7658 = vsub.s32 0, %v7657
          %v7659 = vrot.slane %v7654, %v7658
          %v7669 = vunpack.c.l.b16 %v7646
          %v7670 = vunpack.c.l.b16 %v7647
          %v7671 = vunpack.c.l.b16 %v7648
          %v7672 = vunpack.c.l.b16 %v7649
          %v7673 = vunpack.c.l.b16 %v7650
          %v7674 = vunpack.c.l.b16 %v7651
          %v7675 = vunpack.c.l.b16 %v7652
          %v7676 = vunpack.c.l.b16 %v7653
          %v7677 = vpack.c.b16 %v7670, %v7669
          %v7678 = vpack.c.b16 %v7672, %v7671
          %v7679 = vpack.c.b16 %v7674, %v7673
          %v7680 = vpack.c.b16 %v7676, %v7675
          %vm7685 = vcmask 523264
          %v7687 = vsel %vm7685, %v7645, 0
          %7689 = vmatprep.subr.bf16.mxu0 0
          %7690 = vmatpush1.bf16.msra.mxu0 %v7677
          %7691 = vmatprep.subr.bf16.mxu0 0
          %7692 = vmatpush1.bf16.msra.mxu0 %v7678
          %7693 = vmatprep.subr.bf16.mxu0 0
          %7694 = vmatpush1.bf16.msra.mxu0 %v7679
          %7695 = vmatprep.subr.bf16.mxu0 0
          %7696 = vmatpush1.bf16.msra.mxu0 %v7680
          %7697 = vmatprep.subr.bf16.mxu0 0
          %7698 = vmatpush1.bf16.msra.mxu0 0
          %7699 = vmatprep.subr.bf16.mxu0 0
          %7700 = vmatpush1.bf16.msra.mxu0 0
          %7701 = vmatprep.subr.bf16.mxu0 0
          %7702 = vmatpush1.bf16.msra.mxu0 0
          %7703 = vmatprep.subr.bf16.mxu0 0
          %7704 = vmatpush1.bf16.msra.mxu0 0
          %7705 = vmatprep.subr.bf16.mxu0 0
          %7706 = vmatpush1.bf16.msra.mxu0 0
          %7707 = vmatprep.subr.bf16.mxu0 0
          %7708 = vmatpush1.bf16.msra.mxu0 0
          %7709 = vmatprep.subr.bf16.mxu0 0
          %7710 = vmatpush1.bf16.msra.mxu0 0
          %7711 = vmatprep.subr.bf16.mxu0 0
          %7712 = vmatpush1.bf16.msra.mxu0 0
          %7713 = vmatprep.subr.bf16.mxu0 0
          %7714 = vmatpush1.bf16.msra.mxu0 0
          %7715 = vmatprep.subr.bf16.mxu0 0
          %7716 = vmatpush1.bf16.msra.mxu0 0
          %7717 = vmatprep.subr.bf16.mxu0 0
          %7718 = vmatpush1.bf16.msra.mxu0 0
          %7719 = vmatprep.subr.bf16.mxu0 0
          %7720 = vmatpush1.bf16.msra.mxu0 0
          %7721 = vmatprep.mubr.bf16.mxu0 0
          %7722 = vmatmul.mubr.bf16.gmra.mrb[0].mxu0 %v7687
          %v7723 = vpop.f32.mrb[0].mxu0
          %v7724 = vadd.f32 %v7659, %v7723
          %v7725 = vpop.f32.mrb[0].mxu0
          %v7726 = vpop.f32.mrb[0].mxu0
          %v7727 = vpop.f32.mrb[0].mxu0
          %7728 = vdwg.mxu0
          %vm7729 = vcmask 9216
          %v7730 = vsel %vm7729, %v7724, -inf
          %7731 = vmax.xlane.f32.xlu0 %v7730
          %v7732 = vpop.xlane.xlu0 %7731
          %v7733 = vsub.f32 %v7724, %v7732
          %v7734 = vmul.f32 %v7733, 1.442695
          %v7735 = vpow.pop %v7734
          %v7736 = vsel %vm7729, %v7735, 0.0
          %7737 = vadd.xlane.f32.xlu0 %v7736
          %v7738 = vpop.xlane.xlu0 %7737
          %v7739 = vrcp.pop %v7738
          %v7740 = vmul.f32 %v7735, %v7739
          %7741 = vst.msk [vmem:[#allocation14] sm:$0x3] %vm7729, %v7740
        $region92: #{rgmm_forward.1} parent=59 // pred_fallthru
          _
        // Predicated region
        $region93: #{rgmm_forward.1} parent=59 // pred_check
          %p7742 = pneg %p261
        $region94: #{rgmm_forward.1} parent=59 // pred_check_branch
          %7744 = sbr.rel (%p7742) target = $region96
        $region95: #{rgmm_forward.1} parent=59 // pred_region
          %s7746 = ssub.s32 32, 32
          %7747 = vsyncadd [#allocation5], %s7746
          %s7749 = sshll.u32 [#allocation14], 4
          %s7750 = int_to_ptr.vmem [resolvable:$true] %s7749
          %7752 = dma.vmem_to_hbm [thread:$0]  %s7750, 32, %s10, [#allocation5]
        $region96: #{rgmm_forward.1} parent=59 // pred_fallthru
          _
        // Predicated region
        $region97: #{rgmm_forward.1} parent=59 // pred_check
          %p7753 = pneg %p261
        $region98: #{rgmm_forward.1} parent=59 // pred_check_branch
          %7755 = sbr.rel (%p7753) target = $region100
        $region99: #{rgmm_forward.1} parent=59 // pred_region
          %7756 = dma.done [#allocation5], 32
        $region100: #{rgmm_forward.1} parent=59 // pred_fallthru
          _
      $region60: #{rgmm_forward.1} parent=5 // pred_fallthru
        _
      %p7757 = scmp.le.s32.totalorder 2, %s23
      // Predicated region
      $region101: #{rgmm_forward.1} parent=5 // pred_check
        %p7758 = pneg %p7757
      $region102: #{rgmm_forward.1} parent=5 // pred_check_branch
        %7760 = sbr.rel (%p7758) target = $region104
      $region103: #{rgmm_forward.1} parent=5 // pred_region
        %s7761 = ssub.s32 %s23, 2
      $region104: #{rgmm_forward.1} parent=5 // pred_fallthru
        _
    $region6: #{rgmm_forward.1} parent=1 // loop_footer
      %s27 = sadd.s32 1, %s23
    $region7: #{rgmm_forward.1} parent=1 // loop_footer_branch
      %22 = sbr.rel target = $region3
    $region8: #{rgmm_forward.1} parent=1 // loop_exit
      _
    %7762 = vsyncpa [#allocation4], 1
    %s7763 = scalar_lea.sflag [#allocation4], 1
    %7764 = vsyncpa %s7763, 1
    %7765 = vsyncpa [#allocation7], 1
    %7766 = vsyncpa [#allocation10], 1
    %7767 = vsyncpa [#allocation13], 1
    %7768 = vsyncpa [#allocation5], 1
    %s7769 = scalar_lea.sflag [#allocation5], 1
    %7770 = vsyncpa %s7769, 1

</llo_original>
